<compile_context>
chip_gen: v7x
topology: tpu7x:2x2x1
jax: 0.10.0
libtpu: 0.0.40
codegen_flags: <defaults>
</compile_context>

<pallas_src>
import functools
import math

import jax
import jax.numpy as jnp
from jax import lax
from jax.experimental import pallas as pl
from jax.experimental.pallas import tpu as pltpu

F32 = jnp.float32
BF16 = jnp.bfloat16

SCALING_FACTOR = 0.18215          # vae.config.scaling_factor (SD-Turbo)
# TODO(synk): approximation of DDPM alphas_cumprod[999] (SD betas) — do not
# copy into a real port without using the exact schedule value.
ALPHA_CUMPROD_T999 = 0.0047

TM = 512                          # row tile for the dense matmul path
VMEM_LIMIT = 48 * 1024 * 1024     # <= v7x's 64 MiB/TC; v5e/v6e could use 64-96 MiB

# logical (synthetic) model dims
CIN, CENC, CLAT, CUNET, CTEXT = 3, 8, 4, 16, 16
RANK_UNET, RANK_VAE = 8, 4
VOCAB = 1000


def _cparams(n_grid):
    return pltpu.CompilerParams(dimension_semantics=("parallel",) * n_grid,
                                vmem_limit_bytes=VMEM_LIMIT)


def _divisor_tile(m, tmax):
    """Largest row tile that divides m (multiple of 8 when tiling) — avoids the
    jnp.pad row-padding HBM copy entirely."""
    if m <= tmax:
        return m
    for t in range(tmax - tmax % 8, 7, -8):
        if m % t == 0:
            return t
    # TODO(synk): fall back to a masked tail block for pathological m at real shapes.
    return m


# ---------------------------------------------------------------------------
# Pallas kernels
# ---------------------------------------------------------------------------
def _silu(y):
    # exp and reciprocal both go to the EUP slot; keep f32 (no bf16 VPU/EUP on v5e).
    return y * pl.reciprocal(1.0 + jnp.exp(-y), approx=True)


def _fused_mm_kernel(*refs, mm_scale, res_scale, act, clamp, has_res, lhs_f32):
    # y = mm_scale * (x @ W + b); [silu]; [+ res_scale*res]; [clamp]
    # NOTE: mm_scale intentionally multiplies the bias as well (quant-conv*SF,
    # 1/sqrt(d) q-scale, scheduler-step fusions all rely on this).
    if has_res:
        x_ref, w_ref, b_ref, res_ref, o_ref = refs
    else:
        x_ref, w_ref, b_ref, o_ref = refs
    x = x_ref[...]
    if not lhs_f32:
        x = x.astype(BF16)
    y = jnp.dot(x, w_ref[...], preferred_element_type=jnp.float32)
    y = y + b_ref[...]
    if mm_scale != 1.0:
        y = y * mm_scale
    if act == "silu":
        y = _silu(y)
    if has_res:
        y = y + res_scale * res_ref[...].astype(jnp.float32)
    if clamp:
        y = jnp.clip(y, -1.0, 1.0)
    o_ref[...] = y.astype(o_ref.dtype)


def _dual_mm_kernel(x_ref, w_ref, b_ref, s_ref, ws_ref, o_ref, *, act):
    # y = silu(x @ W + b) + skip @ Wskip_eff   (gamma pre-folded into Wskip_eff)
    y = jnp.dot(x_ref[...].astype(BF16), w_ref[...],
                preferred_element_type=jnp.float32) + b_ref[...]
    if act == "silu":
        y = _silu(y)
    y = y + jnp.dot(s_ref[...].astype(BF16), ws_ref[...],
                    preferred_element_type=jnp.float32)
    o_ref[...] = y.astype(o_ref.dtype)


def _conv_kernel(x_ref, w_ref, b_ref, o_ref, *, k, th, wo, act, clamp, mm_scale):
    # In-kernel im2col: the k*k taps are gathered from a whole-image VMEM block
    # (fetched once per batch element thanks to the constant index_map over the
    # H-tile axis); the 9x patch tensor is never materialized in HBM.
    hblk = pl.program_id(1)
    row0 = pl.multiple_of(hblk * th, th)
    rows = x_ref[pl.ds(row0, th + k - 1), :, :].astype(jnp.float32)  # (th+k-1, Wp, Cin)
    acc = None
    for ki in range(k):
        for kj in range(k):
            tap = rows[ki:ki + th, kj:kj + wo, :]                    # (th, wo, Cin)
            tap2d = tap.reshape(th * wo, tap.shape[-1]).astype(BF16)
            prt = jnp.dot(tap2d, w_ref[ki * k + kj],
                          preferred_element_type=jnp.float32)
            acc = prt if acc is None else acc + prt
    y = acc + b_ref[...]
    if mm_scale != 1.0:
        y = y * mm_scale
    if act == "silu":
        y = _silu(y)
    if clamp:
        y = jnp.clip(y, -1.0, 1.0)
    o_ref[...] = y.reshape(th, wo, y.shape[-1]).astype(o_ref.dtype)


def _attn_kernel(q_ref, k_ref, v_ref, o_ref):
    # q is already pre-scaled by 1/sqrt(d) (folded into the q projection).
    # TODO(synk): at real SD sequence lengths also tile over K/V (flash-style).
    q = q_ref[...].astype(BF16)                    # (tq, D)
    k = k_ref[...].astype(BF16)                    # (S, D)
    v = v_ref[...].astype(BF16)
    s = lax.dot_general(q, k, (((1,), (1,)), ((), ())),
                        preferred_element_type=jnp.float32)           # (tq, S)
    m = jnp.max(s, axis=-1, keepdims=True)
    p = jnp.exp(s - m)
    p = p * pl.reciprocal(jnp.sum(p, axis=-1, keepdims=True), approx=True)
    o_ref[...] = jnp.dot(p.astype(BF16), v,
                         preferred_element_type=jnp.float32).astype(o_ref.dtype)


# ---------------------------------------------------------------------------
# pallas_call wrappers
# ---------------------------------------------------------------------------
def fused_matmul(x2d, w, b, *, res=None, mm_scale=1.0, res_scale=1.0, act="none",
                 clamp=False, lhs_f32=False, out_dtype=BF16, tm=TM):
    M, K = x2d.shape
    N = w.shape[1]
    tm_eff = _divisor_tile(M, tm)
    grid = (M // tm_eff,)
    kernel = functools.partial(_fused_mm_kernel, mm_scale=float(mm_scale),
                               res_scale=float(res_scale), act=act, clamp=clamp,
                               has_res=res is not None, lhs_f32=lhs_f32)
    in_specs = [pl.BlockSpec((tm_eff, K), lambda i: (i, 0)),
                pl.BlockSpec((K, N), lambda i: (0, 0)),
                pl.BlockSpec((1, N), lambda i: (0, 0))]
    args = [x2d, w, b]
    if res is not None:
        in_specs.append(pl.BlockSpec((tm_eff, N), lambda i: (i, 0)))
        args.append(res)
    ce = pl.CostEstimate(flops=2 * M * K * N,
                         transcendentals=M * N if act == "silu" else 0,
                         bytes_accessed=2 * M * (K + N) + 2 * K * N)
    # TODO(synk): at real SD channel widths (K = 9*1280) add a K grid axis
    # marked "arbitrary" with a VMEM f32 accumulator (v7x 64 MiB VMEM), and
    # consider pipeline_mode=pl.Buffered(3) for the tiny-K projections.
    return pl.pallas_call(
        kernel,
        out_shape=jax.ShapeDtypeStruct((M, N), out_dtype),
        grid=grid,
        in_specs=in_specs,
        out_specs=pl.BlockSpec((tm_eff, N), lambda i: (i, 0)),
        compiler_params=_cparams(1),
        cost_estimate=ce,
    )(*args)


def fused_matmul_skip(x2d, w, b, skip2d, ws_eff, *, act="silu", out_dtype=BF16, tm=TM):
    M, K = x2d.shape
    Ks = skip2d.shape[1]
    N = w.shape[1]
    tm_eff = _divisor_tile(M, tm)
    grid = (M // tm_eff,)
    ce = pl.CostEstimate(flops=2 * M * (K + Ks) * N,
                         transcendentals=M * N if act == "silu" else 0,
                         bytes_accessed=2 * M * (K + Ks + N) + 2 * (K + Ks) * N)
    return pl.pallas_call(
        functools.partial(_dual_mm_kernel, act=act),
        out_shape=jax.ShapeDtypeStruct((M, N), out_dtype),
        grid=grid,
        in_specs=[pl.BlockSpec((tm_eff, K), lambda i: (i, 0)),
                  pl.BlockSpec((K, N), lambda i: (0, 0)),
                  pl.BlockSpec((1, N), lambda i: (0, 0)),
                  pl.BlockSpec((tm_eff, Ks), lambda i: (i, 0)),
                  pl.BlockSpec((Ks, N), lambda i: (0, 0))],
        out_specs=pl.BlockSpec((tm_eff, N), lambda i: (i, 0)),
        compiler_params=_cparams(1),
        cost_estimate=ce,
    )(x2d, w, b, skip2d, ws_eff)


def conv_spatial(x_nhwc, w_taps, b, *, k, pads, act="none", clamp=False,
                 mm_scale=1.0, out_dtype=BF16):
    """k x k stride-1 conv with in-kernel im2col.  Gridded over (B, H-tiles);
    the input block is the whole (pre-padded) image for one batch element and
    is only re-DMA'd when the batch index changes."""
    xp = jnp.pad(x_nhwc, ((0, 0), pads[0], pads[1], (0, 0)))
    B, Hp, Wp, Cin = xp.shape
    Ho, Wo = Hp - k + 1, Wp - k + 1
    Cout = w_taps.shape[-1]
    th = Ho if Ho <= 8 else 8
    assert Ho % th == 0 and Wo % 8 == 0   # tiny odd-shaped convs go via the dense path
    grid = (B, Ho // th)
    kernel = functools.partial(_conv_kernel, k=k, th=th, wo=Wo, act=act,
                               clamp=clamp, mm_scale=float(mm_scale))
    ce = pl.CostEstimate(flops=2 * B * Ho * Wo * k * k * Cin * Cout,
                         transcendentals=B * Ho * Wo * Cout if act == "silu" else 0,
                         bytes_accessed=2 * (B * Hp * Wp * Cin + B * Ho * Wo * Cout
                                             + k * k * Cin * Cout))
    return pl.pallas_call(
        kernel,
        out_shape=jax.ShapeDtypeStruct((B, Ho, Wo, Cout), out_dtype),
        grid=grid,
        in_specs=[pl.BlockSpec((None, Hp, Wp, Cin), lambda bb, hh: (bb, 0, 0, 0)),
                  pl.BlockSpec((k * k, Cin, Cout), lambda bb, hh: (0, 0, 0)),
                  pl.BlockSpec((1, Cout), lambda bb, hh: (0, 0))],
        out_specs=pl.BlockSpec((None, th, Wo, Cout), lambda bb, hh: (bb, hh, 0, 0)),
        compiler_params=_cparams(2),
        cost_estimate=ce,
    )(xp, w_taps, b)


def attention(q, k, v, *, tq_max=256):
    B, Sq, D = q.shape
    S = k.shape[1]
    tq = _divisor_tile(Sq, tq_max)
    grid = (B, Sq // tq)
    ce = pl.CostEstimate(flops=4 * B * Sq * S * D,
                         transcendentals=B * Sq * S,
                         bytes_accessed=2 * B * (2 * Sq * D + 2 * S * D))
    return pl.pallas_call(
        _attn_kernel,
        out_shape=jax.ShapeDtypeStruct((B, Sq, D), BF16),
        grid=grid,
        in_specs=[pl.BlockSpec((None, tq, D), lambda bb, ss: (bb, ss, 0)),
                  pl.BlockSpec((None, S, D), lambda bb, ss: (bb, 0, 0)),
                  pl.BlockSpec((None, S, D), lambda bb, ss: (bb, 0, 0))],
        out_specs=pl.BlockSpec((None, tq, D), lambda bb, ss: (bb, ss, 0)),
        compiler_params=_cparams(2),
        cost_estimate=ce,
    )(q, k, v)


# ---------------------------------------------------------------------------
# XLA-side layout glue (cheap 1x rearrangements — never a 9x patch tensor)
# ---------------------------------------------------------------------------
def _im2col(x, k, stride, pad):
    # Only used for the tiny 4x4-latent convs and the 8x8 stride-2 encoder conv
    # (a few KB); all half/full-resolution convs use conv_spatial's in-kernel gather.
    B, H, W, C = x.shape
    xp = jnp.pad(x, ((0, 0), (pad, pad), (pad, pad), (0, 0)))
    Ho = (H + 2 * pad - k) // stride + 1
    Wo = (W + 2 * pad - k) // stride + 1
    cols = [xp[:, i:i + stride * Ho:stride, j:j + stride * Wo:stride, :]
            for i in range(k) for j in range(k)]
    patches = jnp.concatenate(cols, axis=-1)
    return patches.reshape(B * Ho * Wo, k * k * C), (B, Ho, Wo)


def _space_to_depth(x):      # (B,H,W,C) -> (B,H/2,W/2,4C), group (sy,sx) slow, c fast
    B, H, W, C = x.shape
    x = x.reshape(B, H // 2, 2, W // 2, 2, C)
    x = jnp.transpose(x, (0, 1, 3, 2, 4, 5))
    return x.reshape(B, H // 2, W // 2, 4 * C)


def _depth_to_space(x):      # (B,H,W,4C) -> (B,2H,2W,C), group (a,b) slow, c fast
    B, H, W, C4 = x.shape
    C = C4 // 4
    x = x.reshape(B, H, W, 2, 2, C)
    x = jnp.transpose(x, (0, 1, 3, 2, 4, 5))
    return x.reshape(B, 2 * H, 2 * W, C)


# ---------------------------------------------------------------------------
# Init-time weight rearrangements (exact algebraic refolds, zero runtime cost)
# ---------------------------------------------------------------------------
def _fold_stride2_weight(w3):
    """3x3 stride-2 pad-1 conv  ==  space-to-depth(2) + 2x2 stride-1 conv on the
    s2d tensor padded by 1 on top/left.  Returns (4 taps, 4*Cin, Cout)."""
    Cin, Cout = w3.shape[2], w3.shape[3]
    w2 = jnp.zeros((2, 2, 2, 2, Cin, Cout), F32)       # (ty, tx, sy, sx, c, co)
    m = [(0, 1), (1, 0), (1, 1)]                        # ki -> (tap, sub)
    for ki, (ty, sy) in enumerate(m):
        for kj, (tx, sx) in enumerate(m):
            w2 = w2.at[ty, tx, sy, sx].set(w3[ki, kj])
    return w2.reshape(2, 2, 4 * Cin, Cout).reshape(4, 4 * Cin, Cout)


def _fold_upsample_weight(w3):
    """nearest-2x upsample + 3x3 pad-1 conv  ==  3x3 pad-1 conv at LOW res with
    4*Cout parity groups + depth-to-space.  Returns (3, 3, Cin, 4*Cout),
    output channel order (a, b, co) with the parity group slow."""
    Cin, Cout = w3.shape[2], w3.shape[3]
    maps = [{0: 0, 1: 1, 2: 1}, {0: 1, 1: 1, 2: 2}]     # ki -> low-res tap, per parity
    w_eff = jnp.zeros((3, 3, Cin, 2, 2, Cout), F32)
    for a in range(2):
        for b_ in range(2):
            for ki in range(3):
                for kj in range(3):
                    w_eff = w_eff.at[maps[a][ki], maps[b_][kj], :, a, b_, :].add(w3[ki, kj])
    return w_eff.reshape(3, 3, Cin, 4 * Cout)


# ---------------------------------------------------------------------------
# Deterministic parameter initialization (synthetic; no per-tap channel padding;
# static weights pre-cast to bf16 once here)
# ---------------------------------------------------------------------------
def init_params(key):
    ks = iter(jax.random.split(key, 32))
    p = {}
    # text "encoder" stand-in (CLIPTextModel): embedding table.
    p['text_emb'] = jax.random.normal(next(ks), (VOCAB, CTEXT), F32) * 0.1

    # --- VAE encoder (down blocks whose activations feed the decoder skips) ---
    w1 = jax.random.normal(next(ks), (3, 3, CIN, CENC), F32) * 0.05
    p['enc_down1_w'] = _fold_stride2_weight(w1).astype(BF16)        # (4, 12, 8)
    p['enc_down1_b'] = jnp.zeros((1, CENC), F32)
    w2 = jax.random.normal(next(ks), (3, 3, CENC, CENC), F32) * 0.05
    p['enc_down2_w'] = w2.reshape(9 * CENC, CENC).astype(BF16)
    p['enc_down2_b'] = jnp.zeros((1, CENC), F32)
    # quant conv mean half only (latent_dist mode is used downstream)
    p['enc_quant_mean_w'] = (jax.random.normal(next(ks), (CENC, CLAT), F32) * 0.05).astype(BF16)
    p['enc_quant_mean_b'] = jnp.zeros((1, CLAT), F32)

    # --- UNet: TwinConv conv_in + one LoRA cross-attention block + conv_out ---
    # (TwinConv / LoRA master weights stay f32: folded at runtime with r / lora_scale.)
    p['unet_convin_pre_w'] = (jax.random.normal(next(ks), (3, 3, CLAT, CUNET), F32) * 0.05
                              ).reshape(9 * CLAT, CUNET)
    p['unet_convin_cur_w'] = (jax.random.normal(next(ks), (3, 3, CLAT, CUNET), F32) * 0.05
                              ).reshape(9 * CLAT, CUNET)
    p['unet_convin_pre_b'] = jnp.zeros((1, CUNET), F32)
    p['unet_convin_cur_b'] = jnp.zeros((1, CUNET), F32)
    for name, din in (('q', CUNET), ('k', CTEXT), ('v', CTEXT), ('o', CUNET)):
        p[f'unet_to{name}_w'] = jax.random.normal(next(ks), (din, CUNET), F32) * 0.05
        p[f'unet_to{name}_b'] = jnp.zeros((1, CUNET), F32)
        p[f'unet_to{name}_la'] = jax.random.normal(next(ks), (din, RANK_UNET), F32) * 0.02
        p[f'unet_to{name}_lb'] = jnp.zeros((RANK_UNET, CUNET), F32)   # peft zero-init B
    # conv_out kept f32: its fused scheduler-step epilogue scale is ~80x, so the
    # matmul inputs stay f32 per the precision review.
    p['unet_convout_w'] = (jax.random.normal(next(ks), (3, 3, CUNET, CLAT), F32) * 0.05
                           ).reshape(9 * CUNET, CLAT)
    p['unet_convout_b'] = jnp.zeros((1, CLAT), F32)

    # --- VAE decoder (skip_conv weights = 1e-5, matching torch.nn.init.constant_) ---
    p['dec_convin_w'] = (jax.random.normal(next(ks), (CLAT, CENC), F32) * 0.05).astype(BF16)
    p['dec_convin_b'] = jnp.zeros((1, CENC), F32)
    p['dec_skip1_w'] = jnp.full((CENC, CENC), 1e-5, F32)
    p['dec_skip2_w'] = jnp.full((CENC, CENC), 1e-5, F32)
    wu1 = jax.random.normal(next(ks), (3, 3, CENC, CENC), F32) * 0.05
    p['dec_up1_w'] = _fold_upsample_weight(wu1).reshape(9 * CENC, 4 * CENC).astype(BF16)
    p['dec_up1_b'] = jnp.zeros((1, 4 * CENC), F32)
    wu2 = jax.random.normal(next(ks), (3, 3, CENC, CENC), F32) * 0.05
    p['dec_up2_w'] = _fold_upsample_weight(wu2).reshape(9, CENC, 4 * CENC).astype(BF16)
    p['dec_up2_b'] = jnp.zeros((1, 4 * CENC), F32)
    wout = jax.random.normal(next(ks), (3, 3, CENC, CIN), F32) * 0.05
    p['dec_convout_w'] = wout.reshape(9, CENC, CIN).astype(BF16)
    p['dec_convout_b'] = jnp.zeros((1, CIN), F32)
    # TODO(synk): VAE-side LoRA adapters ('vae_skip') are not materialized here.
    return p


# ---------------------------------------------------------------------------
# Forward pass (mirrors Pix2Pix_Turbo.forward)
# ---------------------------------------------------------------------------
def _lora_fold(params, name, scale):
    # W_eff = W + scale*(A@B): rank-8 fold in the wrapper (f32), so the kernel
    # sees a single dense matmul instead of a two-stage LoRA path.
    return params[f'unet_to{name}_w'] + scale * (
        params[f'unet_to{name}_la'] @ params[f'unet_to{name}_lb'])


def pix2pix_turbo_forward(params, c_t, prompt_tokens, noise_map=None,
                          deterministic=True, r=1.0):
    r = 1.0 if deterministic else float(r)
    gamma = 1.0 if deterministic else r
    lora_scale = 1.0 if deterministic else r

    B = c_t.shape[0]
    x = jnp.transpose(c_t, (0, 2, 3, 1)).astype(BF16)                # NHWC bf16

    # text encoder (CLIP stand-in)
    # TODO(synk): full CLIPTextModel transformer has no compact Pallas equivalent.
    caption_enc = params['text_emb'][prompt_tokens].astype(BF16)     # (B, S, CTEXT)
    S = caption_enc.shape[1]
    ctx_flat = caption_enc.reshape(B * S, CTEXT)

    # --- vae.encode(c_t) ---
    # stride-2 conv re-expressed as space-to-depth + in-kernel 2x2 gather.
    d1 = conv_spatial(_space_to_depth(x), params['enc_down1_w'], params['enc_down1_b'],
                      k=2, pads=((1, 0), (1, 0)), act="silu")        # (B, H/2, W/2, CENC)
    p2, (_, Hl, Wl) = _im2col(d1, 3, 2, 1)                           # tiny latent-res conv
    d2_flat = fused_matmul(p2, params['enc_down2_w'], params['enc_down2_b'],
                           act="silu")                               # (B*Hl*Wl, CENC) bf16

    # quant conv (mean) * scaling_factor, fused with unet_input = enc*r + noise*(1-r)
    # TODO(synk): latent_dist.sample() gaussian noise omitted; the mode is used.
    if deterministic:
        unet_in_flat = fused_matmul(d2_flat, params['enc_quant_mean_w'],
                                    params['enc_quant_mean_b'],
                                    mm_scale=SCALING_FACTOR, out_dtype=F32)
    else:
        nm = jnp.transpose(noise_map, (0, 2, 3, 1)).reshape(B * Hl * Wl, CLAT)
        unet_in_flat = fused_matmul(d2_flat, params['enc_quant_mean_w'],
                                    params['enc_quant_mean_b'],
                                    mm_scale=SCALING_FACTOR * r,
                                    res=nm, res_scale=1.0 - r, out_dtype=F32)
    unet_in_img = unet_in_flat.reshape(B, Hl, Wl, CLAT).astype(BF16)

    # --- unet(unet_input, t=999, encoder_hidden_states=caption_enc) ---
    # TODO(synk): timestep embedding / full UNet2DConditionModel stack omitted.
    # TwinConv: x1*(1-r)+x2*r folded into one effective conv weight (linear), f32 then bf16.
    w_in = ((1.0 - r) * params['unet_convin_pre_w'] + r * params['unet_convin_cur_w']).astype(BF16)
    b_in = (1.0 - r) * params['unet_convin_pre_b'] + r * params['unet_convin_cur_b']
    pin, _ = _im2col(unet_in_img, 3, 1, 1)                           # tiny latent-res conv
    h_flat = fused_matmul(pin, w_in, b_in)                           # (B*Hl*Wl, CUNET) bf16

    wq = _lora_fold(params, 'q', lora_scale).astype(BF16)
    wo = _lora_fold(params, 'o', lora_scale).astype(BF16)
    wkv = jnp.concatenate([_lora_fold(params, 'k', lora_scale),
                           _lora_fold(params, 'v', lora_scale)], axis=1).astype(BF16)
    bkv = jnp.concatenate([params['unet_tok_b'], params['unet_tov_b']], axis=1)

    # q projection with the attention 1/sqrt(d) scale folded in as a constant.
    q = fused_matmul(h_flat, wq, params['unet_toq_b'], mm_scale=1.0 / math.sqrt(CUNET))
    kv = fused_matmul(ctx_flat, wkv, bkv).reshape(B, S, 2 * CUNET)
    attn = attention(q.reshape(B, Hl * Wl, CUNET), kv[..., :CUNET], kv[..., CUNET:])
    # out projection with the residual add fused in; kept f32 (feeds conv_out).
    h2_flat = fused_matmul(attn.reshape(B * Hl * Wl, CUNET), wo, params['unet_too_b'],
                           res=h_flat, res_scale=1.0, out_dtype=F32)

    # conv_out fused with sched.step(t=999) and the /scaling_factor of vae.decode:
    #   z = (sample - sqrt(1-a)*eps_pred) / (sqrt(a) * scaling_factor)
    # kept in f32 (lhs_f32 + f32 weight + f32 residual): the ~80x epilogue scale
    # would amplify bf16 rounding of the eps prediction.
    pco, _ = _im2col(h2_flat.reshape(B, Hl, Wl, CUNET), 3, 1, 1)
    a = ALPHA_CUMPROD_T999
    z_flat = fused_matmul(pco, params['unet_convout_w'], params['unet_convout_b'],
                          lhs_f32=True,
                          mm_scale=-math.sqrt(1.0 - a) / (math.sqrt(a) * SCALING_FACTOR),
                          res=unet_in_flat,
                          res_scale=1.0 / (math.sqrt(a) * SCALING_FACTOR))

    # --- vae.decode with encoder skips; gamma pre-folded into the skip weights ---
    hdec = fused_matmul_skip(z_flat, params['dec_convin_w'], params['dec_convin_b'],
                             d2_flat, (gamma * params['dec_skip1_w']).astype(BF16),
                             act="silu")                             # (B*Hl*Wl, CENC)
    # up-block 1: nearest-2x upsample folded into the conv weights -> conv runs at
    # LOW res with 4 parity groups; skip_conv_2 folded block-diagonally on the
    # space-to-depth'd skip so it stays a single dual-matmul kernel.
    p1, _ = _im2col(hdec.reshape(B, Hl, Wl, CENC), 3, 1, 1)          # tiny latent-res conv
    d1_s2d = _space_to_depth(d1).reshape(B * Hl * Wl, 4 * CENC)
    skip2_eff = (gamma * jnp.kron(jnp.eye(4, dtype=F32), params['dec_skip2_w'])).astype(BF16)
    hdec = fused_matmul_skip(p1, params['dec_up1_w'], params['dec_up1_b'],
                             d1_s2d, skip2_eff, act="silu")          # (B*Hl*Wl, 4*CENC)
    hdec = _depth_to_space(hdec.reshape(B, Hl, Wl, 4 * CENC))        # (B, H/2, W/2, CENC)
    # up-block 2: upsample folded, in-kernel 3x3 gather at half resolution.
    hdec = conv_spatial(hdec, params['dec_up2_w'], params['dec_up2_b'],
                        k=3, pads=((1, 1), (1, 1)), act="silu")      # (B, H/2, W/2, 4*CENC)
    hdec = _depth_to_space(hdec)                                     # (B, H, W, CENC)
    # final conv with clamp(-1, 1) fused; in-kernel 3x3 gather at full resolution.
    out = conv_spatial(hdec, params['dec_convout_w'], params['dec_convout_b'],
                       k=3, pads=((1, 1), (1, 1)), clamp=True, out_dtype=F32)
    return jnp.transpose(out, (0, 3, 1, 2))                          # NHWC -> NCHW


# ---------------------------------------------------------------------------
if __name__ == "__main__":
    key = jax.random.PRNGKey(0)
    kp, kx, kn, kt = jax.random.split(key, 4)
    params = init_params(kp)

    B, C, H, W = 2, 3, 16, 16
    c_t = jax.random.normal(kx, (B, C, H, W), F32)
    noise_map = jax.random.normal(kn, (B, CLAT, H // 4, W // 4), F32)  # latent-shaped
    prompt_tokens = jax.random.randint(kt, (B, 8), 0, VOCAB)

    fwd_sto = jax.jit(functools.partial(pix2pix_turbo_forward,
                                        deterministic=False, r=0.6))
    fwd_det = jax.jit(functools.partial(pix2pix_turbo_forward,
                                        deterministic=True, r=1.0, noise_map=None))

    # stochastic branch: exercises TwinConv blend, noise blend, LoRA scale r, gamma
    out = jax.block_until_ready(fwd_sto(params, c_t, prompt_tokens, noise_map))
    assert out.shape == (B, C, H, W)
    assert float(jnp.max(jnp.abs(out))) <= 1.0 + 1e-6

    # deterministic branch
    out_det = jax.block_until_ready(fwd_det(params, c_t, prompt_tokens))
    assert out_det.shape == (B, C, H, W)

    print("KERNEL_OK")
</pallas_src>

<mosaic_0001>
module attributes {stable_mosaic.version = 11 : i64} {
  func.func @_conv_kernel(%arg0: i32, %arg1: i32, %arg2: memref<1x9x9x12xbf16, #tpu.memory_space<vmem>>, %arg3: memref<4x12x8xbf16, #tpu.memory_space<vmem>>, %arg4: memref<1x8xf32, #tpu.memory_space<vmem>>, %arg5: memref<1x8x8x8xbf16, #tpu.memory_space<vmem>>) attributes {dimension_semantics = [#tpu.dimension_semantics<parallel>, #tpu.dimension_semantics<parallel>], iteration_bounds = array<i64: 2, 1>, scalar_prefetch = 0 : i64, scratch_operands = 0 : i64, tpu.core_type = #tpu.core_type<tc>, window_params = [{transform_indices = @transform_0, window_bounds = array<i64: 1, 9, 9, 12>}, {pipeline_mode = #tpu.pipeline_mode<synchronous>, transform_indices = @transform_1, window_bounds = array<i64: 4, 12, 8>}, {pipeline_mode = #tpu.pipeline_mode<synchronous>, transform_indices = @transform_2, window_bounds = array<i64: 1, 8>}, {transform_indices = @transform_3, window_bounds = array<i64: 1, 8, 8, 8>}]} {
    %c8_i32 = arith.constant 8 : i32
    %0 = arith.muli %arg1, %c8_i32 : i32
    %1 = tpu.assume_multiple %0, 8 : i32
    %c0 = arith.constant 0 : index
    %2 = arith.index_cast %1 : i32 to index
    %c0_0 = arith.constant 0 : index
    %c0_1 = arith.constant 0 : index
    %3 = vector.load %arg2[%c0, %2, %c0_0, %c0_1] : memref<1x9x9x12xbf16, #tpu.memory_space<vmem>>, vector<1x9x9x12xbf16>
    %4 = vector.shape_cast %3 : vector<1x9x9x12xbf16> to vector<9x9x12xbf16>
    %5 = arith.extf %4 : vector<9x9x12xbf16> to vector<9x9x12xf32>
    %6 = vector.extract_strided_slice %5 {offsets = [0, 0, 0], sizes = [8, 8, 12], strides = [1, 1, 1]} : vector<9x9x12xf32> to vector<8x8x12xf32>
    %7 = vector.shape_cast %6 : vector<8x8x12xf32> to vector<64x12xf32>
    %8 = arith.truncf %7 : vector<64x12xf32> to vector<64x12xbf16>
    %c0_2 = arith.constant 0 : index
    %c0_3 = arith.constant 0 : index
    %c0_4 = arith.constant 0 : index
    %9 = vector.load %arg3[%c0_2, %c0_3, %c0_4] : memref<4x12x8xbf16, #tpu.memory_space<vmem>>, vector<1x12x8xbf16>
    %10 = vector.shape_cast %9 : vector<1x12x8xbf16> to vector<12x8xbf16>
    %cst = arith.constant dense<0.000000e+00> : vector<64x8xf32>
    %11 = tpu.matmul %8, %10, %cst {dimension_numbers = #tpu.dot_dimension_numbers<[1], [0], [0], [1], [0, 0, 1, 1], [], []>} : vector<64x12xbf16>, vector<12x8xbf16>, vector<64x8xf32> -> vector<64x8xf32>
    %12 = vector.extract_strided_slice %5 {offsets = [0, 1, 0], sizes = [8, 8, 12], strides = [1, 1, 1]} : vector<9x9x12xf32> to vector<8x8x12xf32>
    %13 = vector.shape_cast %12 : vector<8x8x12xf32> to vector<64x12xf32>
    %14 = arith.truncf %13 : vector<64x12xf32> to vector<64x12xbf16>
    %c1 = arith.constant 1 : index
    %c0_5 = arith.constant 0 : index
    %c0_6 = arith.constant 0 : index
    %15 = vector.load %arg3[%c1, %c0_5, %c0_6] : memref<4x12x8xbf16, #tpu.memory_space<vmem>>, vector<1x12x8xbf16>
    %16 = vector.shape_cast %15 : vector<1x12x8xbf16> to vector<12x8xbf16>
    %cst_7 = arith.constant dense<0.000000e+00> : vector<64x8xf32>
    %17 = tpu.matmul %14, %16, %cst_7 {dimension_numbers = #tpu.dot_dimension_numbers<[1], [0], [0], [1], [0, 0, 1, 1], [], []>} : vector<64x12xbf16>, vector<12x8xbf16>, vector<64x8xf32> -> vector<64x8xf32>
    %18 = arith.addf %11, %17 : vector<64x8xf32>
    %19 = vector.extract_strided_slice %5 {offsets = [1, 0, 0], sizes = [8, 8, 12], strides = [1, 1, 1]} : vector<9x9x12xf32> to vector<8x8x12xf32>
    %20 = vector.shape_cast %19 : vector<8x8x12xf32> to vector<64x12xf32>
    %21 = arith.truncf %20 : vector<64x12xf32> to vector<64x12xbf16>
    %c2 = arith.constant 2 : index
    %c0_8 = arith.constant 0 : index
    %c0_9 = arith.constant 0 : index
    %22 = vector.load %arg3[%c2, %c0_8, %c0_9] : memref<4x12x8xbf16, #tpu.memory_space<vmem>>, vector<1x12x8xbf16>
    %23 = vector.shape_cast %22 : vector<1x12x8xbf16> to vector<12x8xbf16>
    %cst_10 = arith.constant dense<0.000000e+00> : vector<64x8xf32>
    %24 = tpu.matmul %21, %23, %cst_10 {dimension_numbers = #tpu.dot_dimension_numbers<[1], [0], [0], [1], [0, 0, 1, 1], [], []>} : vector<64x12xbf16>, vector<12x8xbf16>, vector<64x8xf32> -> vector<64x8xf32>
    %25 = arith.addf %18, %24 : vector<64x8xf32>
    %26 = vector.extract_strided_slice %5 {offsets = [1, 1, 0], sizes = [8, 8, 12], strides = [1, 1, 1]} : vector<9x9x12xf32> to vector<8x8x12xf32>
    %27 = vector.shape_cast %26 : vector<8x8x12xf32> to vector<64x12xf32>
    %28 = arith.truncf %27 : vector<64x12xf32> to vector<64x12xbf16>
    %c3 = arith.constant 3 : index
    %c0_11 = arith.constant 0 : index
    %c0_12 = arith.constant 0 : index
    %29 = vector.load %arg3[%c3, %c0_11, %c0_12] : memref<4x12x8xbf16, #tpu.memory_space<vmem>>, vector<1x12x8xbf16>
    %30 = vector.shape_cast %29 : vector<1x12x8xbf16> to vector<12x8xbf16>
    %cst_13 = arith.constant dense<0.000000e+00> : vector<64x8xf32>
    %31 = tpu.matmul %28, %30, %cst_13 {dimension_numbers = #tpu.dot_dimension_numbers<[1], [0], [0], [1], [0, 0, 1, 1], [], []>} : vector<64x12xbf16>, vector<12x8xbf16>, vector<64x8xf32> -> vector<64x8xf32>
    %32 = arith.addf %25, %31 : vector<64x8xf32>
    %c0_14 = arith.constant 0 : index
    %c0_15 = arith.constant 0 : index
    %33 = vector.load %arg4[%c0_14, %c0_15] : memref<1x8xf32, #tpu.memory_space<vmem>>, vector<1x8xf32>
    %34 = vector.broadcast %33 : vector<1x8xf32> to vector<64x8xf32>
    %35 = arith.addf %32, %34 : vector<64x8xf32>
    %cst_16 = arith.constant 0.000000e+00 : f32
    %36 = vector.broadcast %cst_16 : f32 to vector<64x8xf32>
    %37 = arith.subf %36, %35 : vector<64x8xf32>
    %38 = math.exp %37 : vector<64x8xf32>
    %cst_17 = arith.constant 1.000000e+00 : f32
    %39 = vector.broadcast %cst_17 : f32 to vector<64x8xf32>
    %40 = arith.addf %39, %38 : vector<64x8xf32>
    %41 = tpu.reciprocal %40 {approx = true} : vector<64x8xf32> -> vector<64x8xf32>
    %42 = arith.mulf %35, %41 : vector<64x8xf32>
    %43 = vector.shape_cast %42 : vector<64x8xf32> to vector<8x8x8xf32>
    %44 = arith.truncf %43 : vector<8x8x8xf32> to vector<8x8x8xbf16>
    %c0_18 = arith.constant 0 : index
    %c0_19 = arith.constant 0 : index
    %c0_20 = arith.constant 0 : index
    %c0_21 = arith.constant 0 : index
    %45 = vector.load %arg5[%c0_18, %c0_19, %c0_20, %c0_21] : memref<1x8x8x8xbf16, #tpu.memory_space<vmem>>, vector<1x8x8x8xbf16>
    %46 = vector.shape_cast %45 : vector<1x8x8x8xbf16> to vector<8x8x8xbf16>
    %47 = vector.shape_cast %44 : vector<8x8x8xbf16> to vector<1x8x8x8xbf16>
    tpu.vector_store %arg5[%c0_18, %c0_19, %c0_20, %c0_21], %47 {strides = array<i32>} : memref<1x8x8x8xbf16, #tpu.memory_space<vmem>>, vector<1x8x8x8xbf16>,
    return
  }
  func.func @transform_0(%arg0: i32, %arg1: i32) -> (i32, i32, i32, i32) {
    %c0_i32 = arith.constant 0 : i32
    %c0_i32_0 = arith.constant 0 : i32
    %c0_i32_1 = arith.constant 0 : i32
    %c0_i32_2 = arith.constant 0 : i32
    return %arg0, %c0_i32, %c0_i32_0, %c0_i32_1 : i32, i32, i32, i32
  }
  func.func @transform_1(%arg0: i32, %arg1: i32) -> (i32, i32, i32) {
    %c0_i32 = arith.constant 0 : i32
    %c0_i32_0 = arith.constant 0 : i32
    %c0_i32_1 = arith.constant 0 : i32
    %c0_i32_2 = arith.constant 0 : i32
    return %c0_i32, %c0_i32_0, %c0_i32_1 : i32, i32, i32
  }
  func.func @transform_2(%arg0: i32, %arg1: i32) -> (i32, i32) {
    %c0_i32 = arith.constant 0 : i32
    %c0_i32_0 = arith.constant 0 : i32
    %c0_i32_1 = arith.constant 0 : i32
    return %c0_i32, %c0_i32_0 : i32, i32
  }
  func.func @transform_3(%arg0: i32, %arg1: i32) -> (i32, i32, i32, i32) {
    %c0_i32 = arith.constant 0 : i32
    %c0_i32_0 = arith.constant 0 : i32
    %c0_i32_1 = arith.constant 0 : i32
    return %arg0, %arg1, %c0_i32, %c0_i32_0 : i32, i32, i32, i32
  }
}

module attributes {stable_mosaic.version = 11 : i64} {
  func.func @_fused_mm_kernel(%arg0: i32, %arg1: memref<32x8xbf16, #tpu.memory_space<vmem>>, %arg2: memref<8x4xbf16, #tpu.memory_space<vmem>>, %arg3: memref<1x4xf32, #tpu.memory_space<vmem>>, %arg4: memref<32x4xf32, #tpu.memory_space<vmem>>, %arg5: memref<32x4xf32, #tpu.memory_space<vmem>>) attributes {dimension_semantics = [#tpu.dimension_semantics<parallel>], iteration_bounds = array<i64: 1>, scalar_prefetch = 0 : i64, scratch_operands = 0 : i64, tpu.core_type = #tpu.core_type<tc>, window_params = [{transform_indices = @transform_0, window_bounds = array<i64: 32, 8>}, {pipeline_mode = #tpu.pipeline_mode<synchronous>, transform_indices = @transform_1, window_bounds = array<i64: 8, 4>}, {pipeline_mode = #tpu.pipeline_mode<synchronous>, transform_indices = @transform_2, window_bounds = array<i64: 1, 4>}, {transform_indices = @transform_3, window_bounds = array<i64: 32, 4>}, {transform_indices = @transform_4, window_bounds = array<i64: 32, 4>}]} {
    %c0 = arith.constant 0 : index
    %c0_0 = arith.constant 0 : index
    %0 = vector.load %arg1[%c0, %c0_0] : memref<32x8xbf16, #tpu.memory_space<vmem>>, vector<32x8xbf16>
    %c0_1 = arith.constant 0 : index
    %c0_2 = arith.constant 0 : index
    %1 = vector.load %arg2[%c0_1, %c0_2] : memref<8x4xbf16, #tpu.memory_space<vmem>>, vector<8x4xbf16>
    %cst = arith.constant dense<0.000000e+00> : vector<32x4xf32>
    %2 = tpu.matmul %0, %1, %cst {dimension_numbers = #tpu.dot_dimension_numbers<[1], [0], [0], [1], [0, 0, 1, 1], [], []>} : vector<32x8xbf16>, vector<8x4xbf16>, vector<32x4xf32> -> vector<32x4xf32>
    %c0_3 = arith.constant 0 : index
    %c0_4 = arith.constant 0 : index
    %3 = vector.load %arg3[%c0_3, %c0_4] : memref<1x4xf32, #tpu.memory_space<vmem>>, vector<1x4xf32>
    %4 = vector.broadcast %3 : vector<1x4xf32> to vector<32x4xf32>
    %5 = arith.addf %2, %4 : vector<32x4xf32>
    %cst_5 = arith.constant 1.092900e-01 : f32
    %6 = vector.broadcast %cst_5 : f32 to vector<32x4xf32>
    %7 = arith.mulf %5, %6 : vector<32x4xf32>
    %c0_6 = arith.constant 0 : index
    %c0_7 = arith.constant 0 : index
    %8 = vector.load %arg4[%c0_6, %c0_7] : memref<32x4xf32, #tpu.memory_space<vmem>>, vector<32x4xf32>
    %cst_8 = arith.constant 4.000000e-01 : f32
    %9 = vector.broadcast %cst_8 : f32 to vector<32x4xf32>
    %10 = arith.mulf %9, %8 : vector<32x4xf32>
    %11 = arith.addf %7, %10 : vector<32x4xf32>
    %c0_9 = arith.constant 0 : index
    %c0_10 = arith.constant 0 : index
    %12 = vector.load %arg5[%c0_9, %c0_10] : memref<32x4xf32, #tpu.memory_space<vmem>>, vector<32x4xf32>
    tpu.vector_store %arg5[%c0_9, %c0_10], %11 {strides = array<i32>} : memref<32x4xf32, #tpu.memory_space<vmem>>, vector<32x4xf32>,
    return
  }
  func.func @transform_0(%arg0: i32) -> (i32, i32) {
    %c0_i32 = arith.constant 0 : i32
    %c0_i32_0 = arith.constant 0 : i32
    return %arg0, %c0_i32 : i32, i32
  }
  func.func @transform_1(%arg0: i32) -> (i32, i32) {
    %c0_i32 = arith.constant 0 : i32
    %c0_i32_0 = arith.constant 0 : i32
    %c0_i32_1 = arith.constant 0 : i32
    return %c0_i32, %c0_i32_0 : i32, i32
  }
  func.func @transform_2(%arg0: i32) -> (i32, i32) {
    %c0_i32 = arith.constant 0 : i32
    %c0_i32_0 = arith.constant 0 : i32
    %c0_i32_1 = arith.constant 0 : i32
    return %c0_i32, %c0_i32_0 : i32, i32
  }
  func.func @transform_3(%arg0: i32) -> (i32, i32) {
    %c0_i32 = arith.constant 0 : i32
    %c0_i32_0 = arith.constant 0 : i32
    return %arg0, %c0_i32 : i32, i32
  }
  func.func @transform_4(%arg0: i32) -> (i32, i32) {
    %c0_i32 = arith.constant 0 : i32
    %c0_i32_0 = arith.constant 0 : i32
    return %arg0, %c0_i32 : i32, i32
  }
}

module attributes {stable_mosaic.version = 11 : i64} {
  func.func @_fused_mm_kernel(%arg0: i32, %arg1: memref<32x72xbf16, #tpu.memory_space<vmem>>, %arg2: memref<72x8xbf16, #tpu.memory_space<vmem>>, %arg3: memref<1x8xf32, #tpu.memory_space<vmem>>, %arg4: memref<32x8xbf16, #tpu.memory_space<vmem>>) attributes {dimension_semantics = [#tpu.dimension_semantics<parallel>], iteration_bounds = array<i64: 1>, scalar_prefetch = 0 : i64, scratch_operands = 0 : i64, tpu.core_type = #tpu.core_type<tc>, window_params = [{transform_indices = @transform_0, window_bounds = array<i64: 32, 72>}, {pipeline_mode = #tpu.pipeline_mode<synchronous>, transform_indices = @transform_1, window_bounds = array<i64: 72, 8>}, {pipeline_mode = #tpu.pipeline_mode<synchronous>, transform_indices = @transform_2, window_bounds = array<i64: 1, 8>}, {transform_indices = @transform_3, window_bounds = array<i64: 32, 8>}]} {
    %c0 = arith.constant 0 : index
    %c0_0 = arith.constant 0 : index
    %0 = vector.load %arg1[%c0, %c0_0] : memref<32x72xbf16, #tpu.memory_space<vmem>>, vector<32x72xbf16>
    %c0_1 = arith.constant 0 : index
    %c0_2 = arith.constant 0 : index
    %1 = vector.load %arg2[%c0_1, %c0_2] : memref<72x8xbf16, #tpu.memory_space<vmem>>, vector<72x8xbf16>
    %cst = arith.constant dense<0.000000e+00> : vector<32x8xf32>
    %2 = tpu.matmul %0, %1, %cst {dimension_numbers = #tpu.dot_dimension_numbers<[1], [0], [0], [1], [0, 0, 1, 1], [], []>} : vector<32x72xbf16>, vector<72x8xbf16>, vector<32x8xf32> -> vector<32x8xf32>
    %c0_3 = arith.constant 0 : index
    %c0_4 = arith.constant 0 : index
    %3 = vector.load %arg3[%c0_3, %c0_4] : memref<1x8xf32, #tpu.memory_space<vmem>>, vector<1x8xf32>
    %4 = vector.broadcast %3 : vector<1x8xf32> to vector<32x8xf32>
    %5 = arith.addf %2, %4 : vector<32x8xf32>
    %cst_5 = arith.constant 0.000000e+00 : f32
    %6 = vector.broadcast %cst_5 : f32 to vector<32x8xf32>
    %7 = arith.subf %6, %5 : vector<32x8xf32>
    %8 = math.exp %7 : vector<32x8xf32>
    %cst_6 = arith.constant 1.000000e+00 : f32
    %9 = vector.broadcast %cst_6 : f32 to vector<32x8xf32>
    %10 = arith.addf %9, %8 : vector<32x8xf32>
    %11 = tpu.reciprocal %10 {approx = true} : vector<32x8xf32> -> vector<32x8xf32>
    %12 = arith.mulf %5, %11 : vector<32x8xf32>
    %13 = arith.truncf %12 : vector<32x8xf32> to vector<32x8xbf16>
    %c0_7 = arith.constant 0 : index
    %c0_8 = arith.constant 0 : index
    %14 = vector.load %arg4[%c0_7, %c0_8] : memref<32x8xbf16, #tpu.memory_space<vmem>>, vector<32x8xbf16>
    tpu.vector_store %arg4[%c0_7, %c0_8], %13 {strides = array<i32>} : memref<32x8xbf16, #tpu.memory_space<vmem>>, vector<32x8xbf16>,
    return
  }
  func.func @transform_0(%arg0: i32) -> (i32, i32) {
    %c0_i32 = arith.constant 0 : i32
    %c0_i32_0 = arith.constant 0 : i32
    return %arg0, %c0_i32 : i32, i32
  }
  func.func @transform_1(%arg0: i32) -> (i32, i32) {
    %c0_i32 = arith.constant 0 : i32
    %c0_i32_0 = arith.constant 0 : i32
    %c0_i32_1 = arith.constant 0 : i32
    return %c0_i32, %c0_i32_0 : i32, i32
  }
  func.func @transform_2(%arg0: i32) -> (i32, i32) {
    %c0_i32 = arith.constant 0 : i32
    %c0_i32_0 = arith.constant 0 : i32
    %c0_i32_1 = arith.constant 0 : i32
    return %c0_i32, %c0_i32_0 : i32, i32
  }
  func.func @transform_3(%arg0: i32) -> (i32, i32) {
    %c0_i32 = arith.constant 0 : i32
    %c0_i32_0 = arith.constant 0 : i32
    return %arg0, %c0_i32 : i32, i32
  }
}

module attributes {stable_mosaic.version = 11 : i64} {
  func.func @_fused_mm_kernel(%arg0: i32, %arg1: memref<32x16xbf16, #tpu.memory_space<vmem>>, %arg2: memref<16x16xbf16, #tpu.memory_space<vmem>>, %arg3: memref<1x16xf32, #tpu.memory_space<vmem>>, %arg4: memref<32x16xbf16, #tpu.memory_space<vmem>>) attributes {dimension_semantics = [#tpu.dimension_semantics<parallel>], iteration_bounds = array<i64: 1>, scalar_prefetch = 0 : i64, scratch_operands = 0 : i64, tpu.core_type = #tpu.core_type<tc>, window_params = [{transform_indices = @transform_0, window_bounds = array<i64: 32, 16>}, {pipeline_mode = #tpu.pipeline_mode<synchronous>, transform_indices = @transform_1, window_bounds = array<i64: 16, 16>}, {pipeline_mode = #tpu.pipeline_mode<synchronous>, transform_indices = @transform_2, window_bounds = array<i64: 1, 16>}, {transform_indices = @transform_3, window_bounds = array<i64: 32, 16>}]} {
    %c0 = arith.constant 0 : index
    %c0_0 = arith.constant 0 : index
    %0 = vector.load %arg1[%c0, %c0_0] : memref<32x16xbf16, #tpu.memory_space<vmem>>, vector<32x16xbf16>
    %c0_1 = arith.constant 0 : index
    %c0_2 = arith.constant 0 : index
    %1 = vector.load %arg2[%c0_1, %c0_2] : memref<16x16xbf16, #tpu.memory_space<vmem>>, vector<16x16xbf16>
    %cst = arith.constant dense<0.000000e+00> : vector<32x16xf32>
    %2 = tpu.matmul %0, %1, %cst {dimension_numbers = #tpu.dot_dimension_numbers<[1], [0], [0], [1], [0, 0, 1, 1], [], []>} : vector<32x16xbf16>, vector<16x16xbf16>, vector<32x16xf32> -> vector<32x16xf32>
    %c0_3 = arith.constant 0 : index
    %c0_4 = arith.constant 0 : index
    %3 = vector.load %arg3[%c0_3, %c0_4] : memref<1x16xf32, #tpu.memory_space<vmem>>, vector<1x16xf32>
    %4 = vector.broadcast %3 : vector<1x16xf32> to vector<32x16xf32>
    %5 = arith.addf %2, %4 : vector<32x16xf32>
    %cst_5 = arith.constant 2.500000e-01 : f32
    %6 = vector.broadcast %cst_5 : f32 to vector<32x16xf32>
    %7 = arith.mulf %5, %6 : vector<32x16xf32>
    %8 = arith.truncf %7 : vector<32x16xf32> to vector<32x16xbf16>
    %c0_6 = arith.constant 0 : index
    %c0_7 = arith.constant 0 : index
    %9 = vector.load %arg4[%c0_6, %c0_7] : memref<32x16xbf16, #tpu.memory_space<vmem>>, vector<32x16xbf16>
    tpu.vector_store %arg4[%c0_6, %c0_7], %8 {strides = array<i32>} : memref<32x16xbf16, #tpu.memory_space<vmem>>, vector<32x16xbf16>,
    return
  }
  func.func @transform_0(%arg0: i32) -> (i32, i32) {
    %c0_i32 = arith.constant 0 : i32
    %c0_i32_0 = arith.constant 0 : i32
    return %arg0, %c0_i32 : i32, i32
  }
  func.func @transform_1(%arg0: i32) -> (i32, i32) {
    %c0_i32 = arith.constant 0 : i32
    %c0_i32_0 = arith.constant 0 : i32
    %c0_i32_1 = arith.constant 0 : i32
    return %c0_i32, %c0_i32_0 : i32, i32
  }
  func.func @transform_2(%arg0: i32) -> (i32, i32) {
    %c0_i32 = arith.constant 0 : i32
    %c0_i32_0 = arith.constant 0 : i32
    %c0_i32_1 = arith.constant 0 : i32
    return %c0_i32, %c0_i32_0 : i32, i32
  }
  func.func @transform_3(%arg0: i32) -> (i32, i32) {
    %c0_i32 = arith.constant 0 : i32
    %c0_i32_0 = arith.constant 0 : i32
    return %arg0, %c0_i32 : i32, i32
  }
}

module attributes {stable_mosaic.version = 11 : i64} {
  func.func @_fused_mm_kernel(%arg0: i32, %arg1: memref<32x36xbf16, #tpu.memory_space<vmem>>, %arg2: memref<36x16xbf16, #tpu.memory_space<vmem>>, %arg3: memref<1x16xf32, #tpu.memory_space<vmem>>, %arg4: memref<32x16xbf16, #tpu.memory_space<vmem>>) attributes {dimension_semantics = [#tpu.dimension_semantics<parallel>], iteration_bounds = array<i64: 1>, scalar_prefetch = 0 : i64, scratch_operands = 0 : i64, tpu.core_type = #tpu.core_type<tc>, window_params = [{transform_indices = @transform_0, window_bounds = array<i64: 32, 36>}, {pipeline_mode = #tpu.pipeline_mode<synchronous>, transform_indices = @transform_1, window_bounds = array<i64: 36, 16>}, {pipeline_mode = #tpu.pipeline_mode<synchronous>, transform_indices = @transform_2, window_bounds = array<i64: 1, 16>}, {transform_indices = @transform_3, window_bounds = array<i64: 32, 16>}]} {
    %c0 = arith.constant 0 : index
    %c0_0 = arith.constant 0 : index
    %0 = vector.load %arg1[%c0, %c0_0] : memref<32x36xbf16, #tpu.memory_space<vmem>>, vector<32x36xbf16>
    %c0_1 = arith.constant 0 : index
    %c0_2 = arith.constant 0 : index
    %1 = vector.load %arg2[%c0_1, %c0_2] : memref<36x16xbf16, #tpu.memory_space<vmem>>, vector<36x16xbf16>
    %cst = arith.constant dense<0.000000e+00> : vector<32x16xf32>
    %2 = tpu.matmul %0, %1, %cst {dimension_numbers = #tpu.dot_dimension_numbers<[1], [0], [0], [1], [0, 0, 1, 1], [], []>} : vector<32x36xbf16>, vector<36x16xbf16>, vector<32x16xf32> -> vector<32x16xf32>
    %c0_3 = arith.constant 0 : index
    %c0_4 = arith.constant 0 : index
    %3 = vector.load %arg3[%c0_3, %c0_4] : memref<1x16xf32, #tpu.memory_space<vmem>>, vector<1x16xf32>
    %4 = vector.broadcast %3 : vector<1x16xf32> to vector<32x16xf32>
    %5 = arith.addf %2, %4 : vector<32x16xf32>
    %6 = arith.truncf %5 : vector<32x16xf32> to vector<32x16xbf16>
    %c0_5 = arith.constant 0 : index
    %c0_6 = arith.constant 0 : index
    %7 = vector.load %arg4[%c0_5, %c0_6] : memref<32x16xbf16, #tpu.memory_space<vmem>>, vector<32x16xbf16>
    tpu.vector_store %arg4[%c0_5, %c0_6], %6 {strides = array<i32>} : memref<32x16xbf16, #tpu.memory_space<vmem>>, vector<32x16xbf16>,
    return
  }
  func.func @transform_0(%arg0: i32) -> (i32, i32) {
    %c0_i32 = arith.constant 0 : i32
    %c0_i32_0 = arith.constant 0 : i32
    return %arg0, %c0_i32 : i32, i32
  }
  func.func @transform_1(%arg0: i32) -> (i32, i32) {
    %c0_i32 = arith.constant 0 : i32
    %c0_i32_0 = arith.constant 0 : i32
    %c0_i32_1 = arith.constant 0 : i32
    return %c0_i32, %c0_i32_0 : i32, i32
  }
  func.func @transform_2(%arg0: i32) -> (i32, i32) {
    %c0_i32 = arith.constant 0 : i32
    %c0_i32_0 = arith.constant 0 : i32
    %c0_i32_1 = arith.constant 0 : i32
    return %c0_i32, %c0_i32_0 : i32, i32
  }
  func.func @transform_3(%arg0: i32) -> (i32, i32) {
    %c0_i32 = arith.constant 0 : i32
    %c0_i32_0 = arith.constant 0 : i32
    return %arg0, %c0_i32 : i32, i32
  }
}

module attributes {stable_mosaic.version = 11 : i64} {
  func.func @_fused_mm_kernel(%arg0: i32, %arg1: memref<16x16xbf16, #tpu.memory_space<vmem>>, %arg2: memref<16x32xbf16, #tpu.memory_space<vmem>>, %arg3: memref<1x32xf32, #tpu.memory_space<vmem>>, %arg4: memref<16x32xbf16, #tpu.memory_space<vmem>>) attributes {dimension_semantics = [#tpu.dimension_semantics<parallel>], iteration_bounds = array<i64: 1>, scalar_prefetch = 0 : i64, scratch_operands = 0 : i64, tpu.core_type = #tpu.core_type<tc>, window_params = [{transform_indices = @transform_0, window_bounds = array<i64: 16, 16>}, {pipeline_mode = #tpu.pipeline_mode<synchronous>, transform_indices = @transform_1, window_bounds = array<i64: 16, 32>}, {pipeline_mode = #tpu.pipeline_mode<synchronous>, transform_indices = @transform_2, window_bounds = array<i64: 1, 32>}, {transform_indices = @transform_3, window_bounds = array<i64: 16, 32>}]} {
    %c0 = arith.constant 0 : index
    %c0_0 = arith.constant 0 : index
    %0 = vector.load %arg1[%c0, %c0_0] : memref<16x16xbf16, #tpu.memory_space<vmem>>, vector<16x16xbf16>
    %c0_1 = arith.constant 0 : index
    %c0_2 = arith.constant 0 : index
    %1 = vector.load %arg2[%c0_1, %c0_2] : memref<16x32xbf16, #tpu.memory_space<vmem>>, vector<16x32xbf16>
    %cst = arith.constant dense<0.000000e+00> : vector<16x32xf32>
    %2 = tpu.matmul %0, %1, %cst {dimension_numbers = #tpu.dot_dimension_numbers<[1], [0], [0], [1], [0, 0, 1, 1], [], []>} : vector<16x16xbf16>, vector<16x32xbf16>, vector<16x32xf32> -> vector<16x32xf32>
    %c0_3 = arith.constant 0 : index
    %c0_4 = arith.constant 0 : index
    %3 = vector.load %arg3[%c0_3, %c0_4] : memref<1x32xf32, #tpu.memory_space<vmem>>, vector<1x32xf32>
    %4 = vector.broadcast %3 : vector<1x32xf32> to vector<16x32xf32>
    %5 = arith.addf %2, %4 : vector<16x32xf32>
    %6 = arith.truncf %5 : vector<16x32xf32> to vector<16x32xbf16>
    %c0_5 = arith.constant 0 : index
    %c0_6 = arith.constant 0 : index
    %7 = vector.load %arg4[%c0_5, %c0_6] : memref<16x32xbf16, #tpu.memory_space<vmem>>, vector<16x32xbf16>
    tpu.vector_store %arg4[%c0_5, %c0_6], %6 {strides = array<i32>} : memref<16x32xbf16, #tpu.memory_space<vmem>>, vector<16x32xbf16>,
    return
  }
  func.func @transform_0(%arg0: i32) -> (i32, i32) {
    %c0_i32 = arith.constant 0 : i32
    %c0_i32_0 = arith.constant 0 : i32
    return %arg0, %c0_i32 : i32, i32
  }
  func.func @transform_1(%arg0: i32) -> (i32, i32) {
    %c0_i32 = arith.constant 0 : i32
    %c0_i32_0 = arith.constant 0 : i32
    %c0_i32_1 = arith.constant 0 : i32
    return %c0_i32, %c0_i32_0 : i32, i32
  }
  func.func @transform_2(%arg0: i32) -> (i32, i32) {
    %c0_i32 = arith.constant 0 : i32
    %c0_i32_0 = arith.constant 0 : i32
    %c0_i32_1 = arith.constant 0 : i32
    return %c0_i32, %c0_i32_0 : i32, i32
  }
  func.func @transform_3(%arg0: i32) -> (i32, i32) {
    %c0_i32 = arith.constant 0 : i32
    %c0_i32_0 = arith.constant 0 : i32
    return %arg0, %c0_i32 : i32, i32
  }
}

module attributes {stable_mosaic.version = 11 : i64} {
  func.func @_attn_kernel(%arg0: i32, %arg1: i32, %arg2: memref<1x16x16xbf16, #tpu.memory_space<vmem>>, %arg3: memref<1x8x16xbf16, #tpu.memory_space<vmem>>, %arg4: memref<1x8x16xbf16, #tpu.memory_space<vmem>>, %arg5: memref<1x16x16xbf16, #tpu.memory_space<vmem>>) attributes {dimension_semantics = [#tpu.dimension_semantics<parallel>, #tpu.dimension_semantics<parallel>], iteration_bounds = array<i64: 2, 1>, scalar_prefetch = 0 : i64, scratch_operands = 0 : i64, tpu.core_type = #tpu.core_type<tc>, window_params = [{transform_indices = @transform_0, window_bounds = array<i64: 1, 16, 16>}, {transform_indices = @transform_1, window_bounds = array<i64: 1, 8, 16>}, {transform_indices = @transform_2, window_bounds = array<i64: 1, 8, 16>}, {transform_indices = @transform_3, window_bounds = array<i64: 1, 16, 16>}]} {
    %c0 = arith.constant 0 : index
    %c0_0 = arith.constant 0 : index
    %c0_1 = arith.constant 0 : index
    %0 = vector.load %arg2[%c0, %c0_0, %c0_1] : memref<1x16x16xbf16, #tpu.memory_space<vmem>>, vector<1x16x16xbf16>
    %1 = vector.shape_cast %0 : vector<1x16x16xbf16> to vector<16x16xbf16>
    %c0_2 = arith.constant 0 : index
    %c0_3 = arith.constant 0 : index
    %c0_4 = arith.constant 0 : index
    %2 = vector.load %arg3[%c0_2, %c0_3, %c0_4] : memref<1x8x16xbf16, #tpu.memory_space<vmem>>, vector<1x8x16xbf16>
    %3 = vector.shape_cast %2 : vector<1x8x16xbf16> to vector<8x16xbf16>
    %c0_5 = arith.constant 0 : index
    %c0_6 = arith.constant 0 : index
    %c0_7 = arith.constant 0 : index
    %4 = vector.load %arg4[%c0_5, %c0_6, %c0_7] : memref<1x8x16xbf16, #tpu.memory_space<vmem>>, vector<1x8x16xbf16>
    %5 = vector.shape_cast %4 : vector<1x8x16xbf16> to vector<8x16xbf16>
    %cst = arith.constant dense<0.000000e+00> : vector<16x8xf32>
    %6 = tpu.matmul %1, %3, %cst {dimension_numbers = #tpu.dot_dimension_numbers<[1], [1], [0], [0], [0, 0, 1, 0], [], []>} : vector<16x16xbf16>, vector<8x16xbf16>, vector<16x8xf32> -> vector<16x8xf32>
    %cst_8 = arith.constant dense<0xFF800000> : vector<16xf32>
    %7 = vector.multi_reduction <maximumf>, %6, %cst_8 [1] : vector<16x8xf32> to vector<16xf32>
    %8 = vector.shape_cast %7 : vector<16xf32> to vector<16x1xf32>
    %9 = vector.broadcast %8 : vector<16x1xf32> to vector<16x8xf32>
    %10 = arith.subf %6, %9 : vector<16x8xf32>
    %11 = math.exp %10 : vector<16x8xf32>
    %cst_9 = arith.constant dense<0.000000e+00> : vector<16xf32>
    %12 = vector.multi_reduction <add>, %11, %cst_9 [1] : vector<16x8xf32> to vector<16xf32>
    %13 = vector.shape_cast %12 : vector<16xf32> to vector<16x1xf32>
    %14 = tpu.reciprocal %13 {approx = true} : vector<16x1xf32> -> vector<16x1xf32>
    %15 = vector.broadcast %14 : vector<16x1xf32> to vector<16x8xf32>
    %16 = arith.mulf %11, %15 : vector<16x8xf32>
    %17 = arith.truncf %16 : vector<16x8xf32> to vector<16x8xbf16>
    %cst_10 = arith.constant dense<0.000000e+00> : vector<16x16xf32>
    %18 = tpu.matmul %17, %5, %cst_10 {dimension_numbers = #tpu.dot_dimension_numbers<[1], [0], [0], [1], [0, 0, 1, 1], [], []>} : vector<16x8xbf16>, vector<8x16xbf16>, vector<16x16xf32> -> vector<16x16xf32>
    %19 = arith.truncf %18 : vector<16x16xf32> to vector<16x16xbf16>
    %c0_11 = arith.constant 0 : index
    %c0_12 = arith.constant 0 : index
    %c0_13 = arith.constant 0 : index
    %20 = vector.load %arg5[%c0_11, %c0_12, %c0_13] : memref<1x16x16xbf16, #tpu.memory_space<vmem>>, vector<1x16x16xbf16>
    %21 = vector.shape_cast %20 : vector<1x16x16xbf16> to vector<16x16xbf16>
    %22 = vector.shape_cast %19 : vector<16x16xbf16> to vector<1x16x16xbf16>
    tpu.vector_store %arg5[%c0_11, %c0_12, %c0_13], %22 {strides = array<i32>} : memref<1x16x16xbf16, #tpu.memory_space<vmem>>, vector<1x16x16xbf16>,
    return
  }
  func.func @transform_0(%arg0: i32, %arg1: i32) -> (i32, i32, i32) {
    %c0_i32 = arith.constant 0 : i32
    %c0_i32_0 = arith.constant 0 : i32
    return %arg0, %arg1, %c0_i32 : i32, i32, i32
  }
  func.func @transform_1(%arg0: i32, %arg1: i32) -> (i32, i32, i32) {
    %c0_i32 = arith.constant 0 : i32
    %c0_i32_0 = arith.constant 0 : i32
    %c0_i32_1 = arith.constant 0 : i32
    return %arg0, %c0_i32, %c0_i32_0 : i32, i32, i32
  }
  func.func @transform_2(%arg0: i32, %arg1: i32) -> (i32, i32, i32) {
    %c0_i32 = arith.constant 0 : i32
    %c0_i32_0 = arith.constant 0 : i32
    %c0_i32_1 = arith.constant 0 : i32
    return %arg0, %c0_i32, %c0_i32_0 : i32, i32, i32
  }
  func.func @transform_3(%arg0: i32, %arg1: i32) -> (i32, i32, i32) {
    %c0_i32 = arith.constant 0 : i32
    %c0_i32_0 = arith.constant 0 : i32
    return %arg0, %arg1, %c0_i32 : i32, i32, i32
  }
}

module attributes {stable_mosaic.version = 11 : i64} {
  func.func @_fused_mm_kernel(%arg0: i32, %arg1: memref<32x16xbf16, #tpu.memory_space<vmem>>, %arg2: memref<16x16xbf16, #tpu.memory_space<vmem>>, %arg3: memref<1x16xf32, #tpu.memory_space<vmem>>, %arg4: memref<32x16xbf16, #tpu.memory_space<vmem>>, %arg5: memref<32x16xf32, #tpu.memory_space<vmem>>) attributes {dimension_semantics = [#tpu.dimension_semantics<parallel>], iteration_bounds = array<i64: 1>, scalar_prefetch = 0 : i64, scratch_operands = 0 : i64, tpu.core_type = #tpu.core_type<tc>, window_params = [{transform_indices = @transform_0, window_bounds = array<i64: 32, 16>}, {pipeline_mode = #tpu.pipeline_mode<synchronous>, transform_indices = @transform_1, window_bounds = array<i64: 16, 16>}, {pipeline_mode = #tpu.pipeline_mode<synchronous>, transform_indices = @transform_2, window_bounds = array<i64: 1, 16>}, {transform_indices = @transform_3, window_bounds = array<i64: 32, 16>}, {transform_indices = @transform_4, window_bounds = array<i64: 32, 16>}]} {
    %c0 = arith.constant 0 : index
    %c0_0 = arith.constant 0 : index
    %0 = vector.load %arg1[%c0, %c0_0] : memref<32x16xbf16, #tpu.memory_space<vmem>>, vector<32x16xbf16>
    %c0_1 = arith.constant 0 : index
    %c0_2 = arith.constant 0 : index
    %1 = vector.load %arg2[%c0_1, %c0_2] : memref<16x16xbf16, #tpu.memory_space<vmem>>, vector<16x16xbf16>
    %cst = arith.constant dense<0.000000e+00> : vector<32x16xf32>
    %2 = tpu.matmul %0, %1, %cst {dimension_numbers = #tpu.dot_dimension_numbers<[1], [0], [0], [1], [0, 0, 1, 1], [], []>} : vector<32x16xbf16>, vector<16x16xbf16>, vector<32x16xf32> -> vector<32x16xf32>
    %c0_3 = arith.constant 0 : index
    %c0_4 = arith.constant 0 : index
    %3 = vector.load %arg3[%c0_3, %c0_4] : memref<1x16xf32, #tpu.memory_space<vmem>>, vector<1x16xf32>
    %4 = vector.broadcast %3 : vector<1x16xf32> to vector<32x16xf32>
    %5 = arith.addf %2, %4 : vector<32x16xf32>
    %c0_5 = arith.constant 0 : index
    %c0_6 = arith.constant 0 : index
    %6 = vector.load %arg4[%c0_5, %c0_6] : memref<32x16xbf16, #tpu.memory_space<vmem>>, vector<32x16xbf16>
    %7 = arith.extf %6 : vector<32x16xbf16> to vector<32x16xf32>
    %cst_7 = arith.constant 1.000000e+00 : f32
    %8 = vector.broadcast %cst_7 : f32 to vector<32x16xf32>
    %9 = arith.mulf %8, %7 : vector<32x16xf32>
    %10 = arith.addf %5, %9 : vector<32x16xf32>
    %c0_8 = arith.constant 0 : index
    %c0_9 = arith.constant 0 : index
    %11 = vector.load %arg5[%c0_8, %c0_9] : memref<32x16xf32, #tpu.memory_space<vmem>>, vector<32x16xf32>
    tpu.vector_store %arg5[%c0_8, %c0_9], %10 {strides = array<i32>} : memref<32x16xf32, #tpu.memory_space<vmem>>, vector<32x16xf32>,
    return
  }
  func.func @transform_0(%arg0: i32) -> (i32, i32) {
    %c0_i32 = arith.constant 0 : i32
    %c0_i32_0 = arith.constant 0 : i32
    return %arg0, %c0_i32 : i32, i32
  }
  func.func @transform_1(%arg0: i32) -> (i32, i32) {
    %c0_i32 = arith.constant 0 : i32
    %c0_i32_0 = arith.constant 0 : i32
    %c0_i32_1 = arith.constant 0 : i32
    return %c0_i32, %c0_i32_0 : i32, i32
  }
  func.func @transform_2(%arg0: i32) -> (i32, i32) {
    %c0_i32 = arith.constant 0 : i32
    %c0_i32_0 = arith.constant 0 : i32
    %c0_i32_1 = arith.constant 0 : i32
    return %c0_i32, %c0_i32_0 : i32, i32
  }
  func.func @transform_3(%arg0: i32) -> (i32, i32) {
    %c0_i32 = arith.constant 0 : i32
    %c0_i32_0 = arith.constant 0 : i32
    return %arg0, %c0_i32 : i32, i32
  }
  func.func @transform_4(%arg0: i32) -> (i32, i32) {
    %c0_i32 = arith.constant 0 : i32
    %c0_i32_0 = arith.constant 0 : i32
    return %arg0, %c0_i32 : i32, i32
  }
}

module attributes {stable_mosaic.version = 11 : i64} {
  func.func @_dual_mm_kernel(%arg0: i32, %arg1: memref<32x4xbf16, #tpu.memory_space<vmem>>, %arg2: memref<4x8xbf16, #tpu.memory_space<vmem>>, %arg3: memref<1x8xf32, #tpu.memory_space<vmem>>, %arg4: memref<32x8xbf16, #tpu.memory_space<vmem>>, %arg5: memref<8x8xbf16, #tpu.memory_space<vmem>>, %arg6: memref<32x8xbf16, #tpu.memory_space<vmem>>) attributes {dimension_semantics = [#tpu.dimension_semantics<parallel>], iteration_bounds = array<i64: 1>, scalar_prefetch = 0 : i64, scratch_operands = 0 : i64, tpu.core_type = #tpu.core_type<tc>, window_params = [{transform_indices = @transform_0, window_bounds = array<i64: 32, 4>}, {pipeline_mode = #tpu.pipeline_mode<synchronous>, transform_indices = @transform_1, window_bounds = array<i64: 4, 8>}, {pipeline_mode = #tpu.pipeline_mode<synchronous>, transform_indices = @transform_2, window_bounds = array<i64: 1, 8>}, {transform_indices = @transform_3, window_bounds = array<i64: 32, 8>}, {pipeline_mode = #tpu.pipeline_mode<synchronous>, transform_indices = @transform_4, window_bounds = array<i64: 8, 8>}, {transform_indices = @transform_5, window_bounds = array<i64: 32, 8>}]} {
    %c0 = arith.constant 0 : index
    %c0_0 = arith.constant 0 : index
    %0 = vector.load %arg1[%c0, %c0_0] : memref<32x4xbf16, #tpu.memory_space<vmem>>, vector<32x4xbf16>
    %c0_1 = arith.constant 0 : index
    %c0_2 = arith.constant 0 : index
    %1 = vector.load %arg2[%c0_1, %c0_2] : memref<4x8xbf16, #tpu.memory_space<vmem>>, vector<4x8xbf16>
    %cst = arith.constant dense<0.000000e+00> : vector<32x8xf32>
    %2 = tpu.matmul %0, %1, %cst {dimension_numbers = #tpu.dot_dimension_numbers<[1], [0], [0], [1], [0, 0, 1, 1], [], []>} : vector<32x4xbf16>, vector<4x8xbf16>, vector<32x8xf32> -> vector<32x8xf32>
    %c0_3 = arith.constant 0 : index
    %c0_4 = arith.constant 0 : index
    %3 = vector.load %arg3[%c0_3, %c0_4] : memref<1x8xf32, #tpu.memory_space<vmem>>, vector<1x8xf32>
    %4 = vector.broadcast %3 : vector<1x8xf32> to vector<32x8xf32>
    %5 = arith.addf %2, %4 : vector<32x8xf32>
    %cst_5 = arith.constant 0.000000e+00 : f32
    %6 = vector.broadcast %cst_5 : f32 to vector<32x8xf32>
    %7 = arith.subf %6, %5 : vector<32x8xf32>
    %8 = math.exp %7 : vector<32x8xf32>
    %cst_6 = arith.constant 1.000000e+00 : f32
    %9 = vector.broadcast %cst_6 : f32 to vector<32x8xf32>
    %10 = arith.addf %9, %8 : vector<32x8xf32>
    %11 = tpu.reciprocal %10 {approx = true} : vector<32x8xf32> -> vector<32x8xf32>
    %12 = arith.mulf %5, %11 : vector<32x8xf32>
    %c0_7 = arith.constant 0 : index
    %c0_8 = arith.constant 0 : index
    %13 = vector.load %arg4[%c0_7, %c0_8] : memref<32x8xbf16, #tpu.memory_space<vmem>>, vector<32x8xbf16>
    %c0_9 = arith.constant 0 : index
    %c0_10 = arith.constant 0 : index
    %14 = vector.load %arg5[%c0_9, %c0_10] : memref<8x8xbf16, #tpu.memory_space<vmem>>, vector<8x8xbf16>
    %cst_11 = arith.constant dense<0.000000e+00> : vector<32x8xf32>
    %15 = tpu.matmul %13, %14, %cst_11 {dimension_numbers = #tpu.dot_dimension_numbers<[1], [0], [0], [1], [0, 0, 1, 1], [], []>} : vector<32x8xbf16>, vector<8x8xbf16>, vector<32x8xf32> -> vector<32x8xf32>
    %16 = arith.addf %12, %15 : vector<32x8xf32>
    %17 = arith.truncf %16 : vector<32x8xf32> to vector<32x8xbf16>
    %c0_12 = arith.constant 0 : index
    %c0_13 = arith.constant 0 : index
    %18 = vector.load %arg6[%c0_12, %c0_13] : memref<32x8xbf16, #tpu.memory_space<vmem>>, vector<32x8xbf16>
    tpu.vector_store %arg6[%c0_12, %c0_13], %17 {strides = array<i32>} : memref<32x8xbf16, #tpu.memory_space<vmem>>, vector<32x8xbf16>,
    return
  }
  func.func @transform_0(%arg0: i32) -> (i32, i32) {
    %c0_i32 = arith.constant 0 : i32
    %c0_i32_0 = arith.constant 0 : i32
    return %arg0, %c0_i32 : i32, i32
  }
  func.func @transform_1(%arg0: i32) -> (i32, i32) {
    %c0_i32 = arith.constant 0 : i32
    %c0_i32_0 = arith.constant 0 : i32
    %c0_i32_1 = arith.constant 0 : i32
    return %c0_i32, %c0_i32_0 : i32, i32
  }
  func.func @transform_2(%arg0: i32) -> (i32, i32) {
    %c0_i32 = arith.constant 0 : i32
    %c0_i32_0 = arith.constant 0 : i32
    %c0_i32_1 = arith.constant 0 : i32
    return %c0_i32, %c0_i32_0 : i32, i32
  }
  func.func @transform_3(%arg0: i32) -> (i32, i32) {
    %c0_i32 = arith.constant 0 : i32
    %c0_i32_0 = arith.constant 0 : i32
    return %arg0, %c0_i32 : i32, i32
  }
  func.func @transform_4(%arg0: i32) -> (i32, i32) {
    %c0_i32 = arith.constant 0 : i32
    %c0_i32_0 = arith.constant 0 : i32
    %c0_i32_1 = arith.constant 0 : i32
    return %c0_i32, %c0_i32_0 : i32, i32
  }
  func.func @transform_5(%arg0: i32) -> (i32, i32) {
    %c0_i32 = arith.constant 0 : i32
    %c0_i32_0 = arith.constant 0 : i32
    return %arg0, %c0_i32 : i32, i32
  }
}

module attributes {stable_mosaic.version = 11 : i64} {
  func.func @_fused_mm_kernel(%arg0: i32, %arg1: memref<32x144xf32, #tpu.memory_space<vmem>>, %arg2: memref<144x4xf32, #tpu.memory_space<vmem>>, %arg3: memref<1x4xf32, #tpu.memory_space<vmem>>, %arg4: memref<32x4xf32, #tpu.memory_space<vmem>>, %arg5: memref<32x4xbf16, #tpu.memory_space<vmem>>) attributes {dimension_semantics = [#tpu.dimension_semantics<parallel>], iteration_bounds = array<i64: 1>, scalar_prefetch = 0 : i64, scratch_operands = 0 : i64, tpu.core_type = #tpu.core_type<tc>, window_params = [{transform_indices = @transform_0, window_bounds = array<i64: 32, 144>}, {pipeline_mode = #tpu.pipeline_mode<synchronous>, transform_indices = @transform_1, window_bounds = array<i64: 144, 4>}, {pipeline_mode = #tpu.pipeline_mode<synchronous>, transform_indices = @transform_2, window_bounds = array<i64: 1, 4>}, {transform_indices = @transform_3, window_bounds = array<i64: 32, 4>}, {transform_indices = @transform_4, window_bounds = array<i64: 32, 4>}]} {
    %c0 = arith.constant 0 : index
    %c0_0 = arith.constant 0 : index
    %0 = vector.load %arg1[%c0, %c0_0] : memref<32x144xf32, #tpu.memory_space<vmem>>, vector<32x144xf32>
    %c0_1 = arith.constant 0 : index
    %c0_2 = arith.constant 0 : index
    %1 = vector.load %arg2[%c0_1, %c0_2] : memref<144x4xf32, #tpu.memory_space<vmem>>, vector<144x4xf32>
    %cst = arith.constant dense<0.000000e+00> : vector<32x4xf32>
    %2 = tpu.matmul %0, %1, %cst {dimension_numbers = #tpu.dot_dimension_numbers<[1], [0], [0], [1], [0, 0, 1, 1], [], []>} : vector<32x144xf32>, vector<144x4xf32>, vector<32x4xf32> -> vector<32x4xf32>
    %c0_3 = arith.constant 0 : index
    %c0_4 = arith.constant 0 : index
    %3 = vector.load %arg3[%c0_3, %c0_4] : memref<1x4xf32, #tpu.memory_space<vmem>>, vector<1x4xf32>
    %4 = vector.broadcast %3 : vector<1x4xf32> to vector<32x4xf32>
    %5 = arith.addf %2, %4 : vector<32x4xf32>
    %cst_5 = arith.constant -79.8911895 : f32
    %6 = vector.broadcast %cst_5 : f32 to vector<32x4xf32>
    %7 = arith.mulf %5, %6 : vector<32x4xf32>
    %c0_6 = arith.constant 0 : index
    %c0_7 = arith.constant 0 : index
    %8 = vector.load %arg4[%c0_6, %c0_7] : memref<32x4xf32, #tpu.memory_space<vmem>>, vector<32x4xf32>
    %cst_8 = arith.constant 8.007960e+01 : f32
    %9 = vector.broadcast %cst_8 : f32 to vector<32x4xf32>
    %10 = arith.mulf %9, %8 : vector<32x4xf32>
    %11 = arith.addf %7, %10 : vector<32x4xf32>
    %12 = arith.truncf %11 : vector<32x4xf32> to vector<32x4xbf16>
    %c0_9 = arith.constant 0 : index
    %c0_10 = arith.constant 0 : index
    %13 = vector.load %arg5[%c0_9, %c0_10] : memref<32x4xbf16, #tpu.memory_space<vmem>>, vector<32x4xbf16>
    tpu.vector_store %arg5[%c0_9, %c0_10], %12 {strides = array<i32>} : memref<32x4xbf16, #tpu.memory_space<vmem>>, vector<32x4xbf16>,
    return
  }
  func.func @transform_0(%arg0: i32) -> (i32, i32) {
    %c0_i32 = arith.constant 0 : i32
    %c0_i32_0 = arith.constant 0 : i32
    return %arg0, %c0_i32 : i32, i32
  }
  func.func @transform_1(%arg0: i32) -> (i32, i32) {
    %c0_i32 = arith.constant 0 : i32
    %c0_i32_0 = arith.constant 0 : i32
    %c0_i32_1 = arith.constant 0 : i32
    return %c0_i32, %c0_i32_0 : i32, i32
  }
  func.func @transform_2(%arg0: i32) -> (i32, i32) {
    %c0_i32 = arith.constant 0 : i32
    %c0_i32_0 = arith.constant 0 : i32
    %c0_i32_1 = arith.constant 0 : i32
    return %c0_i32, %c0_i32_0 : i32, i32
  }
  func.func @transform_3(%arg0: i32) -> (i32, i32) {
    %c0_i32 = arith.constant 0 : i32
    %c0_i32_0 = arith.constant 0 : i32
    return %arg0, %c0_i32 : i32, i32
  }
  func.func @transform_4(%arg0: i32) -> (i32, i32) {
    %c0_i32 = arith.constant 0 : i32
    %c0_i32_0 = arith.constant 0 : i32
    return %arg0, %c0_i32 : i32, i32
  }
}

module attributes {stable_mosaic.version = 11 : i64} {
  func.func @_conv_kernel(%arg0: i32, %arg1: i32, %arg2: memref<1x10x10x8xbf16, #tpu.memory_space<vmem>>, %arg3: memref<9x8x32xbf16, #tpu.memory_space<vmem>>, %arg4: memref<1x32xf32, #tpu.memory_space<vmem>>, %arg5: memref<1x8x8x32xbf16, #tpu.memory_space<vmem>>) attributes {dimension_semantics = [#tpu.dimension_semantics<parallel>, #tpu.dimension_semantics<parallel>], iteration_bounds = array<i64: 2, 1>, scalar_prefetch = 0 : i64, scratch_operands = 0 : i64, tpu.core_type = #tpu.core_type<tc>, window_params = [{transform_indices = @transform_0, window_bounds = array<i64: 1, 10, 10, 8>}, {pipeline_mode = #tpu.pipeline_mode<synchronous>, transform_indices = @transform_1, window_bounds = array<i64: 9, 8, 32>}, {pipeline_mode = #tpu.pipeline_mode<synchronous>, transform_indices = @transform_2, window_bounds = array<i64: 1, 32>}, {transform_indices = @transform_3, window_bounds = array<i64: 1, 8, 8, 32>}]} {
    %c8_i32 = arith.constant 8 : i32
    %0 = arith.muli %arg1, %c8_i32 : i32
    %1 = tpu.assume_multiple %0, 8 : i32
    %c0 = arith.constant 0 : index
    %2 = arith.index_cast %1 : i32 to index
    %c0_0 = arith.constant 0 : index
    %c0_1 = arith.constant 0 : index
    %3 = vector.load %arg2[%c0, %2, %c0_0, %c0_1] : memref<1x10x10x8xbf16, #tpu.memory_space<vmem>>, vector<1x10x10x8xbf16>
    %4 = vector.shape_cast %3 : vector<1x10x10x8xbf16> to vector<10x10x8xbf16>
    %5 = arith.extf %4 : vector<10x10x8xbf16> to vector<10x10x8xf32>
    %6 = vector.extract_strided_slice %5 {offsets = [0, 0, 0], sizes = [8, 8, 8], strides = [1, 1, 1]} : vector<10x10x8xf32> to vector<8x8x8xf32>
    %7 = vector.shape_cast %6 : vector<8x8x8xf32> to vector<64x8xf32>
    %8 = arith.truncf %7 : vector<64x8xf32> to vector<64x8xbf16>
    %c0_2 = arith.constant 0 : index
    %c0_3 = arith.constant 0 : index
    %c0_4 = arith.constant 0 : index
    %9 = vector.load %arg3[%c0_2, %c0_3, %c0_4] : memref<9x8x32xbf16, #tpu.memory_space<vmem>>, vector<1x8x32xbf16>
    %10 = vector.shape_cast %9 : vector<1x8x32xbf16> to vector<8x32xbf16>
    %cst = arith.constant dense<0.000000e+00> : vector<64x32xf32>
    %11 = tpu.matmul %8, %10, %cst {dimension_numbers = #tpu.dot_dimension_numbers<[1], [0], [0], [1], [0, 0, 1, 1], [], []>} : vector<64x8xbf16>, vector<8x32xbf16>, vector<64x32xf32> -> vector<64x32xf32>
    %12 = vector.extract_strided_slice %5 {offsets = [0, 1, 0], sizes = [8, 8, 8], strides = [1, 1, 1]} : vector<10x10x8xf32> to vector<8x8x8xf32>
    %13 = vector.shape_cast %12 : vector<8x8x8xf32> to vector<64x8xf32>
    %14 = arith.truncf %13 : vector<64x8xf32> to vector<64x8xbf16>
    %c1 = arith.constant 1 : index
    %c0_5 = arith.constant 0 : index
    %c0_6 = arith.constant 0 : index
    %15 = vector.load %arg3[%c1, %c0_5, %c0_6] : memref<9x8x32xbf16, #tpu.memory_space<vmem>>, vector<1x8x32xbf16>
    %16 = vector.shape_cast %15 : vector<1x8x32xbf16> to vector<8x32xbf16>
    %cst_7 = arith.constant dense<0.000000e+00> : vector<64x32xf32>
    %17 = tpu.matmul %14, %16, %cst_7 {dimension_numbers = #tpu.dot_dimension_numbers<[1], [0], [0], [1], [0, 0, 1, 1], [], []>} : vector<64x8xbf16>, vector<8x32xbf16>, vector<64x32xf32> -> vector<64x32xf32>
    %18 = arith.addf %11, %17 : vector<64x32xf32>
    %19 = vector.extract_strided_slice %5 {offsets = [0, 2, 0], sizes = [8, 8, 8], strides = [1, 1, 1]} : vector<10x10x8xf32> to vector<8x8x8xf32>
    %20 = vector.shape_cast %19 : vector<8x8x8xf32> to vector<64x8xf32>
    %21 = arith.truncf %20 : vector<64x8xf32> to vector<64x8xbf16>
    %c2 = arith.constant 2 : index
    %c0_8 = arith.constant 0 : index
    %c0_9 = arith.constant 0 : index
    %22 = vector.load %arg3[%c2, %c0_8, %c0_9] : memref<9x8x32xbf16, #tpu.memory_space<vmem>>, vector<1x8x32xbf16>
    %23 = vector.shape_cast %22 : vector<1x8x32xbf16> to vector<8x32xbf16>
    %cst_10 = arith.constant dense<0.000000e+00> : vector<64x32xf32>
    %24 = tpu.matmul %21, %23, %cst_10 {dimension_numbers = #tpu.dot_dimension_numbers<[1], [0], [0], [1], [0, 0, 1, 1], [], []>} : vector<64x8xbf16>, vector<8x32xbf16>, vector<64x32xf32> -> vector<64x32xf32>
    %25 = arith.addf %18, %24 : vector<64x32xf32>
    %26 = vector.extract_strided_slice %5 {offsets = [1, 0, 0], sizes = [8, 8, 8], strides = [1, 1, 1]} : vector<10x10x8xf32> to vector<8x8x8xf32>
    %27 = vector.shape_cast %26 : vector<8x8x8xf32> to vector<64x8xf32>
    %28 = arith.truncf %27 : vector<64x8xf32> to vector<64x8xbf16>
    %c3 = arith.constant 3 : index
    %c0_11 = arith.constant 0 : index
    %c0_12 = arith.constant 0 : index
    %29 = vector.load %arg3[%c3, %c0_11, %c0_12] : memref<9x8x32xbf16, #tpu.memory_space<vmem>>, vector<1x8x32xbf16>
    %30 = vector.shape_cast %29 : vector<1x8x32xbf16> to vector<8x32xbf16>
    %cst_13 = arith.constant dense<0.000000e+00> : vector<64x32xf32>
    %31 = tpu.matmul %28, %30, %cst_13 {dimension_numbers = #tpu.dot_dimension_numbers<[1], [0], [0], [1], [0, 0, 1, 1], [], []>} : vector<64x8xbf16>, vector<8x32xbf16>, vector<64x32xf32> -> vector<64x32xf32>
    %32 = arith.addf %25, %31 : vector<64x32xf32>
    %33 = vector.extract_strided_slice %5 {offsets = [1, 1, 0], sizes = [8, 8, 8], strides = [1, 1, 1]} : vector<10x10x8xf32> to vector<8x8x8xf32>
    %34 = vector.shape_cast %33 : vector<8x8x8xf32> to vector<64x8xf32>
    %35 = arith.truncf %34 : vector<64x8xf32> to vector<64x8xbf16>
    %c4 = arith.constant 4 : index
    %c0_14 = arith.constant 0 : index
    %c0_15 = arith.constant 0 : index
    %36 = vector.load %arg3[%c4, %c0_14, %c0_15] : memref<9x8x32xbf16, #tpu.memory_space<vmem>>, vector<1x8x32xbf16>
    %37 = vector.shape_cast %36 : vector<1x8x32xbf16> to vector<8x32xbf16>
    %cst_16 = arith.constant dense<0.000000e+00> : vector<64x32xf32>
    %38 = tpu.matmul %35, %37, %cst_16 {dimension_numbers = #tpu.dot_dimension_numbers<[1], [0], [0], [1], [0, 0, 1, 1], [], []>} : vector<64x8xbf16>, vector<8x32xbf16>, vector<64x32xf32> -> vector<64x32xf32>
    %39 = arith.addf %32, %38 : vector<64x32xf32>
    %40 = vector.extract_strided_slice %5 {offsets = [1, 2, 0], sizes = [8, 8, 8], strides = [1, 1, 1]} : vector<10x10x8xf32> to vector<8x8x8xf32>
    %41 = vector.shape_cast %40 : vector<8x8x8xf32> to vector<64x8xf32>
    %42 = arith.truncf %41 : vector<64x8xf32> to vector<64x8xbf16>
    %c5 = arith.constant 5 : index
    %c0_17 = arith.constant 0 : index
    %c0_18 = arith.constant 0 : index
    %43 = vector.load %arg3[%c5, %c0_17, %c0_18] : memref<9x8x32xbf16, #tpu.memory_space<vmem>>, vector<1x8x32xbf16>
    %44 = vector.shape_cast %43 : vector<1x8x32xbf16> to vector<8x32xbf16>
    %cst_19 = arith.constant dense<0.000000e+00> : vector<64x32xf32>
    %45 = tpu.matmul %42, %44, %cst_19 {dimension_numbers = #tpu.dot_dimension_numbers<[1], [0], [0], [1], [0, 0, 1, 1], [], []>} : vector<64x8xbf16>, vector<8x32xbf16>, vector<64x32xf32> -> vector<64x32xf32>
    %46 = arith.addf %39, %45 : vector<64x32xf32>
    %47 = vector.extract_strided_slice %5 {offsets = [2, 0, 0], sizes = [8, 8, 8], strides = [1, 1, 1]} : vector<10x10x8xf32> to vector<8x8x8xf32>
    %48 = vector.shape_cast %47 : vector<8x8x8xf32> to vector<64x8xf32>
    %49 = arith.truncf %48 : vector<64x8xf32> to vector<64x8xbf16>
    %c6 = arith.constant 6 : index
    %c0_20 = arith.constant 0 : index
    %c0_21 = arith.constant 0 : index
    %50 = vector.load %arg3[%c6, %c0_20, %c0_21] : memref<9x8x32xbf16, #tpu.memory_space<vmem>>, vector<1x8x32xbf16>
    %51 = vector.shape_cast %50 : vector<1x8x32xbf16> to vector<8x32xbf16>
    %cst_22 = arith.constant dense<0.000000e+00> : vector<64x32xf32>
    %52 = tpu.matmul %49, %51, %cst_22 {dimension_numbers = #tpu.dot_dimension_numbers<[1], [0], [0], [1], [0, 0, 1, 1], [], []>} : vector<64x8xbf16>, vector<8x32xbf16>, vector<64x32xf32> -> vector<64x32xf32>
    %53 = arith.addf %46, %52 : vector<64x32xf32>
    %54 = vector.extract_strided_slice %5 {offsets = [2, 1, 0], sizes = [8, 8, 8], strides = [1, 1, 1]} : vector<10x10x8xf32> to vector<8x8x8xf32>
    %55 = vector.shape_cast %54 : vector<8x8x8xf32> to vector<64x8xf32>
    %56 = arith.truncf %55 : vector<64x8xf32> to vector<64x8xbf16>
    %c7 = arith.constant 7 : index
    %c0_23 = arith.constant 0 : index
    %c0_24 = arith.constant 0 : index
    %57 = vector.load %arg3[%c7, %c0_23, %c0_24] : memref<9x8x32xbf16, #tpu.memory_space<vmem>>, vector<1x8x32xbf16>
    %58 = vector.shape_cast %57 : vector<1x8x32xbf16> to vector<8x32xbf16>
    %cst_25 = arith.constant dense<0.000000e+00> : vector<64x32xf32>
    %59 = tpu.matmul %56, %58, %cst_25 {dimension_numbers = #tpu.dot_dimension_numbers<[1], [0], [0], [1], [0, 0, 1, 1], [], []>} : vector<64x8xbf16>, vector<8x32xbf16>, vector<64x32xf32> -> vector<64x32xf32>
    %60 = arith.addf %53, %59 : vector<64x32xf32>
    %61 = vector.extract_strided_slice %5 {offsets = [2, 2, 0], sizes = [8, 8, 8], strides = [1, 1, 1]} : vector<10x10x8xf32> to vector<8x8x8xf32>
    %62 = vector.shape_cast %61 : vector<8x8x8xf32> to vector<64x8xf32>
    %63 = arith.truncf %62 : vector<64x8xf32> to vector<64x8xbf16>
    %c8 = arith.constant 8 : index
    %c0_26 = arith.constant 0 : index
    %c0_27 = arith.constant 0 : index
    %64 = vector.load %arg3[%c8, %c0_26, %c0_27] : memref<9x8x32xbf16, #tpu.memory_space<vmem>>, vector<1x8x32xbf16>
    %65 = vector.shape_cast %64 : vector<1x8x32xbf16> to vector<8x32xbf16>
    %cst_28 = arith.constant dense<0.000000e+00> : vector<64x32xf32>
    %66 = tpu.matmul %63, %65, %cst_28 {dimension_numbers = #tpu.dot_dimension_numbers<[1], [0], [0], [1], [0, 0, 1, 1], [], []>} : vector<64x8xbf16>, vector<8x32xbf16>, vector<64x32xf32> -> vector<64x32xf32>
    %67 = arith.addf %60, %66 : vector<64x32xf32>
    %c0_29 = arith.constant 0 : index
    %c0_30 = arith.constant 0 : index
    %68 = vector.load %arg4[%c0_29, %c0_30] : memref<1x32xf32, #tpu.memory_space<vmem>>, vector<1x32xf32>
    %69 = vector.broadcast %68 : vector<1x32xf32> to vector<64x32xf32>
    %70 = arith.addf %67, %69 : vector<64x32xf32>
    %cst_31 = arith.constant 0.000000e+00 : f32
    %71 = vector.broadcast %cst_31 : f32 to vector<64x32xf32>
    %72 = arith.subf %71, %70 : vector<64x32xf32>
    %73 = math.exp %72 : vector<64x32xf32>
    %cst_32 = arith.constant 1.000000e+00 : f32
    %74 = vector.broadcast %cst_32 : f32 to vector<64x32xf32>
    %75 = arith.addf %74, %73 : vector<64x32xf32>
    %76 = tpu.reciprocal %75 {approx = true} : vector<64x32xf32> -> vector<64x32xf32>
    %77 = arith.mulf %70, %76 : vector<64x32xf32>
    %78 = vector.shape_cast %77 : vector<64x32xf32> to vector<8x8x32xf32>
    %79 = arith.truncf %78 : vector<8x8x32xf32> to vector<8x8x32xbf16>
    %c0_33 = arith.constant 0 : index
    %c0_34 = arith.constant 0 : index
    %c0_35 = arith.constant 0 : index
    %c0_36 = arith.constant 0 : index
    %80 = vector.load %arg5[%c0_33, %c0_34, %c0_35, %c0_36] : memref<1x8x8x32xbf16, #tpu.memory_space<vmem>>, vector<1x8x8x32xbf16>
    %81 = vector.shape_cast %80 : vector<1x8x8x32xbf16> to vector<8x8x32xbf16>
    %82 = vector.shape_cast %79 : vector<8x8x32xbf16> to vector<1x8x8x32xbf16>
    tpu.vector_store %arg5[%c0_33, %c0_34, %c0_35, %c0_36], %82 {strides = array<i32>} : memref<1x8x8x32xbf16, #tpu.memory_space<vmem>>, vector<1x8x8x32xbf16>,
    return
  }
  func.func @transform_0(%arg0: i32, %arg1: i32) -> (i32, i32, i32, i32) {
    %c0_i32 = arith.constant 0 : i32
    %c0_i32_0 = arith.constant 0 : i32
    %c0_i32_1 = arith.constant 0 : i32
    %c0_i32_2 = arith.constant 0 : i32
    return %arg0, %c0_i32, %c0_i32_0, %c0_i32_1 : i32, i32, i32, i32
  }
  func.func @transform_1(%arg0: i32, %arg1: i32) -> (i32, i32, i32) {
    %c0_i32 = arith.constant 0 : i32
    %c0_i32_0 = arith.constant 0 : i32
    %c0_i32_1 = arith.constant 0 : i32
    %c0_i32_2 = arith.constant 0 : i32
    return %c0_i32, %c0_i32_0, %c0_i32_1 : i32, i32, i32
  }
  func.func @transform_2(%arg0: i32, %arg1: i32) -> (i32, i32) {
    %c0_i32 = arith.constant 0 : i32
    %c0_i32_0 = arith.constant 0 : i32
    %c0_i32_1 = arith.constant 0 : i32
    return %c0_i32, %c0_i32_0 : i32, i32
  }
  func.func @transform_3(%arg0: i32, %arg1: i32) -> (i32, i32, i32, i32) {
    %c0_i32 = arith.constant 0 : i32
    %c0_i32_0 = arith.constant 0 : i32
    %c0_i32_1 = arith.constant 0 : i32
    return %arg0, %arg1, %c0_i32, %c0_i32_0 : i32, i32, i32, i32
  }
}

module attributes {stable_mosaic.version = 11 : i64} {
  func.func @_dual_mm_kernel(%arg0: i32, %arg1: memref<32x72xbf16, #tpu.memory_space<vmem>>, %arg2: memref<72x32xbf16, #tpu.memory_space<vmem>>, %arg3: memref<1x32xf32, #tpu.memory_space<vmem>>, %arg4: memref<32x32xbf16, #tpu.memory_space<vmem>>, %arg5: memref<32x32xbf16, #tpu.memory_space<vmem>>, %arg6: memref<32x32xbf16, #tpu.memory_space<vmem>>) attributes {dimension_semantics = [#tpu.dimension_semantics<parallel>], iteration_bounds = array<i64: 1>, scalar_prefetch = 0 : i64, scratch_operands = 0 : i64, tpu.core_type = #tpu.core_type<tc>, window_params = [{transform_indices = @transform_0, window_bounds = array<i64: 32, 72>}, {pipeline_mode = #tpu.pipeline_mode<synchronous>, transform_indices = @transform_1, window_bounds = array<i64: 72, 32>}, {pipeline_mode = #tpu.pipeline_mode<synchronous>, transform_indices = @transform_2, window_bounds = array<i64: 1, 32>}, {transform_indices = @transform_3, window_bounds = array<i64: 32, 32>}, {pipeline_mode = #tpu.pipeline_mode<synchronous>, transform_indices = @transform_4, window_bounds = array<i64: 32, 32>}, {transform_indices = @transform_5, window_bounds = array<i64: 32, 32>}]} {
    %c0 = arith.constant 0 : index
    %c0_0 = arith.constant 0 : index
    %0 = vector.load %arg1[%c0, %c0_0] : memref<32x72xbf16, #tpu.memory_space<vmem>>, vector<32x72xbf16>
    %c0_1 = arith.constant 0 : index
    %c0_2 = arith.constant 0 : index
    %1 = vector.load %arg2[%c0_1, %c0_2] : memref<72x32xbf16, #tpu.memory_space<vmem>>, vector<72x32xbf16>
    %cst = arith.constant dense<0.000000e+00> : vector<32x32xf32>
    %2 = tpu.matmul %0, %1, %cst {dimension_numbers = #tpu.dot_dimension_numbers<[1], [0], [0], [1], [0, 0, 1, 1], [], []>} : vector<32x72xbf16>, vector<72x32xbf16>, vector<32x32xf32> -> vector<32x32xf32>
    %c0_3 = arith.constant 0 : index
    %c0_4 = arith.constant 0 : index
    %3 = vector.load %arg3[%c0_3, %c0_4] : memref<1x32xf32, #tpu.memory_space<vmem>>, vector<1x32xf32>
    %4 = vector.broadcast %3 : vector<1x32xf32> to vector<32x32xf32>
    %5 = arith.addf %2, %4 : vector<32x32xf32>
    %cst_5 = arith.constant 0.000000e+00 : f32
    %6 = vector.broadcast %cst_5 : f32 to vector<32x32xf32>
    %7 = arith.subf %6, %5 : vector<32x32xf32>
    %8 = math.exp %7 : vector<32x32xf32>
    %cst_6 = arith.constant 1.000000e+00 : f32
    %9 = vector.broadcast %cst_6 : f32 to vector<32x32xf32>
    %10 = arith.addf %9, %8 : vector<32x32xf32>
    %11 = tpu.reciprocal %10 {approx = true} : vector<32x32xf32> -> vector<32x32xf32>
    %12 = arith.mulf %5, %11 : vector<32x32xf32>
    %c0_7 = arith.constant 0 : index
    %c0_8 = arith.constant 0 : index
    %13 = vector.load %arg4[%c0_7, %c0_8] : memref<32x32xbf16, #tpu.memory_space<vmem>>, vector<32x32xbf16>
    %c0_9 = arith.constant 0 : index
    %c0_10 = arith.constant 0 : index
    %14 = vector.load %arg5[%c0_9, %c0_10] : memref<32x32xbf16, #tpu.memory_space<vmem>>, vector<32x32xbf16>
    %cst_11 = arith.constant dense<0.000000e+00> : vector<32x32xf32>
    %15 = tpu.matmul %13, %14, %cst_11 {dimension_numbers = #tpu.dot_dimension_numbers<[1], [0], [0], [1], [0, 0, 1, 1], [], []>} : vector<32x32xbf16>, vector<32x32xbf16>, vector<32x32xf32> -> vector<32x32xf32>
    %16 = arith.addf %12, %15 : vector<32x32xf32>
    %17 = arith.truncf %16 : vector<32x32xf32> to vector<32x32xbf16>
    %c0_12 = arith.constant 0 : index
    %c0_13 = arith.constant 0 : index
    %18 = vector.load %arg6[%c0_12, %c0_13] : memref<32x32xbf16, #tpu.memory_space<vmem>>, vector<32x32xbf16>
    tpu.vector_store %arg6[%c0_12, %c0_13], %17 {strides = array<i32>} : memref<32x32xbf16, #tpu.memory_space<vmem>>, vector<32x32xbf16>,
    return
  }
  func.func @transform_0(%arg0: i32) -> (i32, i32) {
    %c0_i32 = arith.constant 0 : i32
    %c0_i32_0 = arith.constant 0 : i32
    return %arg0, %c0_i32 : i32, i32
  }
  func.func @transform_1(%arg0: i32) -> (i32, i32) {
    %c0_i32 = arith.constant 0 : i32
    %c0_i32_0 = arith.constant 0 : i32
    %c0_i32_1 = arith.constant 0 : i32
    return %c0_i32, %c0_i32_0 : i32, i32
  }
  func.func @transform_2(%arg0: i32) -> (i32, i32) {
    %c0_i32 = arith.constant 0 : i32
    %c0_i32_0 = arith.constant 0 : i32
    %c0_i32_1 = arith.constant 0 : i32
    return %c0_i32, %c0_i32_0 : i32, i32
  }
  func.func @transform_3(%arg0: i32) -> (i32, i32) {
    %c0_i32 = arith.constant 0 : i32
    %c0_i32_0 = arith.constant 0 : i32
    return %arg0, %c0_i32 : i32, i32
  }
  func.func @transform_4(%arg0: i32) -> (i32, i32) {
    %c0_i32 = arith.constant 0 : i32
    %c0_i32_0 = arith.constant 0 : i32
    %c0_i32_1 = arith.constant 0 : i32
    return %c0_i32, %c0_i32_0 : i32, i32
  }
  func.func @transform_5(%arg0: i32) -> (i32, i32) {
    %c0_i32 = arith.constant 0 : i32
    %c0_i32_0 = arith.constant 0 : i32
    return %arg0, %c0_i32 : i32, i32
  }
}

module attributes {stable_mosaic.version = 11 : i64} {
  func.func @_conv_kernel(%arg0: i32, %arg1: i32, %arg2: memref<1x18x18x8xbf16, #tpu.memory_space<vmem>>, %arg3: memref<9x8x3xbf16, #tpu.memory_space<vmem>>, %arg4: memref<1x3xf32, #tpu.memory_space<vmem>>, %arg5: memref<1x8x16x3xf32, #tpu.memory_space<vmem>>) attributes {dimension_semantics = [#tpu.dimension_semantics<parallel>, #tpu.dimension_semantics<parallel>], iteration_bounds = array<i64: 2, 2>, scalar_prefetch = 0 : i64, scratch_operands = 0 : i64, tpu.core_type = #tpu.core_type<tc>, window_params = [{transform_indices = @transform_0, window_bounds = array<i64: 1, 18, 18, 8>}, {pipeline_mode = #tpu.pipeline_mode<synchronous>, transform_indices = @transform_1, window_bounds = array<i64: 9, 8, 3>}, {pipeline_mode = #tpu.pipeline_mode<synchronous>, transform_indices = @transform_2, window_bounds = array<i64: 1, 3>}, {transform_indices = @transform_3, window_bounds = array<i64: 1, 8, 16, 3>}]} {
    %c8_i32 = arith.constant 8 : i32
    %0 = arith.muli %arg1, %c8_i32 : i32
    %1 = tpu.assume_multiple %0, 8 : i32
    %c0 = arith.constant 0 : index
    %2 = arith.index_cast %1 : i32 to index
    %c0_0 = arith.constant 0 : index
    %c0_1 = arith.constant 0 : index
    %3 = vector.load %arg2[%c0, %2, %c0_0, %c0_1] : memref<1x18x18x8xbf16, #tpu.memory_space<vmem>>, vector<1x10x18x8xbf16>
    %4 = vector.shape_cast %3 : vector<1x10x18x8xbf16> to vector<10x18x8xbf16>
    %5 = arith.extf %4 : vector<10x18x8xbf16> to vector<10x18x8xf32>
    %6 = vector.extract_strided_slice %5 {offsets = [0, 0, 0], sizes = [8, 16, 8], strides = [1, 1, 1]} : vector<10x18x8xf32> to vector<8x16x8xf32>
    %7 = vector.shape_cast %6 : vector<8x16x8xf32> to vector<128x8xf32>
    %8 = arith.truncf %7 : vector<128x8xf32> to vector<128x8xbf16>
    %c0_2 = arith.constant 0 : index
    %c0_3 = arith.constant 0 : index
    %c0_4 = arith.constant 0 : index
    %9 = vector.load %arg3[%c0_2, %c0_3, %c0_4] : memref<9x8x3xbf16, #tpu.memory_space<vmem>>, vector<1x8x3xbf16>
    %10 = vector.shape_cast %9 : vector<1x8x3xbf16> to vector<8x3xbf16>
    %cst = arith.constant dense<0.000000e+00> : vector<128x3xf32>
    %11 = tpu.matmul %8, %10, %cst {dimension_numbers = #tpu.dot_dimension_numbers<[1], [0], [0], [1], [0, 0, 1, 1], [], []>} : vector<128x8xbf16>, vector<8x3xbf16>, vector<128x3xf32> -> vector<128x3xf32>
    %12 = vector.extract_strided_slice %5 {offsets = [0, 1, 0], sizes = [8, 16, 8], strides = [1, 1, 1]} : vector<10x18x8xf32> to vector<8x16x8xf32>
    %13 = vector.shape_cast %12 : vector<8x16x8xf32> to vector<128x8xf32>
    %14 = arith.truncf %13 : vector<128x8xf32> to vector<128x8xbf16>
    %c1 = arith.constant 1 : index
    %c0_5 = arith.constant 0 : index
    %c0_6 = arith.constant 0 : index
    %15 = vector.load %arg3[%c1, %c0_5, %c0_6] : memref<9x8x3xbf16, #tpu.memory_space<vmem>>, vector<1x8x3xbf16>
    %16 = vector.shape_cast %15 : vector<1x8x3xbf16> to vector<8x3xbf16>
    %cst_7 = arith.constant dense<0.000000e+00> : vector<128x3xf32>
    %17 = tpu.matmul %14, %16, %cst_7 {dimension_numbers = #tpu.dot_dimension_numbers<[1], [0], [0], [1], [0, 0, 1, 1], [], []>} : vector<128x8xbf16>, vector<8x3xbf16>, vector<128x3xf32> -> vector<128x3xf32>
    %18 = arith.addf %11, %17 : vector<128x3xf32>
    %19 = vector.extract_strided_slice %5 {offsets = [0, 2, 0], sizes = [8, 16, 8], strides = [1, 1, 1]} : vector<10x18x8xf32> to vector<8x16x8xf32>
    %20 = vector.shape_cast %19 : vector<8x16x8xf32> to vector<128x8xf32>
    %21 = arith.truncf %20 : vector<128x8xf32> to vector<128x8xbf16>
    %c2 = arith.constant 2 : index
    %c0_8 = arith.constant 0 : index
    %c0_9 = arith.constant 0 : index
    %22 = vector.load %arg3[%c2, %c0_8, %c0_9] : memref<9x8x3xbf16, #tpu.memory_space<vmem>>, vector<1x8x3xbf16>
    %23 = vector.shape_cast %22 : vector<1x8x3xbf16> to vector<8x3xbf16>
    %cst_10 = arith.constant dense<0.000000e+00> : vector<128x3xf32>
    %24 = tpu.matmul %21, %23, %cst_10 {dimension_numbers = #tpu.dot_dimension_numbers<[1], [0], [0], [1], [0, 0, 1, 1], [], []>} : vector<128x8xbf16>, vector<8x3xbf16>, vector<128x3xf32> -> vector<128x3xf32>
    %25 = arith.addf %18, %24 : vector<128x3xf32>
    %26 = vector.extract_strided_slice %5 {offsets = [1, 0, 0], sizes = [8, 16, 8], strides = [1, 1, 1]} : vector<10x18x8xf32> to vector<8x16x8xf32>
    %27 = vector.shape_cast %26 : vector<8x16x8xf32> to vector<128x8xf32>
    %28 = arith.truncf %27 : vector<128x8xf32> to vector<128x8xbf16>
    %c3 = arith.constant 3 : index
    %c0_11 = arith.constant 0 : index
    %c0_12 = arith.constant 0 : index
    %29 = vector.load %arg3[%c3, %c0_11, %c0_12] : memref<9x8x3xbf16, #tpu.memory_space<vmem>>, vector<1x8x3xbf16>
    %30 = vector.shape_cast %29 : vector<1x8x3xbf16> to vector<8x3xbf16>
    %cst_13 = arith.constant dense<0.000000e+00> : vector<128x3xf32>
    %31 = tpu.matmul %28, %30, %cst_13 {dimension_numbers = #tpu.dot_dimension_numbers<[1], [0], [0], [1], [0, 0, 1, 1], [], []>} : vector<128x8xbf16>, vector<8x3xbf16>, vector<128x3xf32> -> vector<128x3xf32>
    %32 = arith.addf %25, %31 : vector<128x3xf32>
    %33 = vector.extract_strided_slice %5 {offsets = [1, 1, 0], sizes = [8, 16, 8], strides = [1, 1, 1]} : vector<10x18x8xf32> to vector<8x16x8xf32>
    %34 = vector.shape_cast %33 : vector<8x16x8xf32> to vector<128x8xf32>
    %35 = arith.truncf %34 : vector<128x8xf32> to vector<128x8xbf16>
    %c4 = arith.constant 4 : index
    %c0_14 = arith.constant 0 : index
    %c0_15 = arith.constant 0 : index
    %36 = vector.load %arg3[%c4, %c0_14, %c0_15] : memref<9x8x3xbf16, #tpu.memory_space<vmem>>, vector<1x8x3xbf16>
    %37 = vector.shape_cast %36 : vector<1x8x3xbf16> to vector<8x3xbf16>
    %cst_16 = arith.constant dense<0.000000e+00> : vector<128x3xf32>
    %38 = tpu.matmul %35, %37, %cst_16 {dimension_numbers = #tpu.dot_dimension_numbers<[1], [0], [0], [1], [0, 0, 1, 1], [], []>} : vector<128x8xbf16>, vector<8x3xbf16>, vector<128x3xf32> -> vector<128x3xf32>
    %39 = arith.addf %32, %38 : vector<128x3xf32>
    %40 = vector.extract_strided_slice %5 {offsets = [1, 2, 0], sizes = [8, 16, 8], strides = [1, 1, 1]} : vector<10x18x8xf32> to vector<8x16x8xf32>
    %41 = vector.shape_cast %40 : vector<8x16x8xf32> to vector<128x8xf32>
    %42 = arith.truncf %41 : vector<128x8xf32> to vector<128x8xbf16>
    %c5 = arith.constant 5 : index
    %c0_17 = arith.constant 0 : index
    %c0_18 = arith.constant 0 : index
    %43 = vector.load %arg3[%c5, %c0_17, %c0_18] : memref<9x8x3xbf16, #tpu.memory_space<vmem>>, vector<1x8x3xbf16>
    %44 = vector.shape_cast %43 : vector<1x8x3xbf16> to vector<8x3xbf16>
    %cst_19 = arith.constant dense<0.000000e+00> : vector<128x3xf32>
    %45 = tpu.matmul %42, %44, %cst_19 {dimension_numbers = #tpu.dot_dimension_numbers<[1], [0], [0], [1], [0, 0, 1, 1], [], []>} : vector<128x8xbf16>, vector<8x3xbf16>, vector<128x3xf32> -> vector<128x3xf32>
    %46 = arith.addf %39, %45 : vector<128x3xf32>
    %47 = vector.extract_strided_slice %5 {offsets = [2, 0, 0], sizes = [8, 16, 8], strides = [1, 1, 1]} : vector<10x18x8xf32> to vector<8x16x8xf32>
    %48 = vector.shape_cast %47 : vector<8x16x8xf32> to vector<128x8xf32>
    %49 = arith.truncf %48 : vector<128x8xf32> to vector<128x8xbf16>
    %c6 = arith.constant 6 : index
    %c0_20 = arith.constant 0 : index
    %c0_21 = arith.constant 0 : index
    %50 = vector.load %arg3[%c6, %c0_20, %c0_21] : memref<9x8x3xbf16, #tpu.memory_space<vmem>>, vector<1x8x3xbf16>
    %51 = vector.shape_cast %50 : vector<1x8x3xbf16> to vector<8x3xbf16>
    %cst_22 = arith.constant dense<0.000000e+00> : vector<128x3xf32>
    %52 = tpu.matmul %49, %51, %cst_22 {dimension_numbers = #tpu.dot_dimension_numbers<[1], [0], [0], [1], [0, 0, 1, 1], [], []>} : vector<128x8xbf16>, vector<8x3xbf16>, vector<128x3xf32> -> vector<128x3xf32>
    %53 = arith.addf %46, %52 : vector<128x3xf32>
    %54 = vector.extract_strided_slice %5 {offsets = [2, 1, 0], sizes = [8, 16, 8], strides = [1, 1, 1]} : vector<10x18x8xf32> to vector<8x16x8xf32>
    %55 = vector.shape_cast %54 : vector<8x16x8xf32> to vector<128x8xf32>
    %56 = arith.truncf %55 : vector<128x8xf32> to vector<128x8xbf16>
    %c7 = arith.constant 7 : index
    %c0_23 = arith.constant 0 : index
    %c0_24 = arith.constant 0 : index
    %57 = vector.load %arg3[%c7, %c0_23, %c0_24] : memref<9x8x3xbf16, #tpu.memory_space<vmem>>, vector<1x8x3xbf16>
    %58 = vector.shape_cast %57 : vector<1x8x3xbf16> to vector<8x3xbf16>
    %cst_25 = arith.constant dense<0.000000e+00> : vector<128x3xf32>
    %59 = tpu.matmul %56, %58, %cst_25 {dimension_numbers = #tpu.dot_dimension_numbers<[1], [0], [0], [1], [0, 0, 1, 1], [], []>} : vector<128x8xbf16>, vector<8x3xbf16>, vector<128x3xf32> -> vector<128x3xf32>
    %60 = arith.addf %53, %59 : vector<128x3xf32>
    %61 = vector.extract_strided_slice %5 {offsets = [2, 2, 0], sizes = [8, 16, 8], strides = [1, 1, 1]} : vector<10x18x8xf32> to vector<8x16x8xf32>
    %62 = vector.shape_cast %61 : vector<8x16x8xf32> to vector<128x8xf32>
    %63 = arith.truncf %62 : vector<128x8xf32> to vector<128x8xbf16>
    %c8 = arith.constant 8 : index
    %c0_26 = arith.constant 0 : index
    %c0_27 = arith.constant 0 : index
    %64 = vector.load %arg3[%c8, %c0_26, %c0_27] : memref<9x8x3xbf16, #tpu.memory_space<vmem>>, vector<1x8x3xbf16>
    %65 = vector.shape_cast %64 : vector<1x8x3xbf16> to vector<8x3xbf16>
    %cst_28 = arith.constant dense<0.000000e+00> : vector<128x3xf32>
    %66 = tpu.matmul %63, %65, %cst_28 {dimension_numbers = #tpu.dot_dimension_numbers<[1], [0], [0], [1], [0, 0, 1, 1], [], []>} : vector<128x8xbf16>, vector<8x3xbf16>, vector<128x3xf32> -> vector<128x3xf32>
    %67 = arith.addf %60, %66 : vector<128x3xf32>
    %c0_29 = arith.constant 0 : index
    %c0_30 = arith.constant 0 : index
    %68 = vector.load %arg4[%c0_29, %c0_30] : memref<1x3xf32, #tpu.memory_space<vmem>>, vector<1x3xf32>
    %69 = vector.broadcast %68 : vector<1x3xf32> to vector<128x3xf32>
    %70 = arith.addf %67, %69 : vector<128x3xf32>
    %cst_31 = arith.constant -1.000000e+00 : f32
    %cst_32 = arith.constant 1.000000e+00 : f32
    %71 = vector.broadcast %cst_31 : f32 to vector<128x3xf32>
    %72 = arith.maximumf %71, %70 : vector<128x3xf32>
    %73 = vector.broadcast %cst_32 : f32 to vector<128x3xf32>
    %74 = arith.minimumf %73, %72 : vector<128x3xf32>
    %75 = vector.shape_cast %74 : vector<128x3xf32> to vector<8x16x3xf32>
    %c0_33 = arith.constant 0 : index
    %c0_34 = arith.constant 0 : index
    %c0_35 = arith.constant 0 : index
    %c0_36 = arith.constant 0 : index
    %76 = vector.load %arg5[%c0_33, %c0_34, %c0_35, %c0_36] : memref<1x8x16x3xf32, #tpu.memory_space<vmem>>, vector<1x8x16x3xf32>
    %77 = vector.shape_cast %76 : vector<1x8x16x3xf32> to vector<8x16x3xf32>
    %78 = vector.shape_cast %75 : vector<8x16x3xf32> to vector<1x8x16x3xf32>
    tpu.vector_store %arg5[%c0_33, %c0_34, %c0_35, %c0_36], %78 {strides = array<i32>} : memref<1x8x16x3xf32, #tpu.memory_space<vmem>>, vector<1x8x16x3xf32>,
    return
  }
  func.func @transform_0(%arg0: i32, %arg1: i32) -> (i32, i32, i32, i32) {
    %c0_i32 = arith.constant 0 : i32
    %c0_i32_0 = arith.constant 0 : i32
    %c0_i32_1 = arith.constant 0 : i32
    %c0_i32_2 = arith.constant 0 : i32
    return %arg0, %c0_i32, %c0_i32_0, %c0_i32_1 : i32, i32, i32, i32
  }
  func.func @transform_1(%arg0: i32, %arg1: i32) -> (i32, i32, i32) {
    %c0_i32 = arith.constant 0 : i32
    %c0_i32_0 = arith.constant 0 : i32
    %c0_i32_1 = arith.constant 0 : i32
    %c0_i32_2 = arith.constant 0 : i32
    return %c0_i32, %c0_i32_0, %c0_i32_1 : i32, i32, i32
  }
  func.func @transform_2(%arg0: i32, %arg1: i32) -> (i32, i32) {
    %c0_i32 = arith.constant 0 : i32
    %c0_i32_0 = arith.constant 0 : i32
    %c0_i32_1 = arith.constant 0 : i32
    return %c0_i32, %c0_i32_0 : i32, i32
  }
  func.func @transform_3(%arg0: i32, %arg1: i32) -> (i32, i32, i32, i32) {
    %c0_i32 = arith.constant 0 : i32
    %c0_i32_0 = arith.constant 0 : i32
    %c0_i32_1 = arith.constant 0 : i32
    return %arg0, %arg1, %c0_i32, %c0_i32_0 : i32, i32, i32, i32
  }
}

</mosaic_0001>

<llo_original>
// kernel: pix2pix_turbo_forward.13
$region0: #{pix2pix_turbo_forward.13}
  #allocation0 [shape = 'u32[]', space=smem, size = 0x4, offset = 0x4, fixed_abs, tag = 'smem constant byte address 0x4 - core index']
  #allocation1 [shape = 'u32[144,128]{1,0:T(1,128)}', space=vmem, size = 0x12000, scoped, tag = 'internal scratch']
  %s0 = inlined_call_operand.vmem [shape: bf16[2,9,9,12], index: 0, kind: input, shape index: {}]
  %s1 = inlined_call_operand.vmem [shape: bf16[4,12,8], index: 1, kind: input, shape index: {}]
  %s2 = inlined_call_operand.vmem [shape: f32[1,8], index: 2, kind: input, shape index: {}]
  %s3 = inlined_call_operand.vmem [shape: bf16[2,8,8,8], index: 3, kind: output, shape index: {}]
  %s4 = sld [smem:[#allocation0]]
  $region45: #{pix2pix_turbo_forward.13} parent=0
    _
  %s6 = ssub.s32 1, %s4
  %s7 = scalar_select 0, %s6, %s4
  loop: start=0, step=1, limit=4
  $region2: #{pix2pix_turbo_forward.13} parent=0 // loop_pre_header
    _
  $region3: #{pix2pix_turbo_forward.13} parent=0 // loop_header
    %s9 = sphi 0, %s13
    %p10 = scmp.ge.s32.totalorder %s9, 4
    %s16 = sphi 0, %s28
    %s17 = sphi 0, %s24
    %s18 = sphi 0, %s16
    %s19 = sphi 0, %s17
    %s20 = sphi 0, %s18
    %s21 = sphi 0, %s19
    %s31 = sphi 0, %s33
    %s34 = sphi 0, %s31
    %s35 = sphi 0, %s34
    %s51 = sphi 0, %s35
    %s55 = sphi 0, %s55
    %s57 = sphi 0, %s55
    %s58 = sphi 0, %s57
    %s72 = sphi 0, %s58
    %s76 = sphi 0, %s76
    %s78 = sphi 0, %s76
    %s79 = sphi 0, %s78
    %s93 = sphi 0, %s79
    %s101 = sphi 0, %s103
    %s104 = sphi 0, %s101
    %s105 = sphi 0, %s104
    %s121 = sphi 0, %s105
  $region4: #{pix2pix_turbo_forward.13} parent=0 // loop_header_branch
    %12 = sbr.rel (%p10) target = $region8
  $region5: #{pix2pix_turbo_forward.13} parent=0 // loop_body
    %s14 = ssub.s32 %s9, 1
    %s15 = ssub.s32 %s9, 2
    %s22 = sadd.s32 1, %s17
    %p23 = scmp.ge.s32.totalorder %s22, 1
    %s24 = scalar_select %p23, 0, %s22
    %s25 = sadd.s32 1, %s16
    %s26 = scalar_select %p23, %s25, %s16
    %p27 = scmp.ge.s32.totalorder %s26, 2
    %s28 = scalar_select %p27, 0, %s26
    %s29 = ssub.s32 %s16, %s28
    %p30 = scmp.eq.s32.totalorder %s29, 0
    %s32 = sadd.s32 %s31, 1
    %s33 = scalar_select %p30, %s31, %s32
    %p36 = pneg %p30
    %p37 = scmp.eq.s32.totalorder %s9, 1
    %p38 = por %p36, %p37
    %p39 = scmp.ne.s32.totalorder %s31, %s34
    %p40 = scmp.eq.s32.totalorder %s9, 0
    %p41 = por %p39, %p40
    %p42 = scmp.ne.s32.totalorder %s31, %s34
    %p43 = scmp.eq.s32.totalorder %s14, 1
    %p44 = por %p42, %p43
    %p45 = scmp.ne.s32.totalorder %s34, %s35
    %p46 = scmp.eq.s32.totalorder %s14, 0
    %p47 = por %p45, %p46
    %p48 = scmp.ne.s32.totalorder %s34, %s35
    %p49 = scmp.eq.s32.totalorder %s15, 1
    %p50 = por %p48, %p49
    %p52 = scmp.ne.s32.totalorder %s35, %s51
    %p53 = scmp.eq.s32.totalorder %s15, 0
    %p54 = por %p52, %p53
    %s56 = sadd.s32 %s55, 1
    %p59 = scmp.eq.s32.totalorder %s9, 1
    %p60 = scmp.ne.s32.totalorder %s55, %s57
    %p61 = scmp.eq.s32.totalorder %s9, 0
    %p62 = por %p60, %p61
    %p63 = scmp.ne.s32.totalorder %s55, %s57
    %p64 = scmp.eq.s32.totalorder %s14, 1
    %p65 = por %p63, %p64
    %p66 = scmp.ne.s32.totalorder %s57, %s58
    %p67 = scmp.eq.s32.totalorder %s14, 0
    %p68 = por %p66, %p67
    %p69 = scmp.ne.s32.totalorder %s57, %s58
    %p70 = scmp.eq.s32.totalorder %s15, 1
    %p71 = por %p69, %p70
    %p73 = scmp.ne.s32.totalorder %s58, %s72
    %p74 = scmp.eq.s32.totalorder %s15, 0
    %p75 = por %p73, %p74
    %s77 = sadd.s32 %s76, 1
    %p80 = scmp.eq.s32.totalorder %s9, 1
    %p81 = scmp.ne.s32.totalorder %s76, %s78
    %p82 = scmp.eq.s32.totalorder %s9, 0
    %p83 = por %p81, %p82
    %p84 = scmp.ne.s32.totalorder %s76, %s78
    %p85 = scmp.eq.s32.totalorder %s14, 1
    %p86 = por %p84, %p85
    %p87 = scmp.ne.s32.totalorder %s78, %s79
    %p88 = scmp.eq.s32.totalorder %s14, 0
    %p89 = por %p87, %p88
    %p90 = scmp.ne.s32.totalorder %s78, %s79
    %p91 = scmp.eq.s32.totalorder %s15, 1
    %p92 = por %p90, %p91
    %p94 = scmp.ne.s32.totalorder %s79, %s93
    %p95 = scmp.eq.s32.totalorder %s15, 0
    %p96 = por %p94, %p95
    %s97 = ssub.s32 %s16, %s28
    %s98 = ssub.s32 %s17, %s24
    %s99 = sor.u32 %s97, %s98
    %p100 = scmp.eq.s32.totalorder %s99, 0
    %s102 = sadd.s32 %s101, 1
    %s103 = scalar_select %p100, %s101, %s102
    %p106 = pneg %p100
    %p107 = scmp.eq.s32.totalorder %s9, 1
    %p108 = por %p106, %p107
    %p109 = scmp.ne.s32.totalorder %s101, %s104
    %p110 = scmp.eq.s32.totalorder %s9, 0
    %p111 = por %p109, %p110
    %p112 = scmp.ne.s32.totalorder %s101, %s104
    %p113 = scmp.eq.s32.totalorder %s14, 1
    %p114 = por %p112, %p113
    %p115 = scmp.ne.s32.totalorder %s104, %s105
    %p116 = scmp.eq.s32.totalorder %s14, 0
    %p117 = por %p115, %p116
    %p118 = scmp.ne.s32.totalorder %s104, %s105
    %p119 = scmp.eq.s32.totalorder %s15, 1
    %p120 = por %p118, %p119
    %p122 = scmp.ne.s32.totalorder %s105, %s121
    %p123 = scmp.eq.s32.totalorder %s15, 0
    %p124 = por %p122, %p123
    %p125 = scmp.le.s32.totalorder 1, %s9
    %p126 = scmp.lt.s32.totalorder %s9, 3
    %p127 = pnand %p125, %p126
    %p128 = pneg %p127
    // Predicated region
    $region9: #{pix2pix_turbo_forward.13} parent=5 // pred_check
      _
    $region10: #{pix2pix_turbo_forward.13} parent=5 // pred_check_branch
      %130 = sbr.rel (%p127) target = $region12
    $region11: #{pix2pix_turbo_forward.13} parent=5 // pred_region
      %s131 = ssub.s32 %s9, 1
      // Predicated region
      $region13: #{pix2pix_turbo_forward.13} parent=11 // pred_check
        %p132 = pneg %p68
      $region14: #{pix2pix_turbo_forward.13} parent=11 // pred_check_branch
        %134 = sbr.rel (%p132) target = $region16
      $region15: #{pix2pix_turbo_forward.13} parent=11 // pred_region
        _
      $region16: #{pix2pix_turbo_forward.13} parent=11 // pred_fallthru
        _
      // Predicated region
      $region17: #{pix2pix_turbo_forward.13} parent=11 // pred_check
        %p135 = pneg %p89
      $region18: #{pix2pix_turbo_forward.13} parent=11 // pred_check_branch
        %137 = sbr.rel (%p135) target = $region20
      $region19: #{pix2pix_turbo_forward.13} parent=11 // pred_region
        _
      $region20: #{pix2pix_turbo_forward.13} parent=11 // pred_fallthru
        _
    $region12: #{pix2pix_turbo_forward.13} parent=5 // pred_fallthru
      _
    %p138 = scmp.lt.s32.totalorder %s9, 2
    // Predicated region
    $region21: #{pix2pix_turbo_forward.13} parent=5 // pred_check
      %p139 = pneg %p138
    $region22: #{pix2pix_turbo_forward.13} parent=5 // pred_check_branch
      %141 = sbr.rel (%p139) target = $region24
    $region23: #{pix2pix_turbo_forward.13} parent=5 // pred_region
      // Predicated region
      $region25: #{pix2pix_turbo_forward.13} parent=23 // pred_check
        %p142 = pneg %p41
      $region26: #{pix2pix_turbo_forward.13} parent=23 // pred_check_branch
        %144 = sbr.rel (%p142) target = $region28
      $region27: #{pix2pix_turbo_forward.13} parent=23 // pred_region
        %p145 = scmp.lt.s32.totalorder %s16, 1
        %s146 = scalar_select %p145, %s16, 1
        %s147 = smul.addr %s146, 18
        %s148 = smul.addr %s147, 4
        %s149 = scalar_lea.vmem %s0, %s148
      $region28: #{pix2pix_turbo_forward.13} parent=23 // pred_fallthru
        _
    $region24: #{pix2pix_turbo_forward.13} parent=5 // pred_fallthru
      _
    %p150 = scmp.le.s32.totalorder 1, %s9
    %p151 = scmp.lt.s32.totalorder %s9, 3
    %p152 = pnand %p150, %p151
    %p153 = pneg %p152
    // Predicated region
    $region29: #{pix2pix_turbo_forward.13} parent=5 // pred_check
      _
    $region30: #{pix2pix_turbo_forward.13} parent=5 // pred_check_branch
      %155 = sbr.rel (%p152) target = $region32
    $region31: #{pix2pix_turbo_forward.13} parent=5 // pred_region
      %s156 = ssub.s32 %s9, 1
      %p157 = scmp.lt.s32.totalorder %s18, 1
      %s158 = scalar_select %p157, %s18, 1
      %s159 = smul.addr %s158, 18
      %s160 = smul.addr %s159, 4
      %s161 = scalar_lea.vmem %s0, %s160
      %p162 = pneg %p47
      %p163 = pneg %p44
      %p164 = pneg %p68
      %p165 = pneg %p65
      %p166 = pneg %p89
      %p167 = pneg %p86
      %p168 = pneg %p117
      %p169 = pneg %p114
      %s170 = smul.u32 8, %s19
      %p171 = scmp.lt.s32.totalorder %s18, 1
      %s172 = scalar_select %p171, %s18, 1
      %p173 = scmp.lt.s32.totalorder %s170, 7
      %s174 = scalar_select %p173, %s170, 7
      %s175 = smul.addr %s172, 8
      %s176 = sadd.s32 %s174, %s175
      %s177 = smul.addr %s176, 4
      %s178 = scalar_lea.vmem %s3, %s177
      %p179 = scmp.lt.s32.totalorder %s18, 1
      %s180 = scalar_select %p179, %s18, 1
      %s181 = smul.addr %s180, 18
      %s182 = smul.addr %s181, 4
      %s183 = scalar_lea.vmem %s0, %s182
      %s184 = smul.u32 8, %s19
      %p185 = scmp.lt.s32.totalorder %s18, 1
      %s186 = scalar_select %p185, %s18, 1
      %p187 = scmp.lt.s32.totalorder %s184, 7
      %s188 = scalar_select %p187, %s184, 7
      %s189 = smul.addr %s186, 8
      %s190 = sadd.s32 %s188, %s189
      %s191 = smul.addr %s190, 4
      %s192 = scalar_lea.vmem %s3, %s191
      %s193 = smul.u32 8, %s19
      %s195 = smul.u32 %s19, 8
      %s196 = smul.u32 %s195, 2
      %s197 = smul.addr %s196, 4
      %s198 = scalar_lea.vmem %s183, %s197
      %v199 = vld [vmem:[%s198] sm:$0xf]
      %v200 = vld [vmem:[%s198 + $0x4] sm:$0x1]
      %v201 = vld [vmem:[%s198 + $0x8] sm:$0xf]
      %v202 = vld [vmem:[%s198 + $0xc] sm:$0x1]
      %v203 = vld [vmem:[%s198 + $0x10] sm:$0xf]
      %v204 = vld [vmem:[%s198 + $0x14] sm:$0x1]
      %v205 = vld [vmem:[%s198 + $0x18] sm:$0xf]
      %v206 = vld [vmem:[%s198 + $0x1c] sm:$0x1]
      %v207 = vld [vmem:[%s198 + $0x20] sm:$0xf]
      %v208 = vld [vmem:[%s198 + $0x24] sm:$0x1]
      %v209 = vld [vmem:[%s198 + $0x28] sm:$0xf]
      %v210 = vld [vmem:[%s198 + $0x2c] sm:$0x1]
      %v211 = vld [vmem:[%s198 + $0x30] sm:$0xf]
      %v212 = vld [vmem:[%s198 + $0x34] sm:$0x1]
      %v213 = vld [vmem:[%s198 + $0x38] sm:$0xf]
      %v214 = vld [vmem:[%s198 + $0x3c] sm:$0x1]
      %v215 = vld [vmem:[%s198 + $0x40] sm:$0xf]
      %v216 = vld [vmem:[%s198 + $0x44] sm:$0x1]
      %v217 = vunpack.c.l.bf16 %v199
      %v218 = vunpack.c.l.bf16 %v200
      %v219 = vunpack.c.l.bf16 %v201
      %v220 = vunpack.c.l.bf16 %v202
      %v221 = vunpack.c.l.bf16 %v203
      %v222 = vunpack.c.l.bf16 %v204
      %v223 = vunpack.c.l.bf16 %v205
      %v224 = vunpack.c.l.bf16 %v206
      %v225 = vunpack.c.l.bf16 %v207
      %v226 = vunpack.c.l.bf16 %v208
      %v227 = vunpack.c.l.bf16 %v209
      %v228 = vunpack.c.l.bf16 %v210
      %v229 = vunpack.c.l.bf16 %v211
      %v230 = vunpack.c.l.bf16 %v212
      %v231 = vunpack.c.l.bf16 %v213
      %v232 = vunpack.c.l.bf16 %v214
      %v233 = vunpack.c.l.bf16 %v215
      %v234 = vunpack.c.l.bf16 %v216
      %v235 = vpack.c.bf16 %v219, %v217
      %v236 = vpack.c.bf16 %v223, %v221
      %v237 = vpack.c.bf16 %v227, %v225
      %v238 = vpack.c.bf16 %v231, %v229
      %v239 = vld [vmem:[%s1] sm:$0xf]
      %v240 = vld [vmem:[%s1 + $0x4] sm:$0x3]
      %vm257 = vcmask 1046528
      %v258 = vrot.slane %v217, 1
      %v259 = vrot.slane %v218, 1
      %v260 = vsel %vm257, %v258, %v259
      %v261 = vrot.slane %v219, 1
      %v262 = vrot.slane %v220, 1
      %v263 = vsel %vm257, %v261, %v262
      %v264 = vrot.slane %v221, 1
      %v265 = vrot.slane %v222, 1
      %v266 = vsel %vm257, %v264, %v265
      %v267 = vrot.slane %v223, 1
      %v268 = vrot.slane %v224, 1
      %v269 = vsel %vm257, %v267, %v268
      %v270 = vrot.slane %v225, 1
      %v271 = vrot.slane %v226, 1
      %v272 = vsel %vm257, %v270, %v271
      %v273 = vrot.slane %v227, 1
      %v274 = vrot.slane %v228, 1
      %v275 = vsel %vm257, %v273, %v274
      %v276 = vrot.slane %v229, 1
      %v277 = vrot.slane %v230, 1
      %v278 = vsel %vm257, %v276, %v277
      %v279 = vrot.slane %v231, 1
      %v280 = vrot.slane %v232, 1
      %v281 = vsel %vm257, %v279, %v280
      %v290 = vpack.c.bf16 %v263, %v260
      %v291 = vpack.c.bf16 %v269, %v266
      %v292 = vpack.c.bf16 %v275, %v272
      %v293 = vpack.c.bf16 %v281, %v278
      %s294 = scalar_lea.vmem %s1, 8
      %v295 = vld [vmem:[%s294] sm:$0xf]
      %v296 = vld [vmem:[%s294 + $0x4] sm:$0x3]
      %v299 = vunpack.c.l.b16 %v295
      %v300 = vunpack.c.l.b16 %v296
      %v301 = vpack.c.b16 %v300, %v299
      %vm302 = vcmask 97280
      %v304 = vsel %vm302, %v290, 0
      %v307 = vsel %vm302, %v291, 0
      %v310 = vsel %vm302, %v292, 0
      %v313 = vsel %vm302, %v293, 0
      %vm315 = vcmask 1045504
      %v317 = vsel %vm315, %v301, 0
      %319 = vmatprep.subr.bf16.mxu0 0
      %320 = vmatpush1.bf16.msra.mxu0 %v317
      %321 = vmatprep.subr.bf16.mxu0 0
      %322 = vmatpush1.bf16.msra.mxu0 0
      %323 = vmatprep.subr.bf16.mxu0 0
      %324 = vmatpush1.bf16.msra.mxu0 0
      %325 = vmatprep.subr.bf16.mxu0 0
      %326 = vmatpush1.bf16.msra.mxu0 0
      %327 = vmatprep.subr.bf16.mxu0 0
      %328 = vmatpush1.bf16.msra.mxu0 0
      %329 = vmatprep.subr.bf16.mxu0 0
      %330 = vmatpush1.bf16.msra.mxu0 0
      %331 = vmatprep.subr.bf16.mxu0 0
      %332 = vmatpush1.bf16.msra.mxu0 0
      %333 = vmatprep.subr.bf16.mxu0 0
      %334 = vmatpush1.bf16.msra.mxu0 0
      %335 = vmatprep.subr.bf16.mxu0 0
      %336 = vmatpush1.bf16.msra.mxu0 0
      %337 = vmatprep.subr.bf16.mxu0 0
      %338 = vmatpush1.bf16.msra.mxu0 0
      %339 = vmatprep.subr.bf16.mxu0 0
      %340 = vmatpush1.bf16.msra.mxu0 0
      %341 = vmatprep.subr.bf16.mxu0 0
      %342 = vmatpush1.bf16.msra.mxu0 0
      %343 = vmatprep.subr.bf16.mxu0 0
      %344 = vmatpush1.bf16.msra.mxu0 0
      %345 = vmatprep.subr.bf16.mxu0 0
      %346 = vmatpush1.bf16.msra.mxu0 0
      %347 = vmatprep.subr.bf16.mxu0 0
      %348 = vmatpush1.bf16.msra.mxu0 0
      %349 = vmatprep.subr.bf16.mxu0 0
      %350 = vmatpush1.bf16.msra.mxu0 0
      %351 = vmatprep.mubr.bf16.mxu0 0
      %352 = vmatmul.mubr.bf16.gmra.mrb[0].mxu0 %v304
      %v353 = vpop.f32.mrb[0].mxu0
      %v354 = vadd.f32 0.0, %v353
      %v355 = vpop.f32.mrb[0].mxu0
      %v356 = vpop.f32.mrb[0].mxu0
      %v357 = vadd.f32 0.0, %v356
      %v358 = vpop.f32.mrb[0].mxu0
      %359 = vmatprep.mubr.bf16.mxu0 0
      %360 = vmatmul.mubr.bf16.gmra.mrb[0].mxu0 %v307
      %v361 = vpop.f32.mrb[0].mxu0
      %v362 = vadd.f32 0.0, %v361
      %v363 = vpop.f32.mrb[0].mxu0
      %v364 = vpop.f32.mrb[0].mxu0
      %v365 = vadd.f32 0.0, %v364
      %v366 = vpop.f32.mrb[0].mxu0
      %367 = vmatprep.mubr.bf16.mxu0 0
      %368 = vmatmul.mubr.bf16.gmra.mrb[0].mxu0 %v310
      %v369 = vpop.f32.mrb[0].mxu0
      %v370 = vadd.f32 0.0, %v369
      %v371 = vpop.f32.mrb[0].mxu0
      %v372 = vpop.f32.mrb[0].mxu0
      %v373 = vadd.f32 0.0, %v372
      %v374 = vpop.f32.mrb[0].mxu0
      %375 = vmatprep.mubr.bf16.mxu0 0
      %376 = vmatmul.mubr.bf16.gmra.mrb[0].mxu0 %v313
      %v377 = vpop.f32.mrb[0].mxu0
      %v378 = vadd.f32 0.0, %v377
      %v379 = vpop.f32.mrb[0].mxu0
      %v380 = vpop.f32.mrb[0].mxu0
      %v381 = vadd.f32 0.0, %v380
      %v382 = vpop.f32.mrb[0].mxu0
      %383 = vdwg.mxu0
      %v386 = vunpack.c.l.b16 %v239
      %v387 = vunpack.c.l.b16 %v240
      %v388 = vpack.c.b16 %v387, %v386
      %v390 = vsel %vm302, %v235, 0
      %v393 = vsel %vm302, %v236, 0
      %v396 = vsel %vm302, %v237, 0
      %v399 = vsel %vm302, %v238, 0
      %v402 = vsel %vm315, %v388, 0
      %404 = vmatprep.subr.bf16.mxu0 0
      %405 = vmatpush1.bf16.msra.mxu0 %v402
      %406 = vmatprep.subr.bf16.mxu0 0
      %407 = vmatpush1.bf16.msra.mxu0 0
      %408 = vmatprep.subr.bf16.mxu0 0
      %409 = vmatpush1.bf16.msra.mxu0 0
      %410 = vmatprep.subr.bf16.mxu0 0
      %411 = vmatpush1.bf16.msra.mxu0 0
      %412 = vmatprep.subr.bf16.mxu0 0
      %413 = vmatpush1.bf16.msra.mxu0 0
      %414 = vmatprep.subr.bf16.mxu0 0
      %415 = vmatpush1.bf16.msra.mxu0 0
      %416 = vmatprep.subr.bf16.mxu0 0
      %417 = vmatpush1.bf16.msra.mxu0 0
      %418 = vmatprep.subr.bf16.mxu0 0
      %419 = vmatpush1.bf16.msra.mxu0 0
      %420 = vmatprep.subr.bf16.mxu0 0
      %421 = vmatpush1.bf16.msra.mxu0 0
      %422 = vmatprep.subr.bf16.mxu0 0
      %423 = vmatpush1.bf16.msra.mxu0 0
      %424 = vmatprep.subr.bf16.mxu0 0
      %425 = vmatpush1.bf16.msra.mxu0 0
      %426 = vmatprep.subr.bf16.mxu0 0
      %427 = vmatpush1.bf16.msra.mxu0 0
      %428 = vmatprep.subr.bf16.mxu0 0
      %429 = vmatpush1.bf16.msra.mxu0 0
      %430 = vmatprep.subr.bf16.mxu0 0
      %431 = vmatpush1.bf16.msra.mxu0 0
      %432 = vmatprep.subr.bf16.mxu0 0
      %433 = vmatpush1.bf16.msra.mxu0 0
      %434 = vmatprep.subr.bf16.mxu0 0
      %435 = vmatpush1.bf16.msra.mxu0 0
      %436 = vmatprep.mubr.bf16.mxu0 0
      %437 = vmatmul.mubr.bf16.gmra.mrb[0].mxu0 %v390
      %v438 = vpop.f32.mrb[0].mxu0
      %v439 = vadd.f32 %v354, %v438
      %v440 = vpop.f32.mrb[0].mxu0
      %v441 = vpop.f32.mrb[0].mxu0
      %v442 = vadd.f32 %v357, %v441
      %v443 = vpop.f32.mrb[0].mxu0
      %444 = vmatprep.mubr.bf16.mxu0 0
      %445 = vmatmul.mubr.bf16.gmra.mrb[0].mxu0 %v393
      %v446 = vpop.f32.mrb[0].mxu0
      %v447 = vadd.f32 %v362, %v446
      %v448 = vpop.f32.mrb[0].mxu0
      %v449 = vpop.f32.mrb[0].mxu0
      %v450 = vadd.f32 %v365, %v449
      %v451 = vpop.f32.mrb[0].mxu0
      %452 = vmatprep.mubr.bf16.mxu0 0
      %453 = vmatmul.mubr.bf16.gmra.mrb[0].mxu0 %v396
      %v454 = vpop.f32.mrb[0].mxu0
      %v455 = vadd.f32 %v370, %v454
      %v456 = vpop.f32.mrb[0].mxu0
      %v457 = vpop.f32.mrb[0].mxu0
      %v458 = vadd.f32 %v373, %v457
      %v459 = vpop.f32.mrb[0].mxu0
      %460 = vmatprep.mubr.bf16.mxu0 0
      %461 = vmatmul.mubr.bf16.gmra.mrb[0].mxu0 %v399
      %v462 = vpop.f32.mrb[0].mxu0
      %v463 = vadd.f32 %v378, %v462
      %v464 = vpop.f32.mrb[0].mxu0
      %v465 = vpop.f32.mrb[0].mxu0
      %v466 = vadd.f32 %v381, %v465
      %v467 = vpop.f32.mrb[0].mxu0
      %468 = vdwg.mxu0
      %v469 = vpack.c.bf16 %v221, %v219
      %v470 = vpack.c.bf16 %v225, %v223
      %v471 = vpack.c.bf16 %v229, %v227
      %v472 = vpack.c.bf16 %v233, %v231
      %s473 = scalar_lea.vmem %s1, 16
      %v474 = vld [vmem:[%s473] sm:$0xf]
      %v475 = vld [vmem:[%s473 + $0x4] sm:$0x3]
      %v478 = vunpack.c.l.b16 %v474
      %v479 = vunpack.c.l.b16 %v475
      %v480 = vpack.c.b16 %v479, %v478
      %v482 = vsel %vm302, %v469, 0
      %v485 = vsel %vm302, %v470, 0
      %v488 = vsel %vm302, %v471, 0
      %v491 = vsel %vm302, %v472, 0
      %v494 = vsel %vm315, %v480, 0
      %496 = vmatprep.subr.bf16.mxu0 0
      %497 = vmatpush1.bf16.msra.mxu0 %v494
      %498 = vmatprep.subr.bf16.mxu0 0
      %499 = vmatpush1.bf16.msra.mxu0 0
      %500 = vmatprep.subr.bf16.mxu0 0
      %501 = vmatpush1.bf16.msra.mxu0 0
      %502 = vmatprep.subr.bf16.mxu0 0
      %503 = vmatpush1.bf16.msra.mxu0 0
      %504 = vmatprep.subr.bf16.mxu0 0
      %505 = vmatpush1.bf16.msra.mxu0 0
      %506 = vmatprep.subr.bf16.mxu0 0
      %507 = vmatpush1.bf16.msra.mxu0 0
      %508 = vmatprep.subr.bf16.mxu0 0
      %509 = vmatpush1.bf16.msra.mxu0 0
      %510 = vmatprep.subr.bf16.mxu0 0
      %511 = vmatpush1.bf16.msra.mxu0 0
      %512 = vmatprep.subr.bf16.mxu0 0
      %513 = vmatpush1.bf16.msra.mxu0 0
      %514 = vmatprep.subr.bf16.mxu0 0
      %515 = vmatpush1.bf16.msra.mxu0 0
      %516 = vmatprep.subr.bf16.mxu0 0
      %517 = vmatpush1.bf16.msra.mxu0 0
      %518 = vmatprep.subr.bf16.mxu0 0
      %519 = vmatpush1.bf16.msra.mxu0 0
      %520 = vmatprep.subr.bf16.mxu0 0
      %521 = vmatpush1.bf16.msra.mxu0 0
      %522 = vmatprep.subr.bf16.mxu0 0
      %523 = vmatpush1.bf16.msra.mxu0 0
      %524 = vmatprep.subr.bf16.mxu0 0
      %525 = vmatpush1.bf16.msra.mxu0 0
      %526 = vmatprep.subr.bf16.mxu0 0
      %527 = vmatpush1.bf16.msra.mxu0 0
      %528 = vmatprep.mubr.bf16.mxu0 0
      %529 = vmatmul.mubr.bf16.gmra.mrb[0].mxu0 %v482
      %v530 = vpop.f32.mrb[0].mxu0
      %v531 = vadd.f32 0.0, %v530
      %v532 = vpop.f32.mrb[0].mxu0
      %v533 = vpop.f32.mrb[0].mxu0
      %v534 = vadd.f32 0.0, %v533
      %v535 = vpop.f32.mrb[0].mxu0
      %536 = vmatprep.mubr.bf16.mxu0 0
      %537 = vmatmul.mubr.bf16.gmra.mrb[0].mxu0 %v485
      %v538 = vpop.f32.mrb[0].mxu0
      %v539 = vadd.f32 0.0, %v538
      %v540 = vpop.f32.mrb[0].mxu0
      %v541 = vpop.f32.mrb[0].mxu0
      %v542 = vadd.f32 0.0, %v541
      %v543 = vpop.f32.mrb[0].mxu0
      %544 = vmatprep.mubr.bf16.mxu0 0
      %545 = vmatmul.mubr.bf16.gmra.mrb[0].mxu0 %v488
      %v546 = vpop.f32.mrb[0].mxu0
      %v547 = vadd.f32 0.0, %v546
      %v548 = vpop.f32.mrb[0].mxu0
      %v549 = vpop.f32.mrb[0].mxu0
      %v550 = vadd.f32 0.0, %v549
      %v551 = vpop.f32.mrb[0].mxu0
      %552 = vmatprep.mubr.bf16.mxu0 0
      %553 = vmatmul.mubr.bf16.gmra.mrb[0].mxu0 %v491
      %v554 = vpop.f32.mrb[0].mxu0
      %v555 = vadd.f32 0.0, %v554
      %v556 = vpop.f32.mrb[0].mxu0
      %v557 = vpop.f32.mrb[0].mxu0
      %v558 = vadd.f32 0.0, %v557
      %v559 = vpop.f32.mrb[0].mxu0
      %560 = vdwg.mxu0
      %v561 = vadd.f32 %v439, %v531
      %v562 = vadd.f32 %v442, %v534
      %v563 = vadd.f32 %v447, %v539
      %v564 = vadd.f32 %v450, %v542
      %v565 = vadd.f32 %v455, %v547
      %v566 = vadd.f32 %v458, %v550
      %v567 = vadd.f32 %v463, %v555
      %v568 = vadd.f32 %v466, %v558
      %v571 = vrot.slane %v233, 1
      %v572 = vrot.slane %v234, 1
      %v573 = vsel %vm257, %v571, %v572
      %v575 = vpack.c.bf16 %v266, %v263
      %v576 = vpack.c.bf16 %v272, %v269
      %v577 = vpack.c.bf16 %v278, %v275
      %v578 = vpack.c.bf16 %v573, %v281
      %s579 = scalar_lea.vmem %s1, 24
      %v580 = vld [vmem:[%s579] sm:$0xf]
      %v581 = vld [vmem:[%s579 + $0x4] sm:$0x3]
      %v584 = vunpack.c.l.b16 %v580
      %v585 = vunpack.c.l.b16 %v581
      %v586 = vpack.c.b16 %v585, %v584
      %v588 = vsel %vm302, %v575, 0
      %v591 = vsel %vm302, %v576, 0
      %v594 = vsel %vm302, %v577, 0
      %v597 = vsel %vm302, %v578, 0
      %v600 = vsel %vm315, %v586, 0
      %602 = vmatprep.subr.bf16.mxu0 0
      %603 = vmatpush1.bf16.msra.mxu0 %v600
      %604 = vmatprep.subr.bf16.mxu0 0
      %605 = vmatpush1.bf16.msra.mxu0 0
      %606 = vmatprep.subr.bf16.mxu0 0
      %607 = vmatpush1.bf16.msra.mxu0 0
      %608 = vmatprep.subr.bf16.mxu0 0
      %609 = vmatpush1.bf16.msra.mxu0 0
      %610 = vmatprep.subr.bf16.mxu0 0
      %611 = vmatpush1.bf16.msra.mxu0 0
      %612 = vmatprep.subr.bf16.mxu0 0
      %613 = vmatpush1.bf16.msra.mxu0 0
      %614 = vmatprep.subr.bf16.mxu0 0
      %615 = vmatpush1.bf16.msra.mxu0 0
      %616 = vmatprep.subr.bf16.mxu0 0
      %617 = vmatpush1.bf16.msra.mxu0 0
      %618 = vmatprep.subr.bf16.mxu0 0
      %619 = vmatpush1.bf16.msra.mxu0 0
      %620 = vmatprep.subr.bf16.mxu0 0
      %621 = vmatpush1.bf16.msra.mxu0 0
      %622 = vmatprep.subr.bf16.mxu0 0
      %623 = vmatpush1.bf16.msra.mxu0 0
      %624 = vmatprep.subr.bf16.mxu0 0
      %625 = vmatpush1.bf16.msra.mxu0 0
      %626 = vmatprep.subr.bf16.mxu0 0
      %627 = vmatpush1.bf16.msra.mxu0 0
      %628 = vmatprep.subr.bf16.mxu0 0
      %629 = vmatpush1.bf16.msra.mxu0 0
      %630 = vmatprep.subr.bf16.mxu0 0
      %631 = vmatpush1.bf16.msra.mxu0 0
      %632 = vmatprep.subr.bf16.mxu0 0
      %633 = vmatpush1.bf16.msra.mxu0 0
      %634 = vmatprep.mubr.bf16.mxu0 0
      %635 = vmatmul.mubr.bf16.gmra.mrb[0].mxu0 %v588
      %v636 = vpop.f32.mrb[0].mxu0
      %v637 = vadd.f32 0.0, %v636
      %v638 = vpop.f32.mrb[0].mxu0
      %v639 = vpop.f32.mrb[0].mxu0
      %v640 = vadd.f32 0.0, %v639
      %v641 = vpop.f32.mrb[0].mxu0
      %642 = vmatprep.mubr.bf16.mxu0 0
      %643 = vmatmul.mubr.bf16.gmra.mrb[0].mxu0 %v591
      %v644 = vpop.f32.mrb[0].mxu0
      %v645 = vadd.f32 0.0, %v644
      %v646 = vpop.f32.mrb[0].mxu0
      %v647 = vpop.f32.mrb[0].mxu0
      %v648 = vadd.f32 0.0, %v647
      %v649 = vpop.f32.mrb[0].mxu0
      %650 = vmatprep.mubr.bf16.mxu0 0
      %651 = vmatmul.mubr.bf16.gmra.mrb[0].mxu0 %v594
      %v652 = vpop.f32.mrb[0].mxu0
      %v653 = vadd.f32 0.0, %v652
      %v654 = vpop.f32.mrb[0].mxu0
      %v655 = vpop.f32.mrb[0].mxu0
      %v656 = vadd.f32 0.0, %v655
      %v657 = vpop.f32.mrb[0].mxu0
      %658 = vmatprep.mubr.bf16.mxu0 0
      %659 = vmatmul.mubr.bf16.gmra.mrb[0].mxu0 %v597
      %v660 = vpop.f32.mrb[0].mxu0
      %v661 = vadd.f32 0.0, %v660
      %v662 = vpop.f32.mrb[0].mxu0
      %v663 = vpop.f32.mrb[0].mxu0
      %v664 = vadd.f32 0.0, %v663
      %v665 = vpop.f32.mrb[0].mxu0
      %666 = vdwg.mxu0
      %v667 = vadd.f32 %v561, %v637
      %v668 = vadd.f32 %v562, %v640
      %v669 = vadd.f32 %v563, %v645
      %v670 = vadd.f32 %v564, %v648
      %v671 = vadd.f32 %v565, %v653
      %v672 = vadd.f32 %v566, %v656
      %v673 = vadd.f32 %v567, %v661
      %v674 = vadd.f32 %v568, %v664
      %v675 = vld [vmem:[%s2] sm:$0x1]
      %v677 = vlaneseq
      %v678 = vshrl.u32 %v677, 7
      %v679 = vsub.s32 0, %v678
      %v680 = vrot.slane %v675, %v679
      %v682 = vadd.f32 %v667, %v680
      %v683 = vadd.f32 %v668, %v680
      %v684 = vadd.f32 %v669, %v680
      %v685 = vadd.f32 %v670, %v680
      %v686 = vadd.f32 %v671, %v680
      %v687 = vadd.f32 %v672, %v680
      %v688 = vadd.f32 %v673, %v680
      %v689 = vadd.f32 %v674, %v680
      %v690 = vsub.f32 0.0, %v682
      %v691 = vsub.f32 0.0, %v683
      %v692 = vsub.f32 0.0, %v684
      %v693 = vsub.f32 0.0, %v685
      %v694 = vsub.f32 0.0, %v686
      %v695 = vsub.f32 0.0, %v687
      %v696 = vsub.f32 0.0, %v688
      %v697 = vsub.f32 0.0, %v689
      %v698 = vmul.f32 %v690, 1.442695
      %v699 = vpow.pop %v698
      %v700 = vmul.f32 %v691, 1.442695
      %v701 = vpow.pop %v700
      %v702 = vmul.f32 %v692, 1.442695
      %v703 = vpow.pop %v702
      %v704 = vmul.f32 %v693, 1.442695
      %v705 = vpow.pop %v704
      %v706 = vmul.f32 %v694, 1.442695
      %v707 = vpow.pop %v706
      %v708 = vmul.f32 %v695, 1.442695
      %v709 = vpow.pop %v708
      %v710 = vmul.f32 %v696, 1.442695
      %v711 = vpow.pop %v710
      %v712 = vmul.f32 %v697, 1.442695
      %v713 = vpow.pop %v712
      %v714 = vadd.f32 %v699, 1.0
      %v715 = vadd.f32 %v701, 1.0
      %v716 = vadd.f32 %v703, 1.0
      %v717 = vadd.f32 %v705, 1.0
      %v718 = vadd.f32 %v707, 1.0
      %v719 = vadd.f32 %v709, 1.0
      %v720 = vadd.f32 %v711, 1.0
      %v721 = vadd.f32 %v713, 1.0
      %v722 = vrcp.pop %v714
      %v723 = vrcp.pop %v715
      %v724 = vrcp.pop %v716
      %v725 = vrcp.pop %v717
      %v726 = vrcp.pop %v718
      %v727 = vrcp.pop %v719
      %v728 = vrcp.pop %v720
      %v729 = vrcp.pop %v721
      %v730 = vmul.f32 %v682, %v722
      %v731 = vmul.f32 %v683, %v723
      %v732 = vmul.f32 %v684, %v724
      %v733 = vmul.f32 %v685, %v725
      %v734 = vmul.f32 %v686, %v726
      %v735 = vmul.f32 %v687, %v727
      %v736 = vmul.f32 %v688, %v728
      %v737 = vmul.f32 %v689, %v729
      %v738 = vpack.c.bf16 %v730, %v730
      %v739 = vpack.c.bf16 %v731, %v731
      %v740 = vpack.c.bf16 %v732, %v732
      %v741 = vpack.c.bf16 %v733, %v733
      %v742 = vpack.c.bf16 %v734, %v734
      %v743 = vpack.c.bf16 %v735, %v735
      %v744 = vpack.c.bf16 %v736, %v736
      %v745 = vpack.c.bf16 %v737, %v737
      %vm746 = vcmask 60416
      %747 = vst.msk [vmem:[%s192] sm:$0xf] %vm746, %v738
      %748 = vst.msk [vmem:[%s192 + $0x4] sm:$0xf] %vm746, %v739
      %749 = vst.msk [vmem:[%s192 + $0x8] sm:$0xf] %vm746, %v740
      %750 = vst.msk [vmem:[%s192 + $0xc] sm:$0xf] %vm746, %v741
      %751 = vst.msk [vmem:[%s192 + $0x10] sm:$0xf] %vm746, %v742
      %752 = vst.msk [vmem:[%s192 + $0x14] sm:$0xf] %vm746, %v743
      %753 = vst.msk [vmem:[%s192 + $0x18] sm:$0xf] %vm746, %v744
      %754 = vst.msk [vmem:[%s192 + $0x1c] sm:$0xf] %vm746, %v745
      %s755 = smul.u32 8, %s19
      %p756 = scmp.lt.s32.totalorder %s18, 1
      %s757 = scalar_select %p756, %s18, 1
      %p758 = scmp.lt.s32.totalorder %s755, 7
      %s759 = scalar_select %p758, %s755, 7
      %s760 = smul.addr %s757, 8
      %s761 = sadd.s32 %s759, %s760
      %s762 = smul.addr %s761, 4
      %s763 = scalar_lea.vmem %s3, %s762
      // Predicated region
      $region33: #{pix2pix_turbo_forward.13} parent=31 // pred_check
        %p764 = pneg %p114
      $region34: #{pix2pix_turbo_forward.13} parent=31 // pred_check_branch
        %766 = sbr.rel (%p764) target = $region36
      $region35: #{pix2pix_turbo_forward.13} parent=31 // pred_region
        %s767 = smul.u32 8, %s19
      $region36: #{pix2pix_turbo_forward.13} parent=31 // pred_fallthru
        _
    $region32: #{pix2pix_turbo_forward.13} parent=5 // pred_fallthru
      _
    %p768 = scmp.le.s32.totalorder 2, %s9
    // Predicated region
    $region37: #{pix2pix_turbo_forward.13} parent=5 // pred_check
      %p769 = pneg %p768
    $region38: #{pix2pix_turbo_forward.13} parent=5 // pred_check_branch
      %771 = sbr.rel (%p769) target = $region40
    $region39: #{pix2pix_turbo_forward.13} parent=5 // pred_region
      %s772 = ssub.s32 %s9, 2
      // Predicated region
      $region41: #{pix2pix_turbo_forward.13} parent=39 // pred_check
        %p773 = pneg %p120
      $region42: #{pix2pix_turbo_forward.13} parent=39 // pred_check_branch
        %775 = sbr.rel (%p773) target = $region44
      $region43: #{pix2pix_turbo_forward.13} parent=39 // pred_region
        %s776 = smul.u32 8, %s21
        %p777 = scmp.lt.s32.totalorder %s20, 1
        %s778 = scalar_select %p777, %s20, 1
        %p779 = scmp.lt.s32.totalorder %s776, 7
        %s780 = scalar_select %p779, %s776, 7
        %s781 = smul.addr %s778, 8
        %s782 = sadd.s32 %s780, %s781
        %s783 = smul.addr %s782, 4
        %s784 = scalar_lea.vmem %s3, %s783
      $region44: #{pix2pix_turbo_forward.13} parent=39 // pred_fallthru
        _
    $region40: #{pix2pix_turbo_forward.13} parent=5 // pred_fallthru
      _
  $region6: #{pix2pix_turbo_forward.13} parent=0 // loop_footer
    %s13 = sadd.s32 1, %s9
  $region7: #{pix2pix_turbo_forward.13} parent=0 // loop_footer_branch
    %8 = sbr.rel target = $region3
  $region8: #{pix2pix_turbo_forward.13} parent=0 // loop_exit
    _

// kernel: pix2pix_turbo_forward.14
$region0: #{pix2pix_turbo_forward.14}
  #allocation0 [shape = 'u32[]', space=smem, size = 0x4, offset = 0x4, fixed_abs, tag = 'smem constant byte address 0x4 - core index']
  #allocation1 [shape = 'u32[144,128]{1,0:T(1,128)}', space=vmem, size = 0x12000, scoped, tag = 'internal scratch']
  %s0 = inlined_call_operand.vmem [shape: bf16[32,72], index: 0, kind: input, shape index: {}]
  %s1 = inlined_call_operand.vmem [shape: bf16[72,8], index: 1, kind: input, shape index: {}]
  %s2 = inlined_call_operand.vmem [shape: f32[1,8], index: 2, kind: input, shape index: {}]
  %s3 = inlined_call_operand.vmem [shape: bf16[32,8], index: 3, kind: output, shape index: {}]
  %s4 = sld [smem:[#allocation0]]
  $region22: #{pix2pix_turbo_forward.14} parent=0
    _
  %s6 = ssub.s32 1, %s4
  %s7 = scalar_select 0, %s6, %s4
  // Predicated region
  $region2: #{pix2pix_turbo_forward.14} parent=0 // pred_check
    _
  $region3: #{pix2pix_turbo_forward.14} parent=0 // pred_check_branch
    %9 = sbr.rel (0) target = $region5
  $region4: #{pix2pix_turbo_forward.14} parent=0 // pred_region
    _
  $region5: #{pix2pix_turbo_forward.14} parent=0 // pred_fallthru
    _
  // Predicated region
  $region6: #{pix2pix_turbo_forward.14} parent=0 // pred_check
    _
  $region7: #{pix2pix_turbo_forward.14} parent=0 // pred_check_branch
    %11 = sbr.rel (0) target = $region9
  $region8: #{pix2pix_turbo_forward.14} parent=0 // pred_region
    _
  $region9: #{pix2pix_turbo_forward.14} parent=0 // pred_fallthru
    _
  // Predicated region
  $region10: #{pix2pix_turbo_forward.14} parent=0 // pred_check
    _
  $region11: #{pix2pix_turbo_forward.14} parent=0 // pred_check_branch
    %13 = sbr.rel (0) target = $region13
  $region12: #{pix2pix_turbo_forward.14} parent=0 // pred_region
    _
  $region13: #{pix2pix_turbo_forward.14} parent=0 // pred_fallthru
    _
  %v15 = vld [vmem:[%s0] sm:$0xf]
  %v16 = vld [vmem:[%s0 + $0x4] sm:$0xf]
  %v17 = vld [vmem:[%s0 + $0x8] sm:$0xf]
  %v18 = vld [vmem:[%s0 + $0xc] sm:$0xf]
  %v19 = vld [vmem:[%s1] sm:$0xf]
  %v20 = vld [vmem:[%s1 + $0x4] sm:$0xf]
  %v21 = vld [vmem:[%s1 + $0x8] sm:$0xf]
  %v22 = vld [vmem:[%s1 + $0xc] sm:$0xf]
  %v23 = vld [vmem:[%s1 + $0x10] sm:$0xf]
  %v24 = vld [vmem:[%s1 + $0x14] sm:$0xf]
  %v25 = vld [vmem:[%s1 + $0x18] sm:$0xf]
  %v26 = vld [vmem:[%s1 + $0x1c] sm:$0xf]
  %v27 = vld [vmem:[%s1 + $0x20] sm:$0xf]
  %v28 = vld [vmem:[%s2] sm:$0x1]
  %v30 = vlaneseq
  %v31 = vshrl.u32 %v30, 7
  %v32 = vsub.s32 0, %v31
  %v33 = vrot.slane %v28, %v32
  %v39 = vunpack.c.l.b16 %v15
  %v40 = vunpack.c.l.b16 %v16
  %v41 = vunpack.c.l.b16 %v17
  %v42 = vunpack.c.l.b16 %v18
  %v43 = vpack.c.b16 %v40, %v39
  %v44 = vpack.c.b16 %v42, %v41
  %v54 = vunpack.c.l.b16 %v19
  %v55 = vunpack.c.l.b16 %v20
  %v56 = vunpack.c.l.b16 %v21
  %v57 = vunpack.c.l.b16 %v22
  %v58 = vunpack.c.l.b16 %v23
  %v59 = vunpack.c.l.b16 %v24
  %v60 = vunpack.c.l.b16 %v25
  %v61 = vunpack.c.l.b16 %v26
  %v62 = vunpack.c.l.b16 %v27
  %v63 = vpack.c.b16 %v55, %v54
  %v64 = vpack.c.b16 %v57, %v56
  %v65 = vpack.c.b16 %v59, %v58
  %v66 = vpack.c.b16 %v61, %v60
  %v67 = vpack.c.b16 %v62, %v62
  %vm72 = vcmask 588800
  %v74 = vsel %vm72, %v43, 0
  %v77 = vsel %vm72, %v44, 0
  %vm79 = vcmask 1043456
  %v81 = vsel %vm79, %v67, 0
  %83 = vmatprep.subr.bf16.mxu0 0
  %84 = vmatpush1.bf16.msra.mxu0 %v63
  %85 = vmatprep.subr.bf16.mxu0 0
  %86 = vmatpush1.bf16.msra.mxu0 %v64
  %87 = vmatprep.subr.bf16.mxu0 0
  %88 = vmatpush1.bf16.msra.mxu0 %v65
  %89 = vmatprep.subr.bf16.mxu0 0
  %90 = vmatpush1.bf16.msra.mxu0 %v66
  %91 = vmatprep.subr.bf16.mxu0 0
  %92 = vmatpush1.bf16.msra.mxu0 %v81
  %93 = vmatprep.subr.bf16.mxu0 0
  %94 = vmatpush1.bf16.msra.mxu0 0
  %95 = vmatprep.subr.bf16.mxu0 0
  %96 = vmatpush1.bf16.msra.mxu0 0
  %97 = vmatprep.subr.bf16.mxu0 0
  %98 = vmatpush1.bf16.msra.mxu0 0
  %99 = vmatprep.subr.bf16.mxu0 0
  %100 = vmatpush1.bf16.msra.mxu0 0
  %101 = vmatprep.subr.bf16.mxu0 0
  %102 = vmatpush1.bf16.msra.mxu0 0
  %103 = vmatprep.subr.bf16.mxu0 0
  %104 = vmatpush1.bf16.msra.mxu0 0
  %105 = vmatprep.subr.bf16.mxu0 0
  %106 = vmatpush1.bf16.msra.mxu0 0
  %107 = vmatprep.subr.bf16.mxu0 0
  %108 = vmatpush1.bf16.msra.mxu0 0
  %109 = vmatprep.subr.bf16.mxu0 0
  %110 = vmatpush1.bf16.msra.mxu0 0
  %111 = vmatprep.subr.bf16.mxu0 0
  %112 = vmatpush1.bf16.msra.mxu0 0
  %113 = vmatprep.subr.bf16.mxu0 0
  %114 = vmatpush1.bf16.msra.mxu0 0
  %115 = vmatprep.mubr.bf16.mxu0 0
  %116 = vmatmul.mubr.bf16.gmra.mrb[0].mxu0 %v74
  %v117 = vpop.f32.mrb[0].mxu0
  %v118 = vadd.f32 %v33, %v117
  %v119 = vpop.f32.mrb[0].mxu0
  %v120 = vpop.f32.mrb[0].mxu0
  %v121 = vadd.f32 %v33, %v120
  %v122 = vpop.f32.mrb[0].mxu0
  %123 = vmatprep.mubr.bf16.mxu0 0
  %124 = vmatmul.mubr.bf16.gmra.mrb[0].mxu0 %v77
  %v125 = vpop.f32.mrb[0].mxu0
  %v126 = vadd.f32 %v33, %v125
  %v127 = vpop.f32.mrb[0].mxu0
  %v128 = vpop.f32.mrb[0].mxu0
  %v129 = vadd.f32 %v33, %v128
  %v130 = vpop.f32.mrb[0].mxu0
  %131 = vdwg.mxu0
  %v132 = vsub.f32 0.0, %v118
  %v133 = vsub.f32 0.0, %v121
  %v134 = vsub.f32 0.0, %v126
  %v135 = vsub.f32 0.0, %v129
  %v136 = vmul.f32 %v132, 1.442695
  %v137 = vpow.pop %v136
  %v138 = vmul.f32 %v133, 1.442695
  %v139 = vpow.pop %v138
  %v140 = vmul.f32 %v134, 1.442695
  %v141 = vpow.pop %v140
  %v142 = vmul.f32 %v135, 1.442695
  %v143 = vpow.pop %v142
  %v144 = vadd.f32 %v137, 1.0
  %v145 = vadd.f32 %v139, 1.0
  %v146 = vadd.f32 %v141, 1.0
  %v147 = vadd.f32 %v143, 1.0
  %v148 = vrcp.pop %v144
  %v149 = vrcp.pop %v145
  %v150 = vrcp.pop %v146
  %v151 = vrcp.pop %v147
  %v152 = vmul.f32 %v118, %v148
  %v153 = vmul.f32 %v121, %v149
  %v154 = vmul.f32 %v126, %v150
  %v155 = vmul.f32 %v129, %v151
  %v156 = vpack.c.bf16 %v153, %v152
  %v157 = vpack.c.bf16 %v155, %v154
  %v160 = vunpack.c.l.b16 %v156
  %v161 = vunpack.c.h.b16 %v156
  %v162 = vunpack.c.l.b16 %v157
  %v163 = vunpack.c.h.b16 %v157
  %v164 = vpack.c.b16 %v160, %v160
  %v165 = vpack.c.b16 %v161, %v161
  %v166 = vpack.c.b16 %v162, %v162
  %v167 = vpack.c.b16 %v163, %v163
  %vm172 = vcmask 60416
  %173 = vst.msk [vmem:[%s3] sm:$0xf] %vm172, %v164
  %174 = vst.msk [vmem:[%s3 + $0x4] sm:$0xf] %vm172, %v165
  %175 = vst.msk [vmem:[%s3 + $0x8] sm:$0xf] %vm172, %v166
  %176 = vst.msk [vmem:[%s3 + $0xc] sm:$0xf] %vm172, %v167
  // Predicated region
  $region14: #{pix2pix_turbo_forward.14} parent=0 // pred_check
    _
  $region15: #{pix2pix_turbo_forward.14} parent=0 // pred_check_branch
    %178 = sbr.rel (0) target = $region17
  $region16: #{pix2pix_turbo_forward.14} parent=0 // pred_region
    _
  $region17: #{pix2pix_turbo_forward.14} parent=0 // pred_fallthru
    _
  // Predicated region
  $region18: #{pix2pix_turbo_forward.14} parent=0 // pred_check
    _
  $region19: #{pix2pix_turbo_forward.14} parent=0 // pred_check_branch
    %180 = sbr.rel (0) target = $region21
  $region20: #{pix2pix_turbo_forward.14} parent=0 // pred_region
    _
  $region21: #{pix2pix_turbo_forward.14} parent=0 // pred_fallthru
    _

// kernel: pix2pix_turbo_forward.15
$region0: #{pix2pix_turbo_forward.15}
  #allocation0 [shape = 'u32[]', space=smem, size = 0x4, offset = 0x4, fixed_abs, tag = 'smem constant byte address 0x4 - core index']
  #allocation1 [shape = 'u32[144,128]{1,0:T(1,128)}', space=vmem, size = 0x12000, scoped, tag = 'internal scratch']
  %s0 = inlined_call_operand.vmem [shape: bf16[32,8], index: 0, kind: input, shape index: {}]
  %s1 = inlined_call_operand.vmem [shape: bf16[8,4], index: 1, kind: input, shape index: {}]
  %s2 = inlined_call_operand.vmem [shape: f32[1,4], index: 2, kind: input, shape index: {}]
  %s3 = inlined_call_operand.vmem [shape: f32[32,4], index: 3, kind: input, shape index: {}]
  %s4 = inlined_call_operand.vmem [shape: f32[32,4], index: 4, kind: output, shape index: {}]
  %s5 = sld [smem:[#allocation0]]
  $region26: #{pix2pix_turbo_forward.15} parent=0
    _
  %s7 = ssub.s32 1, %s5
  %s8 = scalar_select 0, %s7, %s5
  // Predicated region
  $region2: #{pix2pix_turbo_forward.15} parent=0 // pred_check
    _
  $region3: #{pix2pix_turbo_forward.15} parent=0 // pred_check_branch
    %10 = sbr.rel (0) target = $region5
  $region4: #{pix2pix_turbo_forward.15} parent=0 // pred_region
    _
  $region5: #{pix2pix_turbo_forward.15} parent=0 // pred_fallthru
    _
  // Predicated region
  $region6: #{pix2pix_turbo_forward.15} parent=0 // pred_check
    _
  $region7: #{pix2pix_turbo_forward.15} parent=0 // pred_check_branch
    %12 = sbr.rel (0) target = $region9
  $region8: #{pix2pix_turbo_forward.15} parent=0 // pred_region
    _
  $region9: #{pix2pix_turbo_forward.15} parent=0 // pred_fallthru
    _
  // Predicated region
  $region10: #{pix2pix_turbo_forward.15} parent=0 // pred_check
    _
  $region11: #{pix2pix_turbo_forward.15} parent=0 // pred_check_branch
    %14 = sbr.rel (0) target = $region13
  $region12: #{pix2pix_turbo_forward.15} parent=0 // pred_region
    _
  $region13: #{pix2pix_turbo_forward.15} parent=0 // pred_fallthru
    _
  // Predicated region
  $region14: #{pix2pix_turbo_forward.15} parent=0 // pred_check
    _
  $region15: #{pix2pix_turbo_forward.15} parent=0 // pred_check_branch
    %16 = sbr.rel (0) target = $region17
  $region16: #{pix2pix_turbo_forward.15} parent=0 // pred_region
    _
  $region17: #{pix2pix_turbo_forward.15} parent=0 // pred_fallthru
    _
  %v18 = vld [vmem:[%s0] sm:$0xf]
  %v19 = vld [vmem:[%s0 + $0x4] sm:$0xf]
  %v20 = vld [vmem:[%s0 + $0x8] sm:$0xf]
  %v21 = vld [vmem:[%s0 + $0xc] sm:$0xf]
  %v22 = vld [vmem:[%s1] sm:$0xf]
  %v23 = vld [vmem:[%s2] sm:$0x1]
  %v25 = vlaneseq
  %v26 = vshrl.u32 %v25, 7
  %v27 = vsub.s32 0, %v26
  %v28 = vrot.slane %v23, %v27
  %v34 = vunpack.c.l.b16 %v18
  %v35 = vunpack.c.l.b16 %v19
  %v36 = vunpack.c.l.b16 %v20
  %v37 = vunpack.c.l.b16 %v21
  %v38 = vpack.c.b16 %v35, %v34
  %v39 = vpack.c.b16 %v37, %v36
  %vm40 = vcmask 64512
  %v42 = vsel %vm40, %v38, 0
  %v45 = vsel %vm40, %v39, 0
  %vm47 = vcmask 1043456
  %v49 = vsel %vm47, %v22, 0
  %51 = vmatprep.subr.bf16.mxu0 0
  %52 = vmatpush1.bf16.msra.mxu0 %v49
  %53 = vmatprep.subr.bf16.mxu0 0
  %54 = vmatpush1.bf16.msra.mxu0 0
  %55 = vmatprep.subr.bf16.mxu0 0
  %56 = vmatpush1.bf16.msra.mxu0 0
  %57 = vmatprep.subr.bf16.mxu0 0
  %58 = vmatpush1.bf16.msra.mxu0 0
  %59 = vmatprep.subr.bf16.mxu0 0
  %60 = vmatpush1.bf16.msra.mxu0 0
  %61 = vmatprep.subr.bf16.mxu0 0
  %62 = vmatpush1.bf16.msra.mxu0 0
  %63 = vmatprep.subr.bf16.mxu0 0
  %64 = vmatpush1.bf16.msra.mxu0 0
  %65 = vmatprep.subr.bf16.mxu0 0
  %66 = vmatpush1.bf16.msra.mxu0 0
  %67 = vmatprep.subr.bf16.mxu0 0
  %68 = vmatpush1.bf16.msra.mxu0 0
  %69 = vmatprep.subr.bf16.mxu0 0
  %70 = vmatpush1.bf16.msra.mxu0 0
  %71 = vmatprep.subr.bf16.mxu0 0
  %72 = vmatpush1.bf16.msra.mxu0 0
  %73 = vmatprep.subr.bf16.mxu0 0
  %74 = vmatpush1.bf16.msra.mxu0 0
  %75 = vmatprep.subr.bf16.mxu0 0
  %76 = vmatpush1.bf16.msra.mxu0 0
  %77 = vmatprep.subr.bf16.mxu0 0
  %78 = vmatpush1.bf16.msra.mxu0 0
  %79 = vmatprep.subr.bf16.mxu0 0
  %80 = vmatpush1.bf16.msra.mxu0 0
  %81 = vmatprep.subr.bf16.mxu0 0
  %82 = vmatpush1.bf16.msra.mxu0 0
  %83 = vmatprep.mubr.bf16.mxu0 0
  %84 = vmatmul.mubr.bf16.gmra.mrb[0].mxu0 %v42
  %v85 = vpop.f32.mrb[0].mxu0
  %v86 = vadd.f32 %v28, %v85
  %v87 = vpop.f32.mrb[0].mxu0
  %v88 = vpop.f32.mrb[0].mxu0
  %v89 = vadd.f32 %v28, %v88
  %v90 = vpop.f32.mrb[0].mxu0
  %91 = vmatprep.mubr.bf16.mxu0 0
  %92 = vmatmul.mubr.bf16.gmra.mrb[0].mxu0 %v45
  %v93 = vpop.f32.mrb[0].mxu0
  %v94 = vadd.f32 %v28, %v93
  %v95 = vpop.f32.mrb[0].mxu0
  %v96 = vpop.f32.mrb[0].mxu0
  %v97 = vadd.f32 %v28, %v96
  %v98 = vpop.f32.mrb[0].mxu0
  %99 = vdwg.mxu0
  %v100 = vmul.f32 %v86, 0.10929
  %v101 = vmul.f32 %v89, 0.10929
  %v102 = vmul.f32 %v94, 0.10929
  %v103 = vmul.f32 %v97, 0.10929
  %v104 = vld [vmem:[%s3] sm:$0xff]
  %v105 = vld [vmem:[%s3 + $0x8] sm:$0xff]
  %v106 = vld [vmem:[%s3 + $0x10] sm:$0xff]
  %v107 = vld [vmem:[%s3 + $0x18] sm:$0xff]
  %v108 = vmul.f32 %v104, 0.4
  %v109 = vmul.f32 %v105, 0.4
  %v110 = vmul.f32 %v106, 0.4
  %v111 = vmul.f32 %v107, 0.4
  %v112 = vadd.f32 %v100, %v108
  %v113 = vadd.f32 %v101, %v109
  %v114 = vadd.f32 %v102, %v110
  %v115 = vadd.f32 %v103, %v111
  %vm116 = vcmask 31744
  %117 = vst.msk [vmem:[%s4] sm:$0xff] %vm116, %v112
  %118 = vst.msk [vmem:[%s4 + $0x8] sm:$0xff] %vm116, %v113
  %119 = vst.msk [vmem:[%s4 + $0x10] sm:$0xff] %vm116, %v114
  %120 = vst.msk [vmem:[%s4 + $0x18] sm:$0xff] %vm116, %v115
  // Predicated region
  $region18: #{pix2pix_turbo_forward.15} parent=0 // pred_check
    _
  $region19: #{pix2pix_turbo_forward.15} parent=0 // pred_check_branch
    %122 = sbr.rel (0) target = $region21
  $region20: #{pix2pix_turbo_forward.15} parent=0 // pred_region
    _
  $region21: #{pix2pix_turbo_forward.15} parent=0 // pred_fallthru
    _
  // Predicated region
  $region22: #{pix2pix_turbo_forward.15} parent=0 // pred_check
    _
  $region23: #{pix2pix_turbo_forward.15} parent=0 // pred_check_branch
    %124 = sbr.rel (0) target = $region25
  $region24: #{pix2pix_turbo_forward.15} parent=0 // pred_region
    _
  $region25: #{pix2pix_turbo_forward.15} parent=0 // pred_fallthru
    _

// kernel: pix2pix_turbo_forward.17
$region0: #{pix2pix_turbo_forward.17}
  #allocation0 [shape = 'u32[]', space=smem, size = 0x4, offset = 0x4, fixed_abs, tag = 'smem constant byte address 0x4 - core index']
  #allocation1 [shape = 'u32[144,128]{1,0:T(1,128)}', space=vmem, size = 0x12000, scoped, tag = 'internal scratch']
  %s0 = inlined_call_operand.vmem [shape: bf16[32,16], index: 0, kind: input, shape index: {}]
  %s1 = inlined_call_operand.vmem [shape: bf16[16,16], index: 1, kind: input, shape index: {}]
  %s2 = inlined_call_operand.vmem [shape: f32[1,16], index: 2, kind: input, shape index: {}]
  %s3 = inlined_call_operand.vmem [shape: bf16[32,16], index: 3, kind: output, shape index: {}]
  %s4 = sld [smem:[#allocation0]]
  $region22: #{pix2pix_turbo_forward.17} parent=0
    _
  %s6 = ssub.s32 1, %s4
  %s7 = scalar_select 0, %s6, %s4
  // Predicated region
  $region2: #{pix2pix_turbo_forward.17} parent=0 // pred_check
    _
  $region3: #{pix2pix_turbo_forward.17} parent=0 // pred_check_branch
    %9 = sbr.rel (0) target = $region5
  $region4: #{pix2pix_turbo_forward.17} parent=0 // pred_region
    _
  $region5: #{pix2pix_turbo_forward.17} parent=0 // pred_fallthru
    _
  // Predicated region
  $region6: #{pix2pix_turbo_forward.17} parent=0 // pred_check
    _
  $region7: #{pix2pix_turbo_forward.17} parent=0 // pred_check_branch
    %11 = sbr.rel (0) target = $region9
  $region8: #{pix2pix_turbo_forward.17} parent=0 // pred_region
    _
  $region9: #{pix2pix_turbo_forward.17} parent=0 // pred_fallthru
    _
  // Predicated region
  $region10: #{pix2pix_turbo_forward.17} parent=0 // pred_check
    _
  $region11: #{pix2pix_turbo_forward.17} parent=0 // pred_check_branch
    %13 = sbr.rel (0) target = $region13
  $region12: #{pix2pix_turbo_forward.17} parent=0 // pred_region
    _
  $region13: #{pix2pix_turbo_forward.17} parent=0 // pred_fallthru
    _
  %v15 = vld [vmem:[%s0] sm:$0xf]
  %v16 = vld [vmem:[%s0 + $0x4] sm:$0xf]
  %v17 = vld [vmem:[%s0 + $0x8] sm:$0xf]
  %v18 = vld [vmem:[%s0 + $0xc] sm:$0xf]
  %v19 = vld [vmem:[%s1] sm:$0xf]
  %v20 = vld [vmem:[%s1 + $0x4] sm:$0xf]
  %v21 = vld [vmem:[%s2] sm:$0x1]
  %v23 = vlaneseq
  %v24 = vshrl.u32 %v23, 7
  %v25 = vsub.s32 0, %v24
  %v26 = vrot.slane %v21, %v25
  %v32 = vunpack.c.l.b16 %v15
  %v33 = vunpack.c.l.b16 %v16
  %v34 = vunpack.c.l.b16 %v17
  %v35 = vunpack.c.l.b16 %v18
  %v36 = vpack.c.b16 %v33, %v32
  %v37 = vpack.c.b16 %v35, %v34
  %v40 = vunpack.c.l.b16 %v19
  %v41 = vunpack.c.l.b16 %v20
  %v42 = vpack.c.b16 %v41, %v40
  %vm44 = vcmask 130048
  %v46 = vsel %vm44, %v36, 0
  %v49 = vsel %vm44, %v37, 0
  %51 = vmatprep.subr.bf16.mxu0 0
  %52 = vmatpush1.bf16.msra.mxu0 %v42
  %53 = vmatprep.subr.bf16.mxu0 0
  %54 = vmatpush1.bf16.msra.mxu0 0
  %55 = vmatprep.subr.bf16.mxu0 0
  %56 = vmatpush1.bf16.msra.mxu0 0
  %57 = vmatprep.subr.bf16.mxu0 0
  %58 = vmatpush1.bf16.msra.mxu0 0
  %59 = vmatprep.subr.bf16.mxu0 0
  %60 = vmatpush1.bf16.msra.mxu0 0
  %61 = vmatprep.subr.bf16.mxu0 0
  %62 = vmatpush1.bf16.msra.mxu0 0
  %63 = vmatprep.subr.bf16.mxu0 0
  %64 = vmatpush1.bf16.msra.mxu0 0
  %65 = vmatprep.subr.bf16.mxu0 0
  %66 = vmatpush1.bf16.msra.mxu0 0
  %67 = vmatprep.subr.bf16.mxu0 0
  %68 = vmatpush1.bf16.msra.mxu0 0
  %69 = vmatprep.subr.bf16.mxu0 0
  %70 = vmatpush1.bf16.msra.mxu0 0
  %71 = vmatprep.subr.bf16.mxu0 0
  %72 = vmatpush1.bf16.msra.mxu0 0
  %73 = vmatprep.subr.bf16.mxu0 0
  %74 = vmatpush1.bf16.msra.mxu0 0
  %75 = vmatprep.subr.bf16.mxu0 0
  %76 = vmatpush1.bf16.msra.mxu0 0
  %77 = vmatprep.subr.bf16.mxu0 0
  %78 = vmatpush1.bf16.msra.mxu0 0
  %79 = vmatprep.subr.bf16.mxu0 0
  %80 = vmatpush1.bf16.msra.mxu0 0
  %81 = vmatprep.subr.bf16.mxu0 0
  %82 = vmatpush1.bf16.msra.mxu0 0
  %83 = vmatprep.mubr.bf16.mxu0 0
  %84 = vmatmul.mubr.bf16.gmra.mrb[0].mxu0 %v46
  %v85 = vpop.f32.mrb[0].mxu0
  %v86 = vadd.f32 %v26, %v85
  %v87 = vpop.f32.mrb[0].mxu0
  %v88 = vpop.f32.mrb[0].mxu0
  %v89 = vadd.f32 %v26, %v88
  %v90 = vpop.f32.mrb[0].mxu0
  %91 = vmatprep.mubr.bf16.mxu0 0
  %92 = vmatmul.mubr.bf16.gmra.mrb[0].mxu0 %v49
  %v93 = vpop.f32.mrb[0].mxu0
  %v94 = vadd.f32 %v26, %v93
  %v95 = vpop.f32.mrb[0].mxu0
  %v96 = vpop.f32.mrb[0].mxu0
  %v97 = vadd.f32 %v26, %v96
  %v98 = vpop.f32.mrb[0].mxu0
  %99 = vdwg.mxu0
  %v100 = vmul.f32 %v86, 0.25
  %v101 = vmul.f32 %v89, 0.25
  %v102 = vmul.f32 %v94, 0.25
  %v103 = vmul.f32 %v97, 0.25
  %v104 = vpack.c.bf16 %v101, %v100
  %v105 = vpack.c.bf16 %v103, %v102
  %v108 = vunpack.c.l.b16 %v104
  %v109 = vunpack.c.h.b16 %v104
  %v110 = vunpack.c.l.b16 %v105
  %v111 = vunpack.c.h.b16 %v105
  %v112 = vpack.c.b16 %v108, %v108
  %v113 = vpack.c.b16 %v109, %v109
  %v114 = vpack.c.b16 %v110, %v110
  %v115 = vpack.c.b16 %v111, %v111
  %vm120 = vcmask 125952
  %121 = vst.msk [vmem:[%s3] sm:$0xf] %vm120, %v112
  %122 = vst.msk [vmem:[%s3 + $0x4] sm:$0xf] %vm120, %v113
  %123 = vst.msk [vmem:[%s3 + $0x8] sm:$0xf] %vm120, %v114
  %124 = vst.msk [vmem:[%s3 + $0xc] sm:$0xf] %vm120, %v115
  // Predicated region
  $region14: #{pix2pix_turbo_forward.17} parent=0 // pred_check
    _
  $region15: #{pix2pix_turbo_forward.17} parent=0 // pred_check_branch
    %126 = sbr.rel (0) target = $region17
  $region16: #{pix2pix_turbo_forward.17} parent=0 // pred_region
    _
  $region17: #{pix2pix_turbo_forward.17} parent=0 // pred_fallthru
    _
  // Predicated region
  $region18: #{pix2pix_turbo_forward.17} parent=0 // pred_check
    _
  $region19: #{pix2pix_turbo_forward.17} parent=0 // pred_check_branch
    %128 = sbr.rel (0) target = $region21
  $region20: #{pix2pix_turbo_forward.17} parent=0 // pred_region
    _
  $region21: #{pix2pix_turbo_forward.17} parent=0 // pred_fallthru
    _

// kernel: pix2pix_turbo_forward.16
$region0: #{pix2pix_turbo_forward.16}
  #allocation0 [shape = 'u32[]', space=smem, size = 0x4, offset = 0x4, fixed_abs, tag = 'smem constant byte address 0x4 - core index']
  #allocation1 [shape = 'u32[144,128]{1,0:T(1,128)}', space=vmem, size = 0x12000, scoped, tag = 'internal scratch']
  %s0 = inlined_call_operand.vmem [shape: bf16[32,36], index: 0, kind: input, shape index: {}]
  %s1 = inlined_call_operand.vmem [shape: bf16[36,16], index: 1, kind: input, shape index: {}]
  %s2 = inlined_call_operand.vmem [shape: f32[1,16], index: 2, kind: input, shape index: {}]
  %s3 = inlined_call_operand.vmem [shape: bf16[32,16], index: 3, kind: output, shape index: {}]
  %s4 = sld [smem:[#allocation0]]
  $region22: #{pix2pix_turbo_forward.16} parent=0
    _
  %s6 = ssub.s32 1, %s4
  %s7 = scalar_select 0, %s6, %s4
  // Predicated region
  $region2: #{pix2pix_turbo_forward.16} parent=0 // pred_check
    _
  $region3: #{pix2pix_turbo_forward.16} parent=0 // pred_check_branch
    %9 = sbr.rel (0) target = $region5
  $region4: #{pix2pix_turbo_forward.16} parent=0 // pred_region
    _
  $region5: #{pix2pix_turbo_forward.16} parent=0 // pred_fallthru
    _
  // Predicated region
  $region6: #{pix2pix_turbo_forward.16} parent=0 // pred_check
    _
  $region7: #{pix2pix_turbo_forward.16} parent=0 // pred_check_branch
    %11 = sbr.rel (0) target = $region9
  $region8: #{pix2pix_turbo_forward.16} parent=0 // pred_region
    _
  $region9: #{pix2pix_turbo_forward.16} parent=0 // pred_fallthru
    _
  // Predicated region
  $region10: #{pix2pix_turbo_forward.16} parent=0 // pred_check
    _
  $region11: #{pix2pix_turbo_forward.16} parent=0 // pred_check_branch
    %13 = sbr.rel (0) target = $region13
  $region12: #{pix2pix_turbo_forward.16} parent=0 // pred_region
    _
  $region13: #{pix2pix_turbo_forward.16} parent=0 // pred_fallthru
    _
  %v15 = vld [vmem:[%s0] sm:$0xf]
  %v16 = vld [vmem:[%s0 + $0x4] sm:$0xf]
  %v17 = vld [vmem:[%s0 + $0x8] sm:$0xf]
  %v18 = vld [vmem:[%s0 + $0xc] sm:$0xf]
  %v19 = vld [vmem:[%s1] sm:$0xf]
  %v20 = vld [vmem:[%s1 + $0x4] sm:$0xf]
  %v21 = vld [vmem:[%s1 + $0x8] sm:$0xf]
  %v22 = vld [vmem:[%s1 + $0xc] sm:$0xf]
  %v23 = vld [vmem:[%s1 + $0x10] sm:$0x3]
  %v24 = vld [vmem:[%s2] sm:$0x1]
  %v26 = vlaneseq
  %v27 = vshrl.u32 %v26, 7
  %v28 = vsub.s32 0, %v27
  %v29 = vrot.slane %v24, %v28
  %v35 = vunpack.c.l.b16 %v15
  %v36 = vunpack.c.l.b16 %v16
  %v37 = vunpack.c.l.b16 %v17
  %v38 = vunpack.c.l.b16 %v18
  %v39 = vpack.c.b16 %v36, %v35
  %v40 = vpack.c.b16 %v38, %v37
  %v46 = vunpack.c.l.b16 %v19
  %v47 = vunpack.c.l.b16 %v20
  %v48 = vunpack.c.l.b16 %v21
  %v49 = vunpack.c.l.b16 %v22
  %v50 = vunpack.c.l.b16 %v23
  %v51 = vpack.c.b16 %v47, %v46
  %v52 = vpack.c.b16 %v49, %v48
  %v53 = vpack.c.b16 %v50, %v50
  %vm56 = vcmask 293888
  %v58 = vsel %vm56, %v39, 0
  %v61 = vsel %vm56, %v40, 0
  %vm63 = vcmask 1041408
  %v65 = vsel %vm63, %v53, 0
  %67 = vmatprep.subr.bf16.mxu0 0
  %68 = vmatpush1.bf16.msra.mxu0 %v51
  %69 = vmatprep.subr.bf16.mxu0 0
  %70 = vmatpush1.bf16.msra.mxu0 %v52
  %71 = vmatprep.subr.bf16.mxu0 0
  %72 = vmatpush1.bf16.msra.mxu0 %v65
  %73 = vmatprep.subr.bf16.mxu0 0
  %74 = vmatpush1.bf16.msra.mxu0 0
  %75 = vmatprep.subr.bf16.mxu0 0
  %76 = vmatpush1.bf16.msra.mxu0 0
  %77 = vmatprep.subr.bf16.mxu0 0
  %78 = vmatpush1.bf16.msra.mxu0 0
  %79 = vmatprep.subr.bf16.mxu0 0
  %80 = vmatpush1.bf16.msra.mxu0 0
  %81 = vmatprep.subr.bf16.mxu0 0
  %82 = vmatpush1.bf16.msra.mxu0 0
  %83 = vmatprep.subr.bf16.mxu0 0
  %84 = vmatpush1.bf16.msra.mxu0 0
  %85 = vmatprep.subr.bf16.mxu0 0
  %86 = vmatpush1.bf16.msra.mxu0 0
  %87 = vmatprep.subr.bf16.mxu0 0
  %88 = vmatpush1.bf16.msra.mxu0 0
  %89 = vmatprep.subr.bf16.mxu0 0
  %90 = vmatpush1.bf16.msra.mxu0 0
  %91 = vmatprep.subr.bf16.mxu0 0
  %92 = vmatpush1.bf16.msra.mxu0 0
  %93 = vmatprep.subr.bf16.mxu0 0
  %94 = vmatpush1.bf16.msra.mxu0 0
  %95 = vmatprep.subr.bf16.mxu0 0
  %96 = vmatpush1.bf16.msra.mxu0 0
  %97 = vmatprep.subr.bf16.mxu0 0
  %98 = vmatpush1.bf16.msra.mxu0 0
  %99 = vmatprep.mubr.bf16.mxu0 0
  %100 = vmatmul.mubr.bf16.gmra.mrb[0].mxu0 %v58
  %v101 = vpop.f32.mrb[0].mxu0
  %v102 = vadd.f32 %v29, %v101
  %v103 = vpop.f32.mrb[0].mxu0
  %v104 = vpop.f32.mrb[0].mxu0
  %v105 = vadd.f32 %v29, %v104
  %v106 = vpop.f32.mrb[0].mxu0
  %107 = vmatprep.mubr.bf16.mxu0 0
  %108 = vmatmul.mubr.bf16.gmra.mrb[0].mxu0 %v61
  %v109 = vpop.f32.mrb[0].mxu0
  %v110 = vadd.f32 %v29, %v109
  %v111 = vpop.f32.mrb[0].mxu0
  %v112 = vpop.f32.mrb[0].mxu0
  %v113 = vadd.f32 %v29, %v112
  %v114 = vpop.f32.mrb[0].mxu0
  %115 = vdwg.mxu0
  %v116 = vpack.c.bf16 %v105, %v102
  %v117 = vpack.c.bf16 %v113, %v110
  %v120 = vunpack.c.l.b16 %v116
  %v121 = vunpack.c.h.b16 %v116
  %v122 = vunpack.c.l.b16 %v117
  %v123 = vunpack.c.h.b16 %v117
  %v124 = vpack.c.b16 %v120, %v120
  %v125 = vpack.c.b16 %v121, %v121
  %v126 = vpack.c.b16 %v122, %v122
  %v127 = vpack.c.b16 %v123, %v123
  %vm132 = vcmask 125952
  %133 = vst.msk [vmem:[%s3] sm:$0xf] %vm132, %v124
  %134 = vst.msk [vmem:[%s3 + $0x4] sm:$0xf] %vm132, %v125
  %135 = vst.msk [vmem:[%s3 + $0x8] sm:$0xf] %vm132, %v126
  %136 = vst.msk [vmem:[%s3 + $0xc] sm:$0xf] %vm132, %v127
  // Predicated region
  $region14: #{pix2pix_turbo_forward.16} parent=0 // pred_check
    _
  $region15: #{pix2pix_turbo_forward.16} parent=0 // pred_check_branch
    %138 = sbr.rel (0) target = $region17
  $region16: #{pix2pix_turbo_forward.16} parent=0 // pred_region
    _
  $region17: #{pix2pix_turbo_forward.16} parent=0 // pred_fallthru
    _
  // Predicated region
  $region18: #{pix2pix_turbo_forward.16} parent=0 // pred_check
    _
  $region19: #{pix2pix_turbo_forward.16} parent=0 // pred_check_branch
    %140 = sbr.rel (0) target = $region21
  $region20: #{pix2pix_turbo_forward.16} parent=0 // pred_region
    _
  $region21: #{pix2pix_turbo_forward.16} parent=0 // pred_fallthru
    _

// kernel: pix2pix_turbo_forward.18
$region0: #{pix2pix_turbo_forward.18}
  #allocation0 [shape = 'u32[]', space=smem, size = 0x4, offset = 0x4, fixed_abs, tag = 'smem constant byte address 0x4 - core index']
  #allocation1 [shape = 'u32[144,128]{1,0:T(1,128)}', space=vmem, size = 0x12000, scoped, tag = 'internal scratch']
  %s0 = inlined_call_operand.vmem [shape: bf16[16,16], index: 0, kind: input, shape index: {}]
  %s1 = inlined_call_operand.vmem [shape: bf16[16,32], index: 1, kind: input, shape index: {}]
  %s2 = inlined_call_operand.vmem [shape: f32[1,32], index: 2, kind: input, shape index: {}]
  %s3 = inlined_call_operand.vmem [shape: bf16[16,32], index: 3, kind: output, shape index: {}]
  %s4 = sld [smem:[#allocation0]]
  $region22: #{pix2pix_turbo_forward.18} parent=0
    _
  %s6 = ssub.s32 1, %s4
  %s7 = scalar_select 0, %s6, %s4
  // Predicated region
  $region2: #{pix2pix_turbo_forward.18} parent=0 // pred_check
    _
  $region3: #{pix2pix_turbo_forward.18} parent=0 // pred_check_branch
    %9 = sbr.rel (0) target = $region5
  $region4: #{pix2pix_turbo_forward.18} parent=0 // pred_region
    _
  $region5: #{pix2pix_turbo_forward.18} parent=0 // pred_fallthru
    _
  // Predicated region
  $region6: #{pix2pix_turbo_forward.18} parent=0 // pred_check
    _
  $region7: #{pix2pix_turbo_forward.18} parent=0 // pred_check_branch
    %11 = sbr.rel (0) target = $region9
  $region8: #{pix2pix_turbo_forward.18} parent=0 // pred_region
    _
  $region9: #{pix2pix_turbo_forward.18} parent=0 // pred_fallthru
    _
  // Predicated region
  $region10: #{pix2pix_turbo_forward.18} parent=0 // pred_check
    _
  $region11: #{pix2pix_turbo_forward.18} parent=0 // pred_check_branch
    %13 = sbr.rel (0) target = $region13
  $region12: #{pix2pix_turbo_forward.18} parent=0 // pred_region
    _
  $region13: #{pix2pix_turbo_forward.18} parent=0 // pred_fallthru
    _
  %v15 = vld [vmem:[%s0] sm:$0xf]
  %v16 = vld [vmem:[%s0 + $0x4] sm:$0xf]
  %v17 = vld [vmem:[%s1] sm:$0xf]
  %v18 = vld [vmem:[%s1 + $0x4] sm:$0xf]
  %v19 = vld [vmem:[%s2] sm:$0x1]
  %v21 = vlaneseq
  %v22 = vshrl.u32 %v21, 7
  %v23 = vsub.s32 0, %v22
  %v24 = vrot.slane %v19, %v23
  %v28 = vunpack.c.l.b16 %v15
  %v29 = vunpack.c.l.b16 %v16
  %v30 = vpack.c.b16 %v29, %v28
  %v33 = vunpack.c.l.b16 %v17
  %v34 = vunpack.c.l.b16 %v18
  %v35 = vpack.c.b16 %v34, %v33
  %vm37 = vcmask 130048
  %v39 = vsel %vm37, %v30, 0
  %41 = vmatprep.subr.bf16.mxu0 0
  %42 = vmatpush1.bf16.msra.mxu0 %v35
  %43 = vmatprep.subr.bf16.mxu0 0
  %44 = vmatpush1.bf16.msra.mxu0 0
  %45 = vmatprep.subr.bf16.mxu0 0
  %46 = vmatpush1.bf16.msra.mxu0 0
  %47 = vmatprep.subr.bf16.mxu0 0
  %48 = vmatpush1.bf16.msra.mxu0 0
  %49 = vmatprep.subr.bf16.mxu0 0
  %50 = vmatpush1.bf16.msra.mxu0 0
  %51 = vmatprep.subr.bf16.mxu0 0
  %52 = vmatpush1.bf16.msra.mxu0 0
  %53 = vmatprep.subr.bf16.mxu0 0
  %54 = vmatpush1.bf16.msra.mxu0 0
  %55 = vmatprep.subr.bf16.mxu0 0
  %56 = vmatpush1.bf16.msra.mxu0 0
  %57 = vmatprep.subr.bf16.mxu0 0
  %58 = vmatpush1.bf16.msra.mxu0 0
  %59 = vmatprep.subr.bf16.mxu0 0
  %60 = vmatpush1.bf16.msra.mxu0 0
  %61 = vmatprep.subr.bf16.mxu0 0
  %62 = vmatpush1.bf16.msra.mxu0 0
  %63 = vmatprep.subr.bf16.mxu0 0
  %64 = vmatpush1.bf16.msra.mxu0 0
  %65 = vmatprep.subr.bf16.mxu0 0
  %66 = vmatpush1.bf16.msra.mxu0 0
  %67 = vmatprep.subr.bf16.mxu0 0
  %68 = vmatpush1.bf16.msra.mxu0 0
  %69 = vmatprep.subr.bf16.mxu0 0
  %70 = vmatpush1.bf16.msra.mxu0 0
  %71 = vmatprep.subr.bf16.mxu0 0
  %72 = vmatpush1.bf16.msra.mxu0 0
  %73 = vmatprep.mubr.bf16.mxu0 0
  %74 = vmatmul.mubr.bf16.gmra.mrb[0].mxu0 %v39
  %v75 = vpop.f32.mrb[0].mxu0
  %v76 = vadd.f32 %v24, %v75
  %v77 = vpop.f32.mrb[0].mxu0
  %v78 = vpop.f32.mrb[0].mxu0
  %v79 = vadd.f32 %v24, %v78
  %v80 = vpop.f32.mrb[0].mxu0
  %81 = vdwg.mxu0
  %v82 = vpack.c.bf16 %v79, %v76
  %v84 = vunpack.c.l.b16 %v82
  %v85 = vunpack.c.h.b16 %v82
  %v86 = vpack.c.b16 %v84, %v84
  %v87 = vpack.c.b16 %v85, %v85
  %vm90 = vcmask 257024
  %91 = vst.msk [vmem:[%s3] sm:$0xf] %vm90, %v86
  %92 = vst.msk [vmem:[%s3 + $0x4] sm:$0xf] %vm90, %v87
  // Predicated region
  $region14: #{pix2pix_turbo_forward.18} parent=0 // pred_check
    _
  $region15: #{pix2pix_turbo_forward.18} parent=0 // pred_check_branch
    %94 = sbr.rel (0) target = $region17
  $region16: #{pix2pix_turbo_forward.18} parent=0 // pred_region
    _
  $region17: #{pix2pix_turbo_forward.18} parent=0 // pred_fallthru
    _
  // Predicated region
  $region18: #{pix2pix_turbo_forward.18} parent=0 // pred_check
    _
  $region19: #{pix2pix_turbo_forward.18} parent=0 // pred_check_branch
    %96 = sbr.rel (0) target = $region21
  $region20: #{pix2pix_turbo_forward.18} parent=0 // pred_region
    _
  $region21: #{pix2pix_turbo_forward.18} parent=0 // pred_fallthru
    _

// kernel: pix2pix_turbo_forward.19
$region0: #{pix2pix_turbo_forward.19}
  #allocation0 [shape = 'u32[]', space=smem, size = 0x4, offset = 0x4, fixed_abs, tag = 'smem constant byte address 0x4 - core index']
  #allocation1 [shape = 'u32[144,128]{1,0:T(1,128)}', space=vmem, size = 0x12000, scoped, tag = 'internal scratch']
  %s0 = inlined_call_operand.vmem [shape: bf16[2,16,16], index: 0, kind: input, shape index: {}]
  %s1 = inlined_call_operand.vmem [shape: bf16[2,8,16], index: 1, kind: input, shape index: {}]
  %s2 = inlined_call_operand.vmem [shape: bf16[2,8,16], index: 2, kind: input, shape index: {}]
  %s3 = inlined_call_operand.vmem [shape: bf16[2,16,16], index: 3, kind: output, shape index: {}]
  %s4 = sld [smem:[#allocation0]]
  $region45: #{pix2pix_turbo_forward.19} parent=0
    _
  %s6 = ssub.s32 1, %s4
  %s7 = scalar_select 0, %s6, %s4
  loop: start=0, step=1, limit=4
  $region2: #{pix2pix_turbo_forward.19} parent=0 // loop_pre_header
    _
  $region3: #{pix2pix_turbo_forward.19} parent=0 // loop_header
    %s9 = sphi 0, %s13
    %p10 = scmp.ge.s32.totalorder %s9, 4
    %s16 = sphi 0, %s28
    %s17 = sphi 0, %s24
    %s18 = sphi 0, %s16
    %s19 = sphi 0, %s17
    %s20 = sphi 0, %s18
    %s21 = sphi 0, %s19
    %s33 = sphi 0, %s35
    %s36 = sphi 0, %s33
    %s37 = sphi 0, %s36
    %s53 = sphi 0, %s37
    %s59 = sphi 0, %s61
    %s62 = sphi 0, %s59
    %s63 = sphi 0, %s62
    %s79 = sphi 0, %s63
    %s85 = sphi 0, %s87
    %s88 = sphi 0, %s85
    %s89 = sphi 0, %s88
    %s105 = sphi 0, %s89
    %s113 = sphi 0, %s115
    %s116 = sphi 0, %s113
    %s117 = sphi 0, %s116
    %s133 = sphi 0, %s117
  $region4: #{pix2pix_turbo_forward.19} parent=0 // loop_header_branch
    %12 = sbr.rel (%p10) target = $region8
  $region5: #{pix2pix_turbo_forward.19} parent=0 // loop_body
    %s14 = ssub.s32 %s9, 1
    %s15 = ssub.s32 %s9, 2
    %s22 = sadd.s32 1, %s17
    %p23 = scmp.ge.s32.totalorder %s22, 1
    %s24 = scalar_select %p23, 0, %s22
    %s25 = sadd.s32 1, %s16
    %s26 = scalar_select %p23, %s25, %s16
    %p27 = scmp.ge.s32.totalorder %s26, 2
    %s28 = scalar_select %p27, 0, %s26
    %s29 = ssub.s32 %s16, %s28
    %s30 = ssub.s32 %s17, %s24
    %s31 = sor.u32 %s29, %s30
    %p32 = scmp.eq.s32.totalorder %s31, 0
    %s34 = sadd.s32 %s33, 1
    %s35 = scalar_select %p32, %s33, %s34
    %p38 = pneg %p32
    %p39 = scmp.eq.s32.totalorder %s9, 1
    %p40 = por %p38, %p39
    %p41 = scmp.ne.s32.totalorder %s33, %s36
    %p42 = scmp.eq.s32.totalorder %s9, 0
    %p43 = por %p41, %p42
    %p44 = scmp.ne.s32.totalorder %s33, %s36
    %p45 = scmp.eq.s32.totalorder %s14, 1
    %p46 = por %p44, %p45
    %p47 = scmp.ne.s32.totalorder %s36, %s37
    %p48 = scmp.eq.s32.totalorder %s14, 0
    %p49 = por %p47, %p48
    %p50 = scmp.ne.s32.totalorder %s36, %s37
    %p51 = scmp.eq.s32.totalorder %s15, 1
    %p52 = por %p50, %p51
    %p54 = scmp.ne.s32.totalorder %s37, %s53
    %p55 = scmp.eq.s32.totalorder %s15, 0
    %p56 = por %p54, %p55
    %s57 = ssub.s32 %s16, %s28
    %p58 = scmp.eq.s32.totalorder %s57, 0
    %s60 = sadd.s32 %s59, 1
    %s61 = scalar_select %p58, %s59, %s60
    %p64 = pneg %p58
    %p65 = scmp.eq.s32.totalorder %s9, 1
    %p66 = por %p64, %p65
    %p67 = scmp.ne.s32.totalorder %s59, %s62
    %p68 = scmp.eq.s32.totalorder %s9, 0
    %p69 = por %p67, %p68
    %p70 = scmp.ne.s32.totalorder %s59, %s62
    %p71 = scmp.eq.s32.totalorder %s14, 1
    %p72 = por %p70, %p71
    %p73 = scmp.ne.s32.totalorder %s62, %s63
    %p74 = scmp.eq.s32.totalorder %s14, 0
    %p75 = por %p73, %p74
    %p76 = scmp.ne.s32.totalorder %s62, %s63
    %p77 = scmp.eq.s32.totalorder %s15, 1
    %p78 = por %p76, %p77
    %p80 = scmp.ne.s32.totalorder %s63, %s79
    %p81 = scmp.eq.s32.totalorder %s15, 0
    %p82 = por %p80, %p81
    %s83 = ssub.s32 %s16, %s28
    %p84 = scmp.eq.s32.totalorder %s83, 0
    %s86 = sadd.s32 %s85, 1
    %s87 = scalar_select %p84, %s85, %s86
    %p90 = pneg %p84
    %p91 = scmp.eq.s32.totalorder %s9, 1
    %p92 = por %p90, %p91
    %p93 = scmp.ne.s32.totalorder %s85, %s88
    %p94 = scmp.eq.s32.totalorder %s9, 0
    %p95 = por %p93, %p94
    %p96 = scmp.ne.s32.totalorder %s85, %s88
    %p97 = scmp.eq.s32.totalorder %s14, 1
    %p98 = por %p96, %p97
    %p99 = scmp.ne.s32.totalorder %s88, %s89
    %p100 = scmp.eq.s32.totalorder %s14, 0
    %p101 = por %p99, %p100
    %p102 = scmp.ne.s32.totalorder %s88, %s89
    %p103 = scmp.eq.s32.totalorder %s15, 1
    %p104 = por %p102, %p103
    %p106 = scmp.ne.s32.totalorder %s89, %s105
    %p107 = scmp.eq.s32.totalorder %s15, 0
    %p108 = por %p106, %p107
    %s109 = ssub.s32 %s16, %s28
    %s110 = ssub.s32 %s17, %s24
    %s111 = sor.u32 %s109, %s110
    %p112 = scmp.eq.s32.totalorder %s111, 0
    %s114 = sadd.s32 %s113, 1
    %s115 = scalar_select %p112, %s113, %s114
    %p118 = pneg %p112
    %p119 = scmp.eq.s32.totalorder %s9, 1
    %p120 = por %p118, %p119
    %p121 = scmp.ne.s32.totalorder %s113, %s116
    %p122 = scmp.eq.s32.totalorder %s9, 0
    %p123 = por %p121, %p122
    %p124 = scmp.ne.s32.totalorder %s113, %s116
    %p125 = scmp.eq.s32.totalorder %s14, 1
    %p126 = por %p124, %p125
    %p127 = scmp.ne.s32.totalorder %s116, %s117
    %p128 = scmp.eq.s32.totalorder %s14, 0
    %p129 = por %p127, %p128
    %p130 = scmp.ne.s32.totalorder %s116, %s117
    %p131 = scmp.eq.s32.totalorder %s15, 1
    %p132 = por %p130, %p131
    %p134 = scmp.ne.s32.totalorder %s117, %s133
    %p135 = scmp.eq.s32.totalorder %s15, 0
    %p136 = por %p134, %p135
    %p137 = scmp.le.s32.totalorder 1, %s9
    %p138 = scmp.lt.s32.totalorder %s9, 3
    %p139 = pnand %p137, %p138
    %p140 = pneg %p139
    // Predicated region
    $region9: #{pix2pix_turbo_forward.19} parent=5 // pred_check
      _
    $region10: #{pix2pix_turbo_forward.19} parent=5 // pred_check_branch
      %142 = sbr.rel (%p139) target = $region12
    $region11: #{pix2pix_turbo_forward.19} parent=5 // pred_region
      %s143 = ssub.s32 %s9, 1
    $region12: #{pix2pix_turbo_forward.19} parent=5 // pred_fallthru
      _
    %p144 = scmp.lt.s32.totalorder %s9, 2
    // Predicated region
    $region13: #{pix2pix_turbo_forward.19} parent=5 // pred_check
      %p145 = pneg %p144
    $region14: #{pix2pix_turbo_forward.19} parent=5 // pred_check_branch
      %147 = sbr.rel (%p145) target = $region16
    $region15: #{pix2pix_turbo_forward.19} parent=5 // pred_region
      // Predicated region
      $region17: #{pix2pix_turbo_forward.19} parent=15 // pred_check
        %p148 = pneg %p43
      $region18: #{pix2pix_turbo_forward.19} parent=15 // pred_check_branch
        %150 = sbr.rel (%p148) target = $region20
      $region19: #{pix2pix_turbo_forward.19} parent=15 // pred_region
        %s151 = smul.u32 2, %s17
        %p152 = scmp.lt.s32.totalorder %s16, 1
        %s153 = scalar_select %p152, %s16, 1
        %p154 = scmp.lt.s32.totalorder %s151, 1
        %s155 = scalar_select %p154, %s151, 1
        %s156 = smul.addr %s153, 2
        %s157 = sadd.s32 %s155, %s156
        %s158 = smul.addr %s157, 4
        %s159 = scalar_lea.vmem %s0, %s158
        %s160 = smul.u32 2, %s17
      $region20: #{pix2pix_turbo_forward.19} parent=15 // pred_fallthru
        _
      // Predicated region
      $region21: #{pix2pix_turbo_forward.19} parent=15 // pred_check
        %p161 = pneg %p69
      $region22: #{pix2pix_turbo_forward.19} parent=15 // pred_check_branch
        %163 = sbr.rel (%p161) target = $region24
      $region23: #{pix2pix_turbo_forward.19} parent=15 // pred_region
        %p164 = scmp.lt.s32.totalorder %s16, 1
        %s165 = scalar_select %p164, %s16, 1
        %s166 = smul.addr %s165, 4
        %s167 = scalar_lea.vmem %s1, %s166
      $region24: #{pix2pix_turbo_forward.19} parent=15 // pred_fallthru
        _
      // Predicated region
      $region25: #{pix2pix_turbo_forward.19} parent=15 // pred_check
        %p168 = pneg %p95
      $region26: #{pix2pix_turbo_forward.19} parent=15 // pred_check_branch
        %170 = sbr.rel (%p168) target = $region28
      $region27: #{pix2pix_turbo_forward.19} parent=15 // pred_region
        %p171 = scmp.lt.s32.totalorder %s16, 1
        %s172 = scalar_select %p171, %s16, 1
        %s173 = smul.addr %s172, 4
        %s174 = scalar_lea.vmem %s2, %s173
      $region28: #{pix2pix_turbo_forward.19} parent=15 // pred_fallthru
        _
    $region16: #{pix2pix_turbo_forward.19} parent=5 // pred_fallthru
      _
    %p175 = scmp.le.s32.totalorder 1, %s9
    %p176 = scmp.lt.s32.totalorder %s9, 3
    %p177 = pnand %p175, %p176
    %p178 = pneg %p177
    // Predicated region
    $region29: #{pix2pix_turbo_forward.19} parent=5 // pred_check
      _
    $region30: #{pix2pix_turbo_forward.19} parent=5 // pred_check_branch
      %180 = sbr.rel (%p177) target = $region32
    $region31: #{pix2pix_turbo_forward.19} parent=5 // pred_region
      %s181 = ssub.s32 %s9, 1
      %s182 = smul.u32 2, %s19
      %p183 = scmp.lt.s32.totalorder %s18, 1
      %s184 = scalar_select %p183, %s18, 1
      %p185 = scmp.lt.s32.totalorder %s182, 1
      %s186 = scalar_select %p185, %s182, 1
      %s187 = smul.addr %s184, 2
      %s188 = sadd.s32 %s186, %s187
      %s189 = smul.addr %s188, 4
      %s190 = scalar_lea.vmem %s0, %s189
      %p191 = pneg %p49
      %p192 = pneg %p46
      %p193 = scmp.lt.s32.totalorder %s18, 1
      %s194 = scalar_select %p193, %s18, 1
      %s195 = smul.addr %s194, 4
      %s196 = scalar_lea.vmem %s1, %s195
      %p197 = pneg %p75
      %p198 = pneg %p72
      %p199 = scmp.lt.s32.totalorder %s18, 1
      %s200 = scalar_select %p199, %s18, 1
      %s201 = smul.addr %s200, 4
      %s202 = scalar_lea.vmem %s2, %s201
      %p203 = pneg %p101
      %p204 = pneg %p98
      %p205 = pneg %p129
      %p206 = pneg %p126
      %s207 = smul.u32 2, %s19
      %p208 = scmp.lt.s32.totalorder %s18, 1
      %s209 = scalar_select %p208, %s18, 1
      %p210 = scmp.lt.s32.totalorder %s207, 1
      %s211 = scalar_select %p210, %s207, 1
      %s212 = smul.addr %s209, 2
      %s213 = sadd.s32 %s211, %s212
      %s214 = smul.addr %s213, 4
      %s215 = scalar_lea.vmem %s3, %s214
      %s216 = smul.u32 2, %s19
      %p217 = scmp.lt.s32.totalorder %s18, 1
      %s218 = scalar_select %p217, %s18, 1
      %p219 = scmp.lt.s32.totalorder %s216, 1
      %s220 = scalar_select %p219, %s216, 1
      %s221 = smul.addr %s218, 2
      %s222 = sadd.s32 %s220, %s221
      %s223 = smul.addr %s222, 4
      %s224 = scalar_lea.vmem %s0, %s223
      %s225 = smul.u32 2, %s19
      %p226 = scmp.lt.s32.totalorder %s18, 1
      %s227 = scalar_select %p226, %s18, 1
      %s228 = smul.addr %s227, 4
      %s229 = scalar_lea.vmem %s1, %s228
      %p230 = scmp.lt.s32.totalorder %s18, 1
      %s231 = scalar_select %p230, %s18, 1
      %s232 = smul.addr %s231, 4
      %s233 = scalar_lea.vmem %s2, %s232
      %s234 = smul.u32 2, %s19
      %p235 = scmp.lt.s32.totalorder %s18, 1
      %s236 = scalar_select %p235, %s18, 1
      %p237 = scmp.lt.s32.totalorder %s234, 1
      %s238 = scalar_select %p237, %s234, 1
      %s239 = smul.addr %s236, 2
      %s240 = sadd.s32 %s238, %s239
      %s241 = smul.addr %s240, 4
      %s242 = scalar_lea.vmem %s3, %s241
      %s243 = smul.u32 2, %s19
      %v245 = vld [vmem:[%s224] sm:$0xf]
      %v246 = vld [vmem:[%s224 + $0x4] sm:$0xf]
      %v247 = vld [vmem:[%s229] sm:$0xf]
      %v248 = vld [vmem:[%s233] sm:$0xf]
      %v251 = vunpack.c.l.b16 %v245
      %v252 = vunpack.c.l.b16 %v246
      %v253 = vpack.c.b16 %v252, %v251
      %vm254 = vcmask 130048
      %v256 = vsel %vm254, %v253, 0
      %v259 = vsel %vm254, %v247, 0
      %261 = vmatprep.subr.bf16.mxu0 0
      %262 = vmatpush1.bf16.xpose.msra.mxu0 %v259
      %263 = vmatprep.subr.bf16.mxu0 0
      %264 = vmatpush1.bf16.xpose.msra.mxu0 0
      %265 = vmatprep.subr.bf16.mxu0 0
      %266 = vmatpush1.bf16.xpose.msra.mxu0 0
      %267 = vmatprep.subr.bf16.mxu0 0
      %268 = vmatpush1.bf16.xpose.msra.mxu0 0
      %269 = vmatprep.subr.bf16.mxu0 0
      %270 = vmatpush1.bf16.xpose.msra.mxu0 0
      %271 = vmatprep.subr.bf16.mxu0 0
      %272 = vmatpush1.bf16.xpose.msra.mxu0 0
      %273 = vmatprep.subr.bf16.mxu0 0
      %274 = vmatpush1.bf16.xpose.msra.mxu0 0
      %275 = vmatprep.subr.bf16.mxu0 0
      %276 = vmatpush1.bf16.xpose.msra.mxu0 0
      %277 = vmatprep.subr.bf16.mxu0 0
      %278 = vmatpush1.bf16.xpose.msra.mxu0 0
      %279 = vmatprep.subr.bf16.mxu0 0
      %280 = vmatpush1.bf16.xpose.msra.mxu0 0
      %281 = vmatprep.subr.bf16.mxu0 0
      %282 = vmatpush1.bf16.xpose.msra.mxu0 0
      %283 = vmatprep.subr.bf16.mxu0 0
      %284 = vmatpush1.bf16.xpose.msra.mxu0 0
      %285 = vmatprep.subr.bf16.mxu0 0
      %286 = vmatpush1.bf16.xpose.msra.mxu0 0
      %287 = vmatprep.subr.bf16.mxu0 0
      %288 = vmatpush1.bf16.xpose.msra.mxu0 0
      %289 = vmatprep.subr.bf16.mxu0 0
      %290 = vmatpush1.bf16.xpose.msra.mxu0 0
      %291 = vmatprep.subr.bf16.mxu0 0
      %292 = vmatpush1.bf16.xpose.msra.mxu0 0
      %293 = vmatprep.mubr.bf16.mxu0 0
      %294 = vmatmul.mubr.bf16.gmra.mrb[0].mxu0 %v256
      %v295 = vpop.f32.mrb[0].mxu0
      %v296 = vadd.f32 0.0, %v295
      %v297 = vpop.f32.mrb[0].mxu0
      %v298 = vpop.f32.mrb[0].mxu0
      %v299 = vadd.f32 0.0, %v298
      %v300 = vpop.f32.mrb[0].mxu0
      %301 = vdwg.mxu0
      %vm302 = vcmask 64512
      %v303 = vsel %vm302, %v296, -inf
      %304 = vmax.xlane.f32.xlu0 %v303
      %v305 = vpop.xlane.xlu0 %304
      %v306 = vsel %vm302, %v299, -inf
      %307 = vmax.xlane.f32.xlu0 %v306
      %v308 = vpop.xlane.xlu0 %307
      %v309 = vsub.f32 %v296, %v305
      %v310 = vsub.f32 %v299, %v308
      %v311 = vmul.f32 %v309, 1.442695
      %v312 = vpow.pop %v311
      %v313 = vmul.f32 %v310, 1.442695
      %v314 = vpow.pop %v313
      %v315 = vsel %vm302, %v312, 0.0
      %316 = vadd.xlane.f32.xlu0 %v315
      %v317 = vpop.xlane.xlu0 %316
      %v318 = vsel %vm302, %v314, 0.0
      %319 = vadd.xlane.f32.xlu0 %v318
      %v320 = vpop.xlane.xlu0 %319
      %v321 = vrcp.pop %v317
      %v322 = vrcp.pop %v320
      %v323 = vmul.f32 %v312, %v321
      %v324 = vmul.f32 %v314, %v322
      %v325 = vpack.c.bf16 %v324, %v323
      %v327 = vsel %vm302, %v325, 0
      %vm329 = vcmask 1043456
      %v331 = vsel %vm329, %v248, 0
      %333 = vmatprep.subr.bf16.mxu0 0
      %334 = vmatpush1.bf16.msra.mxu0 %v331
      %335 = vmatprep.subr.bf16.mxu0 0
      %336 = vmatpush1.bf16.msra.mxu0 0
      %337 = vmatprep.subr.bf16.mxu0 0
      %338 = vmatpush1.bf16.msra.mxu0 0
      %339 = vmatprep.subr.bf16.mxu0 0
      %340 = vmatpush1.bf16.msra.mxu0 0
      %341 = vmatprep.subr.bf16.mxu0 0
      %342 = vmatpush1.bf16.msra.mxu0 0
      %343 = vmatprep.subr.bf16.mxu0 0
      %344 = vmatpush1.bf16.msra.mxu0 0
      %345 = vmatprep.subr.bf16.mxu0 0
      %346 = vmatpush1.bf16.msra.mxu0 0
      %347 = vmatprep.subr.bf16.mxu0 0
      %348 = vmatpush1.bf16.msra.mxu0 0
      %349 = vmatprep.subr.bf16.mxu0 0
      %350 = vmatpush1.bf16.msra.mxu0 0
      %351 = vmatprep.subr.bf16.mxu0 0
      %352 = vmatpush1.bf16.msra.mxu0 0
      %353 = vmatprep.subr.bf16.mxu0 0
      %354 = vmatpush1.bf16.msra.mxu0 0
      %355 = vmatprep.subr.bf16.mxu0 0
      %356 = vmatpush1.bf16.msra.mxu0 0
      %357 = vmatprep.subr.bf16.mxu0 0
      %358 = vmatpush1.bf16.msra.mxu0 0
      %359 = vmatprep.subr.bf16.mxu0 0
      %360 = vmatpush1.bf16.msra.mxu0 0
      %361 = vmatprep.subr.bf16.mxu0 0
      %362 = vmatpush1.bf16.msra.mxu0 0
      %363 = vmatprep.subr.bf16.mxu0 0
      %364 = vmatpush1.bf16.msra.mxu0 0
      %365 = vmatprep.mubr.bf16.mxu0 0
      %366 = vmatmul.mubr.bf16.gmra.mrb[0].mxu0 %v327
      %v367 = vpop.f32.mrb[0].mxu0
      %v368 = vadd.f32 0.0, %v367
      %v369 = vpop.f32.mrb[0].mxu0
      %v370 = vpop.f32.mrb[0].mxu0
      %v371 = vadd.f32 0.0, %v370
      %v372 = vpop.f32.mrb[0].mxu0
      %373 = vdwg.mxu0
      %v374 = vpack.c.bf16 %v371, %v368
      %v376 = vunpack.c.l.b16 %v374
      %v377 = vunpack.c.h.b16 %v374
      %v378 = vpack.c.b16 %v376, %v376
      %v379 = vpack.c.b16 %v377, %v377
      %vm382 = vcmask 125952
      %383 = vst.msk [vmem:[%s242] sm:$0xf] %vm382, %v378
      %384 = vst.msk [vmem:[%s242 + $0x4] sm:$0xf] %vm382, %v379
      %s385 = smul.u32 2, %s19
      %p386 = scmp.lt.s32.totalorder %s18, 1
      %s387 = scalar_select %p386, %s18, 1
      %p388 = scmp.lt.s32.totalorder %s385, 1
      %s389 = scalar_select %p388, %s385, 1
      %s390 = smul.addr %s387, 2
      %s391 = sadd.s32 %s389, %s390
      %s392 = smul.addr %s391, 4
      %s393 = scalar_lea.vmem %s3, %s392
      // Predicated region
      $region33: #{pix2pix_turbo_forward.19} parent=31 // pred_check
        %p394 = pneg %p126
      $region34: #{pix2pix_turbo_forward.19} parent=31 // pred_check_branch
        %396 = sbr.rel (%p394) target = $region36
      $region35: #{pix2pix_turbo_forward.19} parent=31 // pred_region
        %s397 = smul.u32 2, %s19
      $region36: #{pix2pix_turbo_forward.19} parent=31 // pred_fallthru
        _
    $region32: #{pix2pix_turbo_forward.19} parent=5 // pred_fallthru
      _
    %p398 = scmp.le.s32.totalorder 2, %s9
    // Predicated region
    $region37: #{pix2pix_turbo_forward.19} parent=5 // pred_check
      %p399 = pneg %p398
    $region38: #{pix2pix_turbo_forward.19} parent=5 // pred_check_branch
      %401 = sbr.rel (%p399) target = $region40
    $region39: #{pix2pix_turbo_forward.19} parent=5 // pred_region
      %s402 = ssub.s32 %s9, 2
      // Predicated region
      $region41: #{pix2pix_turbo_forward.19} parent=39 // pred_check
        %p403 = pneg %p132
      $region42: #{pix2pix_turbo_forward.19} parent=39 // pred_check_branch
        %405 = sbr.rel (%p403) target = $region44
      $region43: #{pix2pix_turbo_forward.19} parent=39 // pred_region
        %s406 = smul.u32 2, %s21
        %p407 = scmp.lt.s32.totalorder %s20, 1
        %s408 = scalar_select %p407, %s20, 1
        %p409 = scmp.lt.s32.totalorder %s406, 1
        %s410 = scalar_select %p409, %s406, 1
        %s411 = smul.addr %s408, 2
        %s412 = sadd.s32 %s410, %s411
        %s413 = smul.addr %s412, 4
        %s414 = scalar_lea.vmem %s3, %s413
      $region44: #{pix2pix_turbo_forward.19} parent=39 // pred_fallthru
        _
    $region40: #{pix2pix_turbo_forward.19} parent=5 // pred_fallthru
      _
  $region6: #{pix2pix_turbo_forward.19} parent=0 // loop_footer
    %s13 = sadd.s32 1, %s9
  $region7: #{pix2pix_turbo_forward.19} parent=0 // loop_footer_branch
    %8 = sbr.rel target = $region3
  $region8: #{pix2pix_turbo_forward.19} parent=0 // loop_exit
    _

// kernel: pix2pix_turbo_forward.20
$region0: #{pix2pix_turbo_forward.20}
  #allocation0 [shape = 'u32[]', space=smem, size = 0x4, offset = 0x4, fixed_abs, tag = 'smem constant byte address 0x4 - core index']
  #allocation1 [shape = 'u32[144,128]{1,0:T(1,128)}', space=vmem, size = 0x12000, scoped, tag = 'internal scratch']
  %s0 = inlined_call_operand.vmem [shape: bf16[32,16], index: 0, kind: input, shape index: {}]
  %s1 = inlined_call_operand.vmem [shape: bf16[16,16], index: 1, kind: input, shape index: {}]
  %s2 = inlined_call_operand.vmem [shape: f32[1,16], index: 2, kind: input, shape index: {}]
  %s3 = inlined_call_operand.vmem [shape: bf16[32,16], index: 3, kind: input, shape index: {}]
  %s4 = inlined_call_operand.vmem [shape: f32[32,16], index: 4, kind: output, shape index: {}]
  %s5 = sld [smem:[#allocation0]]
  $region26: #{pix2pix_turbo_forward.20} parent=0
    _
  %s7 = ssub.s32 1, %s5
  %s8 = scalar_select 0, %s7, %s5
  // Predicated region
  $region2: #{pix2pix_turbo_forward.20} parent=0 // pred_check
    _
  $region3: #{pix2pix_turbo_forward.20} parent=0 // pred_check_branch
    %10 = sbr.rel (0) target = $region5
  $region4: #{pix2pix_turbo_forward.20} parent=0 // pred_region
    _
  $region5: #{pix2pix_turbo_forward.20} parent=0 // pred_fallthru
    _
  // Predicated region
  $region6: #{pix2pix_turbo_forward.20} parent=0 // pred_check
    _
  $region7: #{pix2pix_turbo_forward.20} parent=0 // pred_check_branch
    %12 = sbr.rel (0) target = $region9
  $region8: #{pix2pix_turbo_forward.20} parent=0 // pred_region
    _
  $region9: #{pix2pix_turbo_forward.20} parent=0 // pred_fallthru
    _
  // Predicated region
  $region10: #{pix2pix_turbo_forward.20} parent=0 // pred_check
    _
  $region11: #{pix2pix_turbo_forward.20} parent=0 // pred_check_branch
    %14 = sbr.rel (0) target = $region13
  $region12: #{pix2pix_turbo_forward.20} parent=0 // pred_region
    _
  $region13: #{pix2pix_turbo_forward.20} parent=0 // pred_fallthru
    _
  // Predicated region
  $region14: #{pix2pix_turbo_forward.20} parent=0 // pred_check
    _
  $region15: #{pix2pix_turbo_forward.20} parent=0 // pred_check_branch
    %16 = sbr.rel (0) target = $region17
  $region16: #{pix2pix_turbo_forward.20} parent=0 // pred_region
    _
  $region17: #{pix2pix_turbo_forward.20} parent=0 // pred_fallthru
    _
  %v18 = vld [vmem:[%s0] sm:$0xf]
  %v19 = vld [vmem:[%s0 + $0x4] sm:$0xf]
  %v20 = vld [vmem:[%s0 + $0x8] sm:$0xf]
  %v21 = vld [vmem:[%s0 + $0xc] sm:$0xf]
  %v22 = vld [vmem:[%s1] sm:$0xf]
  %v23 = vld [vmem:[%s1 + $0x4] sm:$0xf]
  %v24 = vld [vmem:[%s2] sm:$0x1]
  %v26 = vlaneseq
  %v27 = vshrl.u32 %v26, 7
  %v28 = vsub.s32 0, %v27
  %v29 = vrot.slane %v24, %v28
  %v35 = vunpack.c.l.b16 %v18
  %v36 = vunpack.c.l.b16 %v19
  %v37 = vunpack.c.l.b16 %v20
  %v38 = vunpack.c.l.b16 %v21
  %v39 = vpack.c.b16 %v36, %v35
  %v40 = vpack.c.b16 %v38, %v37
  %v43 = vunpack.c.l.b16 %v22
  %v44 = vunpack.c.l.b16 %v23
  %v45 = vpack.c.b16 %v44, %v43
  %vm47 = vcmask 130048
  %v49 = vsel %vm47, %v39, 0
  %v52 = vsel %vm47, %v40, 0
  %54 = vmatprep.subr.bf16.mxu0 0
  %55 = vmatpush1.bf16.msra.mxu0 %v45
  %56 = vmatprep.subr.bf16.mxu0 0
  %57 = vmatpush1.bf16.msra.mxu0 0
  %58 = vmatprep.subr.bf16.mxu0 0
  %59 = vmatpush1.bf16.msra.mxu0 0
  %60 = vmatprep.subr.bf16.mxu0 0
  %61 = vmatpush1.bf16.msra.mxu0 0
  %62 = vmatprep.subr.bf16.mxu0 0
  %63 = vmatpush1.bf16.msra.mxu0 0
  %64 = vmatprep.subr.bf16.mxu0 0
  %65 = vmatpush1.bf16.msra.mxu0 0
  %66 = vmatprep.subr.bf16.mxu0 0
  %67 = vmatpush1.bf16.msra.mxu0 0
  %68 = vmatprep.subr.bf16.mxu0 0
  %69 = vmatpush1.bf16.msra.mxu0 0
  %70 = vmatprep.subr.bf16.mxu0 0
  %71 = vmatpush1.bf16.msra.mxu0 0
  %72 = vmatprep.subr.bf16.mxu0 0
  %73 = vmatpush1.bf16.msra.mxu0 0
  %74 = vmatprep.subr.bf16.mxu0 0
  %75 = vmatpush1.bf16.msra.mxu0 0
  %76 = vmatprep.subr.bf16.mxu0 0
  %77 = vmatpush1.bf16.msra.mxu0 0
  %78 = vmatprep.subr.bf16.mxu0 0
  %79 = vmatpush1.bf16.msra.mxu0 0
  %80 = vmatprep.subr.bf16.mxu0 0
  %81 = vmatpush1.bf16.msra.mxu0 0
  %82 = vmatprep.subr.bf16.mxu0 0
  %83 = vmatpush1.bf16.msra.mxu0 0
  %84 = vmatprep.subr.bf16.mxu0 0
  %85 = vmatpush1.bf16.msra.mxu0 0
  %86 = vmatprep.mubr.bf16.mxu0 0
  %87 = vmatmul.mubr.bf16.gmra.mrb[0].mxu0 %v49
  %v88 = vpop.f32.mrb[0].mxu0
  %v89 = vadd.f32 %v29, %v88
  %v90 = vpop.f32.mrb[0].mxu0
  %v91 = vpop.f32.mrb[0].mxu0
  %v92 = vadd.f32 %v29, %v91
  %v93 = vpop.f32.mrb[0].mxu0
  %94 = vmatprep.mubr.bf16.mxu0 0
  %95 = vmatmul.mubr.bf16.gmra.mrb[0].mxu0 %v52
  %v96 = vpop.f32.mrb[0].mxu0
  %v97 = vadd.f32 %v29, %v96
  %v98 = vpop.f32.mrb[0].mxu0
  %v99 = vpop.f32.mrb[0].mxu0
  %v100 = vadd.f32 %v29, %v99
  %v101 = vpop.f32.mrb[0].mxu0
  %102 = vdwg.mxu0
  %v103 = vld [vmem:[%s3] sm:$0xf]
  %v104 = vld [vmem:[%s3 + $0x4] sm:$0xf]
  %v105 = vld [vmem:[%s3 + $0x8] sm:$0xf]
  %v106 = vld [vmem:[%s3 + $0xc] sm:$0xf]
  %v107 = vunpack.c.l.bf16 %v103
  %v108 = vunpack.c.l.bf16 %v104
  %v109 = vunpack.c.l.bf16 %v105
  %v110 = vunpack.c.l.bf16 %v106
  %v111 = vadd.f32 %v89, %v107
  %v112 = vadd.f32 %v92, %v108
  %v113 = vadd.f32 %v97, %v109
  %v114 = vadd.f32 %v100, %v110
  %115 = vst.msk [vmem:[%s4] sm:$0xff] %vm47, %v111
  %116 = vst.msk [vmem:[%s4 + $0x8] sm:$0xff] %vm47, %v112
  %117 = vst.msk [vmem:[%s4 + $0x10] sm:$0xff] %vm47, %v113
  %118 = vst.msk [vmem:[%s4 + $0x18] sm:$0xff] %vm47, %v114
  // Predicated region
  $region18: #{pix2pix_turbo_forward.20} parent=0 // pred_check
    _
  $region19: #{pix2pix_turbo_forward.20} parent=0 // pred_check_branch
    %120 = sbr.rel (0) target = $region21
  $region20: #{pix2pix_turbo_forward.20} parent=0 // pred_region
    _
  $region21: #{pix2pix_turbo_forward.20} parent=0 // pred_fallthru
    _
  // Predicated region
  $region22: #{pix2pix_turbo_forward.20} parent=0 // pred_check
    _
  $region23: #{pix2pix_turbo_forward.20} parent=0 // pred_check_branch
    %122 = sbr.rel (0) target = $region25
  $region24: #{pix2pix_turbo_forward.20} parent=0 // pred_region
    _
  $region25: #{pix2pix_turbo_forward.20} parent=0 // pred_fallthru
    _

// kernel: pix2pix_turbo_forward.22
$region0: #{pix2pix_turbo_forward.22}
  #allocation0 [shape = 'u32[]', space=smem, size = 0x4, offset = 0x4, fixed_abs, tag = 'smem constant byte address 0x4 - core index']
  #allocation1 [shape = 'u32[144,128]{1,0:T(1,128)}', space=vmem, size = 0x12000, scoped, tag = 'internal scratch']
  %s0 = inlined_call_operand.vmem [shape: bf16[32,4], index: 0, kind: input, shape index: {}]
  %s1 = inlined_call_operand.vmem [shape: bf16[4,8], index: 1, kind: input, shape index: {}]
  %s2 = inlined_call_operand.vmem [shape: f32[1,8], index: 2, kind: input, shape index: {}]
  %s3 = inlined_call_operand.vmem [shape: bf16[32,8], index: 3, kind: input, shape index: {}]
  %s4 = inlined_call_operand.vmem [shape: bf16[8,8], index: 4, kind: input, shape index: {}]
  %s5 = inlined_call_operand.vmem [shape: bf16[32,8], index: 5, kind: output, shape index: {}]
  %s6 = sld [smem:[#allocation0]]
  $region30: #{pix2pix_turbo_forward.22} parent=0
    _
  %s8 = ssub.s32 1, %s6
  %s9 = scalar_select 0, %s8, %s6
  // Predicated region
  $region2: #{pix2pix_turbo_forward.22} parent=0 // pred_check
    _
  $region3: #{pix2pix_turbo_forward.22} parent=0 // pred_check_branch
    %11 = sbr.rel (0) target = $region5
  $region4: #{pix2pix_turbo_forward.22} parent=0 // pred_region
    _
  $region5: #{pix2pix_turbo_forward.22} parent=0 // pred_fallthru
    _
  // Predicated region
  $region6: #{pix2pix_turbo_forward.22} parent=0 // pred_check
    _
  $region7: #{pix2pix_turbo_forward.22} parent=0 // pred_check_branch
    %13 = sbr.rel (0) target = $region9
  $region8: #{pix2pix_turbo_forward.22} parent=0 // pred_region
    _
  $region9: #{pix2pix_turbo_forward.22} parent=0 // pred_fallthru
    _
  // Predicated region
  $region10: #{pix2pix_turbo_forward.22} parent=0 // pred_check
    _
  $region11: #{pix2pix_turbo_forward.22} parent=0 // pred_check_branch
    %15 = sbr.rel (0) target = $region13
  $region12: #{pix2pix_turbo_forward.22} parent=0 // pred_region
    _
  $region13: #{pix2pix_turbo_forward.22} parent=0 // pred_fallthru
    _
  // Predicated region
  $region14: #{pix2pix_turbo_forward.22} parent=0 // pred_check
    _
  $region15: #{pix2pix_turbo_forward.22} parent=0 // pred_check_branch
    %17 = sbr.rel (0) target = $region17
  $region16: #{pix2pix_turbo_forward.22} parent=0 // pred_region
    _
  $region17: #{pix2pix_turbo_forward.22} parent=0 // pred_fallthru
    _
  // Predicated region
  $region18: #{pix2pix_turbo_forward.22} parent=0 // pred_check
    _
  $region19: #{pix2pix_turbo_forward.22} parent=0 // pred_check_branch
    %19 = sbr.rel (0) target = $region21
  $region20: #{pix2pix_turbo_forward.22} parent=0 // pred_region
    _
  $region21: #{pix2pix_turbo_forward.22} parent=0 // pred_fallthru
    _
  %v21 = vld [vmem:[%s0] sm:$0xf]
  %v22 = vld [vmem:[%s0 + $0x4] sm:$0xf]
  %v23 = vld [vmem:[%s0 + $0x8] sm:$0xf]
  %v24 = vld [vmem:[%s0 + $0xc] sm:$0xf]
  %v25 = vld [vmem:[%s1] sm:$0x3]
  %v26 = vld [vmem:[%s2] sm:$0x1]
  %v28 = vlaneseq
  %v29 = vshrl.u32 %v28, 7
  %v30 = vsub.s32 0, %v29
  %v31 = vrot.slane %v26, %v30
  %v37 = vunpack.c.l.b16 %v21
  %v38 = vunpack.c.l.b16 %v22
  %v39 = vunpack.c.l.b16 %v23
  %v40 = vunpack.c.l.b16 %v24
  %v41 = vpack.c.b16 %v38, %v37
  %v42 = vpack.c.b16 %v40, %v39
  %vm43 = vcmask 31744
  %v45 = vsel %vm43, %v41, 0
  %v48 = vsel %vm43, %v42, 0
  %vm50 = vcmask 1041408
  %v52 = vsel %vm50, %v25, 0
  %54 = vmatprep.subr.bf16.mxu0 0
  %55 = vmatpush1.bf16.msra.mxu0 %v52
  %56 = vmatprep.subr.bf16.mxu0 0
  %57 = vmatpush1.bf16.msra.mxu0 0
  %58 = vmatprep.subr.bf16.mxu0 0
  %59 = vmatpush1.bf16.msra.mxu0 0
  %60 = vmatprep.subr.bf16.mxu0 0
  %61 = vmatpush1.bf16.msra.mxu0 0
  %62 = vmatprep.subr.bf16.mxu0 0
  %63 = vmatpush1.bf16.msra.mxu0 0
  %64 = vmatprep.subr.bf16.mxu0 0
  %65 = vmatpush1.bf16.msra.mxu0 0
  %66 = vmatprep.subr.bf16.mxu0 0
  %67 = vmatpush1.bf16.msra.mxu0 0
  %68 = vmatprep.subr.bf16.mxu0 0
  %69 = vmatpush1.bf16.msra.mxu0 0
  %70 = vmatprep.subr.bf16.mxu0 0
  %71 = vmatpush1.bf16.msra.mxu0 0
  %72 = vmatprep.subr.bf16.mxu0 0
  %73 = vmatpush1.bf16.msra.mxu0 0
  %74 = vmatprep.subr.bf16.mxu0 0
  %75 = vmatpush1.bf16.msra.mxu0 0
  %76 = vmatprep.subr.bf16.mxu0 0
  %77 = vmatpush1.bf16.msra.mxu0 0
  %78 = vmatprep.subr.bf16.mxu0 0
  %79 = vmatpush1.bf16.msra.mxu0 0
  %80 = vmatprep.subr.bf16.mxu0 0
  %81 = vmatpush1.bf16.msra.mxu0 0
  %82 = vmatprep.subr.bf16.mxu0 0
  %83 = vmatpush1.bf16.msra.mxu0 0
  %84 = vmatprep.subr.bf16.mxu0 0
  %85 = vmatpush1.bf16.msra.mxu0 0
  %86 = vmatprep.mubr.bf16.mxu0 0
  %87 = vmatmul.mubr.bf16.gmra.mrb[0].mxu0 %v45
  %v88 = vpop.f32.mrb[0].mxu0
  %v89 = vadd.f32 %v31, %v88
  %v90 = vpop.f32.mrb[0].mxu0
  %v91 = vpop.f32.mrb[0].mxu0
  %v92 = vadd.f32 %v31, %v91
  %v93 = vpop.f32.mrb[0].mxu0
  %94 = vmatprep.mubr.bf16.mxu0 0
  %95 = vmatmul.mubr.bf16.gmra.mrb[0].mxu0 %v48
  %v96 = vpop.f32.mrb[0].mxu0
  %v97 = vadd.f32 %v31, %v96
  %v98 = vpop.f32.mrb[0].mxu0
  %v99 = vpop.f32.mrb[0].mxu0
  %v100 = vadd.f32 %v31, %v99
  %v101 = vpop.f32.mrb[0].mxu0
  %102 = vdwg.mxu0
  %v103 = vsub.f32 0.0, %v89
  %v104 = vsub.f32 0.0, %v92
  %v105 = vsub.f32 0.0, %v97
  %v106 = vsub.f32 0.0, %v100
  %v107 = vmul.f32 %v103, 1.442695
  %v108 = vpow.pop %v107
  %v109 = vmul.f32 %v104, 1.442695
  %v110 = vpow.pop %v109
  %v111 = vmul.f32 %v105, 1.442695
  %v112 = vpow.pop %v111
  %v113 = vmul.f32 %v106, 1.442695
  %v114 = vpow.pop %v113
  %v115 = vadd.f32 %v108, 1.0
  %v116 = vadd.f32 %v110, 1.0
  %v117 = vadd.f32 %v112, 1.0
  %v118 = vadd.f32 %v114, 1.0
  %v119 = vrcp.pop %v115
  %v120 = vrcp.pop %v116
  %v121 = vrcp.pop %v117
  %v122 = vrcp.pop %v118
  %v123 = vmul.f32 %v89, %v119
  %v124 = vmul.f32 %v92, %v120
  %v125 = vmul.f32 %v97, %v121
  %v126 = vmul.f32 %v100, %v122
  %v127 = vld [vmem:[%s3] sm:$0xf]
  %v128 = vld [vmem:[%s3 + $0x4] sm:$0xf]
  %v129 = vld [vmem:[%s3 + $0x8] sm:$0xf]
  %v130 = vld [vmem:[%s3 + $0xc] sm:$0xf]
  %v131 = vld [vmem:[%s4] sm:$0xf]
  %v136 = vunpack.c.l.b16 %v127
  %v137 = vunpack.c.l.b16 %v128
  %v138 = vunpack.c.l.b16 %v129
  %v139 = vunpack.c.l.b16 %v130
  %v140 = vpack.c.b16 %v137, %v136
  %v141 = vpack.c.b16 %v139, %v138
  %vm142 = vcmask 64512
  %v144 = vsel %vm142, %v140, 0
  %v147 = vsel %vm142, %v141, 0
  %vm149 = vcmask 1043456
  %v151 = vsel %vm149, %v131, 0
  %153 = vmatprep.subr.bf16.mxu0 0
  %154 = vmatpush1.bf16.msra.mxu0 %v151
  %155 = vmatprep.subr.bf16.mxu0 0
  %156 = vmatpush1.bf16.msra.mxu0 0
  %157 = vmatprep.subr.bf16.mxu0 0
  %158 = vmatpush1.bf16.msra.mxu0 0
  %159 = vmatprep.subr.bf16.mxu0 0
  %160 = vmatpush1.bf16.msra.mxu0 0
  %161 = vmatprep.subr.bf16.mxu0 0
  %162 = vmatpush1.bf16.msra.mxu0 0
  %163 = vmatprep.subr.bf16.mxu0 0
  %164 = vmatpush1.bf16.msra.mxu0 0
  %165 = vmatprep.subr.bf16.mxu0 0
  %166 = vmatpush1.bf16.msra.mxu0 0
  %167 = vmatprep.subr.bf16.mxu0 0
  %168 = vmatpush1.bf16.msra.mxu0 0
  %169 = vmatprep.subr.bf16.mxu0 0
  %170 = vmatpush1.bf16.msra.mxu0 0
  %171 = vmatprep.subr.bf16.mxu0 0
  %172 = vmatpush1.bf16.msra.mxu0 0
  %173 = vmatprep.subr.bf16.mxu0 0
  %174 = vmatpush1.bf16.msra.mxu0 0
  %175 = vmatprep.subr.bf16.mxu0 0
  %176 = vmatpush1.bf16.msra.mxu0 0
  %177 = vmatprep.subr.bf16.mxu0 0
  %178 = vmatpush1.bf16.msra.mxu0 0
  %179 = vmatprep.subr.bf16.mxu0 0
  %180 = vmatpush1.bf16.msra.mxu0 0
  %181 = vmatprep.subr.bf16.mxu0 0
  %182 = vmatpush1.bf16.msra.mxu0 0
  %183 = vmatprep.subr.bf16.mxu0 0
  %184 = vmatpush1.bf16.msra.mxu0 0
  %185 = vmatprep.mubr.bf16.mxu0 0
  %186 = vmatmul.mubr.bf16.gmra.mrb[0].mxu0 %v144
  %v187 = vpop.f32.mrb[0].mxu0
  %v188 = vadd.f32 0.0, %v187
  %v189 = vpop.f32.mrb[0].mxu0
  %v190 = vpop.f32.mrb[0].mxu0
  %v191 = vadd.f32 0.0, %v190
  %v192 = vpop.f32.mrb[0].mxu0
  %193 = vmatprep.mubr.bf16.mxu0 0
  %194 = vmatmul.mubr.bf16.gmra.mrb[0].mxu0 %v147
  %v195 = vpop.f32.mrb[0].mxu0
  %v196 = vadd.f32 0.0, %v195
  %v197 = vpop.f32.mrb[0].mxu0
  %v198 = vpop.f32.mrb[0].mxu0
  %v199 = vadd.f32 0.0, %v198
  %v200 = vpop.f32.mrb[0].mxu0
  %201 = vdwg.mxu0
  %v202 = vadd.f32 %v123, %v188
  %v203 = vadd.f32 %v124, %v191
  %v204 = vadd.f32 %v125, %v196
  %v205 = vadd.f32 %v126, %v199
  %v206 = vpack.c.bf16 %v203, %v202
  %v207 = vpack.c.bf16 %v205, %v204
  %v210 = vunpack.c.l.b16 %v206
  %v211 = vunpack.c.h.b16 %v206
  %v212 = vunpack.c.l.b16 %v207
  %v213 = vunpack.c.h.b16 %v207
  %v214 = vpack.c.b16 %v210, %v210
  %v215 = vpack.c.b16 %v211, %v211
  %v216 = vpack.c.b16 %v212, %v212
  %v217 = vpack.c.b16 %v213, %v213
  %vm222 = vcmask 60416
  %223 = vst.msk [vmem:[%s5] sm:$0xf] %vm222, %v214
  %224 = vst.msk [vmem:[%s5 + $0x4] sm:$0xf] %vm222, %v215
  %225 = vst.msk [vmem:[%s5 + $0x8] sm:$0xf] %vm222, %v216
  %226 = vst.msk [vmem:[%s5 + $0xc] sm:$0xf] %vm222, %v217
  // Predicated region
  $region22: #{pix2pix_turbo_forward.22} parent=0 // pred_check
    _
  $region23: #{pix2pix_turbo_forward.22} parent=0 // pred_check_branch
    %228 = sbr.rel (0) target = $region25
  $region24: #{pix2pix_turbo_forward.22} parent=0 // pred_region
    _
  $region25: #{pix2pix_turbo_forward.22} parent=0 // pred_fallthru
    _
  // Predicated region
  $region26: #{pix2pix_turbo_forward.22} parent=0 // pred_check
    _
  $region27: #{pix2pix_turbo_forward.22} parent=0 // pred_check_branch
    %230 = sbr.rel (0) target = $region29
  $region28: #{pix2pix_turbo_forward.22} parent=0 // pred_region
    _
  $region29: #{pix2pix_turbo_forward.22} parent=0 // pred_fallthru
    _

// kernel: pix2pix_turbo_forward.21
$region0: #{pix2pix_turbo_forward.21}
  #allocation0 [shape = 'u32[]', space=smem, size = 0x4, offset = 0x4, fixed_abs, tag = 'smem constant byte address 0x4 - core index']
  #allocation1 [shape = 'u32[144,128]{1,0:T(1,128)}', space=vmem, size = 0x12000, scoped, tag = 'internal scratch']
  %s0 = inlined_call_operand.vmem [shape: f32[32,144], index: 0, kind: input, shape index: {}]
  %s1 = inlined_call_operand.vmem [shape: f32[144,4], index: 1, kind: input, shape index: {}]
  %s2 = inlined_call_operand.vmem [shape: f32[1,4], index: 2, kind: input, shape index: {}]
  %s3 = inlined_call_operand.vmem [shape: f32[32,4], index: 3, kind: input, shape index: {}]
  %s4 = inlined_call_operand.vmem [shape: bf16[32,4], index: 4, kind: output, shape index: {}]
  %s5 = sld [smem:[#allocation0]]
  $region26: #{pix2pix_turbo_forward.21} parent=0
    _
  %s7 = ssub.s32 1, %s5
  %s8 = scalar_select 0, %s7, %s5
  // Predicated region
  $region2: #{pix2pix_turbo_forward.21} parent=0 // pred_check
    _
  $region3: #{pix2pix_turbo_forward.21} parent=0 // pred_check_branch
    %10 = sbr.rel (0) target = $region5
  $region4: #{pix2pix_turbo_forward.21} parent=0 // pred_region
    _
  $region5: #{pix2pix_turbo_forward.21} parent=0 // pred_fallthru
    _
  // Predicated region
  $region6: #{pix2pix_turbo_forward.21} parent=0 // pred_check
    _
  $region7: #{pix2pix_turbo_forward.21} parent=0 // pred_check_branch
    %12 = sbr.rel (0) target = $region9
  $region8: #{pix2pix_turbo_forward.21} parent=0 // pred_region
    _
  $region9: #{pix2pix_turbo_forward.21} parent=0 // pred_fallthru
    _
  // Predicated region
  $region10: #{pix2pix_turbo_forward.21} parent=0 // pred_check
    _
  $region11: #{pix2pix_turbo_forward.21} parent=0 // pred_check_branch
    %14 = sbr.rel (0) target = $region13
  $region12: #{pix2pix_turbo_forward.21} parent=0 // pred_region
    _
  $region13: #{pix2pix_turbo_forward.21} parent=0 // pred_fallthru
    _
  // Predicated region
  $region14: #{pix2pix_turbo_forward.21} parent=0 // pred_check
    _
  $region15: #{pix2pix_turbo_forward.21} parent=0 // pred_check_branch
    %16 = sbr.rel (0) target = $region17
  $region16: #{pix2pix_turbo_forward.21} parent=0 // pred_region
    _
  $region17: #{pix2pix_turbo_forward.21} parent=0 // pred_fallthru
    _
  %v17 = vld [vmem:[%s0] sm:$0xff]
  %v18 = vld [vmem:[%s0 + $0x8] sm:$0xff]
  %v19 = vld [vmem:[%s0 + $0x10] sm:$0xff]
  %v20 = vld [vmem:[%s0 + $0x18] sm:$0xff]
  %v21 = vld [vmem:[%s0 + $0x20] sm:$0xff]
  %v22 = vld [vmem:[%s0 + $0x28] sm:$0xff]
  %v23 = vld [vmem:[%s0 + $0x30] sm:$0xff]
  %v24 = vld [vmem:[%s0 + $0x38] sm:$0xff]
  %v25 = vld [vmem:[%s1] sm:$0xff]
  %v26 = vld [vmem:[%s1 + $0x8] sm:$0xff]
  %v27 = vld [vmem:[%s1 + $0x10] sm:$0xff]
  %v28 = vld [vmem:[%s1 + $0x18] sm:$0xff]
  %v29 = vld [vmem:[%s1 + $0x20] sm:$0xff]
  %v30 = vld [vmem:[%s1 + $0x28] sm:$0xff]
  %v31 = vld [vmem:[%s1 + $0x30] sm:$0xff]
  %v32 = vld [vmem:[%s1 + $0x38] sm:$0xff]
  %v33 = vld [vmem:[%s1 + $0x40] sm:$0xff]
  %v34 = vld [vmem:[%s1 + $0x48] sm:$0xff]
  %v35 = vld [vmem:[%s1 + $0x50] sm:$0xff]
  %v36 = vld [vmem:[%s1 + $0x58] sm:$0xff]
  %v37 = vld [vmem:[%s1 + $0x60] sm:$0xff]
  %v38 = vld [vmem:[%s1 + $0x68] sm:$0xff]
  %v39 = vld [vmem:[%s1 + $0x70] sm:$0xff]
  %v40 = vld [vmem:[%s1 + $0x78] sm:$0xff]
  %v41 = vld [vmem:[%s1 + $0x80] sm:$0xff]
  %v42 = vld [vmem:[%s1 + $0x88] sm:$0xff]
  %v43 = vld [vmem:[%s2] sm:$0x1]
  %v45 = vlaneseq
  %v46 = vshrl.u32 %v45, 7
  %v47 = vsub.s32 0, %v46
  %v48 = vrot.slane %v43, %v47
  %vm50 = vcmask 130048
  %v52 = vsel %vm50, %v18, 0
  %v55 = vsel %vm50, %v20, 0
  %v58 = vsel %vm50, %v22, 0
  %v61 = vsel %vm50, %v24, 0
  %63 = vmatprep.subr.mxu0 0.0
  %64 = vmatpush1.msra.mxu0 %v25
  %65 = vmatprep.subr.mxu0 0.0
  %66 = vmatpush1.msra.mxu0 %v26
  %67 = vmatprep.subr.mxu0 0.0
  %68 = vmatpush1.msra.mxu0 %v27
  %69 = vmatprep.subr.mxu0 0.0
  %70 = vmatpush1.msra.mxu0 %v28
  %71 = vmatprep.subr.mxu0 0.0
  %72 = vmatpush1.msra.mxu0 %v29
  %73 = vmatprep.subr.mxu0 0.0
  %74 = vmatpush1.msra.mxu0 %v30
  %75 = vmatprep.subr.mxu0 0.0
  %76 = vmatpush1.msra.mxu0 %v31
  %77 = vmatprep.subr.mxu0 0.0
  %78 = vmatpush1.msra.mxu0 %v32
  %79 = vmatprep.subr.mxu0 0.0
  %80 = vmatpush1.msra.mxu0 %v33
  %81 = vmatprep.subr.mxu0 0.0
  %82 = vmatpush1.msra.mxu0 %v34
  %83 = vmatprep.subr.mxu0 0.0
  %84 = vmatpush1.msra.mxu0 %v35
  %85 = vmatprep.subr.mxu0 0.0
  %86 = vmatpush1.msra.mxu0 %v36
  %87 = vmatprep.subr.mxu0 0.0
  %88 = vmatpush1.msra.mxu0 %v37
  %89 = vmatprep.subr.mxu0 0.0
  %90 = vmatpush1.msra.mxu0 %v38
  %91 = vmatprep.subr.mxu0 0.0
  %92 = vmatpush1.msra.mxu0 %v39
  %93 = vmatprep.subr.mxu0 0.0
  %94 = vmatpush1.msra.mxu0 %v40
  %95 = vmatprep.subr.mxu0 0.0
  %96 = vmatpush1.msra.mxu0 %v41
  %97 = vmatprep.subr.mxu0 0.0
  %98 = vmatpush1.msra.mxu0 %v42
  %99 = vmatprep.subr.mxu0 0.0
  %100 = vmatpush1.msra.mxu0 0.0
  %101 = vmatprep.subr.mxu0 0.0
  %102 = vmatpush1.msra.mxu0 0.0
  %103 = vmatprep.subr.mxu0 0.0
  %104 = vmatpush1.msra.mxu0 0.0
  %105 = vmatprep.subr.mxu0 0.0
  %106 = vmatpush1.msra.mxu0 0.0
  %107 = vmatprep.subr.mxu0 0.0
  %108 = vmatpush1.msra.mxu0 0.0
  %109 = vmatprep.subr.mxu0 0.0
  %110 = vmatpush1.msra.mxu0 0.0
  %111 = vmatprep.subr.mxu0 0.0
  %112 = vmatpush1.msra.mxu0 0.0
  %113 = vmatprep.subr.mxu0 0.0
  %114 = vmatpush1.msra.mxu0 0.0
  %115 = vmatprep.subr.mxu0 0.0
  %116 = vmatpush1.msra.mxu0 0.0
  %117 = vmatprep.subr.mxu0 0.0
  %118 = vmatpush1.msra.mxu0 0.0
  %119 = vmatprep.subr.mxu0 0.0
  %120 = vmatpush1.msra.mxu0 0.0
  %121 = vmatprep.subr.mxu0 0.0
  %122 = vmatpush1.msra.mxu0 0.0
  %123 = vmatprep.subr.mxu0 0.0
  %124 = vmatpush1.msra.mxu0 0.0
  %125 = vmatprep.subr.mxu0 0.0
  %126 = vmatpush1.msra.mxu0 0.0
  %127 = vmatprep.mubr.f32.mxu0 %v52
  %128 = vmatmul.mubr.f32.gmra.mrb[0].mxu0 %v17
  %v129 = vpop.f32.mrb[0].mxu0
  %v130 = vadd.f32 %v48, %v129
  %v131 = vpop.f32.mrb[0].mxu0
  %132 = vmatprep.mubr.f32.mxu0 %v55
  %133 = vmatmul.mubr.f32.gmra.mrb[0].mxu0 %v19
  %v134 = vpop.f32.mrb[0].mxu0
  %v135 = vadd.f32 %v48, %v134
  %v136 = vpop.f32.mrb[0].mxu0
  %137 = vmatprep.mubr.f32.mxu0 %v58
  %138 = vmatmul.mubr.f32.gmra.mrb[0].mxu0 %v21
  %v139 = vpop.f32.mrb[0].mxu0
  %v140 = vadd.f32 %v48, %v139
  %v141 = vpop.f32.mrb[0].mxu0
  %142 = vmatprep.mubr.f32.mxu0 %v61
  %143 = vmatmul.mubr.f32.gmra.mrb[0].mxu0 %v23
  %v144 = vpop.f32.mrb[0].mxu0
  %v145 = vadd.f32 %v48, %v144
  %v146 = vpop.f32.mrb[0].mxu0
  %147 = vdwg.mxu0
  %v148 = vmul.f32 %v130, -79.89119
  %v149 = vmul.f32 %v135, -79.89119
  %v150 = vmul.f32 %v140, -79.89119
  %v151 = vmul.f32 %v145, -79.89119
  %v152 = vld [vmem:[%s3] sm:$0xff]
  %v153 = vld [vmem:[%s3 + $0x8] sm:$0xff]
  %v154 = vld [vmem:[%s3 + $0x10] sm:$0xff]
  %v155 = vld [vmem:[%s3 + $0x18] sm:$0xff]
  %v156 = vmul.f32 %v152, 80.0796
  %v157 = vmul.f32 %v153, 80.0796
  %v158 = vmul.f32 %v154, 80.0796
  %v159 = vmul.f32 %v155, 80.0796
  %v160 = vadd.f32 %v148, %v156
  %v161 = vadd.f32 %v149, %v157
  %v162 = vadd.f32 %v150, %v158
  %v163 = vadd.f32 %v151, %v159
  %v164 = vpack.c.bf16 %v161, %v160
  %v165 = vpack.c.bf16 %v163, %v162
  %v168 = vunpack.c.l.b16 %v164
  %v169 = vunpack.c.h.b16 %v164
  %v170 = vunpack.c.l.b16 %v165
  %v171 = vunpack.c.h.b16 %v165
  %v172 = vpack.c.b16 %v168, %v168
  %v173 = vpack.c.b16 %v169, %v169
  %v174 = vpack.c.b16 %v170, %v170
  %v175 = vpack.c.b16 %v171, %v171
  %vm180 = vcmask 27648
  %181 = vst.msk [vmem:[%s4] sm:$0xf] %vm180, %v172
  %182 = vst.msk [vmem:[%s4 + $0x4] sm:$0xf] %vm180, %v173
  %183 = vst.msk [vmem:[%s4 + $0x8] sm:$0xf] %vm180, %v174
  %184 = vst.msk [vmem:[%s4 + $0xc] sm:$0xf] %vm180, %v175
  // Predicated region
  $region18: #{pix2pix_turbo_forward.21} parent=0 // pred_check
    _
  $region19: #{pix2pix_turbo_forward.21} parent=0 // pred_check_branch
    %186 = sbr.rel (0) target = $region21
  $region20: #{pix2pix_turbo_forward.21} parent=0 // pred_region
    _
  $region21: #{pix2pix_turbo_forward.21} parent=0 // pred_fallthru
    _
  // Predicated region
  $region22: #{pix2pix_turbo_forward.21} parent=0 // pred_check
    _
  $region23: #{pix2pix_turbo_forward.21} parent=0 // pred_check_branch
    %188 = sbr.rel (0) target = $region25
  $region24: #{pix2pix_turbo_forward.21} parent=0 // pred_region
    _
  $region25: #{pix2pix_turbo_forward.21} parent=0 // pred_fallthru
    _

// kernel: pix2pix_turbo_forward.23
$region0: #{pix2pix_turbo_forward.23}
  #allocation0 [shape = 'u32[]', space=smem, size = 0x4, offset = 0x4, fixed_abs, tag = 'smem constant byte address 0x4 - core index']
  #allocation1 [shape = 'u32[144,128]{1,0:T(1,128)}', space=vmem, size = 0x12000, scoped, tag = 'internal scratch']
  %s0 = inlined_call_operand.vmem [shape: bf16[32,72], index: 0, kind: input, shape index: {}]
  %s1 = inlined_call_operand.vmem [shape: bf16[72,32], index: 1, kind: input, shape index: {}]
  %s2 = inlined_call_operand.vmem [shape: f32[1,32], index: 2, kind: input, shape index: {}]
  %s3 = inlined_call_operand.vmem [shape: bf16[32,32], index: 3, kind: input, shape index: {}]
  %s4 = inlined_call_operand.vmem [shape: bf16[32,32], index: 4, kind: input, shape index: {}]
  %s5 = inlined_call_operand.vmem [shape: bf16[32,32], index: 5, kind: output, shape index: {}]
  %s6 = sld [smem:[#allocation0]]
  $region30: #{pix2pix_turbo_forward.23} parent=0
    _
  %s8 = ssub.s32 1, %s6
  %s9 = scalar_select 0, %s8, %s6
  // Predicated region
  $region2: #{pix2pix_turbo_forward.23} parent=0 // pred_check
    _
  $region3: #{pix2pix_turbo_forward.23} parent=0 // pred_check_branch
    %11 = sbr.rel (0) target = $region5
  $region4: #{pix2pix_turbo_forward.23} parent=0 // pred_region
    _
  $region5: #{pix2pix_turbo_forward.23} parent=0 // pred_fallthru
    _
  // Predicated region
  $region6: #{pix2pix_turbo_forward.23} parent=0 // pred_check
    _
  $region7: #{pix2pix_turbo_forward.23} parent=0 // pred_check_branch
    %13 = sbr.rel (0) target = $region9
  $region8: #{pix2pix_turbo_forward.23} parent=0 // pred_region
    _
  $region9: #{pix2pix_turbo_forward.23} parent=0 // pred_fallthru
    _
  // Predicated region
  $region10: #{pix2pix_turbo_forward.23} parent=0 // pred_check
    _
  $region11: #{pix2pix_turbo_forward.23} parent=0 // pred_check_branch
    %15 = sbr.rel (0) target = $region13
  $region12: #{pix2pix_turbo_forward.23} parent=0 // pred_region
    _
  $region13: #{pix2pix_turbo_forward.23} parent=0 // pred_fallthru
    _
  // Predicated region
  $region14: #{pix2pix_turbo_forward.23} parent=0 // pred_check
    _
  $region15: #{pix2pix_turbo_forward.23} parent=0 // pred_check_branch
    %17 = sbr.rel (0) target = $region17
  $region16: #{pix2pix_turbo_forward.23} parent=0 // pred_region
    _
  $region17: #{pix2pix_turbo_forward.23} parent=0 // pred_fallthru
    _
  // Predicated region
  $region18: #{pix2pix_turbo_forward.23} parent=0 // pred_check
    _
  $region19: #{pix2pix_turbo_forward.23} parent=0 // pred_check_branch
    %19 = sbr.rel (0) target = $region21
  $region20: #{pix2pix_turbo_forward.23} parent=0 // pred_region
    _
  $region21: #{pix2pix_turbo_forward.23} parent=0 // pred_fallthru
    _
  %v21 = vld [vmem:[%s0] sm:$0xf]
  %v22 = vld [vmem:[%s0 + $0x4] sm:$0xf]
  %v23 = vld [vmem:[%s0 + $0x8] sm:$0xf]
  %v24 = vld [vmem:[%s0 + $0xc] sm:$0xf]
  %v25 = vld [vmem:[%s1] sm:$0xf]
  %v26 = vld [vmem:[%s1 + $0x4] sm:$0xf]
  %v27 = vld [vmem:[%s1 + $0x8] sm:$0xf]
  %v28 = vld [vmem:[%s1 + $0xc] sm:$0xf]
  %v29 = vld [vmem:[%s1 + $0x10] sm:$0xf]
  %v30 = vld [vmem:[%s1 + $0x14] sm:$0xf]
  %v31 = vld [vmem:[%s1 + $0x18] sm:$0xf]
  %v32 = vld [vmem:[%s1 + $0x1c] sm:$0xf]
  %v33 = vld [vmem:[%s1 + $0x20] sm:$0xf]
  %v34 = vld [vmem:[%s2] sm:$0x1]
  %v36 = vlaneseq
  %v37 = vshrl.u32 %v36, 7
  %v38 = vsub.s32 0, %v37
  %v39 = vrot.slane %v34, %v38
  %v45 = vunpack.c.l.b16 %v21
  %v46 = vunpack.c.l.b16 %v22
  %v47 = vunpack.c.l.b16 %v23
  %v48 = vunpack.c.l.b16 %v24
  %v49 = vpack.c.b16 %v46, %v45
  %v50 = vpack.c.b16 %v48, %v47
  %v60 = vunpack.c.l.b16 %v25
  %v61 = vunpack.c.l.b16 %v26
  %v62 = vunpack.c.l.b16 %v27
  %v63 = vunpack.c.l.b16 %v28
  %v64 = vunpack.c.l.b16 %v29
  %v65 = vunpack.c.l.b16 %v30
  %v66 = vunpack.c.l.b16 %v31
  %v67 = vunpack.c.l.b16 %v32
  %v68 = vunpack.c.l.b16 %v33
  %v69 = vpack.c.b16 %v61, %v60
  %v70 = vpack.c.b16 %v63, %v62
  %v71 = vpack.c.b16 %v65, %v64
  %v72 = vpack.c.b16 %v67, %v66
  %v73 = vpack.c.b16 %v68, %v68
  %vm78 = vcmask 588800
  %v80 = vsel %vm78, %v49, 0
  %v83 = vsel %vm78, %v50, 0
  %vm85 = vcmask 1043456
  %v87 = vsel %vm85, %v73, 0
  %89 = vmatprep.subr.bf16.mxu0 0
  %90 = vmatpush1.bf16.msra.mxu0 %v69
  %91 = vmatprep.subr.bf16.mxu0 0
  %92 = vmatpush1.bf16.msra.mxu0 %v70
  %93 = vmatprep.subr.bf16.mxu0 0
  %94 = vmatpush1.bf16.msra.mxu0 %v71
  %95 = vmatprep.subr.bf16.mxu0 0
  %96 = vmatpush1.bf16.msra.mxu0 %v72
  %97 = vmatprep.subr.bf16.mxu0 0
  %98 = vmatpush1.bf16.msra.mxu0 %v87
  %99 = vmatprep.subr.bf16.mxu0 0
  %100 = vmatpush1.bf16.msra.mxu0 0
  %101 = vmatprep.subr.bf16.mxu0 0
  %102 = vmatpush1.bf16.msra.mxu0 0
  %103 = vmatprep.subr.bf16.mxu0 0
  %104 = vmatpush1.bf16.msra.mxu0 0
  %105 = vmatprep.subr.bf16.mxu0 0
  %106 = vmatpush1.bf16.msra.mxu0 0
  %107 = vmatprep.subr.bf16.mxu0 0
  %108 = vmatpush1.bf16.msra.mxu0 0
  %109 = vmatprep.subr.bf16.mxu0 0
  %110 = vmatpush1.bf16.msra.mxu0 0
  %111 = vmatprep.subr.bf16.mxu0 0
  %112 = vmatpush1.bf16.msra.mxu0 0
  %113 = vmatprep.subr.bf16.mxu0 0
  %114 = vmatpush1.bf16.msra.mxu0 0
  %115 = vmatprep.subr.bf16.mxu0 0
  %116 = vmatpush1.bf16.msra.mxu0 0
  %117 = vmatprep.subr.bf16.mxu0 0
  %118 = vmatpush1.bf16.msra.mxu0 0
  %119 = vmatprep.subr.bf16.mxu0 0
  %120 = vmatpush1.bf16.msra.mxu0 0
  %121 = vmatprep.mubr.bf16.mxu0 0
  %122 = vmatmul.mubr.bf16.gmra.mrb[0].mxu0 %v80
  %v123 = vpop.f32.mrb[0].mxu0
  %v124 = vadd.f32 %v39, %v123
  %v125 = vpop.f32.mrb[0].mxu0
  %v126 = vpop.f32.mrb[0].mxu0
  %v127 = vadd.f32 %v39, %v126
  %v128 = vpop.f32.mrb[0].mxu0
  %129 = vmatprep.mubr.bf16.mxu0 0
  %130 = vmatmul.mubr.bf16.gmra.mrb[0].mxu0 %v83
  %v131 = vpop.f32.mrb[0].mxu0
  %v132 = vadd.f32 %v39, %v131
  %v133 = vpop.f32.mrb[0].mxu0
  %v134 = vpop.f32.mrb[0].mxu0
  %v135 = vadd.f32 %v39, %v134
  %v136 = vpop.f32.mrb[0].mxu0
  %137 = vdwg.mxu0
  %v138 = vsub.f32 0.0, %v124
  %v139 = vsub.f32 0.0, %v127
  %v140 = vsub.f32 0.0, %v132
  %v141 = vsub.f32 0.0, %v135
  %v142 = vmul.f32 %v138, 1.442695
  %v143 = vpow.pop %v142
  %v144 = vmul.f32 %v139, 1.442695
  %v145 = vpow.pop %v144
  %v146 = vmul.f32 %v140, 1.442695
  %v147 = vpow.pop %v146
  %v148 = vmul.f32 %v141, 1.442695
  %v149 = vpow.pop %v148
  %v150 = vadd.f32 %v143, 1.0
  %v151 = vadd.f32 %v145, 1.0
  %v152 = vadd.f32 %v147, 1.0
  %v153 = vadd.f32 %v149, 1.0
  %v154 = vrcp.pop %v150
  %v155 = vrcp.pop %v151
  %v156 = vrcp.pop %v152
  %v157 = vrcp.pop %v153
  %v158 = vmul.f32 %v124, %v154
  %v159 = vmul.f32 %v127, %v155
  %v160 = vmul.f32 %v132, %v156
  %v161 = vmul.f32 %v135, %v157
  %v162 = vld [vmem:[%s3] sm:$0xf]
  %v163 = vld [vmem:[%s3 + $0x4] sm:$0xf]
  %v164 = vld [vmem:[%s3 + $0x8] sm:$0xf]
  %v165 = vld [vmem:[%s3 + $0xc] sm:$0xf]
  %v166 = vld [vmem:[%s4] sm:$0xf]
  %v167 = vld [vmem:[%s4 + $0x4] sm:$0xf]
  %v168 = vld [vmem:[%s4 + $0x8] sm:$0xf]
  %v169 = vld [vmem:[%s4 + $0xc] sm:$0xf]
  %v174 = vunpack.c.l.b16 %v162
  %v175 = vunpack.c.l.b16 %v163
  %v176 = vunpack.c.l.b16 %v164
  %v177 = vunpack.c.l.b16 %v165
  %v178 = vpack.c.b16 %v175, %v174
  %v179 = vpack.c.b16 %v177, %v176
  %v184 = vunpack.c.l.b16 %v166
  %v185 = vunpack.c.l.b16 %v167
  %v186 = vunpack.c.l.b16 %v168
  %v187 = vunpack.c.l.b16 %v169
  %v188 = vpack.c.b16 %v185, %v184
  %v189 = vpack.c.b16 %v187, %v186
  %vm192 = vcmask 261120
  %v194 = vsel %vm192, %v178, 0
  %v197 = vsel %vm192, %v179, 0
  %199 = vmatprep.subr.bf16.mxu0 0
  %200 = vmatpush1.bf16.msra.mxu0 %v188
  %201 = vmatprep.subr.bf16.mxu0 0
  %202 = vmatpush1.bf16.msra.mxu0 %v189
  %203 = vmatprep.subr.bf16.mxu0 0
  %204 = vmatpush1.bf16.msra.mxu0 0
  %205 = vmatprep.subr.bf16.mxu0 0
  %206 = vmatpush1.bf16.msra.mxu0 0
  %207 = vmatprep.subr.bf16.mxu0 0
  %208 = vmatpush1.bf16.msra.mxu0 0
  %209 = vmatprep.subr.bf16.mxu0 0
  %210 = vmatpush1.bf16.msra.mxu0 0
  %211 = vmatprep.subr.bf16.mxu0 0
  %212 = vmatpush1.bf16.msra.mxu0 0
  %213 = vmatprep.subr.bf16.mxu0 0
  %214 = vmatpush1.bf16.msra.mxu0 0
  %215 = vmatprep.subr.bf16.mxu0 0
  %216 = vmatpush1.bf16.msra.mxu0 0
  %217 = vmatprep.subr.bf16.mxu0 0
  %218 = vmatpush1.bf16.msra.mxu0 0
  %219 = vmatprep.subr.bf16.mxu0 0
  %220 = vmatpush1.bf16.msra.mxu0 0
  %221 = vmatprep.subr.bf16.mxu0 0
  %222 = vmatpush1.bf16.msra.mxu0 0
  %223 = vmatprep.subr.bf16.mxu0 0
  %224 = vmatpush1.bf16.msra.mxu0 0
  %225 = vmatprep.subr.bf16.mxu0 0
  %226 = vmatpush1.bf16.msra.mxu0 0
  %227 = vmatprep.subr.bf16.mxu0 0
  %228 = vmatpush1.bf16.msra.mxu0 0
  %229 = vmatprep.subr.bf16.mxu0 0
  %230 = vmatpush1.bf16.msra.mxu0 0
  %231 = vmatprep.mubr.bf16.mxu0 0
  %232 = vmatmul.mubr.bf16.gmra.mrb[0].mxu0 %v194
  %v233 = vpop.f32.mrb[0].mxu0
  %v234 = vadd.f32 0.0, %v233
  %v235 = vpop.f32.mrb[0].mxu0
  %v236 = vpop.f32.mrb[0].mxu0
  %v237 = vadd.f32 0.0, %v236
  %v238 = vpop.f32.mrb[0].mxu0
  %239 = vmatprep.mubr.bf16.mxu0 0
  %240 = vmatmul.mubr.bf16.gmra.mrb[0].mxu0 %v197
  %v241 = vpop.f32.mrb[0].mxu0
  %v242 = vadd.f32 0.0, %v241
  %v243 = vpop.f32.mrb[0].mxu0
  %v244 = vpop.f32.mrb[0].mxu0
  %v245 = vadd.f32 0.0, %v244
  %v246 = vpop.f32.mrb[0].mxu0
  %247 = vdwg.mxu0
  %v248 = vadd.f32 %v158, %v234
  %v249 = vadd.f32 %v159, %v237
  %v250 = vadd.f32 %v160, %v242
  %v251 = vadd.f32 %v161, %v245
  %v252 = vpack.c.bf16 %v249, %v248
  %v253 = vpack.c.bf16 %v251, %v250
  %v256 = vunpack.c.l.b16 %v252
  %v257 = vunpack.c.h.b16 %v252
  %v258 = vunpack.c.l.b16 %v253
  %v259 = vunpack.c.h.b16 %v253
  %v260 = vpack.c.b16 %v256, %v256
  %v261 = vpack.c.b16 %v257, %v257
  %v262 = vpack.c.b16 %v258, %v258
  %v263 = vpack.c.b16 %v259, %v259
  %vm268 = vcmask 257024
  %269 = vst.msk [vmem:[%s5] sm:$0xf] %vm268, %v260
  %270 = vst.msk [vmem:[%s5 + $0x4] sm:$0xf] %vm268, %v261
  %271 = vst.msk [vmem:[%s5 + $0x8] sm:$0xf] %vm268, %v262
  %272 = vst.msk [vmem:[%s5 + $0xc] sm:$0xf] %vm268, %v263
  // Predicated region
  $region22: #{pix2pix_turbo_forward.23} parent=0 // pred_check
    _
  $region23: #{pix2pix_turbo_forward.23} parent=0 // pred_check_branch
    %274 = sbr.rel (0) target = $region25
  $region24: #{pix2pix_turbo_forward.23} parent=0 // pred_region
    _
  $region25: #{pix2pix_turbo_forward.23} parent=0 // pred_fallthru
    _
  // Predicated region
  $region26: #{pix2pix_turbo_forward.23} parent=0 // pred_check
    _
  $region27: #{pix2pix_turbo_forward.23} parent=0 // pred_check_branch
    %276 = sbr.rel (0) target = $region29
  $region28: #{pix2pix_turbo_forward.23} parent=0 // pred_region
    _
  $region29: #{pix2pix_turbo_forward.23} parent=0 // pred_fallthru
    _

// kernel: pix2pix_turbo_forward.24
$region0: #{pix2pix_turbo_forward.24}
  #allocation0 [shape = 'u32[]', space=smem, size = 0x4, offset = 0x4, fixed_abs, tag = 'smem constant byte address 0x4 - core index']
  #allocation1 [shape = 'u32[144,128]{1,0:T(1,128)}', space=vmem, size = 0x12000, scoped, tag = 'internal scratch']
  %s0 = inlined_call_operand.vmem [shape: bf16[2,10,10,8], index: 0, kind: input, shape index: {}]
  %s1 = inlined_call_operand.vmem [shape: bf16[9,8,32], index: 1, kind: input, shape index: {}]
  %s2 = inlined_call_operand.vmem [shape: f32[1,32], index: 2, kind: input, shape index: {}]
  %s3 = inlined_call_operand.vmem [shape: bf16[2,8,8,32], index: 3, kind: output, shape index: {}]
  %s4 = sld [smem:[#allocation0]]
  $region45: #{pix2pix_turbo_forward.24} parent=0
    _
  %s6 = ssub.s32 1, %s4
  %s7 = scalar_select 0, %s6, %s4
  loop: start=0, step=1, limit=4
  $region2: #{pix2pix_turbo_forward.24} parent=0 // loop_pre_header
    _
  $region3: #{pix2pix_turbo_forward.24} parent=0 // loop_header
    %s9 = sphi 0, %s13
    %p10 = scmp.ge.s32.totalorder %s9, 4
    %s16 = sphi 0, %s28
    %s17 = sphi 0, %s24
    %s18 = sphi 0, %s16
    %s19 = sphi 0, %s17
    %s20 = sphi 0, %s18
    %s21 = sphi 0, %s19
    %s31 = sphi 0, %s33
    %s34 = sphi 0, %s31
    %s35 = sphi 0, %s34
    %s51 = sphi 0, %s35
    %s55 = sphi 0, %s55
    %s57 = sphi 0, %s55
    %s58 = sphi 0, %s57
    %s72 = sphi 0, %s58
    %s76 = sphi 0, %s76
    %s78 = sphi 0, %s76
    %s79 = sphi 0, %s78
    %s93 = sphi 0, %s79
    %s101 = sphi 0, %s103
    %s104 = sphi 0, %s101
    %s105 = sphi 0, %s104
    %s121 = sphi 0, %s105
  $region4: #{pix2pix_turbo_forward.24} parent=0 // loop_header_branch
    %12 = sbr.rel (%p10) target = $region8
  $region5: #{pix2pix_turbo_forward.24} parent=0 // loop_body
    %s14 = ssub.s32 %s9, 1
    %s15 = ssub.s32 %s9, 2
    %s22 = sadd.s32 1, %s17
    %p23 = scmp.ge.s32.totalorder %s22, 1
    %s24 = scalar_select %p23, 0, %s22
    %s25 = sadd.s32 1, %s16
    %s26 = scalar_select %p23, %s25, %s16
    %p27 = scmp.ge.s32.totalorder %s26, 2
    %s28 = scalar_select %p27, 0, %s26
    %s29 = ssub.s32 %s16, %s28
    %p30 = scmp.eq.s32.totalorder %s29, 0
    %s32 = sadd.s32 %s31, 1
    %s33 = scalar_select %p30, %s31, %s32
    %p36 = pneg %p30
    %p37 = scmp.eq.s32.totalorder %s9, 1
    %p38 = por %p36, %p37
    %p39 = scmp.ne.s32.totalorder %s31, %s34
    %p40 = scmp.eq.s32.totalorder %s9, 0
    %p41 = por %p39, %p40
    %p42 = scmp.ne.s32.totalorder %s31, %s34
    %p43 = scmp.eq.s32.totalorder %s14, 1
    %p44 = por %p42, %p43
    %p45 = scmp.ne.s32.totalorder %s34, %s35
    %p46 = scmp.eq.s32.totalorder %s14, 0
    %p47 = por %p45, %p46
    %p48 = scmp.ne.s32.totalorder %s34, %s35
    %p49 = scmp.eq.s32.totalorder %s15, 1
    %p50 = por %p48, %p49
    %p52 = scmp.ne.s32.totalorder %s35, %s51
    %p53 = scmp.eq.s32.totalorder %s15, 0
    %p54 = por %p52, %p53
    %s56 = sadd.s32 %s55, 1
    %p59 = scmp.eq.s32.totalorder %s9, 1
    %p60 = scmp.ne.s32.totalorder %s55, %s57
    %p61 = scmp.eq.s32.totalorder %s9, 0
    %p62 = por %p60, %p61
    %p63 = scmp.ne.s32.totalorder %s55, %s57
    %p64 = scmp.eq.s32.totalorder %s14, 1
    %p65 = por %p63, %p64
    %p66 = scmp.ne.s32.totalorder %s57, %s58
    %p67 = scmp.eq.s32.totalorder %s14, 0
    %p68 = por %p66, %p67
    %p69 = scmp.ne.s32.totalorder %s57, %s58
    %p70 = scmp.eq.s32.totalorder %s15, 1
    %p71 = por %p69, %p70
    %p73 = scmp.ne.s32.totalorder %s58, %s72
    %p74 = scmp.eq.s32.totalorder %s15, 0
    %p75 = por %p73, %p74
    %s77 = sadd.s32 %s76, 1
    %p80 = scmp.eq.s32.totalorder %s9, 1
    %p81 = scmp.ne.s32.totalorder %s76, %s78
    %p82 = scmp.eq.s32.totalorder %s9, 0
    %p83 = por %p81, %p82
    %p84 = scmp.ne.s32.totalorder %s76, %s78
    %p85 = scmp.eq.s32.totalorder %s14, 1
    %p86 = por %p84, %p85
    %p87 = scmp.ne.s32.totalorder %s78, %s79
    %p88 = scmp.eq.s32.totalorder %s14, 0
    %p89 = por %p87, %p88
    %p90 = scmp.ne.s32.totalorder %s78, %s79
    %p91 = scmp.eq.s32.totalorder %s15, 1
    %p92 = por %p90, %p91
    %p94 = scmp.ne.s32.totalorder %s79, %s93
    %p95 = scmp.eq.s32.totalorder %s15, 0
    %p96 = por %p94, %p95
    %s97 = ssub.s32 %s16, %s28
    %s98 = ssub.s32 %s17, %s24
    %s99 = sor.u32 %s97, %s98
    %p100 = scmp.eq.s32.totalorder %s99, 0
    %s102 = sadd.s32 %s101, 1
    %s103 = scalar_select %p100, %s101, %s102
    %p106 = pneg %p100
    %p107 = scmp.eq.s32.totalorder %s9, 1
    %p108 = por %p106, %p107
    %p109 = scmp.ne.s32.totalorder %s101, %s104
    %p110 = scmp.eq.s32.totalorder %s9, 0
    %p111 = por %p109, %p110
    %p112 = scmp.ne.s32.totalorder %s101, %s104
    %p113 = scmp.eq.s32.totalorder %s14, 1
    %p114 = por %p112, %p113
    %p115 = scmp.ne.s32.totalorder %s104, %s105
    %p116 = scmp.eq.s32.totalorder %s14, 0
    %p117 = por %p115, %p116
    %p118 = scmp.ne.s32.totalorder %s104, %s105
    %p119 = scmp.eq.s32.totalorder %s15, 1
    %p120 = por %p118, %p119
    %p122 = scmp.ne.s32.totalorder %s105, %s121
    %p123 = scmp.eq.s32.totalorder %s15, 0
    %p124 = por %p122, %p123
    %p125 = scmp.le.s32.totalorder 1, %s9
    %p126 = scmp.lt.s32.totalorder %s9, 3
    %p127 = pnand %p125, %p126
    %p128 = pneg %p127
    // Predicated region
    $region9: #{pix2pix_turbo_forward.24} parent=5 // pred_check
      _
    $region10: #{pix2pix_turbo_forward.24} parent=5 // pred_check_branch
      %130 = sbr.rel (%p127) target = $region12
    $region11: #{pix2pix_turbo_forward.24} parent=5 // pred_region
      %s131 = ssub.s32 %s9, 1
      // Predicated region
      $region13: #{pix2pix_turbo_forward.24} parent=11 // pred_check
        %p132 = pneg %p68
      $region14: #{pix2pix_turbo_forward.24} parent=11 // pred_check_branch
        %134 = sbr.rel (%p132) target = $region16
      $region15: #{pix2pix_turbo_forward.24} parent=11 // pred_region
        _
      $region16: #{pix2pix_turbo_forward.24} parent=11 // pred_fallthru
        _
      // Predicated region
      $region17: #{pix2pix_turbo_forward.24} parent=11 // pred_check
        %p135 = pneg %p89
      $region18: #{pix2pix_turbo_forward.24} parent=11 // pred_check_branch
        %137 = sbr.rel (%p135) target = $region20
      $region19: #{pix2pix_turbo_forward.24} parent=11 // pred_region
        _
      $region20: #{pix2pix_turbo_forward.24} parent=11 // pred_fallthru
        _
    $region12: #{pix2pix_turbo_forward.24} parent=5 // pred_fallthru
      _
    %p138 = scmp.lt.s32.totalorder %s9, 2
    // Predicated region
    $region21: #{pix2pix_turbo_forward.24} parent=5 // pred_check
      %p139 = pneg %p138
    $region22: #{pix2pix_turbo_forward.24} parent=5 // pred_check_branch
      %141 = sbr.rel (%p139) target = $region24
    $region23: #{pix2pix_turbo_forward.24} parent=5 // pred_region
      // Predicated region
      $region25: #{pix2pix_turbo_forward.24} parent=23 // pred_check
        %p142 = pneg %p41
      $region26: #{pix2pix_turbo_forward.24} parent=23 // pred_check_branch
        %144 = sbr.rel (%p142) target = $region28
      $region27: #{pix2pix_turbo_forward.24} parent=23 // pred_region
        %p145 = scmp.lt.s32.totalorder %s16, 1
        %s146 = scalar_select %p145, %s16, 1
        %s147 = smul.addr %s146, 20
        %s148 = smul.addr %s147, 4
        %s149 = scalar_lea.vmem %s0, %s148
      $region28: #{pix2pix_turbo_forward.24} parent=23 // pred_fallthru
        _
    $region24: #{pix2pix_turbo_forward.24} parent=5 // pred_fallthru
      _
    %p150 = scmp.le.s32.totalorder 1, %s9
    %p151 = scmp.lt.s32.totalorder %s9, 3
    %p152 = pnand %p150, %p151
    %p153 = pneg %p152
    // Predicated region
    $region29: #{pix2pix_turbo_forward.24} parent=5 // pred_check
      _
    $region30: #{pix2pix_turbo_forward.24} parent=5 // pred_check_branch
      %155 = sbr.rel (%p152) target = $region32
    $region31: #{pix2pix_turbo_forward.24} parent=5 // pred_region
      %s156 = ssub.s32 %s9, 1
      %p157 = scmp.lt.s32.totalorder %s18, 1
      %s158 = scalar_select %p157, %s18, 1
      %s159 = smul.addr %s158, 20
      %s160 = smul.addr %s159, 4
      %s161 = scalar_lea.vmem %s0, %s160
      %p162 = pneg %p47
      %p163 = pneg %p44
      %p164 = pneg %p68
      %p165 = pneg %p65
      %p166 = pneg %p89
      %p167 = pneg %p86
      %p168 = pneg %p117
      %p169 = pneg %p114
      %s170 = smul.u32 8, %s19
      %p171 = scmp.lt.s32.totalorder %s18, 1
      %s172 = scalar_select %p171, %s18, 1
      %p173 = scmp.lt.s32.totalorder %s170, 7
      %s174 = scalar_select %p173, %s170, 7
      %s175 = smul.addr %s172, 8
      %s176 = sadd.s32 %s174, %s175
      %s177 = smul.addr %s176, 4
      %s178 = scalar_lea.vmem %s3, %s177
      %p179 = scmp.lt.s32.totalorder %s18, 1
      %s180 = scalar_select %p179, %s18, 1
      %s181 = smul.addr %s180, 20
      %s182 = smul.addr %s181, 4
      %s183 = scalar_lea.vmem %s0, %s182
      %s184 = smul.u32 8, %s19
      %p185 = scmp.lt.s32.totalorder %s18, 1
      %s186 = scalar_select %p185, %s18, 1
      %p187 = scmp.lt.s32.totalorder %s184, 7
      %s188 = scalar_select %p187, %s184, 7
      %s189 = smul.addr %s186, 8
      %s190 = sadd.s32 %s188, %s189
      %s191 = smul.addr %s190, 4
      %s192 = scalar_lea.vmem %s3, %s191
      %s193 = smul.u32 8, %s19
      %s195 = smul.u32 %s19, 8
      %s196 = smul.u32 %s195, 2
      %s197 = smul.addr %s196, 4
      %s198 = scalar_lea.vmem %s183, %s197
      %v199 = vld [vmem:[%s198] sm:$0xf]
      %v200 = vld [vmem:[%s198 + $0x4] sm:$0x1]
      %v201 = vld [vmem:[%s198 + $0x8] sm:$0xf]
      %v202 = vld [vmem:[%s198 + $0xc] sm:$0x1]
      %v203 = vld [vmem:[%s198 + $0x10] sm:$0xf]
      %v204 = vld [vmem:[%s198 + $0x14] sm:$0x1]
      %v205 = vld [vmem:[%s198 + $0x18] sm:$0xf]
      %v206 = vld [vmem:[%s198 + $0x1c] sm:$0x1]
      %v207 = vld [vmem:[%s198 + $0x20] sm:$0xf]
      %v208 = vld [vmem:[%s198 + $0x24] sm:$0x1]
      %v209 = vld [vmem:[%s198 + $0x28] sm:$0xf]
      %v210 = vld [vmem:[%s198 + $0x2c] sm:$0x1]
      %v211 = vld [vmem:[%s198 + $0x30] sm:$0xf]
      %v212 = vld [vmem:[%s198 + $0x34] sm:$0x1]
      %v213 = vld [vmem:[%s198 + $0x38] sm:$0xf]
      %v214 = vld [vmem:[%s198 + $0x3c] sm:$0x1]
      %v215 = vld [vmem:[%s198 + $0x40] sm:$0xf]
      %v216 = vld [vmem:[%s198 + $0x44] sm:$0x1]
      %v217 = vld [vmem:[%s198 + $0x48] sm:$0xf]
      %v218 = vld [vmem:[%s198 + $0x4c] sm:$0x1]
      %v219 = vunpack.c.l.bf16 %v199
      %v220 = vunpack.c.l.bf16 %v200
      %v221 = vunpack.c.l.bf16 %v201
      %v222 = vunpack.c.l.bf16 %v202
      %v223 = vunpack.c.l.bf16 %v203
      %v224 = vunpack.c.l.bf16 %v204
      %v225 = vunpack.c.l.bf16 %v205
      %v226 = vunpack.c.l.bf16 %v206
      %v227 = vunpack.c.l.bf16 %v207
      %v228 = vunpack.c.l.bf16 %v208
      %v229 = vunpack.c.l.bf16 %v209
      %v230 = vunpack.c.l.bf16 %v210
      %v231 = vunpack.c.l.bf16 %v211
      %v232 = vunpack.c.l.bf16 %v212
      %v233 = vunpack.c.l.bf16 %v213
      %v234 = vunpack.c.l.bf16 %v214
      %v235 = vunpack.c.l.bf16 %v215
      %v236 = vunpack.c.l.bf16 %v216
      %v237 = vunpack.c.l.bf16 %v217
      %v238 = vunpack.c.l.bf16 %v218
      %v239 = vpack.c.bf16 %v221, %v219
      %v240 = vpack.c.bf16 %v225, %v223
      %v241 = vpack.c.bf16 %v229, %v227
      %v242 = vpack.c.bf16 %v233, %v231
      %v243 = vld [vmem:[%s1] sm:$0xf]
      %vm260 = vcmask 1046528
      %v261 = vrot.slane %v219, 1
      %v262 = vrot.slane %v220, 1
      %v263 = vsel %vm260, %v261, %v262
      %v264 = vrot.slane %v221, 1
      %v265 = vrot.slane %v222, 1
      %v266 = vsel %vm260, %v264, %v265
      %v267 = vrot.slane %v223, 1
      %v268 = vrot.slane %v224, 1
      %v269 = vsel %vm260, %v267, %v268
      %v270 = vrot.slane %v225, 1
      %v271 = vrot.slane %v226, 1
      %v272 = vsel %vm260, %v270, %v271
      %v273 = vrot.slane %v227, 1
      %v274 = vrot.slane %v228, 1
      %v275 = vsel %vm260, %v273, %v274
      %v276 = vrot.slane %v229, 1
      %v277 = vrot.slane %v230, 1
      %v278 = vsel %vm260, %v276, %v277
      %v279 = vrot.slane %v231, 1
      %v280 = vrot.slane %v232, 1
      %v281 = vsel %vm260, %v279, %v280
      %v282 = vrot.slane %v233, 1
      %v283 = vrot.slane %v234, 1
      %v284 = vsel %vm260, %v282, %v283
      %v293 = vpack.c.bf16 %v266, %v263
      %v294 = vpack.c.bf16 %v272, %v269
      %v295 = vpack.c.bf16 %v278, %v275
      %v296 = vpack.c.bf16 %v284, %v281
      %s297 = scalar_lea.vmem %s1, 4
      %v298 = vld [vmem:[%s297] sm:$0xf]
      %vm299 = vcmask 64512
      %v301 = vsel %vm299, %v293, 0
      %v304 = vsel %vm299, %v294, 0
      %v307 = vsel %vm299, %v295, 0
      %v310 = vsel %vm299, %v296, 0
      %vm312 = vcmask 1043456
      %v314 = vsel %vm312, %v298, 0
      %316 = vmatprep.subr.bf16.mxu0 0
      %317 = vmatpush1.bf16.msra.mxu0 %v314
      %318 = vmatprep.subr.bf16.mxu0 0
      %319 = vmatpush1.bf16.msra.mxu0 0
      %320 = vmatprep.subr.bf16.mxu0 0
      %321 = vmatpush1.bf16.msra.mxu0 0
      %322 = vmatprep.subr.bf16.mxu0 0
      %323 = vmatpush1.bf16.msra.mxu0 0
      %324 = vmatprep.subr.bf16.mxu0 0
      %325 = vmatpush1.bf16.msra.mxu0 0
      %326 = vmatprep.subr.bf16.mxu0 0
      %327 = vmatpush1.bf16.msra.mxu0 0
      %328 = vmatprep.subr.bf16.mxu0 0
      %329 = vmatpush1.bf16.msra.mxu0 0
      %330 = vmatprep.subr.bf16.mxu0 0
      %331 = vmatpush1.bf16.msra.mxu0 0
      %332 = vmatprep.subr.bf16.mxu0 0
      %333 = vmatpush1.bf16.msra.mxu0 0
      %334 = vmatprep.subr.bf16.mxu0 0
      %335 = vmatpush1.bf16.msra.mxu0 0
      %336 = vmatprep.subr.bf16.mxu0 0
      %337 = vmatpush1.bf16.msra.mxu0 0
      %338 = vmatprep.subr.bf16.mxu0 0
      %339 = vmatpush1.bf16.msra.mxu0 0
      %340 = vmatprep.subr.bf16.mxu0 0
      %341 = vmatpush1.bf16.msra.mxu0 0
      %342 = vmatprep.subr.bf16.mxu0 0
      %343 = vmatpush1.bf16.msra.mxu0 0
      %344 = vmatprep.subr.bf16.mxu0 0
      %345 = vmatpush1.bf16.msra.mxu0 0
      %346 = vmatprep.subr.bf16.mxu0 0
      %347 = vmatpush1.bf16.msra.mxu0 0
      %348 = vmatprep.mubr.bf16.mxu0 0
      %349 = vmatmul.mubr.bf16.gmra.mrb[0].mxu0 %v301
      %v350 = vpop.f32.mrb[0].mxu0
      %v351 = vadd.f32 0.0, %v350
      %v352 = vpop.f32.mrb[0].mxu0
      %v353 = vpop.f32.mrb[0].mxu0
      %v354 = vadd.f32 0.0, %v353
      %v355 = vpop.f32.mrb[0].mxu0
      %356 = vmatprep.mubr.bf16.mxu0 0
      %357 = vmatmul.mubr.bf16.gmra.mrb[0].mxu0 %v304
      %v358 = vpop.f32.mrb[0].mxu0
      %v359 = vadd.f32 0.0, %v358
      %v360 = vpop.f32.mrb[0].mxu0
      %v361 = vpop.f32.mrb[0].mxu0
      %v362 = vadd.f32 0.0, %v361
      %v363 = vpop.f32.mrb[0].mxu0
      %364 = vmatprep.mubr.bf16.mxu0 0
      %365 = vmatmul.mubr.bf16.gmra.mrb[0].mxu0 %v307
      %v366 = vpop.f32.mrb[0].mxu0
      %v367 = vadd.f32 0.0, %v366
      %v368 = vpop.f32.mrb[0].mxu0
      %v369 = vpop.f32.mrb[0].mxu0
      %v370 = vadd.f32 0.0, %v369
      %v371 = vpop.f32.mrb[0].mxu0
      %372 = vmatprep.mubr.bf16.mxu0 0
      %373 = vmatmul.mubr.bf16.gmra.mrb[0].mxu0 %v310
      %v374 = vpop.f32.mrb[0].mxu0
      %v375 = vadd.f32 0.0, %v374
      %v376 = vpop.f32.mrb[0].mxu0
      %v377 = vpop.f32.mrb[0].mxu0
      %v378 = vadd.f32 0.0, %v377
      %v379 = vpop.f32.mrb[0].mxu0
      %380 = vdwg.mxu0
      %v382 = vsel %vm299, %v239, 0
      %v385 = vsel %vm299, %v240, 0
      %v388 = vsel %vm299, %v241, 0
      %v391 = vsel %vm299, %v242, 0
      %v394 = vsel %vm312, %v243, 0
      %396 = vmatprep.subr.bf16.mxu0 0
      %397 = vmatpush1.bf16.msra.mxu0 %v394
      %398 = vmatprep.subr.bf16.mxu0 0
      %399 = vmatpush1.bf16.msra.mxu0 0
      %400 = vmatprep.subr.bf16.mxu0 0
      %401 = vmatpush1.bf16.msra.mxu0 0
      %402 = vmatprep.subr.bf16.mxu0 0
      %403 = vmatpush1.bf16.msra.mxu0 0
      %404 = vmatprep.subr.bf16.mxu0 0
      %405 = vmatpush1.bf16.msra.mxu0 0
      %406 = vmatprep.subr.bf16.mxu0 0
      %407 = vmatpush1.bf16.msra.mxu0 0
      %408 = vmatprep.subr.bf16.mxu0 0
      %409 = vmatpush1.bf16.msra.mxu0 0
      %410 = vmatprep.subr.bf16.mxu0 0
      %411 = vmatpush1.bf16.msra.mxu0 0
      %412 = vmatprep.subr.bf16.mxu0 0
      %413 = vmatpush1.bf16.msra.mxu0 0
      %414 = vmatprep.subr.bf16.mxu0 0
      %415 = vmatpush1.bf16.msra.mxu0 0
      %416 = vmatprep.subr.bf16.mxu0 0
      %417 = vmatpush1.bf16.msra.mxu0 0
      %418 = vmatprep.subr.bf16.mxu0 0
      %419 = vmatpush1.bf16.msra.mxu0 0
      %420 = vmatprep.subr.bf16.mxu0 0
      %421 = vmatpush1.bf16.msra.mxu0 0
      %422 = vmatprep.subr.bf16.mxu0 0
      %423 = vmatpush1.bf16.msra.mxu0 0
      %424 = vmatprep.subr.bf16.mxu0 0
      %425 = vmatpush1.bf16.msra.mxu0 0
      %426 = vmatprep.subr.bf16.mxu0 0
      %427 = vmatpush1.bf16.msra.mxu0 0
      %428 = vmatprep.mubr.bf16.mxu0 0
      %429 = vmatmul.mubr.bf16.gmra.mrb[0].mxu0 %v382
      %v430 = vpop.f32.mrb[0].mxu0
      %v431 = vadd.f32 %v351, %v430
      %v432 = vpop.f32.mrb[0].mxu0
      %v433 = vpop.f32.mrb[0].mxu0
      %v434 = vadd.f32 %v354, %v433
      %v435 = vpop.f32.mrb[0].mxu0
      %436 = vmatprep.mubr.bf16.mxu0 0
      %437 = vmatmul.mubr.bf16.gmra.mrb[0].mxu0 %v385
      %v438 = vpop.f32.mrb[0].mxu0
      %v439 = vadd.f32 %v359, %v438
      %v440 = vpop.f32.mrb[0].mxu0
      %v441 = vpop.f32.mrb[0].mxu0
      %v442 = vadd.f32 %v362, %v441
      %v443 = vpop.f32.mrb[0].mxu0
      %444 = vmatprep.mubr.bf16.mxu0 0
      %445 = vmatmul.mubr.bf16.gmra.mrb[0].mxu0 %v388
      %v446 = vpop.f32.mrb[0].mxu0
      %v447 = vadd.f32 %v367, %v446
      %v448 = vpop.f32.mrb[0].mxu0
      %v449 = vpop.f32.mrb[0].mxu0
      %v450 = vadd.f32 %v370, %v449
      %v451 = vpop.f32.mrb[0].mxu0
      %452 = vmatprep.mubr.bf16.mxu0 0
      %453 = vmatmul.mubr.bf16.gmra.mrb[0].mxu0 %v391
      %v454 = vpop.f32.mrb[0].mxu0
      %v455 = vadd.f32 %v375, %v454
      %v456 = vpop.f32.mrb[0].mxu0
      %v457 = vpop.f32.mrb[0].mxu0
      %v458 = vadd.f32 %v378, %v457
      %v459 = vpop.f32.mrb[0].mxu0
      %460 = vdwg.mxu0
      %vm461 = vcmask 1045504
      %v462 = vrot.slane %v219, 2
      %v463 = vrot.slane %v220, 2
      %v464 = vsel %vm461, %v462, %v463
      %v465 = vrot.slane %v221, 2
      %v466 = vrot.slane %v222, 2
      %v467 = vsel %vm461, %v465, %v466
      %v468 = vrot.slane %v223, 2
      %v469 = vrot.slane %v224, 2
      %v470 = vsel %vm461, %v468, %v469
      %v471 = vrot.slane %v225, 2
      %v472 = vrot.slane %v226, 2
      %v473 = vsel %vm461, %v471, %v472
      %v474 = vrot.slane %v227, 2
      %v475 = vrot.slane %v228, 2
      %v476 = vsel %vm461, %v474, %v475
      %v477 = vrot.slane %v229, 2
      %v478 = vrot.slane %v230, 2
      %v479 = vsel %vm461, %v477, %v478
      %v480 = vrot.slane %v231, 2
      %v481 = vrot.slane %v232, 2
      %v482 = vsel %vm461, %v480, %v481
      %v483 = vrot.slane %v233, 2
      %v484 = vrot.slane %v234, 2
      %v485 = vsel %vm461, %v483, %v484
      %v494 = vpack.c.bf16 %v467, %v464
      %v495 = vpack.c.bf16 %v473, %v470
      %v496 = vpack.c.bf16 %v479, %v476
      %v497 = vpack.c.bf16 %v485, %v482
      %s498 = scalar_lea.vmem %s1, 8
      %v499 = vld [vmem:[%s498] sm:$0xf]
      %v501 = vsel %vm299, %v494, 0
      %v504 = vsel %vm299, %v495, 0
      %v507 = vsel %vm299, %v496, 0
      %v510 = vsel %vm299, %v497, 0
      %v513 = vsel %vm312, %v499, 0
      %515 = vmatprep.subr.bf16.mxu0 0
      %516 = vmatpush1.bf16.msra.mxu0 %v513
      %517 = vmatprep.subr.bf16.mxu0 0
      %518 = vmatpush1.bf16.msra.mxu0 0
      %519 = vmatprep.subr.bf16.mxu0 0
      %520 = vmatpush1.bf16.msra.mxu0 0
      %521 = vmatprep.subr.bf16.mxu0 0
      %522 = vmatpush1.bf16.msra.mxu0 0
      %523 = vmatprep.subr.bf16.mxu0 0
      %524 = vmatpush1.bf16.msra.mxu0 0
      %525 = vmatprep.subr.bf16.mxu0 0
      %526 = vmatpush1.bf16.msra.mxu0 0
      %527 = vmatprep.subr.bf16.mxu0 0
      %528 = vmatpush1.bf16.msra.mxu0 0
      %529 = vmatprep.subr.bf16.mxu0 0
      %530 = vmatpush1.bf16.msra.mxu0 0
      %531 = vmatprep.subr.bf16.mxu0 0
      %532 = vmatpush1.bf16.msra.mxu0 0
      %533 = vmatprep.subr.bf16.mxu0 0
      %534 = vmatpush1.bf16.msra.mxu0 0
      %535 = vmatprep.subr.bf16.mxu0 0
      %536 = vmatpush1.bf16.msra.mxu0 0
      %537 = vmatprep.subr.bf16.mxu0 0
      %538 = vmatpush1.bf16.msra.mxu0 0
      %539 = vmatprep.subr.bf16.mxu0 0
      %540 = vmatpush1.bf16.msra.mxu0 0
      %541 = vmatprep.subr.bf16.mxu0 0
      %542 = vmatpush1.bf16.msra.mxu0 0
      %543 = vmatprep.subr.bf16.mxu0 0
      %544 = vmatpush1.bf16.msra.mxu0 0
      %545 = vmatprep.subr.bf16.mxu0 0
      %546 = vmatpush1.bf16.msra.mxu0 0
      %547 = vmatprep.mubr.bf16.mxu0 0
      %548 = vmatmul.mubr.bf16.gmra.mrb[0].mxu0 %v501
      %v549 = vpop.f32.mrb[0].mxu0
      %v550 = vadd.f32 0.0, %v549
      %v551 = vpop.f32.mrb[0].mxu0
      %v552 = vpop.f32.mrb[0].mxu0
      %v553 = vadd.f32 0.0, %v552
      %v554 = vpop.f32.mrb[0].mxu0
      %555 = vmatprep.mubr.bf16.mxu0 0
      %556 = vmatmul.mubr.bf16.gmra.mrb[0].mxu0 %v504
      %v557 = vpop.f32.mrb[0].mxu0
      %v558 = vadd.f32 0.0, %v557
      %v559 = vpop.f32.mrb[0].mxu0
      %v560 = vpop.f32.mrb[0].mxu0
      %v561 = vadd.f32 0.0, %v560
      %v562 = vpop.f32.mrb[0].mxu0
      %563 = vmatprep.mubr.bf16.mxu0 0
      %564 = vmatmul.mubr.bf16.gmra.mrb[0].mxu0 %v507
      %v565 = vpop.f32.mrb[0].mxu0
      %v566 = vadd.f32 0.0, %v565
      %v567 = vpop.f32.mrb[0].mxu0
      %v568 = vpop.f32.mrb[0].mxu0
      %v569 = vadd.f32 0.0, %v568
      %v570 = vpop.f32.mrb[0].mxu0
      %571 = vmatprep.mubr.bf16.mxu0 0
      %572 = vmatmul.mubr.bf16.gmra.mrb[0].mxu0 %v510
      %v573 = vpop.f32.mrb[0].mxu0
      %v574 = vadd.f32 0.0, %v573
      %v575 = vpop.f32.mrb[0].mxu0
      %v576 = vpop.f32.mrb[0].mxu0
      %v577 = vadd.f32 0.0, %v576
      %v578 = vpop.f32.mrb[0].mxu0
      %579 = vdwg.mxu0
      %v580 = vadd.f32 %v431, %v550
      %v581 = vadd.f32 %v434, %v553
      %v582 = vadd.f32 %v439, %v558
      %v583 = vadd.f32 %v442, %v561
      %v584 = vadd.f32 %v447, %v566
      %v585 = vadd.f32 %v450, %v569
      %v586 = vadd.f32 %v455, %v574
      %v587 = vadd.f32 %v458, %v577
      %v588 = vpack.c.bf16 %v223, %v221
      %v589 = vpack.c.bf16 %v227, %v225
      %v590 = vpack.c.bf16 %v231, %v229
      %v591 = vpack.c.bf16 %v235, %v233
      %s592 = scalar_lea.vmem %s1, 12
      %v593 = vld [vmem:[%s592] sm:$0xf]
      %v595 = vsel %vm299, %v588, 0
      %v598 = vsel %vm299, %v589, 0
      %v601 = vsel %vm299, %v590, 0
      %v604 = vsel %vm299, %v591, 0
      %v607 = vsel %vm312, %v593, 0
      %609 = vmatprep.subr.bf16.mxu0 0
      %610 = vmatpush1.bf16.msra.mxu0 %v607
      %611 = vmatprep.subr.bf16.mxu0 0
      %612 = vmatpush1.bf16.msra.mxu0 0
      %613 = vmatprep.subr.bf16.mxu0 0
      %614 = vmatpush1.bf16.msra.mxu0 0
      %615 = vmatprep.subr.bf16.mxu0 0
      %616 = vmatpush1.bf16.msra.mxu0 0
      %617 = vmatprep.subr.bf16.mxu0 0
      %618 = vmatpush1.bf16.msra.mxu0 0
      %619 = vmatprep.subr.bf16.mxu0 0
      %620 = vmatpush1.bf16.msra.mxu0 0
      %621 = vmatprep.subr.bf16.mxu0 0
      %622 = vmatpush1.bf16.msra.mxu0 0
      %623 = vmatprep.subr.bf16.mxu0 0
      %624 = vmatpush1.bf16.msra.mxu0 0
      %625 = vmatprep.subr.bf16.mxu0 0
      %626 = vmatpush1.bf16.msra.mxu0 0
      %627 = vmatprep.subr.bf16.mxu0 0
      %628 = vmatpush1.bf16.msra.mxu0 0
      %629 = vmatprep.subr.bf16.mxu0 0
      %630 = vmatpush1.bf16.msra.mxu0 0
      %631 = vmatprep.subr.bf16.mxu0 0
      %632 = vmatpush1.bf16.msra.mxu0 0
      %633 = vmatprep.subr.bf16.mxu0 0
      %634 = vmatpush1.bf16.msra.mxu0 0
      %635 = vmatprep.subr.bf16.mxu0 0
      %636 = vmatpush1.bf16.msra.mxu0 0
      %637 = vmatprep.subr.bf16.mxu0 0
      %638 = vmatpush1.bf16.msra.mxu0 0
      %639 = vmatprep.subr.bf16.mxu0 0
      %640 = vmatpush1.bf16.msra.mxu0 0
      %641 = vmatprep.mubr.bf16.mxu0 0
      %642 = vmatmul.mubr.bf16.gmra.mrb[0].mxu0 %v595
      %v643 = vpop.f32.mrb[0].mxu0
      %v644 = vadd.f32 0.0, %v643
      %v645 = vpop.f32.mrb[0].mxu0
      %v646 = vpop.f32.mrb[0].mxu0
      %v647 = vadd.f32 0.0, %v646
      %v648 = vpop.f32.mrb[0].mxu0
      %649 = vmatprep.mubr.bf16.mxu0 0
      %650 = vmatmul.mubr.bf16.gmra.mrb[0].mxu0 %v598
      %v651 = vpop.f32.mrb[0].mxu0
      %v652 = vadd.f32 0.0, %v651
      %v653 = vpop.f32.mrb[0].mxu0
      %v654 = vpop.f32.mrb[0].mxu0
      %v655 = vadd.f32 0.0, %v654
      %v656 = vpop.f32.mrb[0].mxu0
      %657 = vmatprep.mubr.bf16.mxu0 0
      %658 = vmatmul.mubr.bf16.gmra.mrb[0].mxu0 %v601
      %v659 = vpop.f32.mrb[0].mxu0
      %v660 = vadd.f32 0.0, %v659
      %v661 = vpop.f32.mrb[0].mxu0
      %v662 = vpop.f32.mrb[0].mxu0
      %v663 = vadd.f32 0.0, %v662
      %v664 = vpop.f32.mrb[0].mxu0
      %665 = vmatprep.mubr.bf16.mxu0 0
      %666 = vmatmul.mubr.bf16.gmra.mrb[0].mxu0 %v604
      %v667 = vpop.f32.mrb[0].mxu0
      %v668 = vadd.f32 0.0, %v667
      %v669 = vpop.f32.mrb[0].mxu0
      %v670 = vpop.f32.mrb[0].mxu0
      %v671 = vadd.f32 0.0, %v670
      %v672 = vpop.f32.mrb[0].mxu0
      %673 = vdwg.mxu0
      %v674 = vadd.f32 %v580, %v644
      %v675 = vadd.f32 %v581, %v647
      %v676 = vadd.f32 %v582, %v652
      %v677 = vadd.f32 %v583, %v655
      %v678 = vadd.f32 %v584, %v660
      %v679 = vadd.f32 %v585, %v663
      %v680 = vadd.f32 %v586, %v668
      %v681 = vadd.f32 %v587, %v671
      %v684 = vrot.slane %v235, 1
      %v685 = vrot.slane %v236, 1
      %v686 = vsel %vm260, %v684, %v685
      %v688 = vpack.c.bf16 %v269, %v266
      %v689 = vpack.c.bf16 %v275, %v272
      %v690 = vpack.c.bf16 %v281, %v278
      %v691 = vpack.c.bf16 %v686, %v284
      %s692 = scalar_lea.vmem %s1, 16
      %v693 = vld [vmem:[%s692] sm:$0xf]
      %v695 = vsel %vm299, %v688, 0
      %v698 = vsel %vm299, %v689, 0
      %v701 = vsel %vm299, %v690, 0
      %v704 = vsel %vm299, %v691, 0
      %v707 = vsel %vm312, %v693, 0
      %709 = vmatprep.subr.bf16.mxu0 0
      %710 = vmatpush1.bf16.msra.mxu0 %v707
      %711 = vmatprep.subr.bf16.mxu0 0
      %712 = vmatpush1.bf16.msra.mxu0 0
      %713 = vmatprep.subr.bf16.mxu0 0
      %714 = vmatpush1.bf16.msra.mxu0 0
      %715 = vmatprep.subr.bf16.mxu0 0
      %716 = vmatpush1.bf16.msra.mxu0 0
      %717 = vmatprep.subr.bf16.mxu0 0
      %718 = vmatpush1.bf16.msra.mxu0 0
      %719 = vmatprep.subr.bf16.mxu0 0
      %720 = vmatpush1.bf16.msra.mxu0 0
      %721 = vmatprep.subr.bf16.mxu0 0
      %722 = vmatpush1.bf16.msra.mxu0 0
      %723 = vmatprep.subr.bf16.mxu0 0
      %724 = vmatpush1.bf16.msra.mxu0 0
      %725 = vmatprep.subr.bf16.mxu0 0
      %726 = vmatpush1.bf16.msra.mxu0 0
      %727 = vmatprep.subr.bf16.mxu0 0
      %728 = vmatpush1.bf16.msra.mxu0 0
      %729 = vmatprep.subr.bf16.mxu0 0
      %730 = vmatpush1.bf16.msra.mxu0 0
      %731 = vmatprep.subr.bf16.mxu0 0
      %732 = vmatpush1.bf16.msra.mxu0 0
      %733 = vmatprep.subr.bf16.mxu0 0
      %734 = vmatpush1.bf16.msra.mxu0 0
      %735 = vmatprep.subr.bf16.mxu0 0
      %736 = vmatpush1.bf16.msra.mxu0 0
      %737 = vmatprep.subr.bf16.mxu0 0
      %738 = vmatpush1.bf16.msra.mxu0 0
      %739 = vmatprep.subr.bf16.mxu0 0
      %740 = vmatpush1.bf16.msra.mxu0 0
      %741 = vmatprep.mubr.bf16.mxu0 0
      %742 = vmatmul.mubr.bf16.gmra.mrb[0].mxu0 %v695
      %v743 = vpop.f32.mrb[0].mxu0
      %v744 = vadd.f32 0.0, %v743
      %v745 = vpop.f32.mrb[0].mxu0
      %v746 = vpop.f32.mrb[0].mxu0
      %v747 = vadd.f32 0.0, %v746
      %v748 = vpop.f32.mrb[0].mxu0
      %749 = vmatprep.mubr.bf16.mxu0 0
      %750 = vmatmul.mubr.bf16.gmra.mrb[0].mxu0 %v698
      %v751 = vpop.f32.mrb[0].mxu0
      %v752 = vadd.f32 0.0, %v751
      %v753 = vpop.f32.mrb[0].mxu0
      %v754 = vpop.f32.mrb[0].mxu0
      %v755 = vadd.f32 0.0, %v754
      %v756 = vpop.f32.mrb[0].mxu0
      %757 = vmatprep.mubr.bf16.mxu0 0
      %758 = vmatmul.mubr.bf16.gmra.mrb[0].mxu0 %v701
      %v759 = vpop.f32.mrb[0].mxu0
      %v760 = vadd.f32 0.0, %v759
      %v761 = vpop.f32.mrb[0].mxu0
      %v762 = vpop.f32.mrb[0].mxu0
      %v763 = vadd.f32 0.0, %v762
      %v764 = vpop.f32.mrb[0].mxu0
      %765 = vmatprep.mubr.bf16.mxu0 0
      %766 = vmatmul.mubr.bf16.gmra.mrb[0].mxu0 %v704
      %v767 = vpop.f32.mrb[0].mxu0
      %v768 = vadd.f32 0.0, %v767
      %v769 = vpop.f32.mrb[0].mxu0
      %v770 = vpop.f32.mrb[0].mxu0
      %v771 = vadd.f32 0.0, %v770
      %v772 = vpop.f32.mrb[0].mxu0
      %773 = vdwg.mxu0
      %v774 = vadd.f32 %v674, %v744
      %v775 = vadd.f32 %v675, %v747
      %v776 = vadd.f32 %v676, %v752
      %v777 = vadd.f32 %v677, %v755
      %v778 = vadd.f32 %v678, %v760
      %v779 = vadd.f32 %v679, %v763
      %v780 = vadd.f32 %v680, %v768
      %v781 = vadd.f32 %v681, %v771
      %v782 = vrot.slane %v235, 2
      %v783 = vrot.slane %v236, 2
      %v784 = vsel %vm461, %v782, %v783
      %v786 = vpack.c.bf16 %v470, %v467
      %v787 = vpack.c.bf16 %v476, %v473
      %v788 = vpack.c.bf16 %v482, %v479
      %v789 = vpack.c.bf16 %v784, %v485
      %s790 = scalar_lea.vmem %s1, 20
      %v791 = vld [vmem:[%s790] sm:$0xf]
      %v793 = vsel %vm299, %v786, 0
      %v796 = vsel %vm299, %v787, 0
      %v799 = vsel %vm299, %v788, 0
      %v802 = vsel %vm299, %v789, 0
      %v805 = vsel %vm312, %v791, 0
      %807 = vmatprep.subr.bf16.mxu0 0
      %808 = vmatpush1.bf16.msra.mxu0 %v805
      %809 = vmatprep.subr.bf16.mxu0 0
      %810 = vmatpush1.bf16.msra.mxu0 0
      %811 = vmatprep.subr.bf16.mxu0 0
      %812 = vmatpush1.bf16.msra.mxu0 0
      %813 = vmatprep.subr.bf16.mxu0 0
      %814 = vmatpush1.bf16.msra.mxu0 0
      %815 = vmatprep.subr.bf16.mxu0 0
      %816 = vmatpush1.bf16.msra.mxu0 0
      %817 = vmatprep.subr.bf16.mxu0 0
      %818 = vmatpush1.bf16.msra.mxu0 0
      %819 = vmatprep.subr.bf16.mxu0 0
      %820 = vmatpush1.bf16.msra.mxu0 0
      %821 = vmatprep.subr.bf16.mxu0 0
      %822 = vmatpush1.bf16.msra.mxu0 0
      %823 = vmatprep.subr.bf16.mxu0 0
      %824 = vmatpush1.bf16.msra.mxu0 0
      %825 = vmatprep.subr.bf16.mxu0 0
      %826 = vmatpush1.bf16.msra.mxu0 0
      %827 = vmatprep.subr.bf16.mxu0 0
      %828 = vmatpush1.bf16.msra.mxu0 0
      %829 = vmatprep.subr.bf16.mxu0 0
      %830 = vmatpush1.bf16.msra.mxu0 0
      %831 = vmatprep.subr.bf16.mxu0 0
      %832 = vmatpush1.bf16.msra.mxu0 0
      %833 = vmatprep.subr.bf16.mxu0 0
      %834 = vmatpush1.bf16.msra.mxu0 0
      %835 = vmatprep.subr.bf16.mxu0 0
      %836 = vmatpush1.bf16.msra.mxu0 0
      %837 = vmatprep.subr.bf16.mxu0 0
      %838 = vmatpush1.bf16.msra.mxu0 0
      %839 = vmatprep.mubr.bf16.mxu0 0
      %840 = vmatmul.mubr.bf16.gmra.mrb[0].mxu0 %v793
      %v841 = vpop.f32.mrb[0].mxu0
      %v842 = vadd.f32 0.0, %v841
      %v843 = vpop.f32.mrb[0].mxu0
      %v844 = vpop.f32.mrb[0].mxu0
      %v845 = vadd.f32 0.0, %v844
      %v846 = vpop.f32.mrb[0].mxu0
      %847 = vmatprep.mubr.bf16.mxu0 0
      %848 = vmatmul.mubr.bf16.gmra.mrb[0].mxu0 %v796
      %v849 = vpop.f32.mrb[0].mxu0
      %v850 = vadd.f32 0.0, %v849
      %v851 = vpop.f32.mrb[0].mxu0
      %v852 = vpop.f32.mrb[0].mxu0
      %v853 = vadd.f32 0.0, %v852
      %v854 = vpop.f32.mrb[0].mxu0
      %855 = vmatprep.mubr.bf16.mxu0 0
      %856 = vmatmul.mubr.bf16.gmra.mrb[0].mxu0 %v799
      %v857 = vpop.f32.mrb[0].mxu0
      %v858 = vadd.f32 0.0, %v857
      %v859 = vpop.f32.mrb[0].mxu0
      %v860 = vpop.f32.mrb[0].mxu0
      %v861 = vadd.f32 0.0, %v860
      %v862 = vpop.f32.mrb[0].mxu0
      %863 = vmatprep.mubr.bf16.mxu0 0
      %864 = vmatmul.mubr.bf16.gmra.mrb[0].mxu0 %v802
      %v865 = vpop.f32.mrb[0].mxu0
      %v866 = vadd.f32 0.0, %v865
      %v867 = vpop.f32.mrb[0].mxu0
      %v868 = vpop.f32.mrb[0].mxu0
      %v869 = vadd.f32 0.0, %v868
      %v870 = vpop.f32.mrb[0].mxu0
      %871 = vdwg.mxu0
      %v872 = vadd.f32 %v774, %v842
      %v873 = vadd.f32 %v775, %v845
      %v874 = vadd.f32 %v776, %v850
      %v875 = vadd.f32 %v777, %v853
      %v876 = vadd.f32 %v778, %v858
      %v877 = vadd.f32 %v779, %v861
      %v878 = vadd.f32 %v780, %v866
      %v879 = vadd.f32 %v781, %v869
      %v880 = vpack.c.bf16 %v237, %v235
      %s881 = scalar_lea.vmem %s1, 24
      %v882 = vld [vmem:[%s881] sm:$0xf]
      %v884 = vsel %vm299, %v880, 0
      %v887 = vsel %vm312, %v882, 0
      %889 = vmatprep.subr.bf16.mxu0 0
      %890 = vmatpush1.bf16.msra.mxu0 %v887
      %891 = vmatprep.subr.bf16.mxu0 0
      %892 = vmatpush1.bf16.msra.mxu0 0
      %893 = vmatprep.subr.bf16.mxu0 0
      %894 = vmatpush1.bf16.msra.mxu0 0
      %895 = vmatprep.subr.bf16.mxu0 0
      %896 = vmatpush1.bf16.msra.mxu0 0
      %897 = vmatprep.subr.bf16.mxu0 0
      %898 = vmatpush1.bf16.msra.mxu0 0
      %899 = vmatprep.subr.bf16.mxu0 0
      %900 = vmatpush1.bf16.msra.mxu0 0
      %901 = vmatprep.subr.bf16.mxu0 0
      %902 = vmatpush1.bf16.msra.mxu0 0
      %903 = vmatprep.subr.bf16.mxu0 0
      %904 = vmatpush1.bf16.msra.mxu0 0
      %905 = vmatprep.subr.bf16.mxu0 0
      %906 = vmatpush1.bf16.msra.mxu0 0
      %907 = vmatprep.subr.bf16.mxu0 0
      %908 = vmatpush1.bf16.msra.mxu0 0
      %909 = vmatprep.subr.bf16.mxu0 0
      %910 = vmatpush1.bf16.msra.mxu0 0
      %911 = vmatprep.subr.bf16.mxu0 0
      %912 = vmatpush1.bf16.msra.mxu0 0
      %913 = vmatprep.subr.bf16.mxu0 0
      %914 = vmatpush1.bf16.msra.mxu0 0
      %915 = vmatprep.subr.bf16.mxu0 0
      %916 = vmatpush1.bf16.msra.mxu0 0
      %917 = vmatprep.subr.bf16.mxu0 0
      %918 = vmatpush1.bf16.msra.mxu0 0
      %919 = vmatprep.subr.bf16.mxu0 0
      %920 = vmatpush1.bf16.msra.mxu0 0
      %921 = vmatprep.mubr.bf16.mxu0 0
      %922 = vmatmul.mubr.bf16.gmra.mrb[0].mxu0 %v385
      %v923 = vpop.f32.mrb[0].mxu0
      %v924 = vadd.f32 0.0, %v923
      %v925 = vpop.f32.mrb[0].mxu0
      %v926 = vpop.f32.mrb[0].mxu0
      %v927 = vadd.f32 0.0, %v926
      %v928 = vpop.f32.mrb[0].mxu0
      %929 = vmatprep.mubr.bf16.mxu0 0
      %930 = vmatmul.mubr.bf16.gmra.mrb[0].mxu0 %v388
      %v931 = vpop.f32.mrb[0].mxu0
      %v932 = vadd.f32 0.0, %v931
      %v933 = vpop.f32.mrb[0].mxu0
      %v934 = vpop.f32.mrb[0].mxu0
      %v935 = vadd.f32 0.0, %v934
      %v936 = vpop.f32.mrb[0].mxu0
      %937 = vmatprep.mubr.bf16.mxu0 0
      %938 = vmatmul.mubr.bf16.gmra.mrb[0].mxu0 %v391
      %v939 = vpop.f32.mrb[0].mxu0
      %v940 = vadd.f32 0.0, %v939
      %v941 = vpop.f32.mrb[0].mxu0
      %v942 = vpop.f32.mrb[0].mxu0
      %v943 = vadd.f32 0.0, %v942
      %v944 = vpop.f32.mrb[0].mxu0
      %945 = vmatprep.mubr.bf16.mxu0 0
      %946 = vmatmul.mubr.bf16.gmra.mrb[0].mxu0 %v884
      %v947 = vpop.f32.mrb[0].mxu0
      %v948 = vadd.f32 0.0, %v947
      %v949 = vpop.f32.mrb[0].mxu0
      %v950 = vpop.f32.mrb[0].mxu0
      %v951 = vadd.f32 0.0, %v950
      %v952 = vpop.f32.mrb[0].mxu0
      %953 = vdwg.mxu0
      %v954 = vadd.f32 %v872, %v924
      %v955 = vadd.f32 %v873, %v927
      %v956 = vadd.f32 %v874, %v932
      %v957 = vadd.f32 %v875, %v935
      %v958 = vadd.f32 %v876, %v940
      %v959 = vadd.f32 %v877, %v943
      %v960 = vadd.f32 %v878, %v948
      %v961 = vadd.f32 %v879, %v951
      %v964 = vrot.slane %v237, 1
      %v965 = vrot.slane %v238, 1
      %v966 = vsel %vm260, %v964, %v965
      %v968 = vpack.c.bf16 %v966, %v686
      %s969 = scalar_lea.vmem %s1, 28
      %v970 = vld [vmem:[%s969] sm:$0xf]
      %v972 = vsel %vm299, %v968, 0
      %v975 = vsel %vm312, %v970, 0
      %977 = vmatprep.subr.bf16.mxu0 0
      %978 = vmatpush1.bf16.msra.mxu0 %v975
      %979 = vmatprep.subr.bf16.mxu0 0
      %980 = vmatpush1.bf16.msra.mxu0 0
      %981 = vmatprep.subr.bf16.mxu0 0
      %982 = vmatpush1.bf16.msra.mxu0 0
      %983 = vmatprep.subr.bf16.mxu0 0
      %984 = vmatpush1.bf16.msra.mxu0 0
      %985 = vmatprep.subr.bf16.mxu0 0
      %986 = vmatpush1.bf16.msra.mxu0 0
      %987 = vmatprep.subr.bf16.mxu0 0
      %988 = vmatpush1.bf16.msra.mxu0 0
      %989 = vmatprep.subr.bf16.mxu0 0
      %990 = vmatpush1.bf16.msra.mxu0 0
      %991 = vmatprep.subr.bf16.mxu0 0
      %992 = vmatpush1.bf16.msra.mxu0 0
      %993 = vmatprep.subr.bf16.mxu0 0
      %994 = vmatpush1.bf16.msra.mxu0 0
      %995 = vmatprep.subr.bf16.mxu0 0
      %996 = vmatpush1.bf16.msra.mxu0 0
      %997 = vmatprep.subr.bf16.mxu0 0
      %998 = vmatpush1.bf16.msra.mxu0 0
      %999 = vmatprep.subr.bf16.mxu0 0
      %1000 = vmatpush1.bf16.msra.mxu0 0
      %1001 = vmatprep.subr.bf16.mxu0 0
      %1002 = vmatpush1.bf16.msra.mxu0 0
      %1003 = vmatprep.subr.bf16.mxu0 0
      %1004 = vmatpush1.bf16.msra.mxu0 0
      %1005 = vmatprep.subr.bf16.mxu0 0
      %1006 = vmatpush1.bf16.msra.mxu0 0
      %1007 = vmatprep.subr.bf16.mxu0 0
      %1008 = vmatpush1.bf16.msra.mxu0 0
      %1009 = vmatprep.mubr.bf16.mxu0 0
      %1010 = vmatmul.mubr.bf16.gmra.mrb[0].mxu0 %v304
      %v1011 = vpop.f32.mrb[0].mxu0
      %v1012 = vadd.f32 0.0, %v1011
      %v1013 = vpop.f32.mrb[0].mxu0
      %v1014 = vpop.f32.mrb[0].mxu0
      %v1015 = vadd.f32 0.0, %v1014
      %v1016 = vpop.f32.mrb[0].mxu0
      %1017 = vmatprep.mubr.bf16.mxu0 0
      %1018 = vmatmul.mubr.bf16.gmra.mrb[0].mxu0 %v307
      %v1019 = vpop.f32.mrb[0].mxu0
      %v1020 = vadd.f32 0.0, %v1019
      %v1021 = vpop.f32.mrb[0].mxu0
      %v1022 = vpop.f32.mrb[0].mxu0
      %v1023 = vadd.f32 0.0, %v1022
      %v1024 = vpop.f32.mrb[0].mxu0
      %1025 = vmatprep.mubr.bf16.mxu0 0
      %1026 = vmatmul.mubr.bf16.gmra.mrb[0].mxu0 %v310
      %v1027 = vpop.f32.mrb[0].mxu0
      %v1028 = vadd.f32 0.0, %v1027
      %v1029 = vpop.f32.mrb[0].mxu0
      %v1030 = vpop.f32.mrb[0].mxu0
      %v1031 = vadd.f32 0.0, %v1030
      %v1032 = vpop.f32.mrb[0].mxu0
      %1033 = vmatprep.mubr.bf16.mxu0 0
      %1034 = vmatmul.mubr.bf16.gmra.mrb[0].mxu0 %v972
      %v1035 = vpop.f32.mrb[0].mxu0
      %v1036 = vadd.f32 0.0, %v1035
      %v1037 = vpop.f32.mrb[0].mxu0
      %v1038 = vpop.f32.mrb[0].mxu0
      %v1039 = vadd.f32 0.0, %v1038
      %v1040 = vpop.f32.mrb[0].mxu0
      %1041 = vdwg.mxu0
      %v1042 = vadd.f32 %v954, %v1012
      %v1043 = vadd.f32 %v955, %v1015
      %v1044 = vadd.f32 %v956, %v1020
      %v1045 = vadd.f32 %v957, %v1023
      %v1046 = vadd.f32 %v958, %v1028
      %v1047 = vadd.f32 %v959, %v1031
      %v1048 = vadd.f32 %v960, %v1036
      %v1049 = vadd.f32 %v961, %v1039
      %v1050 = vrot.slane %v237, 2
      %v1051 = vrot.slane %v238, 2
      %v1052 = vsel %vm461, %v1050, %v1051
      %v1054 = vpack.c.bf16 %v1052, %v784
      %s1055 = scalar_lea.vmem %s1, 32
      %v1056 = vld [vmem:[%s1055] sm:$0xf]
      %v1058 = vsel %vm299, %v1054, 0
      %v1061 = vsel %vm312, %v1056, 0
      %1063 = vmatprep.subr.bf16.mxu0 0
      %1064 = vmatpush1.bf16.msra.mxu0 %v1061
      %1065 = vmatprep.subr.bf16.mxu0 0
      %1066 = vmatpush1.bf16.msra.mxu0 0
      %1067 = vmatprep.subr.bf16.mxu0 0
      %1068 = vmatpush1.bf16.msra.mxu0 0
      %1069 = vmatprep.subr.bf16.mxu0 0
      %1070 = vmatpush1.bf16.msra.mxu0 0
      %1071 = vmatprep.subr.bf16.mxu0 0
      %1072 = vmatpush1.bf16.msra.mxu0 0
      %1073 = vmatprep.subr.bf16.mxu0 0
      %1074 = vmatpush1.bf16.msra.mxu0 0
      %1075 = vmatprep.subr.bf16.mxu0 0
      %1076 = vmatpush1.bf16.msra.mxu0 0
      %1077 = vmatprep.subr.bf16.mxu0 0
      %1078 = vmatpush1.bf16.msra.mxu0 0
      %1079 = vmatprep.subr.bf16.mxu0 0
      %1080 = vmatpush1.bf16.msra.mxu0 0
      %1081 = vmatprep.subr.bf16.mxu0 0
      %1082 = vmatpush1.bf16.msra.mxu0 0
      %1083 = vmatprep.subr.bf16.mxu0 0
      %1084 = vmatpush1.bf16.msra.mxu0 0
      %1085 = vmatprep.subr.bf16.mxu0 0
      %1086 = vmatpush1.bf16.msra.mxu0 0
      %1087 = vmatprep.subr.bf16.mxu0 0
      %1088 = vmatpush1.bf16.msra.mxu0 0
      %1089 = vmatprep.subr.bf16.mxu0 0
      %1090 = vmatpush1.bf16.msra.mxu0 0
      %1091 = vmatprep.subr.bf16.mxu0 0
      %1092 = vmatpush1.bf16.msra.mxu0 0
      %1093 = vmatprep.subr.bf16.mxu0 0
      %1094 = vmatpush1.bf16.msra.mxu0 0
      %1095 = vmatprep.mubr.bf16.mxu0 0
      %1096 = vmatmul.mubr.bf16.gmra.mrb[0].mxu0 %v504
      %v1097 = vpop.f32.mrb[0].mxu0
      %v1098 = vadd.f32 0.0, %v1097
      %v1099 = vpop.f32.mrb[0].mxu0
      %v1100 = vpop.f32.mrb[0].mxu0
      %v1101 = vadd.f32 0.0, %v1100
      %v1102 = vpop.f32.mrb[0].mxu0
      %1103 = vmatprep.mubr.bf16.mxu0 0
      %1104 = vmatmul.mubr.bf16.gmra.mrb[0].mxu0 %v507
      %v1105 = vpop.f32.mrb[0].mxu0
      %v1106 = vadd.f32 0.0, %v1105
      %v1107 = vpop.f32.mrb[0].mxu0
      %v1108 = vpop.f32.mrb[0].mxu0
      %v1109 = vadd.f32 0.0, %v1108
      %v1110 = vpop.f32.mrb[0].mxu0
      %1111 = vmatprep.mubr.bf16.mxu0 0
      %1112 = vmatmul.mubr.bf16.gmra.mrb[0].mxu0 %v510
      %v1113 = vpop.f32.mrb[0].mxu0
      %v1114 = vadd.f32 0.0, %v1113
      %v1115 = vpop.f32.mrb[0].mxu0
      %v1116 = vpop.f32.mrb[0].mxu0
      %v1117 = vadd.f32 0.0, %v1116
      %v1118 = vpop.f32.mrb[0].mxu0
      %1119 = vmatprep.mubr.bf16.mxu0 0
      %1120 = vmatmul.mubr.bf16.gmra.mrb[0].mxu0 %v1058
      %v1121 = vpop.f32.mrb[0].mxu0
      %v1122 = vadd.f32 0.0, %v1121
      %v1123 = vpop.f32.mrb[0].mxu0
      %v1124 = vpop.f32.mrb[0].mxu0
      %v1125 = vadd.f32 0.0, %v1124
      %v1126 = vpop.f32.mrb[0].mxu0
      %1127 = vdwg.mxu0
      %v1128 = vadd.f32 %v1042, %v1098
      %v1129 = vadd.f32 %v1043, %v1101
      %v1130 = vadd.f32 %v1044, %v1106
      %v1131 = vadd.f32 %v1045, %v1109
      %v1132 = vadd.f32 %v1046, %v1114
      %v1133 = vadd.f32 %v1047, %v1117
      %v1134 = vadd.f32 %v1048, %v1122
      %v1135 = vadd.f32 %v1049, %v1125
      %v1136 = vld [vmem:[%s2] sm:$0x1]
      %v1138 = vlaneseq
      %v1139 = vshrl.u32 %v1138, 7
      %v1140 = vsub.s32 0, %v1139
      %v1141 = vrot.slane %v1136, %v1140
      %v1143 = vadd.f32 %v1128, %v1141
      %v1144 = vadd.f32 %v1129, %v1141
      %v1145 = vadd.f32 %v1130, %v1141
      %v1146 = vadd.f32 %v1131, %v1141
      %v1147 = vadd.f32 %v1132, %v1141
      %v1148 = vadd.f32 %v1133, %v1141
      %v1149 = vadd.f32 %v1134, %v1141
      %v1150 = vadd.f32 %v1135, %v1141
      %v1151 = vsub.f32 0.0, %v1143
      %v1152 = vsub.f32 0.0, %v1144
      %v1153 = vsub.f32 0.0, %v1145
      %v1154 = vsub.f32 0.0, %v1146
      %v1155 = vsub.f32 0.0, %v1147
      %v1156 = vsub.f32 0.0, %v1148
      %v1157 = vsub.f32 0.0, %v1149
      %v1158 = vsub.f32 0.0, %v1150
      %v1159 = vmul.f32 %v1151, 1.442695
      %v1160 = vpow.pop %v1159
      %v1161 = vmul.f32 %v1152, 1.442695
      %v1162 = vpow.pop %v1161
      %v1163 = vmul.f32 %v1153, 1.442695
      %v1164 = vpow.pop %v1163
      %v1165 = vmul.f32 %v1154, 1.442695
      %v1166 = vpow.pop %v1165
      %v1167 = vmul.f32 %v1155, 1.442695
      %v1168 = vpow.pop %v1167
      %v1169 = vmul.f32 %v1156, 1.442695
      %v1170 = vpow.pop %v1169
      %v1171 = vmul.f32 %v1157, 1.442695
      %v1172 = vpow.pop %v1171
      %v1173 = vmul.f32 %v1158, 1.442695
      %v1174 = vpow.pop %v1173
      %v1175 = vadd.f32 %v1160, 1.0
      %v1176 = vadd.f32 %v1162, 1.0
      %v1177 = vadd.f32 %v1164, 1.0
      %v1178 = vadd.f32 %v1166, 1.0
      %v1179 = vadd.f32 %v1168, 1.0
      %v1180 = vadd.f32 %v1170, 1.0
      %v1181 = vadd.f32 %v1172, 1.0
      %v1182 = vadd.f32 %v1174, 1.0
      %v1183 = vrcp.pop %v1175
      %v1184 = vrcp.pop %v1176
      %v1185 = vrcp.pop %v1177
      %v1186 = vrcp.pop %v1178
      %v1187 = vrcp.pop %v1179
      %v1188 = vrcp.pop %v1180
      %v1189 = vrcp.pop %v1181
      %v1190 = vrcp.pop %v1182
      %v1191 = vmul.f32 %v1143, %v1183
      %v1192 = vmul.f32 %v1144, %v1184
      %v1193 = vmul.f32 %v1145, %v1185
      %v1194 = vmul.f32 %v1146, %v1186
      %v1195 = vmul.f32 %v1147, %v1187
      %v1196 = vmul.f32 %v1148, %v1188
      %v1197 = vmul.f32 %v1149, %v1189
      %v1198 = vmul.f32 %v1150, %v1190
      %v1199 = vpack.c.bf16 %v1191, %v1191
      %v1200 = vpack.c.bf16 %v1192, %v1192
      %v1201 = vpack.c.bf16 %v1193, %v1193
      %v1202 = vpack.c.bf16 %v1194, %v1194
      %v1203 = vpack.c.bf16 %v1195, %v1195
      %v1204 = vpack.c.bf16 %v1196, %v1196
      %v1205 = vpack.c.bf16 %v1197, %v1197
      %v1206 = vpack.c.bf16 %v1198, %v1198
      %vm1207 = vcmask 257024
      %1208 = vst.msk [vmem:[%s192] sm:$0xf] %vm1207, %v1199
      %1209 = vst.msk [vmem:[%s192 + $0x4] sm:$0xf] %vm1207, %v1200
      %1210 = vst.msk [vmem:[%s192 + $0x8] sm:$0xf] %vm1207, %v1201
      %1211 = vst.msk [vmem:[%s192 + $0xc] sm:$0xf] %vm1207, %v1202
      %1212 = vst.msk [vmem:[%s192 + $0x10] sm:$0xf] %vm1207, %v1203
      %1213 = vst.msk [vmem:[%s192 + $0x14] sm:$0xf] %vm1207, %v1204
      %1214 = vst.msk [vmem:[%s192 + $0x18] sm:$0xf] %vm1207, %v1205
      %1215 = vst.msk [vmem:[%s192 + $0x1c] sm:$0xf] %vm1207, %v1206
      %s1216 = smul.u32 8, %s19
      %p1217 = scmp.lt.s32.totalorder %s18, 1
      %s1218 = scalar_select %p1217, %s18, 1
      %p1219 = scmp.lt.s32.totalorder %s1216, 7
      %s1220 = scalar_select %p1219, %s1216, 7
      %s1221 = smul.addr %s1218, 8
      %s1222 = sadd.s32 %s1220, %s1221
      %s1223 = smul.addr %s1222, 4
      %s1224 = scalar_lea.vmem %s3, %s1223
      // Predicated region
      $region33: #{pix2pix_turbo_forward.24} parent=31 // pred_check
        %p1225 = pneg %p114
      $region34: #{pix2pix_turbo_forward.24} parent=31 // pred_check_branch
        %1227 = sbr.rel (%p1225) target = $region36
      $region35: #{pix2pix_turbo_forward.24} parent=31 // pred_region
        %s1228 = smul.u32 8, %s19
      $region36: #{pix2pix_turbo_forward.24} parent=31 // pred_fallthru
        _
    $region32: #{pix2pix_turbo_forward.24} parent=5 // pred_fallthru
      _
    %p1229 = scmp.le.s32.totalorder 2, %s9
    // Predicated region
    $region37: #{pix2pix_turbo_forward.24} parent=5 // pred_check
      %p1230 = pneg %p1229
    $region38: #{pix2pix_turbo_forward.24} parent=5 // pred_check_branch
      %1232 = sbr.rel (%p1230) target = $region40
    $region39: #{pix2pix_turbo_forward.24} parent=5 // pred_region
      %s1233 = ssub.s32 %s9, 2
      // Predicated region
      $region41: #{pix2pix_turbo_forward.24} parent=39 // pred_check
        %p1234 = pneg %p120
      $region42: #{pix2pix_turbo_forward.24} parent=39 // pred_check_branch
        %1236 = sbr.rel (%p1234) target = $region44
      $region43: #{pix2pix_turbo_forward.24} parent=39 // pred_region
        %s1237 = smul.u32 8, %s21
        %p1238 = scmp.lt.s32.totalorder %s20, 1
        %s1239 = scalar_select %p1238, %s20, 1
        %p1240 = scmp.lt.s32.totalorder %s1237, 7
        %s1241 = scalar_select %p1240, %s1237, 7
        %s1242 = smul.addr %s1239, 8
        %s1243 = sadd.s32 %s1241, %s1242
        %s1244 = smul.addr %s1243, 4
        %s1245 = scalar_lea.vmem %s3, %s1244
      $region44: #{pix2pix_turbo_forward.24} parent=39 // pred_fallthru
        _
    $region40: #{pix2pix_turbo_forward.24} parent=5 // pred_fallthru
      _
  $region6: #{pix2pix_turbo_forward.24} parent=0 // loop_footer
    %s13 = sadd.s32 1, %s9
  $region7: #{pix2pix_turbo_forward.24} parent=0 // loop_footer_branch
    %8 = sbr.rel target = $region3
  $region8: #{pix2pix_turbo_forward.24} parent=0 // loop_exit
    _

// kernel: pix2pix_turbo_forward.25
$region0: #{pix2pix_turbo_forward.25}
  #allocation0 [shape = 'u32[]', space=smem, size = 0x4, offset = 0x4, fixed_abs, tag = 'smem constant byte address 0x4 - core index']
  #allocation1 [shape = 'u32[144,128]{1,0:T(1,128)}', space=vmem, size = 0x12000, scoped, tag = 'internal scratch']
  %s0 = inlined_call_operand.vmem [shape: bf16[2,18,18,8], index: 0, kind: input, shape index: {}]
  %s1 = inlined_call_operand.vmem [shape: bf16[9,8,3], index: 1, kind: input, shape index: {}]
  %s2 = inlined_call_operand.vmem [shape: f32[1,3], index: 2, kind: input, shape index: {}]
  %s3 = inlined_call_operand.vmem [shape: f32[2,16,16,3], index: 3, kind: output, shape index: {}]
  %s4 = sld [smem:[#allocation0]]
  $region45: #{pix2pix_turbo_forward.25} parent=0
    _
  %s6 = ssub.s32 1, %s4
  %s7 = scalar_select 0, %s6, %s4
  loop: start=0, step=1, limit=6
  $region2: #{pix2pix_turbo_forward.25} parent=0 // loop_pre_header
    _
  $region3: #{pix2pix_turbo_forward.25} parent=0 // loop_header
    %s9 = sphi 0, %s13
    %p10 = scmp.ge.s32.totalorder %s9, 6
    %s16 = sphi 0, %s28
    %s17 = sphi 0, %s24
    %s18 = sphi 0, %s16
    %s19 = sphi 0, %s17
    %s20 = sphi 0, %s18
    %s21 = sphi 0, %s19
    %s31 = sphi 0, %s33
    %s34 = sphi 0, %s31
    %s35 = sphi 0, %s34
    %s51 = sphi 0, %s35
    %s55 = sphi 0, %s55
    %s57 = sphi 0, %s55
    %s58 = sphi 0, %s57
    %s72 = sphi 0, %s58
    %s76 = sphi 0, %s76
    %s78 = sphi 0, %s76
    %s79 = sphi 0, %s78
    %s93 = sphi 0, %s79
    %s101 = sphi 0, %s103
    %s104 = sphi 0, %s101
    %s105 = sphi 0, %s104
    %s121 = sphi 0, %s105
  $region4: #{pix2pix_turbo_forward.25} parent=0 // loop_header_branch
    %12 = sbr.rel (%p10) target = $region8
  $region5: #{pix2pix_turbo_forward.25} parent=0 // loop_body
    %s14 = ssub.s32 %s9, 1
    %s15 = ssub.s32 %s9, 2
    %s22 = sadd.s32 1, %s17
    %p23 = scmp.ge.s32.totalorder %s22, 2
    %s24 = scalar_select %p23, 0, %s22
    %s25 = sadd.s32 1, %s16
    %s26 = scalar_select %p23, %s25, %s16
    %p27 = scmp.ge.s32.totalorder %s26, 2
    %s28 = scalar_select %p27, 0, %s26
    %s29 = ssub.s32 %s16, %s28
    %p30 = scmp.eq.s32.totalorder %s29, 0
    %s32 = sadd.s32 %s31, 1
    %s33 = scalar_select %p30, %s31, %s32
    %p36 = pneg %p30
    %p37 = scmp.eq.s32.totalorder %s9, 3
    %p38 = por %p36, %p37
    %p39 = scmp.ne.s32.totalorder %s31, %s34
    %p40 = scmp.eq.s32.totalorder %s9, 0
    %p41 = por %p39, %p40
    %p42 = scmp.ne.s32.totalorder %s31, %s34
    %p43 = scmp.eq.s32.totalorder %s14, 3
    %p44 = por %p42, %p43
    %p45 = scmp.ne.s32.totalorder %s34, %s35
    %p46 = scmp.eq.s32.totalorder %s14, 0
    %p47 = por %p45, %p46
    %p48 = scmp.ne.s32.totalorder %s34, %s35
    %p49 = scmp.eq.s32.totalorder %s15, 3
    %p50 = por %p48, %p49
    %p52 = scmp.ne.s32.totalorder %s35, %s51
    %p53 = scmp.eq.s32.totalorder %s15, 0
    %p54 = por %p52, %p53
    %s56 = sadd.s32 %s55, 1
    %p59 = scmp.eq.s32.totalorder %s9, 3
    %p60 = scmp.ne.s32.totalorder %s55, %s57
    %p61 = scmp.eq.s32.totalorder %s9, 0
    %p62 = por %p60, %p61
    %p63 = scmp.ne.s32.totalorder %s55, %s57
    %p64 = scmp.eq.s32.totalorder %s14, 3
    %p65 = por %p63, %p64
    %p66 = scmp.ne.s32.totalorder %s57, %s58
    %p67 = scmp.eq.s32.totalorder %s14, 0
    %p68 = por %p66, %p67
    %p69 = scmp.ne.s32.totalorder %s57, %s58
    %p70 = scmp.eq.s32.totalorder %s15, 3
    %p71 = por %p69, %p70
    %p73 = scmp.ne.s32.totalorder %s58, %s72
    %p74 = scmp.eq.s32.totalorder %s15, 0
    %p75 = por %p73, %p74
    %s77 = sadd.s32 %s76, 1
    %p80 = scmp.eq.s32.totalorder %s9, 3
    %p81 = scmp.ne.s32.totalorder %s76, %s78
    %p82 = scmp.eq.s32.totalorder %s9, 0
    %p83 = por %p81, %p82
    %p84 = scmp.ne.s32.totalorder %s76, %s78
    %p85 = scmp.eq.s32.totalorder %s14, 3
    %p86 = por %p84, %p85
    %p87 = scmp.ne.s32.totalorder %s78, %s79
    %p88 = scmp.eq.s32.totalorder %s14, 0
    %p89 = por %p87, %p88
    %p90 = scmp.ne.s32.totalorder %s78, %s79
    %p91 = scmp.eq.s32.totalorder %s15, 3
    %p92 = por %p90, %p91
    %p94 = scmp.ne.s32.totalorder %s79, %s93
    %p95 = scmp.eq.s32.totalorder %s15, 0
    %p96 = por %p94, %p95
    %s97 = ssub.s32 %s16, %s28
    %s98 = ssub.s32 %s17, %s24
    %s99 = sor.u32 %s97, %s98
    %p100 = scmp.eq.s32.totalorder %s99, 0
    %s102 = sadd.s32 %s101, 1
    %s103 = scalar_select %p100, %s101, %s102
    %p106 = pneg %p100
    %p107 = scmp.eq.s32.totalorder %s9, 3
    %p108 = por %p106, %p107
    %p109 = scmp.ne.s32.totalorder %s101, %s104
    %p110 = scmp.eq.s32.totalorder %s9, 0
    %p111 = por %p109, %p110
    %p112 = scmp.ne.s32.totalorder %s101, %s104
    %p113 = scmp.eq.s32.totalorder %s14, 3
    %p114 = por %p112, %p113
    %p115 = scmp.ne.s32.totalorder %s104, %s105
    %p116 = scmp.eq.s32.totalorder %s14, 0
    %p117 = por %p115, %p116
    %p118 = scmp.ne.s32.totalorder %s104, %s105
    %p119 = scmp.eq.s32.totalorder %s15, 3
    %p120 = por %p118, %p119
    %p122 = scmp.ne.s32.totalorder %s105, %s121
    %p123 = scmp.eq.s32.totalorder %s15, 0
    %p124 = por %p122, %p123
    %p125 = scmp.le.s32.totalorder 1, %s9
    %p126 = scmp.lt.s32.totalorder %s9, 5
    %p127 = pnand %p125, %p126
    %p128 = pneg %p127
    // Predicated region
    $region9: #{pix2pix_turbo_forward.25} parent=5 // pred_check
      _
    $region10: #{pix2pix_turbo_forward.25} parent=5 // pred_check_branch
      %130 = sbr.rel (%p127) target = $region12
    $region11: #{pix2pix_turbo_forward.25} parent=5 // pred_region
      %s131 = ssub.s32 %s9, 1
      // Predicated region
      $region13: #{pix2pix_turbo_forward.25} parent=11 // pred_check
        %p132 = pneg %p68
      $region14: #{pix2pix_turbo_forward.25} parent=11 // pred_check_branch
        %134 = sbr.rel (%p132) target = $region16
      $region15: #{pix2pix_turbo_forward.25} parent=11 // pred_region
        _
      $region16: #{pix2pix_turbo_forward.25} parent=11 // pred_fallthru
        _
      // Predicated region
      $region17: #{pix2pix_turbo_forward.25} parent=11 // pred_check
        %p135 = pneg %p89
      $region18: #{pix2pix_turbo_forward.25} parent=11 // pred_check_branch
        %137 = sbr.rel (%p135) target = $region20
      $region19: #{pix2pix_turbo_forward.25} parent=11 // pred_region
        _
      $region20: #{pix2pix_turbo_forward.25} parent=11 // pred_fallthru
        _
    $region12: #{pix2pix_turbo_forward.25} parent=5 // pred_fallthru
      _
    %p138 = scmp.lt.s32.totalorder %s9, 4
    // Predicated region
    $region21: #{pix2pix_turbo_forward.25} parent=5 // pred_check
      %p139 = pneg %p138
    $region22: #{pix2pix_turbo_forward.25} parent=5 // pred_check_branch
      %141 = sbr.rel (%p139) target = $region24
    $region23: #{pix2pix_turbo_forward.25} parent=5 // pred_region
      // Predicated region
      $region25: #{pix2pix_turbo_forward.25} parent=23 // pred_check
        %p142 = pneg %p41
      $region26: #{pix2pix_turbo_forward.25} parent=23 // pred_check_branch
        %144 = sbr.rel (%p142) target = $region28
      $region27: #{pix2pix_turbo_forward.25} parent=23 // pred_region
        %p145 = scmp.lt.s32.totalorder %s16, 1
        %s146 = scalar_select %p145, %s16, 1
        %s147 = smul.addr %s146, 54
        %s148 = smul.addr %s147, 4
        %s149 = scalar_lea.vmem %s0, %s148
      $region28: #{pix2pix_turbo_forward.25} parent=23 // pred_fallthru
        _
    $region24: #{pix2pix_turbo_forward.25} parent=5 // pred_fallthru
      _
    %p150 = scmp.le.s32.totalorder 1, %s9
    %p151 = scmp.lt.s32.totalorder %s9, 5
    %p152 = pnand %p150, %p151
    %p153 = pneg %p152
    // Predicated region
    $region29: #{pix2pix_turbo_forward.25} parent=5 // pred_check
      _
    $region30: #{pix2pix_turbo_forward.25} parent=5 // pred_check_branch
      %155 = sbr.rel (%p152) target = $region32
    $region31: #{pix2pix_turbo_forward.25} parent=5 // pred_region
      %s156 = ssub.s32 %s9, 1
      %p157 = scmp.lt.s32.totalorder %s18, 1
      %s158 = scalar_select %p157, %s18, 1
      %s159 = smul.addr %s158, 54
      %s160 = smul.addr %s159, 4
      %s161 = scalar_lea.vmem %s0, %s160
      %p162 = pneg %p47
      %p163 = pneg %p44
      %p164 = pneg %p68
      %p165 = pneg %p65
      %p166 = pneg %p89
      %p167 = pneg %p86
      %p168 = pneg %p117
      %p169 = pneg %p114
      %s170 = smul.u32 8, %s19
      %p171 = scmp.lt.s32.totalorder %s18, 1
      %s172 = scalar_select %p171, %s18, 1
      %p173 = scmp.lt.s32.totalorder %s170, 15
      %s174 = scalar_select %p173, %s170, 15
      %s175 = smul.addr %s174, 2
      %s176 = smul.addr %s172, 32
      %s177 = sadd.s32 %s175, %s176
      %s178 = smul.addr %s177, 8
      %s179 = scalar_lea.vmem %s3, %s178
      %p180 = scmp.lt.s32.totalorder %s18, 1
      %s181 = scalar_select %p180, %s18, 1
      %s182 = smul.addr %s181, 54
      %s183 = smul.addr %s182, 4
      %s184 = scalar_lea.vmem %s0, %s183
      %s185 = smul.u32 8, %s19
      %p186 = scmp.lt.s32.totalorder %s18, 1
      %s187 = scalar_select %p186, %s18, 1
      %p188 = scmp.lt.s32.totalorder %s185, 15
      %s189 = scalar_select %p188, %s185, 15
      %s190 = smul.addr %s189, 2
      %s191 = smul.addr %s187, 32
      %s192 = sadd.s32 %s190, %s191
      %s193 = smul.addr %s192, 8
      %s194 = scalar_lea.vmem %s3, %s193
      %s195 = smul.u32 8, %s19
      %s197 = smul.u32 %s19, 8
      %s198 = smul.u32 %s197, 3
      %s199 = smul.addr %s198, 4
      %s200 = scalar_lea.vmem %s184, %s199
      %v201 = vld [vmem:[%s200] sm:$0xf]
      %v202 = vld [vmem:[%s200 + $0x4] sm:$0xf]
      %v203 = vld [vmem:[%s200 + $0x8] sm:$0x1]
      %v204 = vld [vmem:[%s200 + $0xc] sm:$0xf]
      %v205 = vld [vmem:[%s200 + $0x10] sm:$0xf]
      %v206 = vld [vmem:[%s200 + $0x14] sm:$0x1]
      %v207 = vld [vmem:[%s200 + $0x18] sm:$0xf]
      %v208 = vld [vmem:[%s200 + $0x1c] sm:$0xf]
      %v209 = vld [vmem:[%s200 + $0x20] sm:$0x1]
      %v210 = vld [vmem:[%s200 + $0x24] sm:$0xf]
      %v211 = vld [vmem:[%s200 + $0x28] sm:$0xf]
      %v212 = vld [vmem:[%s200 + $0x2c] sm:$0x1]
      %v213 = vld [vmem:[%s200 + $0x30] sm:$0xf]
      %v214 = vld [vmem:[%s200 + $0x34] sm:$0xf]
      %v215 = vld [vmem:[%s200 + $0x38] sm:$0x1]
      %v216 = vld [vmem:[%s200 + $0x3c] sm:$0xf]
      %v217 = vld [vmem:[%s200 + $0x40] sm:$0xf]
      %v218 = vld [vmem:[%s200 + $0x44] sm:$0x1]
      %v219 = vld [vmem:[%s200 + $0x48] sm:$0xf]
      %v220 = vld [vmem:[%s200 + $0x4c] sm:$0xf]
      %v221 = vld [vmem:[%s200 + $0x50] sm:$0x1]
      %v222 = vld [vmem:[%s200 + $0x54] sm:$0xf]
      %v223 = vld [vmem:[%s200 + $0x58] sm:$0xf]
      %v224 = vld [vmem:[%s200 + $0x5c] sm:$0x1]
      %v225 = vld [vmem:[%s200 + $0x60] sm:$0xf]
      %v226 = vld [vmem:[%s200 + $0x64] sm:$0xf]
      %v227 = vld [vmem:[%s200 + $0x68] sm:$0x1]
      %v228 = vld [vmem:[%s200 + $0x6c] sm:$0xf]
      %v229 = vld [vmem:[%s200 + $0x70] sm:$0xf]
      %v230 = vld [vmem:[%s200 + $0x74] sm:$0x1]
      %v231 = vunpack.c.l.bf16 %v201
      %v232 = vunpack.c.l.bf16 %v202
      %v233 = vunpack.c.l.bf16 %v203
      %v234 = vunpack.c.l.bf16 %v204
      %v235 = vunpack.c.l.bf16 %v205
      %v236 = vunpack.c.l.bf16 %v206
      %v237 = vunpack.c.l.bf16 %v207
      %v238 = vunpack.c.l.bf16 %v208
      %v239 = vunpack.c.l.bf16 %v209
      %v240 = vunpack.c.l.bf16 %v210
      %v241 = vunpack.c.l.bf16 %v211
      %v242 = vunpack.c.l.bf16 %v212
      %v243 = vunpack.c.l.bf16 %v213
      %v244 = vunpack.c.l.bf16 %v214
      %v245 = vunpack.c.l.bf16 %v215
      %v246 = vunpack.c.l.bf16 %v216
      %v247 = vunpack.c.l.bf16 %v217
      %v248 = vunpack.c.l.bf16 %v218
      %v249 = vunpack.c.l.bf16 %v219
      %v250 = vunpack.c.l.bf16 %v220
      %v251 = vunpack.c.l.bf16 %v221
      %v252 = vunpack.c.l.bf16 %v222
      %v253 = vunpack.c.l.bf16 %v223
      %v254 = vunpack.c.l.bf16 %v224
      %v255 = vunpack.c.l.bf16 %v225
      %v256 = vunpack.c.l.bf16 %v226
      %v257 = vunpack.c.l.bf16 %v227
      %v258 = vunpack.c.l.bf16 %v228
      %v259 = vunpack.c.l.bf16 %v229
      %v260 = vunpack.c.l.bf16 %v230
      %v261 = vpack.c.bf16 %v232, %v231
      %v262 = vpack.c.bf16 %v235, %v234
      %v263 = vpack.c.bf16 %v238, %v237
      %v264 = vpack.c.bf16 %v241, %v240
      %v265 = vpack.c.bf16 %v244, %v243
      %v266 = vpack.c.bf16 %v247, %v246
      %v267 = vpack.c.bf16 %v250, %v249
      %v268 = vpack.c.bf16 %v253, %v252
      %v269 = vld [vmem:[%s1] sm:$0xf]
      %vm294 = vcmask 1046528
      %v295 = vrot.slane %v231, 1
      %v296 = vrot.slane %v232, 1
      %v297 = vsel %vm294, %v295, %v296
      %v298 = vrot.slane %v233, 1
      %v299 = vsel %vm294, %v296, %v298
      %v300 = vrot.slane %v234, 1
      %v301 = vrot.slane %v235, 1
      %v302 = vsel %vm294, %v300, %v301
      %v303 = vrot.slane %v236, 1
      %v304 = vsel %vm294, %v301, %v303
      %v305 = vrot.slane %v237, 1
      %v306 = vrot.slane %v238, 1
      %v307 = vsel %vm294, %v305, %v306
      %v308 = vrot.slane %v239, 1
      %v309 = vsel %vm294, %v306, %v308
      %v310 = vrot.slane %v240, 1
      %v311 = vrot.slane %v241, 1
      %v312 = vsel %vm294, %v310, %v311
      %v313 = vrot.slane %v242, 1
      %v314 = vsel %vm294, %v311, %v313
      %v315 = vrot.slane %v243, 1
      %v316 = vrot.slane %v244, 1
      %v317 = vsel %vm294, %v315, %v316
      %v318 = vrot.slane %v245, 1
      %v319 = vsel %vm294, %v316, %v318
      %v320 = vrot.slane %v246, 1
      %v321 = vrot.slane %v247, 1
      %v322 = vsel %vm294, %v320, %v321
      %v323 = vrot.slane %v248, 1
      %v324 = vsel %vm294, %v321, %v323
      %v325 = vrot.slane %v249, 1
      %v326 = vrot.slane %v250, 1
      %v327 = vsel %vm294, %v325, %v326
      %v328 = vrot.slane %v251, 1
      %v329 = vsel %vm294, %v326, %v328
      %v330 = vrot.slane %v252, 1
      %v331 = vrot.slane %v253, 1
      %v332 = vsel %vm294, %v330, %v331
      %v333 = vrot.slane %v254, 1
      %v334 = vsel %vm294, %v331, %v333
      %v351 = vpack.c.bf16 %v299, %v297
      %v352 = vpack.c.bf16 %v304, %v302
      %v353 = vpack.c.bf16 %v309, %v307
      %v354 = vpack.c.bf16 %v314, %v312
      %v355 = vpack.c.bf16 %v319, %v317
      %v356 = vpack.c.bf16 %v324, %v322
      %v357 = vpack.c.bf16 %v329, %v327
      %v358 = vpack.c.bf16 %v334, %v332
      %s359 = scalar_lea.vmem %s1, 4
      %v360 = vld [vmem:[%s359] sm:$0xf]
      %vm361 = vcmask 64512
      %v363 = vsel %vm361, %v351, 0
      %v366 = vsel %vm361, %v352, 0
      %v369 = vsel %vm361, %v353, 0
      %v372 = vsel %vm361, %v354, 0
      %v375 = vsel %vm361, %v355, 0
      %v378 = vsel %vm361, %v356, 0
      %v381 = vsel %vm361, %v357, 0
      %v384 = vsel %vm361, %v358, 0
      %vm386 = vcmask 1043456
      %v388 = vsel %vm386, %v360, 0
      %390 = vmatprep.subr.bf16.mxu0 0
      %391 = vmatpush1.bf16.msra.mxu0 %v388
      %392 = vmatprep.subr.bf16.mxu0 0
      %393 = vmatpush1.bf16.msra.mxu0 0
      %394 = vmatprep.subr.bf16.mxu0 0
      %395 = vmatpush1.bf16.msra.mxu0 0
      %396 = vmatprep.subr.bf16.mxu0 0
      %397 = vmatpush1.bf16.msra.mxu0 0
      %398 = vmatprep.subr.bf16.mxu0 0
      %399 = vmatpush1.bf16.msra.mxu0 0
      %400 = vmatprep.subr.bf16.mxu0 0
      %401 = vmatpush1.bf16.msra.mxu0 0
      %402 = vmatprep.subr.bf16.mxu0 0
      %403 = vmatpush1.bf16.msra.mxu0 0
      %404 = vmatprep.subr.bf16.mxu0 0
      %405 = vmatpush1.bf16.msra.mxu0 0
      %406 = vmatprep.subr.bf16.mxu0 0
      %407 = vmatpush1.bf16.msra.mxu0 0
      %408 = vmatprep.subr.bf16.mxu0 0
      %409 = vmatpush1.bf16.msra.mxu0 0
      %410 = vmatprep.subr.bf16.mxu0 0
      %411 = vmatpush1.bf16.msra.mxu0 0
      %412 = vmatprep.subr.bf16.mxu0 0
      %413 = vmatpush1.bf16.msra.mxu0 0
      %414 = vmatprep.subr.bf16.mxu0 0
      %415 = vmatpush1.bf16.msra.mxu0 0
      %416 = vmatprep.subr.bf16.mxu0 0
      %417 = vmatpush1.bf16.msra.mxu0 0
      %418 = vmatprep.subr.bf16.mxu0 0
      %419 = vmatpush1.bf16.msra.mxu0 0
      %420 = vmatprep.subr.bf16.mxu0 0
      %421 = vmatpush1.bf16.msra.mxu0 0
      %422 = vmatprep.mubr.bf16.mxu0 0
      %423 = vmatmul.mubr.bf16.gmra.mrb[0].mxu0 %v363
      %v424 = vpop.f32.mrb[0].mxu0
      %v425 = vadd.f32 0.0, %v424
      %v426 = vpop.f32.mrb[0].mxu0
      %v427 = vpop.f32.mrb[0].mxu0
      %v428 = vadd.f32 0.0, %v427
      %v429 = vpop.f32.mrb[0].mxu0
      %430 = vmatprep.mubr.bf16.mxu0 0
      %431 = vmatmul.mubr.bf16.gmra.mrb[0].mxu0 %v366
      %v432 = vpop.f32.mrb[0].mxu0
      %v433 = vadd.f32 0.0, %v432
      %v434 = vpop.f32.mrb[0].mxu0
      %v435 = vpop.f32.mrb[0].mxu0
      %v436 = vadd.f32 0.0, %v435
      %v437 = vpop.f32.mrb[0].mxu0
      %438 = vmatprep.mubr.bf16.mxu0 0
      %439 = vmatmul.mubr.bf16.gmra.mrb[0].mxu0 %v369
      %v440 = vpop.f32.mrb[0].mxu0
      %v441 = vadd.f32 0.0, %v440
      %v442 = vpop.f32.mrb[0].mxu0
      %v443 = vpop.f32.mrb[0].mxu0
      %v444 = vadd.f32 0.0, %v443
      %v445 = vpop.f32.mrb[0].mxu0
      %446 = vmatprep.mubr.bf16.mxu0 0
      %447 = vmatmul.mubr.bf16.gmra.mrb[0].mxu0 %v372
      %v448 = vpop.f32.mrb[0].mxu0
      %v449 = vadd.f32 0.0, %v448
      %v450 = vpop.f32.mrb[0].mxu0
      %v451 = vpop.f32.mrb[0].mxu0
      %v452 = vadd.f32 0.0, %v451
      %v453 = vpop.f32.mrb[0].mxu0
      %454 = vmatprep.mubr.bf16.mxu0 0
      %455 = vmatmul.mubr.bf16.gmra.mrb[0].mxu0 %v375
      %v456 = vpop.f32.mrb[0].mxu0
      %v457 = vadd.f32 0.0, %v456
      %v458 = vpop.f32.mrb[0].mxu0
      %v459 = vpop.f32.mrb[0].mxu0
      %v460 = vadd.f32 0.0, %v459
      %v461 = vpop.f32.mrb[0].mxu0
      %462 = vmatprep.mubr.bf16.mxu0 0
      %463 = vmatmul.mubr.bf16.gmra.mrb[0].mxu0 %v378
      %v464 = vpop.f32.mrb[0].mxu0
      %v465 = vadd.f32 0.0, %v464
      %v466 = vpop.f32.mrb[0].mxu0
      %v467 = vpop.f32.mrb[0].mxu0
      %v468 = vadd.f32 0.0, %v467
      %v469 = vpop.f32.mrb[0].mxu0
      %470 = vmatprep.mubr.bf16.mxu0 0
      %471 = vmatmul.mubr.bf16.gmra.mrb[0].mxu0 %v381
      %v472 = vpop.f32.mrb[0].mxu0
      %v473 = vadd.f32 0.0, %v472
      %v474 = vpop.f32.mrb[0].mxu0
      %v475 = vpop.f32.mrb[0].mxu0
      %v476 = vadd.f32 0.0, %v475
      %v477 = vpop.f32.mrb[0].mxu0
      %478 = vmatprep.mubr.bf16.mxu0 0
      %479 = vmatmul.mubr.bf16.gmra.mrb[0].mxu0 %v384
      %v480 = vpop.f32.mrb[0].mxu0
      %v481 = vadd.f32 0.0, %v480
      %v482 = vpop.f32.mrb[0].mxu0
      %v483 = vpop.f32.mrb[0].mxu0
      %v484 = vadd.f32 0.0, %v483
      %v485 = vpop.f32.mrb[0].mxu0
      %486 = vdwg.mxu0
      %v488 = vsel %vm361, %v261, 0
      %v491 = vsel %vm361, %v262, 0
      %v494 = vsel %vm361, %v263, 0
      %v497 = vsel %vm361, %v264, 0
      %v500 = vsel %vm361, %v265, 0
      %v503 = vsel %vm361, %v266, 0
      %v506 = vsel %vm361, %v267, 0
      %v509 = vsel %vm361, %v268, 0
      %v512 = vsel %vm386, %v269, 0
      %514 = vmatprep.subr.bf16.mxu0 0
      %515 = vmatpush1.bf16.msra.mxu0 %v512
      %516 = vmatprep.subr.bf16.mxu0 0
      %517 = vmatpush1.bf16.msra.mxu0 0
      %518 = vmatprep.subr.bf16.mxu0 0
      %519 = vmatpush1.bf16.msra.mxu0 0
      %520 = vmatprep.subr.bf16.mxu0 0
      %521 = vmatpush1.bf16.msra.mxu0 0
      %522 = vmatprep.subr.bf16.mxu0 0
      %523 = vmatpush1.bf16.msra.mxu0 0
      %524 = vmatprep.subr.bf16.mxu0 0
      %525 = vmatpush1.bf16.msra.mxu0 0
      %526 = vmatprep.subr.bf16.mxu0 0
      %527 = vmatpush1.bf16.msra.mxu0 0
      %528 = vmatprep.subr.bf16.mxu0 0
      %529 = vmatpush1.bf16.msra.mxu0 0
      %530 = vmatprep.subr.bf16.mxu0 0
      %531 = vmatpush1.bf16.msra.mxu0 0
      %532 = vmatprep.subr.bf16.mxu0 0
      %533 = vmatpush1.bf16.msra.mxu0 0
      %534 = vmatprep.subr.bf16.mxu0 0
      %535 = vmatpush1.bf16.msra.mxu0 0
      %536 = vmatprep.subr.bf16.mxu0 0
      %537 = vmatpush1.bf16.msra.mxu0 0
      %538 = vmatprep.subr.bf16.mxu0 0
      %539 = vmatpush1.bf16.msra.mxu0 0
      %540 = vmatprep.subr.bf16.mxu0 0
      %541 = vmatpush1.bf16.msra.mxu0 0
      %542 = vmatprep.subr.bf16.mxu0 0
      %543 = vmatpush1.bf16.msra.mxu0 0
      %544 = vmatprep.subr.bf16.mxu0 0
      %545 = vmatpush1.bf16.msra.mxu0 0
      %546 = vmatprep.mubr.bf16.mxu0 0
      %547 = vmatmul.mubr.bf16.gmra.mrb[0].mxu0 %v488
      %v548 = vpop.f32.mrb[0].mxu0
      %v549 = vadd.f32 %v425, %v548
      %v550 = vpop.f32.mrb[0].mxu0
      %v551 = vpop.f32.mrb[0].mxu0
      %v552 = vadd.f32 %v428, %v551
      %v553 = vpop.f32.mrb[0].mxu0
      %554 = vmatprep.mubr.bf16.mxu0 0
      %555 = vmatmul.mubr.bf16.gmra.mrb[0].mxu0 %v491
      %v556 = vpop.f32.mrb[0].mxu0
      %v557 = vadd.f32 %v433, %v556
      %v558 = vpop.f32.mrb[0].mxu0
      %v559 = vpop.f32.mrb[0].mxu0
      %v560 = vadd.f32 %v436, %v559
      %v561 = vpop.f32.mrb[0].mxu0
      %562 = vmatprep.mubr.bf16.mxu0 0
      %563 = vmatmul.mubr.bf16.gmra.mrb[0].mxu0 %v494
      %v564 = vpop.f32.mrb[0].mxu0
      %v565 = vadd.f32 %v441, %v564
      %v566 = vpop.f32.mrb[0].mxu0
      %v567 = vpop.f32.mrb[0].mxu0
      %v568 = vadd.f32 %v444, %v567
      %v569 = vpop.f32.mrb[0].mxu0
      %570 = vmatprep.mubr.bf16.mxu0 0
      %571 = vmatmul.mubr.bf16.gmra.mrb[0].mxu0 %v497
      %v572 = vpop.f32.mrb[0].mxu0
      %v573 = vadd.f32 %v449, %v572
      %v574 = vpop.f32.mrb[0].mxu0
      %v575 = vpop.f32.mrb[0].mxu0
      %v576 = vadd.f32 %v452, %v575
      %v577 = vpop.f32.mrb[0].mxu0
      %578 = vmatprep.mubr.bf16.mxu0 0
      %579 = vmatmul.mubr.bf16.gmra.mrb[0].mxu0 %v500
      %v580 = vpop.f32.mrb[0].mxu0
      %v581 = vadd.f32 %v457, %v580
      %v582 = vpop.f32.mrb[0].mxu0
      %v583 = vpop.f32.mrb[0].mxu0
      %v584 = vadd.f32 %v460, %v583
      %v585 = vpop.f32.mrb[0].mxu0
      %586 = vmatprep.mubr.bf16.mxu0 0
      %587 = vmatmul.mubr.bf16.gmra.mrb[0].mxu0 %v503
      %v588 = vpop.f32.mrb[0].mxu0
      %v589 = vadd.f32 %v465, %v588
      %v590 = vpop.f32.mrb[0].mxu0
      %v591 = vpop.f32.mrb[0].mxu0
      %v592 = vadd.f32 %v468, %v591
      %v593 = vpop.f32.mrb[0].mxu0
      %594 = vmatprep.mubr.bf16.mxu0 0
      %595 = vmatmul.mubr.bf16.gmra.mrb[0].mxu0 %v506
      %v596 = vpop.f32.mrb[0].mxu0
      %v597 = vadd.f32 %v473, %v596
      %v598 = vpop.f32.mrb[0].mxu0
      %v599 = vpop.f32.mrb[0].mxu0
      %v600 = vadd.f32 %v476, %v599
      %v601 = vpop.f32.mrb[0].mxu0
      %602 = vmatprep.mubr.bf16.mxu0 0
      %603 = vmatmul.mubr.bf16.gmra.mrb[0].mxu0 %v509
      %v604 = vpop.f32.mrb[0].mxu0
      %v605 = vadd.f32 %v481, %v604
      %v606 = vpop.f32.mrb[0].mxu0
      %v607 = vpop.f32.mrb[0].mxu0
      %v608 = vadd.f32 %v484, %v607
      %v609 = vpop.f32.mrb[0].mxu0
      %610 = vdwg.mxu0
      %vm611 = vcmask 1045504
      %v612 = vrot.slane %v231, 2
      %v613 = vrot.slane %v232, 2
      %v614 = vsel %vm611, %v612, %v613
      %v615 = vrot.slane %v233, 2
      %v616 = vsel %vm611, %v613, %v615
      %v617 = vrot.slane %v234, 2
      %v618 = vrot.slane %v235, 2
      %v619 = vsel %vm611, %v617, %v618
      %v620 = vrot.slane %v236, 2
      %v621 = vsel %vm611, %v618, %v620
      %v622 = vrot.slane %v237, 2
      %v623 = vrot.slane %v238, 2
      %v624 = vsel %vm611, %v622, %v623
      %v625 = vrot.slane %v239, 2
      %v626 = vsel %vm611, %v623, %v625
      %v627 = vrot.slane %v240, 2
      %v628 = vrot.slane %v241, 2
      %v629 = vsel %vm611, %v627, %v628
      %v630 = vrot.slane %v242, 2
      %v631 = vsel %vm611, %v628, %v630
      %v632 = vrot.slane %v243, 2
      %v633 = vrot.slane %v244, 2
      %v634 = vsel %vm611, %v632, %v633
      %v635 = vrot.slane %v245, 2
      %v636 = vsel %vm611, %v633, %v635
      %v637 = vrot.slane %v246, 2
      %v638 = vrot.slane %v247, 2
      %v639 = vsel %vm611, %v637, %v638
      %v640 = vrot.slane %v248, 2
      %v641 = vsel %vm611, %v638, %v640
      %v642 = vrot.slane %v249, 2
      %v643 = vrot.slane %v250, 2
      %v644 = vsel %vm611, %v642, %v643
      %v645 = vrot.slane %v251, 2
      %v646 = vsel %vm611, %v643, %v645
      %v647 = vrot.slane %v252, 2
      %v648 = vrot.slane %v253, 2
      %v649 = vsel %vm611, %v647, %v648
      %v650 = vrot.slane %v254, 2
      %v651 = vsel %vm611, %v648, %v650
      %v668 = vpack.c.bf16 %v616, %v614
      %v669 = vpack.c.bf16 %v621, %v619
      %v670 = vpack.c.bf16 %v626, %v624
      %v671 = vpack.c.bf16 %v631, %v629
      %v672 = vpack.c.bf16 %v636, %v634
      %v673 = vpack.c.bf16 %v641, %v639
      %v674 = vpack.c.bf16 %v646, %v644
      %v675 = vpack.c.bf16 %v651, %v649
      %s676 = scalar_lea.vmem %s1, 8
      %v677 = vld [vmem:[%s676] sm:$0xf]
      %v679 = vsel %vm361, %v668, 0
      %v682 = vsel %vm361, %v669, 0
      %v685 = vsel %vm361, %v670, 0
      %v688 = vsel %vm361, %v671, 0
      %v691 = vsel %vm361, %v672, 0
      %v694 = vsel %vm361, %v673, 0
      %v697 = vsel %vm361, %v674, 0
      %v700 = vsel %vm361, %v675, 0
      %v703 = vsel %vm386, %v677, 0
      %705 = vmatprep.subr.bf16.mxu0 0
      %706 = vmatpush1.bf16.msra.mxu0 %v703
      %707 = vmatprep.subr.bf16.mxu0 0
      %708 = vmatpush1.bf16.msra.mxu0 0
      %709 = vmatprep.subr.bf16.mxu0 0
      %710 = vmatpush1.bf16.msra.mxu0 0
      %711 = vmatprep.subr.bf16.mxu0 0
      %712 = vmatpush1.bf16.msra.mxu0 0
      %713 = vmatprep.subr.bf16.mxu0 0
      %714 = vmatpush1.bf16.msra.mxu0 0
      %715 = vmatprep.subr.bf16.mxu0 0
      %716 = vmatpush1.bf16.msra.mxu0 0
      %717 = vmatprep.subr.bf16.mxu0 0
      %718 = vmatpush1.bf16.msra.mxu0 0
      %719 = vmatprep.subr.bf16.mxu0 0
      %720 = vmatpush1.bf16.msra.mxu0 0
      %721 = vmatprep.subr.bf16.mxu0 0
      %722 = vmatpush1.bf16.msra.mxu0 0
      %723 = vmatprep.subr.bf16.mxu0 0
      %724 = vmatpush1.bf16.msra.mxu0 0
      %725 = vmatprep.subr.bf16.mxu0 0
      %726 = vmatpush1.bf16.msra.mxu0 0
      %727 = vmatprep.subr.bf16.mxu0 0
      %728 = vmatpush1.bf16.msra.mxu0 0
      %729 = vmatprep.subr.bf16.mxu0 0
      %730 = vmatpush1.bf16.msra.mxu0 0
      %731 = vmatprep.subr.bf16.mxu0 0
      %732 = vmatpush1.bf16.msra.mxu0 0
      %733 = vmatprep.subr.bf16.mxu0 0
      %734 = vmatpush1.bf16.msra.mxu0 0
      %735 = vmatprep.subr.bf16.mxu0 0
      %736 = vmatpush1.bf16.msra.mxu0 0
      %737 = vmatprep.mubr.bf16.mxu0 0
      %738 = vmatmul.mubr.bf16.gmra.mrb[0].mxu0 %v679
      %v739 = vpop.f32.mrb[0].mxu0
      %v740 = vadd.f32 0.0, %v739
      %v741 = vpop.f32.mrb[0].mxu0
      %v742 = vpop.f32.mrb[0].mxu0
      %v743 = vadd.f32 0.0, %v742
      %v744 = vpop.f32.mrb[0].mxu0
      %745 = vmatprep.mubr.bf16.mxu0 0
      %746 = vmatmul.mubr.bf16.gmra.mrb[0].mxu0 %v682
      %v747 = vpop.f32.mrb[0].mxu0
      %v748 = vadd.f32 0.0, %v747
      %v749 = vpop.f32.mrb[0].mxu0
      %v750 = vpop.f32.mrb[0].mxu0
      %v751 = vadd.f32 0.0, %v750
      %v752 = vpop.f32.mrb[0].mxu0
      %753 = vmatprep.mubr.bf16.mxu0 0
      %754 = vmatmul.mubr.bf16.gmra.mrb[0].mxu0 %v685
      %v755 = vpop.f32.mrb[0].mxu0
      %v756 = vadd.f32 0.0, %v755
      %v757 = vpop.f32.mrb[0].mxu0
      %v758 = vpop.f32.mrb[0].mxu0
      %v759 = vadd.f32 0.0, %v758
      %v760 = vpop.f32.mrb[0].mxu0
      %761 = vmatprep.mubr.bf16.mxu0 0
      %762 = vmatmul.mubr.bf16.gmra.mrb[0].mxu0 %v688
      %v763 = vpop.f32.mrb[0].mxu0
      %v764 = vadd.f32 0.0, %v763
      %v765 = vpop.f32.mrb[0].mxu0
      %v766 = vpop.f32.mrb[0].mxu0
      %v767 = vadd.f32 0.0, %v766
      %v768 = vpop.f32.mrb[0].mxu0
      %769 = vmatprep.mubr.bf16.mxu0 0
      %770 = vmatmul.mubr.bf16.gmra.mrb[0].mxu0 %v691
      %v771 = vpop.f32.mrb[0].mxu0
      %v772 = vadd.f32 0.0, %v771
      %v773 = vpop.f32.mrb[0].mxu0
      %v774 = vpop.f32.mrb[0].mxu0
      %v775 = vadd.f32 0.0, %v774
      %v776 = vpop.f32.mrb[0].mxu0
      %777 = vmatprep.mubr.bf16.mxu0 0
      %778 = vmatmul.mubr.bf16.gmra.mrb[0].mxu0 %v694
      %v779 = vpop.f32.mrb[0].mxu0
      %v780 = vadd.f32 0.0, %v779
      %v781 = vpop.f32.mrb[0].mxu0
      %v782 = vpop.f32.mrb[0].mxu0
      %v783 = vadd.f32 0.0, %v782
      %v784 = vpop.f32.mrb[0].mxu0
      %785 = vmatprep.mubr.bf16.mxu0 0
      %786 = vmatmul.mubr.bf16.gmra.mrb[0].mxu0 %v697
      %v787 = vpop.f32.mrb[0].mxu0
      %v788 = vadd.f32 0.0, %v787
      %v789 = vpop.f32.mrb[0].mxu0
      %v790 = vpop.f32.mrb[0].mxu0
      %v791 = vadd.f32 0.0, %v790
      %v792 = vpop.f32.mrb[0].mxu0
      %793 = vmatprep.mubr.bf16.mxu0 0
      %794 = vmatmul.mubr.bf16.gmra.mrb[0].mxu0 %v700
      %v795 = vpop.f32.mrb[0].mxu0
      %v796 = vadd.f32 0.0, %v795
      %v797 = vpop.f32.mrb[0].mxu0
      %v798 = vpop.f32.mrb[0].mxu0
      %v799 = vadd.f32 0.0, %v798
      %v800 = vpop.f32.mrb[0].mxu0
      %801 = vdwg.mxu0
      %v802 = vadd.f32 %v549, %v740
      %v803 = vadd.f32 %v552, %v743
      %v804 = vadd.f32 %v557, %v748
      %v805 = vadd.f32 %v560, %v751
      %v806 = vadd.f32 %v565, %v756
      %v807 = vadd.f32 %v568, %v759
      %v808 = vadd.f32 %v573, %v764
      %v809 = vadd.f32 %v576, %v767
      %v810 = vadd.f32 %v581, %v772
      %v811 = vadd.f32 %v584, %v775
      %v812 = vadd.f32 %v589, %v780
      %v813 = vadd.f32 %v592, %v783
      %v814 = vadd.f32 %v597, %v788
      %v815 = vadd.f32 %v600, %v791
      %v816 = vadd.f32 %v605, %v796
      %v817 = vadd.f32 %v608, %v799
      %v818 = vpack.c.bf16 %v256, %v255
      %s819 = scalar_lea.vmem %s1, 12
      %v820 = vld [vmem:[%s819] sm:$0xf]
      %v822 = vsel %vm361, %v818, 0
      %v825 = vsel %vm386, %v820, 0
      %827 = vmatprep.subr.bf16.mxu0 0
      %828 = vmatpush1.bf16.msra.mxu0 %v825
      %829 = vmatprep.subr.bf16.mxu0 0
      %830 = vmatpush1.bf16.msra.mxu0 0
      %831 = vmatprep.subr.bf16.mxu0 0
      %832 = vmatpush1.bf16.msra.mxu0 0
      %833 = vmatprep.subr.bf16.mxu0 0
      %834 = vmatpush1.bf16.msra.mxu0 0
      %835 = vmatprep.subr.bf16.mxu0 0
      %836 = vmatpush1.bf16.msra.mxu0 0
      %837 = vmatprep.subr.bf16.mxu0 0
      %838 = vmatpush1.bf16.msra.mxu0 0
      %839 = vmatprep.subr.bf16.mxu0 0
      %840 = vmatpush1.bf16.msra.mxu0 0
      %841 = vmatprep.subr.bf16.mxu0 0
      %842 = vmatpush1.bf16.msra.mxu0 0
      %843 = vmatprep.subr.bf16.mxu0 0
      %844 = vmatpush1.bf16.msra.mxu0 0
      %845 = vmatprep.subr.bf16.mxu0 0
      %846 = vmatpush1.bf16.msra.mxu0 0
      %847 = vmatprep.subr.bf16.mxu0 0
      %848 = vmatpush1.bf16.msra.mxu0 0
      %849 = vmatprep.subr.bf16.mxu0 0
      %850 = vmatpush1.bf16.msra.mxu0 0
      %851 = vmatprep.subr.bf16.mxu0 0
      %852 = vmatpush1.bf16.msra.mxu0 0
      %853 = vmatprep.subr.bf16.mxu0 0
      %854 = vmatpush1.bf16.msra.mxu0 0
      %855 = vmatprep.subr.bf16.mxu0 0
      %856 = vmatpush1.bf16.msra.mxu0 0
      %857 = vmatprep.subr.bf16.mxu0 0
      %858 = vmatpush1.bf16.msra.mxu0 0
      %859 = vmatprep.mubr.bf16.mxu0 0
      %860 = vmatmul.mubr.bf16.gmra.mrb[0].mxu0 %v491
      %v861 = vpop.f32.mrb[0].mxu0
      %v862 = vadd.f32 0.0, %v861
      %v863 = vpop.f32.mrb[0].mxu0
      %v864 = vpop.f32.mrb[0].mxu0
      %v865 = vadd.f32 0.0, %v864
      %v866 = vpop.f32.mrb[0].mxu0
      %867 = vmatprep.mubr.bf16.mxu0 0
      %868 = vmatmul.mubr.bf16.gmra.mrb[0].mxu0 %v494
      %v869 = vpop.f32.mrb[0].mxu0
      %v870 = vadd.f32 0.0, %v869
      %v871 = vpop.f32.mrb[0].mxu0
      %v872 = vpop.f32.mrb[0].mxu0
      %v873 = vadd.f32 0.0, %v872
      %v874 = vpop.f32.mrb[0].mxu0
      %875 = vmatprep.mubr.bf16.mxu0 0
      %876 = vmatmul.mubr.bf16.gmra.mrb[0].mxu0 %v497
      %v877 = vpop.f32.mrb[0].mxu0
      %v878 = vadd.f32 0.0, %v877
      %v879 = vpop.f32.mrb[0].mxu0
      %v880 = vpop.f32.mrb[0].mxu0
      %v881 = vadd.f32 0.0, %v880
      %v882 = vpop.f32.mrb[0].mxu0
      %883 = vmatprep.mubr.bf16.mxu0 0
      %884 = vmatmul.mubr.bf16.gmra.mrb[0].mxu0 %v500
      %v885 = vpop.f32.mrb[0].mxu0
      %v886 = vadd.f32 0.0, %v885
      %v887 = vpop.f32.mrb[0].mxu0
      %v888 = vpop.f32.mrb[0].mxu0
      %v889 = vadd.f32 0.0, %v888
      %v890 = vpop.f32.mrb[0].mxu0
      %891 = vmatprep.mubr.bf16.mxu0 0
      %892 = vmatmul.mubr.bf16.gmra.mrb[0].mxu0 %v503
      %v893 = vpop.f32.mrb[0].mxu0
      %v894 = vadd.f32 0.0, %v893
      %v895 = vpop.f32.mrb[0].mxu0
      %v896 = vpop.f32.mrb[0].mxu0
      %v897 = vadd.f32 0.0, %v896
      %v898 = vpop.f32.mrb[0].mxu0
      %899 = vmatprep.mubr.bf16.mxu0 0
      %900 = vmatmul.mubr.bf16.gmra.mrb[0].mxu0 %v506
      %v901 = vpop.f32.mrb[0].mxu0
      %v902 = vadd.f32 0.0, %v901
      %v903 = vpop.f32.mrb[0].mxu0
      %v904 = vpop.f32.mrb[0].mxu0
      %v905 = vadd.f32 0.0, %v904
      %v906 = vpop.f32.mrb[0].mxu0
      %907 = vmatprep.mubr.bf16.mxu0 0
      %908 = vmatmul.mubr.bf16.gmra.mrb[0].mxu0 %v509
      %v909 = vpop.f32.mrb[0].mxu0
      %v910 = vadd.f32 0.0, %v909
      %v911 = vpop.f32.mrb[0].mxu0
      %v912 = vpop.f32.mrb[0].mxu0
      %v913 = vadd.f32 0.0, %v912
      %v914 = vpop.f32.mrb[0].mxu0
      %915 = vmatprep.mubr.bf16.mxu0 0
      %916 = vmatmul.mubr.bf16.gmra.mrb[0].mxu0 %v822
      %v917 = vpop.f32.mrb[0].mxu0
      %v918 = vadd.f32 0.0, %v917
      %v919 = vpop.f32.mrb[0].mxu0
      %v920 = vpop.f32.mrb[0].mxu0
      %v921 = vadd.f32 0.0, %v920
      %v922 = vpop.f32.mrb[0].mxu0
      %923 = vdwg.mxu0
      %v924 = vadd.f32 %v802, %v862
      %v925 = vadd.f32 %v803, %v865
      %v926 = vadd.f32 %v804, %v870
      %v927 = vadd.f32 %v805, %v873
      %v928 = vadd.f32 %v806, %v878
      %v929 = vadd.f32 %v807, %v881
      %v930 = vadd.f32 %v808, %v886
      %v931 = vadd.f32 %v809, %v889
      %v932 = vadd.f32 %v810, %v894
      %v933 = vadd.f32 %v811, %v897
      %v934 = vadd.f32 %v812, %v902
      %v935 = vadd.f32 %v813, %v905
      %v936 = vadd.f32 %v814, %v910
      %v937 = vadd.f32 %v815, %v913
      %v938 = vadd.f32 %v816, %v918
      %v939 = vadd.f32 %v817, %v921
      %v943 = vrot.slane %v255, 1
      %v944 = vrot.slane %v256, 1
      %v945 = vsel %vm294, %v943, %v944
      %v946 = vrot.slane %v257, 1
      %v947 = vsel %vm294, %v944, %v946
      %v950 = vpack.c.bf16 %v947, %v945
      %s951 = scalar_lea.vmem %s1, 16
      %v952 = vld [vmem:[%s951] sm:$0xf]
      %v954 = vsel %vm361, %v950, 0
      %v957 = vsel %vm386, %v952, 0
      %959 = vmatprep.subr.bf16.mxu0 0
      %960 = vmatpush1.bf16.msra.mxu0 %v957
      %961 = vmatprep.subr.bf16.mxu0 0
      %962 = vmatpush1.bf16.msra.mxu0 0
      %963 = vmatprep.subr.bf16.mxu0 0
      %964 = vmatpush1.bf16.msra.mxu0 0
      %965 = vmatprep.subr.bf16.mxu0 0
      %966 = vmatpush1.bf16.msra.mxu0 0
      %967 = vmatprep.subr.bf16.mxu0 0
      %968 = vmatpush1.bf16.msra.mxu0 0
      %969 = vmatprep.subr.bf16.mxu0 0
      %970 = vmatpush1.bf16.msra.mxu0 0
      %971 = vmatprep.subr.bf16.mxu0 0
      %972 = vmatpush1.bf16.msra.mxu0 0
      %973 = vmatprep.subr.bf16.mxu0 0
      %974 = vmatpush1.bf16.msra.mxu0 0
      %975 = vmatprep.subr.bf16.mxu0 0
      %976 = vmatpush1.bf16.msra.mxu0 0
      %977 = vmatprep.subr.bf16.mxu0 0
      %978 = vmatpush1.bf16.msra.mxu0 0
      %979 = vmatprep.subr.bf16.mxu0 0
      %980 = vmatpush1.bf16.msra.mxu0 0
      %981 = vmatprep.subr.bf16.mxu0 0
      %982 = vmatpush1.bf16.msra.mxu0 0
      %983 = vmatprep.subr.bf16.mxu0 0
      %984 = vmatpush1.bf16.msra.mxu0 0
      %985 = vmatprep.subr.bf16.mxu0 0
      %986 = vmatpush1.bf16.msra.mxu0 0
      %987 = vmatprep.subr.bf16.mxu0 0
      %988 = vmatpush1.bf16.msra.mxu0 0
      %989 = vmatprep.subr.bf16.mxu0 0
      %990 = vmatpush1.bf16.msra.mxu0 0
      %991 = vmatprep.mubr.bf16.mxu0 0
      %992 = vmatmul.mubr.bf16.gmra.mrb[0].mxu0 %v366
      %v993 = vpop.f32.mrb[0].mxu0
      %v994 = vadd.f32 0.0, %v993
      %v995 = vpop.f32.mrb[0].mxu0
      %v996 = vpop.f32.mrb[0].mxu0
      %v997 = vadd.f32 0.0, %v996
      %v998 = vpop.f32.mrb[0].mxu0
      %999 = vmatprep.mubr.bf16.mxu0 0
      %1000 = vmatmul.mubr.bf16.gmra.mrb[0].mxu0 %v369
      %v1001 = vpop.f32.mrb[0].mxu0
      %v1002 = vadd.f32 0.0, %v1001
      %v1003 = vpop.f32.mrb[0].mxu0
      %v1004 = vpop.f32.mrb[0].mxu0
      %v1005 = vadd.f32 0.0, %v1004
      %v1006 = vpop.f32.mrb[0].mxu0
      %1007 = vmatprep.mubr.bf16.mxu0 0
      %1008 = vmatmul.mubr.bf16.gmra.mrb[0].mxu0 %v372
      %v1009 = vpop.f32.mrb[0].mxu0
      %v1010 = vadd.f32 0.0, %v1009
      %v1011 = vpop.f32.mrb[0].mxu0
      %v1012 = vpop.f32.mrb[0].mxu0
      %v1013 = vadd.f32 0.0, %v1012
      %v1014 = vpop.f32.mrb[0].mxu0
      %1015 = vmatprep.mubr.bf16.mxu0 0
      %1016 = vmatmul.mubr.bf16.gmra.mrb[0].mxu0 %v375
      %v1017 = vpop.f32.mrb[0].mxu0
      %v1018 = vadd.f32 0.0, %v1017
      %v1019 = vpop.f32.mrb[0].mxu0
      %v1020 = vpop.f32.mrb[0].mxu0
      %v1021 = vadd.f32 0.0, %v1020
      %v1022 = vpop.f32.mrb[0].mxu0
      %1023 = vmatprep.mubr.bf16.mxu0 0
      %1024 = vmatmul.mubr.bf16.gmra.mrb[0].mxu0 %v378
      %v1025 = vpop.f32.mrb[0].mxu0
      %v1026 = vadd.f32 0.0, %v1025
      %v1027 = vpop.f32.mrb[0].mxu0
      %v1028 = vpop.f32.mrb[0].mxu0
      %v1029 = vadd.f32 0.0, %v1028
      %v1030 = vpop.f32.mrb[0].mxu0
      %1031 = vmatprep.mubr.bf16.mxu0 0
      %1032 = vmatmul.mubr.bf16.gmra.mrb[0].mxu0 %v381
      %v1033 = vpop.f32.mrb[0].mxu0
      %v1034 = vadd.f32 0.0, %v1033
      %v1035 = vpop.f32.mrb[0].mxu0
      %v1036 = vpop.f32.mrb[0].mxu0
      %v1037 = vadd.f32 0.0, %v1036
      %v1038 = vpop.f32.mrb[0].mxu0
      %1039 = vmatprep.mubr.bf16.mxu0 0
      %1040 = vmatmul.mubr.bf16.gmra.mrb[0].mxu0 %v384
      %v1041 = vpop.f32.mrb[0].mxu0
      %v1042 = vadd.f32 0.0, %v1041
      %v1043 = vpop.f32.mrb[0].mxu0
      %v1044 = vpop.f32.mrb[0].mxu0
      %v1045 = vadd.f32 0.0, %v1044
      %v1046 = vpop.f32.mrb[0].mxu0
      %1047 = vmatprep.mubr.bf16.mxu0 0
      %1048 = vmatmul.mubr.bf16.gmra.mrb[0].mxu0 %v954
      %v1049 = vpop.f32.mrb[0].mxu0
      %v1050 = vadd.f32 0.0, %v1049
      %v1051 = vpop.f32.mrb[0].mxu0
      %v1052 = vpop.f32.mrb[0].mxu0
      %v1053 = vadd.f32 0.0, %v1052
      %v1054 = vpop.f32.mrb[0].mxu0
      %1055 = vdwg.mxu0
      %v1056 = vadd.f32 %v924, %v994
      %v1057 = vadd.f32 %v925, %v997
      %v1058 = vadd.f32 %v926, %v1002
      %v1059 = vadd.f32 %v927, %v1005
      %v1060 = vadd.f32 %v928, %v1010
      %v1061 = vadd.f32 %v929, %v1013
      %v1062 = vadd.f32 %v930, %v1018
      %v1063 = vadd.f32 %v931, %v1021
      %v1064 = vadd.f32 %v932, %v1026
      %v1065 = vadd.f32 %v933, %v1029
      %v1066 = vadd.f32 %v934, %v1034
      %v1067 = vadd.f32 %v935, %v1037
      %v1068 = vadd.f32 %v936, %v1042
      %v1069 = vadd.f32 %v937, %v1045
      %v1070 = vadd.f32 %v938, %v1050
      %v1071 = vadd.f32 %v939, %v1053
      %v1072 = vrot.slane %v255, 2
      %v1073 = vrot.slane %v256, 2
      %v1074 = vsel %vm611, %v1072, %v1073
      %v1075 = vrot.slane %v257, 2
      %v1076 = vsel %vm611, %v1073, %v1075
      %v1079 = vpack.c.bf16 %v1076, %v1074
      %s1080 = scalar_lea.vmem %s1, 20
      %v1081 = vld [vmem:[%s1080] sm:$0xf]
      %v1083 = vsel %vm361, %v1079, 0
      %v1086 = vsel %vm386, %v1081, 0
      %1088 = vmatprep.subr.bf16.mxu0 0
      %1089 = vmatpush1.bf16.msra.mxu0 %v1086
      %1090 = vmatprep.subr.bf16.mxu0 0
      %1091 = vmatpush1.bf16.msra.mxu0 0
      %1092 = vmatprep.subr.bf16.mxu0 0
      %1093 = vmatpush1.bf16.msra.mxu0 0
      %1094 = vmatprep.subr.bf16.mxu0 0
      %1095 = vmatpush1.bf16.msra.mxu0 0
      %1096 = vmatprep.subr.bf16.mxu0 0
      %1097 = vmatpush1.bf16.msra.mxu0 0
      %1098 = vmatprep.subr.bf16.mxu0 0
      %1099 = vmatpush1.bf16.msra.mxu0 0
      %1100 = vmatprep.subr.bf16.mxu0 0
      %1101 = vmatpush1.bf16.msra.mxu0 0
      %1102 = vmatprep.subr.bf16.mxu0 0
      %1103 = vmatpush1.bf16.msra.mxu0 0
      %1104 = vmatprep.subr.bf16.mxu0 0
      %1105 = vmatpush1.bf16.msra.mxu0 0
      %1106 = vmatprep.subr.bf16.mxu0 0
      %1107 = vmatpush1.bf16.msra.mxu0 0
      %1108 = vmatprep.subr.bf16.mxu0 0
      %1109 = vmatpush1.bf16.msra.mxu0 0
      %1110 = vmatprep.subr.bf16.mxu0 0
      %1111 = vmatpush1.bf16.msra.mxu0 0
      %1112 = vmatprep.subr.bf16.mxu0 0
      %1113 = vmatpush1.bf16.msra.mxu0 0
      %1114 = vmatprep.subr.bf16.mxu0 0
      %1115 = vmatpush1.bf16.msra.mxu0 0
      %1116 = vmatprep.subr.bf16.mxu0 0
      %1117 = vmatpush1.bf16.msra.mxu0 0
      %1118 = vmatprep.subr.bf16.mxu0 0
      %1119 = vmatpush1.bf16.msra.mxu0 0
      %1120 = vmatprep.mubr.bf16.mxu0 0
      %1121 = vmatmul.mubr.bf16.gmra.mrb[0].mxu0 %v682
      %v1122 = vpop.f32.mrb[0].mxu0
      %v1123 = vadd.f32 0.0, %v1122
      %v1124 = vpop.f32.mrb[0].mxu0
      %v1125 = vpop.f32.mrb[0].mxu0
      %v1126 = vadd.f32 0.0, %v1125
      %v1127 = vpop.f32.mrb[0].mxu0
      %1128 = vmatprep.mubr.bf16.mxu0 0
      %1129 = vmatmul.mubr.bf16.gmra.mrb[0].mxu0 %v685
      %v1130 = vpop.f32.mrb[0].mxu0
      %v1131 = vadd.f32 0.0, %v1130
      %v1132 = vpop.f32.mrb[0].mxu0
      %v1133 = vpop.f32.mrb[0].mxu0
      %v1134 = vadd.f32 0.0, %v1133
      %v1135 = vpop.f32.mrb[0].mxu0
      %1136 = vmatprep.mubr.bf16.mxu0 0
      %1137 = vmatmul.mubr.bf16.gmra.mrb[0].mxu0 %v688
      %v1138 = vpop.f32.mrb[0].mxu0
      %v1139 = vadd.f32 0.0, %v1138
      %v1140 = vpop.f32.mrb[0].mxu0
      %v1141 = vpop.f32.mrb[0].mxu0
      %v1142 = vadd.f32 0.0, %v1141
      %v1143 = vpop.f32.mrb[0].mxu0
      %1144 = vmatprep.mubr.bf16.mxu0 0
      %1145 = vmatmul.mubr.bf16.gmra.mrb[0].mxu0 %v691
      %v1146 = vpop.f32.mrb[0].mxu0
      %v1147 = vadd.f32 0.0, %v1146
      %v1148 = vpop.f32.mrb[0].mxu0
      %v1149 = vpop.f32.mrb[0].mxu0
      %v1150 = vadd.f32 0.0, %v1149
      %v1151 = vpop.f32.mrb[0].mxu0
      %1152 = vmatprep.mubr.bf16.mxu0 0
      %1153 = vmatmul.mubr.bf16.gmra.mrb[0].mxu0 %v694
      %v1154 = vpop.f32.mrb[0].mxu0
      %v1155 = vadd.f32 0.0, %v1154
      %v1156 = vpop.f32.mrb[0].mxu0
      %v1157 = vpop.f32.mrb[0].mxu0
      %v1158 = vadd.f32 0.0, %v1157
      %v1159 = vpop.f32.mrb[0].mxu0
      %1160 = vmatprep.mubr.bf16.mxu0 0
      %1161 = vmatmul.mubr.bf16.gmra.mrb[0].mxu0 %v697
      %v1162 = vpop.f32.mrb[0].mxu0
      %v1163 = vadd.f32 0.0, %v1162
      %v1164 = vpop.f32.mrb[0].mxu0
      %v1165 = vpop.f32.mrb[0].mxu0
      %v1166 = vadd.f32 0.0, %v1165
      %v1167 = vpop.f32.mrb[0].mxu0
      %1168 = vmatprep.mubr.bf16.mxu0 0
      %1169 = vmatmul.mubr.bf16.gmra.mrb[0].mxu0 %v700
      %v1170 = vpop.f32.mrb[0].mxu0
      %v1171 = vadd.f32 0.0, %v1170
      %v1172 = vpop.f32.mrb[0].mxu0
      %v1173 = vpop.f32.mrb[0].mxu0
      %v1174 = vadd.f32 0.0, %v1173
      %v1175 = vpop.f32.mrb[0].mxu0
      %1176 = vmatprep.mubr.bf16.mxu0 0
      %1177 = vmatmul.mubr.bf16.gmra.mrb[0].mxu0 %v1083
      %v1178 = vpop.f32.mrb[0].mxu0
      %v1179 = vadd.f32 0.0, %v1178
      %v1180 = vpop.f32.mrb[0].mxu0
      %v1181 = vpop.f32.mrb[0].mxu0
      %v1182 = vadd.f32 0.0, %v1181
      %v1183 = vpop.f32.mrb[0].mxu0
      %1184 = vdwg.mxu0
      %v1185 = vadd.f32 %v1056, %v1123
      %v1186 = vadd.f32 %v1057, %v1126
      %v1187 = vadd.f32 %v1058, %v1131
      %v1188 = vadd.f32 %v1059, %v1134
      %v1189 = vadd.f32 %v1060, %v1139
      %v1190 = vadd.f32 %v1061, %v1142
      %v1191 = vadd.f32 %v1062, %v1147
      %v1192 = vadd.f32 %v1063, %v1150
      %v1193 = vadd.f32 %v1064, %v1155
      %v1194 = vadd.f32 %v1065, %v1158
      %v1195 = vadd.f32 %v1066, %v1163
      %v1196 = vadd.f32 %v1067, %v1166
      %v1197 = vadd.f32 %v1068, %v1171
      %v1198 = vadd.f32 %v1069, %v1174
      %v1199 = vadd.f32 %v1070, %v1179
      %v1200 = vadd.f32 %v1071, %v1182
      %v1201 = vpack.c.bf16 %v259, %v258
      %s1202 = scalar_lea.vmem %s1, 24
      %v1203 = vld [vmem:[%s1202] sm:$0xf]
      %v1205 = vsel %vm361, %v1201, 0
      %v1208 = vsel %vm386, %v1203, 0
      %1210 = vmatprep.subr.bf16.mxu0 0
      %1211 = vmatpush1.bf16.msra.mxu0 %v1208
      %1212 = vmatprep.subr.bf16.mxu0 0
      %1213 = vmatpush1.bf16.msra.mxu0 0
      %1214 = vmatprep.subr.bf16.mxu0 0
      %1215 = vmatpush1.bf16.msra.mxu0 0
      %1216 = vmatprep.subr.bf16.mxu0 0
      %1217 = vmatpush1.bf16.msra.mxu0 0
      %1218 = vmatprep.subr.bf16.mxu0 0
      %1219 = vmatpush1.bf16.msra.mxu0 0
      %1220 = vmatprep.subr.bf16.mxu0 0
      %1221 = vmatpush1.bf16.msra.mxu0 0
      %1222 = vmatprep.subr.bf16.mxu0 0
      %1223 = vmatpush1.bf16.msra.mxu0 0
      %1224 = vmatprep.subr.bf16.mxu0 0
      %1225 = vmatpush1.bf16.msra.mxu0 0
      %1226 = vmatprep.subr.bf16.mxu0 0
      %1227 = vmatpush1.bf16.msra.mxu0 0
      %1228 = vmatprep.subr.bf16.mxu0 0
      %1229 = vmatpush1.bf16.msra.mxu0 0
      %1230 = vmatprep.subr.bf16.mxu0 0
      %1231 = vmatpush1.bf16.msra.mxu0 0
      %1232 = vmatprep.subr.bf16.mxu0 0
      %1233 = vmatpush1.bf16.msra.mxu0 0
      %1234 = vmatprep.subr.bf16.mxu0 0
      %1235 = vmatpush1.bf16.msra.mxu0 0
      %1236 = vmatprep.subr.bf16.mxu0 0
      %1237 = vmatpush1.bf16.msra.mxu0 0
      %1238 = vmatprep.subr.bf16.mxu0 0
      %1239 = vmatpush1.bf16.msra.mxu0 0
      %1240 = vmatprep.subr.bf16.mxu0 0
      %1241 = vmatpush1.bf16.msra.mxu0 0
      %1242 = vmatprep.mubr.bf16.mxu0 0
      %1243 = vmatmul.mubr.bf16.gmra.mrb[0].mxu0 %v494
      %v1244 = vpop.f32.mrb[0].mxu0
      %v1245 = vadd.f32 0.0, %v1244
      %v1246 = vpop.f32.mrb[0].mxu0
      %v1247 = vpop.f32.mrb[0].mxu0
      %v1248 = vadd.f32 0.0, %v1247
      %v1249 = vpop.f32.mrb[0].mxu0
      %1250 = vmatprep.mubr.bf16.mxu0 0
      %1251 = vmatmul.mubr.bf16.gmra.mrb[0].mxu0 %v497
      %v1252 = vpop.f32.mrb[0].mxu0
      %v1253 = vadd.f32 0.0, %v1252
      %v1254 = vpop.f32.mrb[0].mxu0
      %v1255 = vpop.f32.mrb[0].mxu0
      %v1256 = vadd.f32 0.0, %v1255
      %v1257 = vpop.f32.mrb[0].mxu0
      %1258 = vmatprep.mubr.bf16.mxu0 0
      %1259 = vmatmul.mubr.bf16.gmra.mrb[0].mxu0 %v500
      %v1260 = vpop.f32.mrb[0].mxu0
      %v1261 = vadd.f32 0.0, %v1260
      %v1262 = vpop.f32.mrb[0].mxu0
      %v1263 = vpop.f32.mrb[0].mxu0
      %v1264 = vadd.f32 0.0, %v1263
      %v1265 = vpop.f32.mrb[0].mxu0
      %1266 = vmatprep.mubr.bf16.mxu0 0
      %1267 = vmatmul.mubr.bf16.gmra.mrb[0].mxu0 %v503
      %v1268 = vpop.f32.mrb[0].mxu0
      %v1269 = vadd.f32 0.0, %v1268
      %v1270 = vpop.f32.mrb[0].mxu0
      %v1271 = vpop.f32.mrb[0].mxu0
      %v1272 = vadd.f32 0.0, %v1271
      %v1273 = vpop.f32.mrb[0].mxu0
      %1274 = vmatprep.mubr.bf16.mxu0 0
      %1275 = vmatmul.mubr.bf16.gmra.mrb[0].mxu0 %v506
      %v1276 = vpop.f32.mrb[0].mxu0
      %v1277 = vadd.f32 0.0, %v1276
      %v1278 = vpop.f32.mrb[0].mxu0
      %v1279 = vpop.f32.mrb[0].mxu0
      %v1280 = vadd.f32 0.0, %v1279
      %v1281 = vpop.f32.mrb[0].mxu0
      %1282 = vmatprep.mubr.bf16.mxu0 0
      %1283 = vmatmul.mubr.bf16.gmra.mrb[0].mxu0 %v509
      %v1284 = vpop.f32.mrb[0].mxu0
      %v1285 = vadd.f32 0.0, %v1284
      %v1286 = vpop.f32.mrb[0].mxu0
      %v1287 = vpop.f32.mrb[0].mxu0
      %v1288 = vadd.f32 0.0, %v1287
      %v1289 = vpop.f32.mrb[0].mxu0
      %1290 = vmatprep.mubr.bf16.mxu0 0
      %1291 = vmatmul.mubr.bf16.gmra.mrb[0].mxu0 %v822
      %v1292 = vpop.f32.mrb[0].mxu0
      %v1293 = vadd.f32 0.0, %v1292
      %v1294 = vpop.f32.mrb[0].mxu0
      %v1295 = vpop.f32.mrb[0].mxu0
      %v1296 = vadd.f32 0.0, %v1295
      %v1297 = vpop.f32.mrb[0].mxu0
      %1298 = vmatprep.mubr.bf16.mxu0 0
      %1299 = vmatmul.mubr.bf16.gmra.mrb[0].mxu0 %v1205
      %v1300 = vpop.f32.mrb[0].mxu0
      %v1301 = vadd.f32 0.0, %v1300
      %v1302 = vpop.f32.mrb[0].mxu0
      %v1303 = vpop.f32.mrb[0].mxu0
      %v1304 = vadd.f32 0.0, %v1303
      %v1305 = vpop.f32.mrb[0].mxu0
      %1306 = vdwg.mxu0
      %v1307 = vadd.f32 %v1185, %v1245
      %v1308 = vadd.f32 %v1186, %v1248
      %v1309 = vadd.f32 %v1187, %v1253
      %v1310 = vadd.f32 %v1188, %v1256
      %v1311 = vadd.f32 %v1189, %v1261
      %v1312 = vadd.f32 %v1190, %v1264
      %v1313 = vadd.f32 %v1191, %v1269
      %v1314 = vadd.f32 %v1192, %v1272
      %v1315 = vadd.f32 %v1193, %v1277
      %v1316 = vadd.f32 %v1194, %v1280
      %v1317 = vadd.f32 %v1195, %v1285
      %v1318 = vadd.f32 %v1196, %v1288
      %v1319 = vadd.f32 %v1197, %v1293
      %v1320 = vadd.f32 %v1198, %v1296
      %v1321 = vadd.f32 %v1199, %v1301
      %v1322 = vadd.f32 %v1200, %v1304
      %v1326 = vrot.slane %v258, 1
      %v1327 = vrot.slane %v259, 1
      %v1328 = vsel %vm294, %v1326, %v1327
      %v1329 = vrot.slane %v260, 1
      %v1330 = vsel %vm294, %v1327, %v1329
      %v1333 = vpack.c.bf16 %v1330, %v1328
      %s1334 = scalar_lea.vmem %s1, 28
      %v1335 = vld [vmem:[%s1334] sm:$0xf]
      %v1337 = vsel %vm361, %v1333, 0
      %v1340 = vsel %vm386, %v1335, 0
      %1342 = vmatprep.subr.bf16.mxu0 0
      %1343 = vmatpush1.bf16.msra.mxu0 %v1340
      %1344 = vmatprep.subr.bf16.mxu0 0
      %1345 = vmatpush1.bf16.msra.mxu0 0
      %1346 = vmatprep.subr.bf16.mxu0 0
      %1347 = vmatpush1.bf16.msra.mxu0 0
      %1348 = vmatprep.subr.bf16.mxu0 0
      %1349 = vmatpush1.bf16.msra.mxu0 0
      %1350 = vmatprep.subr.bf16.mxu0 0
      %1351 = vmatpush1.bf16.msra.mxu0 0
      %1352 = vmatprep.subr.bf16.mxu0 0
      %1353 = vmatpush1.bf16.msra.mxu0 0
      %1354 = vmatprep.subr.bf16.mxu0 0
      %1355 = vmatpush1.bf16.msra.mxu0 0
      %1356 = vmatprep.subr.bf16.mxu0 0
      %1357 = vmatpush1.bf16.msra.mxu0 0
      %1358 = vmatprep.subr.bf16.mxu0 0
      %1359 = vmatpush1.bf16.msra.mxu0 0
      %1360 = vmatprep.subr.bf16.mxu0 0
      %1361 = vmatpush1.bf16.msra.mxu0 0
      %1362 = vmatprep.subr.bf16.mxu0 0
      %1363 = vmatpush1.bf16.msra.mxu0 0
      %1364 = vmatprep.subr.bf16.mxu0 0
      %1365 = vmatpush1.bf16.msra.mxu0 0
      %1366 = vmatprep.subr.bf16.mxu0 0
      %1367 = vmatpush1.bf16.msra.mxu0 0
      %1368 = vmatprep.subr.bf16.mxu0 0
      %1369 = vmatpush1.bf16.msra.mxu0 0
      %1370 = vmatprep.subr.bf16.mxu0 0
      %1371 = vmatpush1.bf16.msra.mxu0 0
      %1372 = vmatprep.subr.bf16.mxu0 0
      %1373 = vmatpush1.bf16.msra.mxu0 0
      %1374 = vmatprep.mubr.bf16.mxu0 0
      %1375 = vmatmul.mubr.bf16.gmra.mrb[0].mxu0 %v369
      %v1376 = vpop.f32.mrb[0].mxu0
      %v1377 = vadd.f32 0.0, %v1376
      %v1378 = vpop.f32.mrb[0].mxu0
      %v1379 = vpop.f32.mrb[0].mxu0
      %v1380 = vadd.f32 0.0, %v1379
      %v1381 = vpop.f32.mrb[0].mxu0
      %1382 = vmatprep.mubr.bf16.mxu0 0
      %1383 = vmatmul.mubr.bf16.gmra.mrb[0].mxu0 %v372
      %v1384 = vpop.f32.mrb[0].mxu0
      %v1385 = vadd.f32 0.0, %v1384
      %v1386 = vpop.f32.mrb[0].mxu0
      %v1387 = vpop.f32.mrb[0].mxu0
      %v1388 = vadd.f32 0.0, %v1387
      %v1389 = vpop.f32.mrb[0].mxu0
      %1390 = vmatprep.mubr.bf16.mxu0 0
      %1391 = vmatmul.mubr.bf16.gmra.mrb[0].mxu0 %v375
      %v1392 = vpop.f32.mrb[0].mxu0
      %v1393 = vadd.f32 0.0, %v1392
      %v1394 = vpop.f32.mrb[0].mxu0
      %v1395 = vpop.f32.mrb[0].mxu0
      %v1396 = vadd.f32 0.0, %v1395
      %v1397 = vpop.f32.mrb[0].mxu0
      %1398 = vmatprep.mubr.bf16.mxu0 0
      %1399 = vmatmul.mubr.bf16.gmra.mrb[0].mxu0 %v378
      %v1400 = vpop.f32.mrb[0].mxu0
      %v1401 = vadd.f32 0.0, %v1400
      %v1402 = vpop.f32.mrb[0].mxu0
      %v1403 = vpop.f32.mrb[0].mxu0
      %v1404 = vadd.f32 0.0, %v1403
      %v1405 = vpop.f32.mrb[0].mxu0
      %1406 = vmatprep.mubr.bf16.mxu0 0
      %1407 = vmatmul.mubr.bf16.gmra.mrb[0].mxu0 %v381
      %v1408 = vpop.f32.mrb[0].mxu0
      %v1409 = vadd.f32 0.0, %v1408
      %v1410 = vpop.f32.mrb[0].mxu0
      %v1411 = vpop.f32.mrb[0].mxu0
      %v1412 = vadd.f32 0.0, %v1411
      %v1413 = vpop.f32.mrb[0].mxu0
      %1414 = vmatprep.mubr.bf16.mxu0 0
      %1415 = vmatmul.mubr.bf16.gmra.mrb[0].mxu0 %v384
      %v1416 = vpop.f32.mrb[0].mxu0
      %v1417 = vadd.f32 0.0, %v1416
      %v1418 = vpop.f32.mrb[0].mxu0
      %v1419 = vpop.f32.mrb[0].mxu0
      %v1420 = vadd.f32 0.0, %v1419
      %v1421 = vpop.f32.mrb[0].mxu0
      %1422 = vmatprep.mubr.bf16.mxu0 0
      %1423 = vmatmul.mubr.bf16.gmra.mrb[0].mxu0 %v954
      %v1424 = vpop.f32.mrb[0].mxu0
      %v1425 = vadd.f32 0.0, %v1424
      %v1426 = vpop.f32.mrb[0].mxu0
      %v1427 = vpop.f32.mrb[0].mxu0
      %v1428 = vadd.f32 0.0, %v1427
      %v1429 = vpop.f32.mrb[0].mxu0
      %1430 = vmatprep.mubr.bf16.mxu0 0
      %1431 = vmatmul.mubr.bf16.gmra.mrb[0].mxu0 %v1337
      %v1432 = vpop.f32.mrb[0].mxu0
      %v1433 = vadd.f32 0.0, %v1432
      %v1434 = vpop.f32.mrb[0].mxu0
      %v1435 = vpop.f32.mrb[0].mxu0
      %v1436 = vadd.f32 0.0, %v1435
      %v1437 = vpop.f32.mrb[0].mxu0
      %1438 = vdwg.mxu0
      %v1439 = vadd.f32 %v1307, %v1377
      %v1440 = vadd.f32 %v1308, %v1380
      %v1441 = vadd.f32 %v1309, %v1385
      %v1442 = vadd.f32 %v1310, %v1388
      %v1443 = vadd.f32 %v1311, %v1393
      %v1444 = vadd.f32 %v1312, %v1396
      %v1445 = vadd.f32 %v1313, %v1401
      %v1446 = vadd.f32 %v1314, %v1404
      %v1447 = vadd.f32 %v1315, %v1409
      %v1448 = vadd.f32 %v1316, %v1412
      %v1449 = vadd.f32 %v1317, %v1417
      %v1450 = vadd.f32 %v1318, %v1420
      %v1451 = vadd.f32 %v1319, %v1425
      %v1452 = vadd.f32 %v1320, %v1428
      %v1453 = vadd.f32 %v1321, %v1433
      %v1454 = vadd.f32 %v1322, %v1436
      %v1455 = vrot.slane %v258, 2
      %v1456 = vrot.slane %v259, 2
      %v1457 = vsel %vm611, %v1455, %v1456
      %v1458 = vrot.slane %v260, 2
      %v1459 = vsel %vm611, %v1456, %v1458
      %v1462 = vpack.c.bf16 %v1459, %v1457
      %s1463 = scalar_lea.vmem %s1, 32
      %v1464 = vld [vmem:[%s1463] sm:$0xf]
      %v1466 = vsel %vm361, %v1462, 0
      %v1469 = vsel %vm386, %v1464, 0
      %1471 = vmatprep.subr.bf16.mxu0 0
      %1472 = vmatpush1.bf16.msra.mxu0 %v1469
      %1473 = vmatprep.subr.bf16.mxu0 0
      %1474 = vmatpush1.bf16.msra.mxu0 0
      %1475 = vmatprep.subr.bf16.mxu0 0
      %1476 = vmatpush1.bf16.msra.mxu0 0
      %1477 = vmatprep.subr.bf16.mxu0 0
      %1478 = vmatpush1.bf16.msra.mxu0 0
      %1479 = vmatprep.subr.bf16.mxu0 0
      %1480 = vmatpush1.bf16.msra.mxu0 0
      %1481 = vmatprep.subr.bf16.mxu0 0
      %1482 = vmatpush1.bf16.msra.mxu0 0
      %1483 = vmatprep.subr.bf16.mxu0 0
      %1484 = vmatpush1.bf16.msra.mxu0 0
      %1485 = vmatprep.subr.bf16.mxu0 0
      %1486 = vmatpush1.bf16.msra.mxu0 0
      %1487 = vmatprep.subr.bf16.mxu0 0
      %1488 = vmatpush1.bf16.msra.mxu0 0
      %1489 = vmatprep.subr.bf16.mxu0 0
      %1490 = vmatpush1.bf16.msra.mxu0 0
      %1491 = vmatprep.subr.bf16.mxu0 0
      %1492 = vmatpush1.bf16.msra.mxu0 0
      %1493 = vmatprep.subr.bf16.mxu0 0
      %1494 = vmatpush1.bf16.msra.mxu0 0
      %1495 = vmatprep.subr.bf16.mxu0 0
      %1496 = vmatpush1.bf16.msra.mxu0 0
      %1497 = vmatprep.subr.bf16.mxu0 0
      %1498 = vmatpush1.bf16.msra.mxu0 0
      %1499 = vmatprep.subr.bf16.mxu0 0
      %1500 = vmatpush1.bf16.msra.mxu0 0
      %1501 = vmatprep.subr.bf16.mxu0 0
      %1502 = vmatpush1.bf16.msra.mxu0 0
      %1503 = vmatprep.mubr.bf16.mxu0 0
      %1504 = vmatmul.mubr.bf16.gmra.mrb[0].mxu0 %v685
      %v1505 = vpop.f32.mrb[0].mxu0
      %v1506 = vadd.f32 0.0, %v1505
      %v1507 = vpop.f32.mrb[0].mxu0
      %v1508 = vpop.f32.mrb[0].mxu0
      %v1509 = vadd.f32 0.0, %v1508
      %v1510 = vpop.f32.mrb[0].mxu0
      %1511 = vmatprep.mubr.bf16.mxu0 0
      %1512 = vmatmul.mubr.bf16.gmra.mrb[0].mxu0 %v688
      %v1513 = vpop.f32.mrb[0].mxu0
      %v1514 = vadd.f32 0.0, %v1513
      %v1515 = vpop.f32.mrb[0].mxu0
      %v1516 = vpop.f32.mrb[0].mxu0
      %v1517 = vadd.f32 0.0, %v1516
      %v1518 = vpop.f32.mrb[0].mxu0
      %1519 = vmatprep.mubr.bf16.mxu0 0
      %1520 = vmatmul.mubr.bf16.gmra.mrb[0].mxu0 %v691
      %v1521 = vpop.f32.mrb[0].mxu0
      %v1522 = vadd.f32 0.0, %v1521
      %v1523 = vpop.f32.mrb[0].mxu0
      %v1524 = vpop.f32.mrb[0].mxu0
      %v1525 = vadd.f32 0.0, %v1524
      %v1526 = vpop.f32.mrb[0].mxu0
      %1527 = vmatprep.mubr.bf16.mxu0 0
      %1528 = vmatmul.mubr.bf16.gmra.mrb[0].mxu0 %v694
      %v1529 = vpop.f32.mrb[0].mxu0
      %v1530 = vadd.f32 0.0, %v1529
      %v1531 = vpop.f32.mrb[0].mxu0
      %v1532 = vpop.f32.mrb[0].mxu0
      %v1533 = vadd.f32 0.0, %v1532
      %v1534 = vpop.f32.mrb[0].mxu0
      %1535 = vmatprep.mubr.bf16.mxu0 0
      %1536 = vmatmul.mubr.bf16.gmra.mrb[0].mxu0 %v697
      %v1537 = vpop.f32.mrb[0].mxu0
      %v1538 = vadd.f32 0.0, %v1537
      %v1539 = vpop.f32.mrb[0].mxu0
      %v1540 = vpop.f32.mrb[0].mxu0
      %v1541 = vadd.f32 0.0, %v1540
      %v1542 = vpop.f32.mrb[0].mxu0
      %1543 = vmatprep.mubr.bf16.mxu0 0
      %1544 = vmatmul.mubr.bf16.gmra.mrb[0].mxu0 %v700
      %v1545 = vpop.f32.mrb[0].mxu0
      %v1546 = vadd.f32 0.0, %v1545
      %v1547 = vpop.f32.mrb[0].mxu0
      %v1548 = vpop.f32.mrb[0].mxu0
      %v1549 = vadd.f32 0.0, %v1548
      %v1550 = vpop.f32.mrb[0].mxu0
      %1551 = vmatprep.mubr.bf16.mxu0 0
      %1552 = vmatmul.mubr.bf16.gmra.mrb[0].mxu0 %v1083
      %v1553 = vpop.f32.mrb[0].mxu0
      %v1554 = vadd.f32 0.0, %v1553
      %v1555 = vpop.f32.mrb[0].mxu0
      %v1556 = vpop.f32.mrb[0].mxu0
      %v1557 = vadd.f32 0.0, %v1556
      %v1558 = vpop.f32.mrb[0].mxu0
      %1559 = vmatprep.mubr.bf16.mxu0 0
      %1560 = vmatmul.mubr.bf16.gmra.mrb[0].mxu0 %v1466
      %v1561 = vpop.f32.mrb[0].mxu0
      %v1562 = vadd.f32 0.0, %v1561
      %v1563 = vpop.f32.mrb[0].mxu0
      %v1564 = vpop.f32.mrb[0].mxu0
      %v1565 = vadd.f32 0.0, %v1564
      %v1566 = vpop.f32.mrb[0].mxu0
      %1567 = vdwg.mxu0
      %v1568 = vadd.f32 %v1439, %v1506
      %v1569 = vadd.f32 %v1440, %v1509
      %v1570 = vadd.f32 %v1441, %v1514
      %v1571 = vadd.f32 %v1442, %v1517
      %v1572 = vadd.f32 %v1443, %v1522
      %v1573 = vadd.f32 %v1444, %v1525
      %v1574 = vadd.f32 %v1445, %v1530
      %v1575 = vadd.f32 %v1446, %v1533
      %v1576 = vadd.f32 %v1447, %v1538
      %v1577 = vadd.f32 %v1448, %v1541
      %v1578 = vadd.f32 %v1449, %v1546
      %v1579 = vadd.f32 %v1450, %v1549
      %v1580 = vadd.f32 %v1451, %v1554
      %v1581 = vadd.f32 %v1452, %v1557
      %v1582 = vadd.f32 %v1453, %v1562
      %v1583 = vadd.f32 %v1454, %v1565
      %v1584 = vld [vmem:[%s2] sm:$0x1]
      %v1586 = vlaneseq
      %v1587 = vshrl.u32 %v1586, 7
      %v1588 = vsub.s32 0, %v1587
      %v1589 = vrot.slane %v1584, %v1588
      %v1591 = vadd.f32 %v1568, %v1589
      %v1592 = vadd.f32 %v1569, %v1589
      %v1593 = vadd.f32 %v1570, %v1589
      %v1594 = vadd.f32 %v1571, %v1589
      %v1595 = vadd.f32 %v1572, %v1589
      %v1596 = vadd.f32 %v1573, %v1589
      %v1597 = vadd.f32 %v1574, %v1589
      %v1598 = vadd.f32 %v1575, %v1589
      %v1599 = vadd.f32 %v1576, %v1589
      %v1600 = vadd.f32 %v1577, %v1589
      %v1601 = vadd.f32 %v1578, %v1589
      %v1602 = vadd.f32 %v1579, %v1589
      %v1603 = vadd.f32 %v1580, %v1589
      %v1604 = vadd.f32 %v1581, %v1589
      %v1605 = vadd.f32 %v1582, %v1589
      %v1606 = vadd.f32 %v1583, %v1589
      %v1607 = vmax.f32 %v1591, -1.0
      %v1608 = vmax.f32 %v1592, -1.0
      %v1609 = vmax.f32 %v1593, -1.0
      %v1610 = vmax.f32 %v1594, -1.0
      %v1611 = vmax.f32 %v1595, -1.0
      %v1612 = vmax.f32 %v1596, -1.0
      %v1613 = vmax.f32 %v1597, -1.0
      %v1614 = vmax.f32 %v1598, -1.0
      %v1615 = vmax.f32 %v1599, -1.0
      %v1616 = vmax.f32 %v1600, -1.0
      %v1617 = vmax.f32 %v1601, -1.0
      %v1618 = vmax.f32 %v1602, -1.0
      %v1619 = vmax.f32 %v1603, -1.0
      %v1620 = vmax.f32 %v1604, -1.0
      %v1621 = vmax.f32 %v1605, -1.0
      %v1622 = vmax.f32 %v1606, -1.0
      %v1623 = vmin.f32 %v1607, 1.0
      %v1624 = vmin.f32 %v1608, 1.0
      %v1625 = vmin.f32 %v1609, 1.0
      %v1626 = vmin.f32 %v1610, 1.0
      %v1627 = vmin.f32 %v1611, 1.0
      %v1628 = vmin.f32 %v1612, 1.0
      %v1629 = vmin.f32 %v1613, 1.0
      %v1630 = vmin.f32 %v1614, 1.0
      %v1631 = vmin.f32 %v1615, 1.0
      %v1632 = vmin.f32 %v1616, 1.0
      %v1633 = vmin.f32 %v1617, 1.0
      %v1634 = vmin.f32 %v1618, 1.0
      %v1635 = vmin.f32 %v1619, 1.0
      %v1636 = vmin.f32 %v1620, 1.0
      %v1637 = vmin.f32 %v1621, 1.0
      %v1638 = vmin.f32 %v1622, 1.0
      %vm1639 = vcmask 23552
      %1640 = vst.msk [vmem:[%s194] sm:$0xff] %vm1639, %v1623
      %1641 = vst.msk [vmem:[%s194 + $0x8] sm:$0xff] %vm1639, %v1624
      %1642 = vst.msk [vmem:[%s194 + $0x10] sm:$0xff] %vm1639, %v1625
      %1643 = vst.msk [vmem:[%s194 + $0x18] sm:$0xff] %vm1639, %v1626
      %1644 = vst.msk [vmem:[%s194 + $0x20] sm:$0xff] %vm1639, %v1627
      %1645 = vst.msk [vmem:[%s194 + $0x28] sm:$0xff] %vm1639, %v1628
      %1646 = vst.msk [vmem:[%s194 + $0x30] sm:$0xff] %vm1639, %v1629
      %1647 = vst.msk [vmem:[%s194 + $0x38] sm:$0xff] %vm1639, %v1630
      %1648 = vst.msk [vmem:[%s194 + $0x40] sm:$0xff] %vm1639, %v1631
      %1649 = vst.msk [vmem:[%s194 + $0x48] sm:$0xff] %vm1639, %v1632
      %1650 = vst.msk [vmem:[%s194 + $0x50] sm:$0xff] %vm1639, %v1633
      %1651 = vst.msk [vmem:[%s194 + $0x58] sm:$0xff] %vm1639, %v1634
      %1652 = vst.msk [vmem:[%s194 + $0x60] sm:$0xff] %vm1639, %v1635
      %1653 = vst.msk [vmem:[%s194 + $0x68] sm:$0xff] %vm1639, %v1636
      %1654 = vst.msk [vmem:[%s194 + $0x70] sm:$0xff] %vm1639, %v1637
      %1655 = vst.msk [vmem:[%s194 + $0x78] sm:$0xff] %vm1639, %v1638
      %s1656 = smul.u32 8, %s19
      %p1657 = scmp.lt.s32.totalorder %s18, 1
      %s1658 = scalar_select %p1657, %s18, 1
      %p1659 = scmp.lt.s32.totalorder %s1656, 15
      %s1660 = scalar_select %p1659, %s1656, 15
      %s1661 = smul.addr %s1660, 2
      %s1662 = smul.addr %s1658, 32
      %s1663 = sadd.s32 %s1661, %s1662
      %s1664 = smul.addr %s1663, 8
      %s1665 = scalar_lea.vmem %s3, %s1664
      // Predicated region
      $region33: #{pix2pix_turbo_forward.25} parent=31 // pred_check
        %p1666 = pneg %p114
      $region34: #{pix2pix_turbo_forward.25} parent=31 // pred_check_branch
        %1668 = sbr.rel (%p1666) target = $region36
      $region35: #{pix2pix_turbo_forward.25} parent=31 // pred_region
        %s1669 = smul.u32 8, %s19
      $region36: #{pix2pix_turbo_forward.25} parent=31 // pred_fallthru
        _
    $region32: #{pix2pix_turbo_forward.25} parent=5 // pred_fallthru
      _
    %p1670 = scmp.le.s32.totalorder 2, %s9
    // Predicated region
    $region37: #{pix2pix_turbo_forward.25} parent=5 // pred_check
      %p1671 = pneg %p1670
    $region38: #{pix2pix_turbo_forward.25} parent=5 // pred_check_branch
      %1673 = sbr.rel (%p1671) target = $region40
    $region39: #{pix2pix_turbo_forward.25} parent=5 // pred_region
      %s1674 = ssub.s32 %s9, 2
      // Predicated region
      $region41: #{pix2pix_turbo_forward.25} parent=39 // pred_check
        %p1675 = pneg %p120
      $region42: #{pix2pix_turbo_forward.25} parent=39 // pred_check_branch
        %1677 = sbr.rel (%p1675) target = $region44
      $region43: #{pix2pix_turbo_forward.25} parent=39 // pred_region
        %s1678 = smul.u32 8, %s21
        %p1679 = scmp.lt.s32.totalorder %s20, 1
        %s1680 = scalar_select %p1679, %s20, 1
        %p1681 = scmp.lt.s32.totalorder %s1678, 15
        %s1682 = scalar_select %p1681, %s1678, 15
        %s1683 = smul.addr %s1682, 2
        %s1684 = smul.addr %s1680, 32
        %s1685 = sadd.s32 %s1683, %s1684
        %s1686 = smul.addr %s1685, 8
        %s1687 = scalar_lea.vmem %s3, %s1686
      $region44: #{pix2pix_turbo_forward.25} parent=39 // pred_fallthru
        _
    $region40: #{pix2pix_turbo_forward.25} parent=5 // pred_fallthru
      _
  $region6: #{pix2pix_turbo_forward.25} parent=0 // loop_footer
    %s13 = sadd.s32 1, %s9
  $region7: #{pix2pix_turbo_forward.25} parent=0 // loop_footer_branch
    %8 = sbr.rel target = $region3
  $region8: #{pix2pix_turbo_forward.25} parent=0 // loop_exit
    _

</llo_original>
